<compile_context>
chip_gen: v6e
topology: v6e:2x2x1
jax: 0.10.0
libtpu: 0.0.40
codegen_flags: <defaults>
</compile_context>

<pallas_src>
import math
from functools import partial

import jax
import jax.numpy as jnp
from jax.experimental import pallas as pl
from jax.experimental.pallas import tpu as pltpu

_SQRT_HALF = 0.7071067811865476

# bf16 MXU operands (all of v5e/v6e/v7x are bf16-native on the MXU); f32
# accumulation is kept via preferred_element_type.  Set to None for f32.
MXU_DTYPE = jnp.bfloat16
WEIGHT_DTYPE = jnp.float32 if MXU_DTYPE is None else MXU_DTYPE


def _mxu(x):
    return x if MXU_DTYPE is None else x.astype(MXU_DTYPE)


def _erf_f32(x):
    # Rational-polynomial erf (XLA's f32 TPU formula, |x| <= 4): keeps exact
    # nn.GELU() semantics without relying on an erf lowering.
    x = jnp.clip(x, -4.0, 4.0)
    x2 = x * x
    alpha = (-2.72614225801306e-10, 2.77068142495902e-08, -2.10102402082508e-06,
             -5.69250639462346e-05, -7.34990630326855e-04, -2.95459980854025e-03,
             -1.60960333262415e-02)
    beta = (-1.45660718464996e-05, -2.13374055278905e-04, -1.68282697438203e-03,
            -7.37332916720468e-03, -1.42647390514189e-02)
    p = jnp.full_like(x, alpha[0])
    for c in alpha[1:]:
        p = p * x2 + c
    q = jnp.full_like(x, beta[0])
    for c in beta[1:]:
        q = q * x2 + c
    return x * p / q


def _gelu(x):
    return 0.5 * x * (1.0 + _erf_f32(x * _SQRT_HALF))


def _ln(x, g, b, eps):
    mu = jnp.mean(x, axis=-1, keepdims=True)
    xc = x - mu
    var = jnp.mean(xc * xc, axis=-1, keepdims=True)
    return xc * jax.lax.rsqrt(var + eps) * g + b


# ------------- conv3x3 + ReLU + MaxPool2d(2,2), fused, per image ------------ #

def _make_conv_pool_kernel(h, w, cin, cout):
    ho, wo = h // 2, w // 2

    def kernel(x_ref, w_ref, b_ref, o_ref, y_sc):
        # Build ONE [h*w, 9*cin] patch tile in VMEM -> single deep-K matmul
        # (better MXU contraction utilization than 9 accumulated K=cin dots).
        patches = []
        for di in range(3):
            for dj in range(3):
                patches.append(
                    x_ref[0, di:di + h, dj:dj + w, :].reshape(h * w, cin))
        pat = jnp.concatenate(patches, axis=-1)
        y = jnp.dot(_mxu(pat), _mxu(w_ref[...]),
                    preferred_element_type=jnp.float32)
        y = jnp.maximum(y + b_ref[...], 0.0)
        # Fused MaxPool2d(2,2): stage the activation in VMEM and read it back
        # with stride-2 sublane loads (horizontal pairs are adjacent rows of
        # the flattened [h*w, cout] layout), then pair rows for the vertical
        # max with sublane-aligned static slices.
        y_sc[...] = y
        heven = y_sc[pl.ds(0, h * wo, 2), :]
        hodd = y_sc[pl.ds(1, h * wo, 2), :]
        hmax = jnp.maximum(heven, hodd).reshape(ho, 2 * wo, cout)
        o_ref[0] = jnp.maximum(hmax[:, :wo, :], hmax[:, wo:, :])

    return kernel


def conv3x3_relu_pool(x, w_hwio, b):
    """3x3/s1/p1 conv + ReLU + MaxPool2d(2,2) on NHWC, one grid step per
    image-plane.  No im2col in HBM, no pre-pool feature-map round trip."""
    bsz, h, wd, cin = x.shape
    cout = w_hwio.shape[-1]
    ho, wo = h // 2, wd // 2
    xp = jnp.pad(x, ((0, 0), (1, 1), (1, 1), (0, 0)))
    w2d = w_hwio.reshape(9 * cin, cout)
    return pl.pallas_call(
        _make_conv_pool_kernel(h, wd, cin, cout),
        out_shape=jax.ShapeDtypeStruct((bsz, ho, wo, cout), jnp.float32),
        grid=(bsz,),
        in_specs=[pl.BlockSpec((1, h + 2, wd + 2, cin), lambda i: (i, 0, 0, 0)),
                  pl.BlockSpec((9 * cin, cout), lambda i: (0, 0)),
                  pl.BlockSpec((1, cout), lambda i: (0, 0))],
        out_specs=pl.BlockSpec((1, ho, wo, cout), lambda i: (i, 0, 0, 0)),
        scratch_shapes=[pltpu.VMEM((h * wd, cout), jnp.float32)],
        compiler_params=pltpu.CompilerParams(dimension_semantics=("parallel",)),
    )(xp, w2d, b.reshape(1, cout))


# ------------------------ matmul + bias (up-projection) --------------------- #

def _mm_bias_kernel(x_ref, w_ref, b_ref, o_ref):
    o_ref[...] = (jnp.dot(_mxu(x_ref[...]), _mxu(w_ref[...]),
                          preferred_element_type=jnp.float32) + b_ref[...])


def _pick_tile(m):
    if m <= 512:
        mp = -(-m // 8) * 8
        return mp, mp
    mp = -(-m // 256) * 256
    return mp, (512 if mp % 512 == 0 else 256)


def matmul_bias(x, w, b):
    m, k = x.shape
    n = w.shape[1]
    mp, tm = _pick_tile(m)
    if mp != m:
        x = jnp.pad(x, ((0, mp - m), (0, 0)))
    out = pl.pallas_call(
        _mm_bias_kernel,
        out_shape=jax.ShapeDtypeStruct((mp, n), jnp.float32),
        grid=(mp // tm,),
        in_specs=[pl.BlockSpec((tm, k), lambda i: (i, 0)),
                  pl.BlockSpec((k, n), lambda i: (0, 0)),
                  pl.BlockSpec((1, n), lambda i: (0, 0))],
        out_specs=pl.BlockSpec((tm, n), lambda i: (i, 0)),
        compiler_params=pltpu.CompilerParams(dimension_semantics=("parallel",)),
    )(x, w, b.reshape(1, n))
    return out[:m] if mp != m else out


# ------------------ fused per-pixel MLP (+ residual add) -------------------- #

def _mlp_res_kernel(x_ref, w1_ref, b1_ref, w2_ref, b2_ref, r_ref, o_ref):
    h1 = jnp.dot(_mxu(x_ref[...]), _mxu(w1_ref[...]),
                 preferred_element_type=jnp.float32) + b1_ref[...]
    h1 = jnp.maximum(h1, 0.0)
    o_ref[...] = (jnp.dot(_mxu(h1), _mxu(w2_ref[...]),
                          preferred_element_type=jnp.float32)
                  + b2_ref[...] + r_ref[...])


def mlp_residual(x, w1, b1, w2, b2, residual):
    """relu(x@w1+b1)@w2+b2+residual in one pass; both tiny weights resident."""
    m, cin = x.shape
    td = w2.shape[1]
    mp, tm = _pick_tile(m)
    if mp != m:
        x = jnp.pad(x, ((0, mp - m), (0, 0)))
        residual = jnp.pad(residual, ((0, mp - m), (0, 0)))
    out = pl.pallas_call(
        _mlp_res_kernel,
        out_shape=jax.ShapeDtypeStruct((mp, td), jnp.float32),
        grid=(mp // tm,),
        in_specs=[pl.BlockSpec((tm, cin), lambda i: (i, 0)),
                  pl.BlockSpec((cin, td), lambda i: (0, 0)),
                  pl.BlockSpec((1, td), lambda i: (0, 0)),
                  pl.BlockSpec((td, td), lambda i: (0, 0)),
                  pl.BlockSpec((1, td), lambda i: (0, 0)),
                  pl.BlockSpec((tm, td), lambda i: (i, 0))],
        out_specs=pl.BlockSpec((tm, td), lambda i: (i, 0)),
        compiler_params=pltpu.CompilerParams(dimension_semantics=("parallel",)),
    )(x, w1, b1.reshape(1, td), w2, b2.reshape(1, td), residual)
    return out[:m] if mp != m else out


# ------------------ fused transformer stack (all layers) -------------------- #

def _make_transformer_kernel(nb, s, d, num_heads, eps):
    hd = d // num_heads
    scale = 1.0 / math.sqrt(hd)

    def kernel(tok_ref, pos_ref, ln1g, ln1b, wqkv, wo, ln2g, ln2b,
               f1w, f1b, f2w, f2b, lnfg, lnfb, o_ref, x_sc):
        layer = pl.program_id(1)

        @pl.when(layer == 0)
        def _():
            x_sc[...] = (tok_ref[...] + pos_ref[...]).reshape(nb * s, d)

        x = x_sc[...]                                      # [nb*S, D] resident

        # ---- self-attention sublayer: x = x + Wo(MHA(LN1(x))) ----
        h1 = _ln(x, ln1g[0], ln1b[0], eps)
        qkv = jnp.dot(_mxu(h1), wqkv[0],
                      preferred_element_type=jnp.float32).reshape(nb, s, 3 * d)
        attn = jnp.zeros((nb * s, d), jnp.float32)
        for hx in range(num_heads):
            lo = hx * hd
            qh = qkv[:, :, lo:lo + hd]
            kh = qkv[:, :, d + lo:d + lo + hd]
            vh = qkv[:, :, 2 * d + lo:2 * d + lo + hd]
            sc = jnp.einsum('bqd,bkd->bqk', _mxu(qh), _mxu(kh),
                            preferred_element_type=jnp.float32) * scale
            sc = sc - jnp.max(sc, axis=-1, keepdims=True)
            e = jnp.exp(sc)
            p = e * pl.reciprocal(jnp.sum(e, axis=-1, keepdims=True),
                                  approx=True)
            ctx = jnp.einsum('bqk,bkd->bqd', _mxu(p), _mxu(vh),
                             preferred_element_type=jnp.float32)
            # fold the out-projection into per-head accumulation: contraction
            # directly over hd, no lane concat of 8-wide head outputs.
            attn = attn + jnp.dot(_mxu(ctx.reshape(nb * s, hd)),
                                  wo[0, lo:lo + hd, :],
                                  preferred_element_type=jnp.float32)
        x = x + attn

        # ---- MLP sublayer: x = x + fc2(GELU(fc1(LN2(x)))) ----
        h2 = _ln(x, ln2g[0], ln2b[0], eps)
        mid = jnp.dot(_mxu(h2), f1w[0],
                      preferred_element_type=jnp.float32) + f1b[0]
        mid = _gelu(mid)
        x = x + jnp.dot(_mxu(mid), f2w[0],
                        preferred_element_type=jnp.float32) + f2b[0]
        x_sc[...] = x

        @pl.when(layer == pl.num_programs(1) - 1)
        def _():
            o_ref[...] = _ln(x, lnfg[...], lnfb[...], eps).reshape(nb, s, d)

    return kernel


def transformer_stack(tokens, pos, params, num_heads, eps):
    """pos-embed add + all BasicBlocks + final LayerNorm in one pallas_call.
    grid = (batch_groups['parallel'], layer['arbitrary']); activations stay in
    a VMEM scratch across layers while per-layer weights are streamed."""
    n, s, d = tokens.shape
    num_layers, _, hid = params["fc1_w"].shape
    ng = 2 if (n >= 2 and n % 2 == 0) else 1   # 2-way split feeds both v7x TCs
    nb = n // ng

    tok3 = lambda g, l: (g, 0, 0)
    lay3 = lambda g, l: (l, 0, 0)
    fix3 = lambda g, l: (0, 0, 0)
    fix2 = lambda g, l: (0, 0)

    wsize = jnp.dtype(params["wqkv"].dtype).itemsize
    per_layer_w = (d * 3 * d + d * d + 2 * d * hid) * wsize + (5 * d + hid) * 4
    act_blocks = (2 * nb * s * d + s * d) * 4
    vmem_limit = int(min(64 << 20,
                         max(32 << 20, 4 * (2 * per_layer_w + act_blocks))))

    return pl.pallas_call(
        _make_transformer_kernel(nb, s, d, num_heads, eps),
        out_shape=jax.ShapeDtypeStruct((n, s, d), jnp.float32),
        grid=(ng, num_layers),
        in_specs=[
            pl.BlockSpec((nb, s, d), tok3),              # tokens (read once/g)
            pl.BlockSpec((1, s, d), fix3),               # pos embed
            pl.BlockSpec((1, 1, d), lay3),               # ln1 gamma
            pl.BlockSpec((1, 1, d), lay3),               # ln1 beta
            pl.BlockSpec((1, d, 3 * d), lay3),           # fused Wqkv
            pl.BlockSpec((1, d, d), lay3),               # Wo
            pl.BlockSpec((1, 1, d), lay3),               # ln2 gamma
            pl.BlockSpec((1, 1, d), lay3),               # ln2 beta
            pl.BlockSpec((1, d, hid), lay3),             # fc1 W
            pl.BlockSpec((1, 1, hid), lay3),             # fc1 b
            pl.BlockSpec((1, hid, d), lay3),             # fc2 W
            pl.BlockSpec((1, 1, d), lay3),               # fc2 b
            pl.BlockSpec((1, d), fix2),                  # final LN gamma
            pl.BlockSpec((1, d), fix2),                  # final LN beta
        ],
        out_specs=pl.BlockSpec((nb, s, d), tok3),
        scratch_shapes=[pltpu.VMEM((nb * s, d), jnp.float32)],
        compiler_params=pltpu.CompilerParams(
            dimension_semantics=("parallel", "arbitrary"),
            vmem_limit_bytes=vmem_limit),
    )(tokens, pos,
      params["ln1_g"], params["ln1_b"], params["wqkv"], params["wo"],
      params["ln2_g"], params["ln2_b"], params["fc1_w"], params["fc1_b"],
      params["fc2_w"], params["fc2_b"],
      params["lnf_g"].reshape(1, d), params["lnf_b"].reshape(1, d))


# --------------------------- parameters & forward --------------------------- #

def init_params(key, cfg):
    d = cfg["transformer_dim"]
    cin = cfg["input_dim"]
    td = cfg["triplane_dim"]
    lres = cfg["triplane_low_res"]
    hidden = int(d * 4.0)
    n_layers = cfg["transformer_layers"]

    keys = jax.random.split(key, 20)
    ki = iter(keys)

    def nrm(shape, scale, dtype=jnp.float32):
        return (jax.random.normal(next(ki), shape, jnp.float32) * scale
                ).astype(dtype)

    return {
        "pos_embed": nrm((1, 3 * lres * lres, d), (1.0 / d) ** 0.5),
        "conv1_w": nrm((3, 3, cin, d), 0.05),     # HWIO
        "conv1_b": nrm((d,), 0.02),
        "conv2_w": nrm((3, 3, d, d), 0.05),
        "conv2_b": nrm((d,), 0.02),
        # ConvTranspose2d(d, td, k=4, s=4) as [d, (di, dj, td)] matmul weight
        "up_w": nrm((d, 16 * td), 0.05),
        "up_b": nrm((td,), 0.02),
        "mlp_w1": nrm((cin, td), 0.05),
        "mlp_b1": nrm((td,), 0.02),
        "mlp_w2": nrm((td, td), 0.05),
        "mlp_b2": nrm((td,), 0.02),
        # transformer layers, stacked along a leading layer axis
        "ln1_g": jnp.ones((n_layers, 1, d), jnp.float32),
        "ln1_b": jnp.zeros((n_layers, 1, d), jnp.float32),
        "wqkv": nrm((n_layers, d, 3 * d), 0.05, WEIGHT_DTYPE),
        "wo": nrm((n_layers, d, d), 0.05, WEIGHT_DTYPE),
        "ln2_g": jnp.ones((n_layers, 1, d), jnp.float32),
        "ln2_b": jnp.zeros((n_layers, 1, d), jnp.float32),
        "fc1_w": nrm((n_layers, d, hidden), 0.05, WEIGHT_DTYPE),
        "fc1_b": nrm((n_layers, 1, hidden), 0.02),
        "fc2_w": nrm((n_layers, hidden, d), 0.05, WEIGHT_DTYPE),
        "fc2_b": nrm((n_layers, 1, d), 0.02),
        "lnf_g": jnp.ones((d,), jnp.float32),
        "lnf_b": jnp.zeros((d,), jnp.float32),
    }


def triplane_transformer_forward(params, triplanes, cfg):
    n, _, cin, h, w = triplanes.shape
    d = cfg["transformer_dim"]
    td = cfg["triplane_dim"]
    lres = cfg["triplane_low_res"]
    heads = cfg["transformer_heads"]
    eps = 1e-6
    s = 3 * lres * lres

    # single NCHW->NHWC transpose serves both the downsampler and the MLP path
    nhwc = jnp.transpose(triplanes, (0, 1, 3, 4, 2))          # [N,3,H,W,Cin]

    # ---- reshape_downsample: (conv3x3+ReLU+pool) x2, pooling fused in-kernel ----
    x = nhwc.reshape(n * 3, h, w, cin)
    x = conv3x3_relu_pool(x, params["conv1_w"], params["conv1_b"])
    x = conv3x3_relu_pool(x, params["conv2_w"], params["conv2_b"])  # [3N,L,L,D]

    # ---- forward_transformer: pos-add + all layers + final LN, one kernel ----
    tokens = x.reshape(n, s, d)          # plane-major token order, no transpose
    xt = transformer_stack(tokens, params["pos_embed"], params, heads, eps)

    # ---- reshape_upsample: ConvTranspose2d(k=4,s=4) == matmul + pixel shuffle ----
    up = matmul_bias(xt.reshape(n * s, d), params["up_w"],
                     jnp.tile(params["up_b"], 16))
    # TODO(synk): fold this pixel-shuffle transpose into the up-projection's
    # out_specs index_map to save one HBM pass at high resolution.
    up = up.reshape(n, 3, lres, lres, 4, 4, td)
    up = jnp.transpose(up, (0, 1, 2, 4, 3, 5, 6)).reshape(n, 3, h, w, td)

    # ---- per-pixel MLP + residual add, one fused kernel, channels-last ----
    planes = mlp_residual(nhwc.reshape(n * 3 * h * w, cin),
                          params["mlp_w1"], params["mlp_b1"],
                          params["mlp_w2"], params["mlp_b2"],
                          up.reshape(n * 3 * h * w, td))
    planes = planes.reshape(n, 3, h, w, td)
    return jnp.transpose(planes, (0, 1, 4, 2, 3))             # [N,3,Td,H,W]


if __name__ == "__main__":
    cfg = dict(input_dim=8, transformer_dim=32, transformer_layers=2,
               transformer_heads=4, triplane_low_res=4, triplane_high_res=16,
               triplane_dim=16)
    params = init_params(jax.random.PRNGKey(1), cfg)
    triplanes = jax.random.normal(
        jax.random.PRNGKey(0),
        (2, 3, cfg["input_dim"], cfg["triplane_high_res"],
         cfg["triplane_high_res"]), jnp.float32)

    fwd = jax.jit(partial(triplane_transformer_forward, cfg=cfg))
    out = fwd(params, triplanes)
    jax.block_until_ready(out)
    assert out.shape == (2, 3, cfg["triplane_dim"],
                         cfg["triplane_high_res"],
                         cfg["triplane_high_res"]), out.shape
    assert bool(jnp.all(jnp.isfinite(out)))
    print("KERNEL_OK")
</pallas_src>

<mosaic_0001>
module attributes {stable_mosaic.version = 11 : i64} {
  func.func @kernel(%arg0: i32, %arg1: memref<1x18x18x8xf32, #tpu.memory_space<vmem>>, %arg2: memref<72x32xf32, #tpu.memory_space<vmem>>, %arg3: memref<1x32xf32, #tpu.memory_space<vmem>>, %arg4: memref<1x8x8x32xf32, #tpu.memory_space<vmem>>, %arg5: memref<256x32xf32, #tpu.memory_space<vmem>>) attributes {dimension_semantics = [#tpu.dimension_semantics<parallel>], iteration_bounds = array<i64: 6>, scalar_prefetch = 0 : i64, scratch_operands = 1 : i64, tpu.core_type = #tpu.core_type<tc>, window_params = [{transform_indices = @transform_0, window_bounds = array<i64: 1, 18, 18, 8>}, {pipeline_mode = #tpu.pipeline_mode<synchronous>, transform_indices = @transform_1, window_bounds = array<i64: 72, 32>}, {pipeline_mode = #tpu.pipeline_mode<synchronous>, transform_indices = @transform_2, window_bounds = array<i64: 1, 32>}, {transform_indices = @transform_3, window_bounds = array<i64: 1, 8, 8, 32>}]} {
    %c0 = arith.constant 0 : index
    %c0_0 = arith.constant 0 : index
    %c0_1 = arith.constant 0 : index
    %c0_2 = arith.constant 0 : index
    %0 = vector.load %arg1[%c0, %c0_0, %c0_1, %c0_2] : memref<1x18x18x8xf32, #tpu.memory_space<vmem>>, vector<1x16x16x8xf32>
    %1 = vector.shape_cast %0 : vector<1x16x16x8xf32> to vector<16x16x8xf32>
    %2 = vector.shape_cast %1 : vector<16x16x8xf32> to vector<256x8xf32>
    %c0_3 = arith.constant 0 : index
    %c0_4 = arith.constant 0 : index
    %c1 = arith.constant 1 : index
    %c0_5 = arith.constant 0 : index
    %3 = vector.load %arg1[%c0_3, %c0_4, %c1, %c0_5] : memref<1x18x18x8xf32, #tpu.memory_space<vmem>>, vector<1x16x16x8xf32>
    %4 = vector.shape_cast %3 : vector<1x16x16x8xf32> to vector<16x16x8xf32>
    %5 = vector.shape_cast %4 : vector<16x16x8xf32> to vector<256x8xf32>
    %c0_6 = arith.constant 0 : index
    %c0_7 = arith.constant 0 : index
    %c2 = arith.constant 2 : index
    %c0_8 = arith.constant 0 : index
    %6 = vector.load %arg1[%c0_6, %c0_7, %c2, %c0_8] : memref<1x18x18x8xf32, #tpu.memory_space<vmem>>, vector<1x16x16x8xf32>
    %7 = vector.shape_cast %6 : vector<1x16x16x8xf32> to vector<16x16x8xf32>
    %8 = vector.shape_cast %7 : vector<16x16x8xf32> to vector<256x8xf32>
    %c0_9 = arith.constant 0 : index
    %c1_10 = arith.constant 1 : index
    %c0_11 = arith.constant 0 : index
    %c0_12 = arith.constant 0 : index
    %9 = vector.load %arg1[%c0_9, %c1_10, %c0_11, %c0_12] : memref<1x18x18x8xf32, #tpu.memory_space<vmem>>, vector<1x16x16x8xf32>
    %10 = vector.shape_cast %9 : vector<1x16x16x8xf32> to vector<16x16x8xf32>
    %11 = vector.shape_cast %10 : vector<16x16x8xf32> to vector<256x8xf32>
    %c0_13 = arith.constant 0 : index
    %c1_14 = arith.constant 1 : index
    %c1_15 = arith.constant 1 : index
    %c0_16 = arith.constant 0 : index
    %12 = vector.load %arg1[%c0_13, %c1_14, %c1_15, %c0_16] : memref<1x18x18x8xf32, #tpu.memory_space<vmem>>, vector<1x16x16x8xf32>
    %13 = vector.shape_cast %12 : vector<1x16x16x8xf32> to vector<16x16x8xf32>
    %14 = vector.shape_cast %13 : vector<16x16x8xf32> to vector<256x8xf32>
    %c0_17 = arith.constant 0 : index
    %c1_18 = arith.constant 1 : index
    %c2_19 = arith.constant 2 : index
    %c0_20 = arith.constant 0 : index
    %15 = vector.load %arg1[%c0_17, %c1_18, %c2_19, %c0_20] : memref<1x18x18x8xf32, #tpu.memory_space<vmem>>, vector<1x16x16x8xf32>
    %16 = vector.shape_cast %15 : vector<1x16x16x8xf32> to vector<16x16x8xf32>
    %17 = vector.shape_cast %16 : vector<16x16x8xf32> to vector<256x8xf32>
    %c0_21 = arith.constant 0 : index
    %c2_22 = arith.constant 2 : index
    %c0_23 = arith.constant 0 : index
    %c0_24 = arith.constant 0 : index
    %18 = vector.load %arg1[%c0_21, %c2_22, %c0_23, %c0_24] : memref<1x18x18x8xf32, #tpu.memory_space<vmem>>, vector<1x16x16x8xf32>
    %19 = vector.shape_cast %18 : vector<1x16x16x8xf32> to vector<16x16x8xf32>
    %20 = vector.shape_cast %19 : vector<16x16x8xf32> to vector<256x8xf32>
    %c0_25 = arith.constant 0 : index
    %c2_26 = arith.constant 2 : index
    %c1_27 = arith.constant 1 : index
    %c0_28 = arith.constant 0 : index
    %21 = vector.load %arg1[%c0_25, %c2_26, %c1_27, %c0_28] : memref<1x18x18x8xf32, #tpu.memory_space<vmem>>, vector<1x16x16x8xf32>
    %22 = vector.shape_cast %21 : vector<1x16x16x8xf32> to vector<16x16x8xf32>
    %23 = vector.shape_cast %22 : vector<16x16x8xf32> to vector<256x8xf32>
    %c0_29 = arith.constant 0 : index
    %c2_30 = arith.constant 2 : index
    %c2_31 = arith.constant 2 : index
    %c0_32 = arith.constant 0 : index
    %24 = vector.load %arg1[%c0_29, %c2_30, %c2_31, %c0_32] : memref<1x18x18x8xf32, #tpu.memory_space<vmem>>, vector<1x16x16x8xf32>
    %25 = vector.shape_cast %24 : vector<1x16x16x8xf32> to vector<16x16x8xf32>
    %26 = vector.shape_cast %25 : vector<16x16x8xf32> to vector<256x8xf32>
    %27 = tpu.concatenate %2, %5, %8, %11, %14, %17, %20, %23, %26 in 1 : vector<256x8xf32>, vector<256x8xf32>, vector<256x8xf32>, vector<256x8xf32>, vector<256x8xf32>, vector<256x8xf32>, vector<256x8xf32>, vector<256x8xf32>, vector<256x8xf32> -> vector<256x72xf32>
    %28 = arith.truncf %27 : vector<256x72xf32> to vector<256x72xbf16>
    %c0_33 = arith.constant 0 : index
    %c0_34 = arith.constant 0 : index
    %29 = vector.load %arg2[%c0_33, %c0_34] : memref<72x32xf32, #tpu.memory_space<vmem>>, vector<72x32xf32>
    %30 = arith.truncf %29 : vector<72x32xf32> to vector<72x32xbf16>
    %cst = arith.constant dense<0.000000e+00> : vector<256x32xf32>
    %31 = tpu.matmul %28, %30, %cst {dimension_numbers = #tpu.dot_dimension_numbers<[1], [0], [0], [1], [0, 0, 1, 1], [], []>} : vector<256x72xbf16>, vector<72x32xbf16>, vector<256x32xf32> -> vector<256x32xf32>
    %c0_35 = arith.constant 0 : index
    %c0_36 = arith.constant 0 : index
    %32 = vector.load %arg3[%c0_35, %c0_36] : memref<1x32xf32, #tpu.memory_space<vmem>>, vector<1x32xf32>
    %33 = vector.broadcast %32 : vector<1x32xf32> to vector<256x32xf32>
    %34 = arith.addf %31, %33 : vector<256x32xf32>
    %cst_37 = arith.constant 0.000000e+00 : f32
    %35 = vector.broadcast %cst_37 : f32 to vector<256x32xf32>
    %36 = arith.maximumf %34, %35 : vector<256x32xf32>
    %c0_38 = arith.constant 0 : index
    %c0_39 = arith.constant 0 : index
    %37 = vector.load %arg5[%c0_38, %c0_39] : memref<256x32xf32, #tpu.memory_space<vmem>>, vector<256x32xf32>
    tpu.vector_store %arg5[%c0_38, %c0_39], %36 {strides = array<i32>} : memref<256x32xf32, #tpu.memory_space<vmem>>, vector<256x32xf32>,
    %c0_40 = arith.constant 0 : index
    %c0_41 = arith.constant 0 : index
    %38 = tpu.strided_load %arg5[%c0_40, %c0_41] {strides = array<i32: 2, 1>} : memref<256x32xf32, #tpu.memory_space<vmem>>, vector<128x32xf32>
    %c1_42 = arith.constant 1 : index
    %c0_43 = arith.constant 0 : index
    %39 = tpu.strided_load %arg5[%c1_42, %c0_43] {strides = array<i32: 2, 1>} : memref<256x32xf32, #tpu.memory_space<vmem>>, vector<128x32xf32>
    %40 = arith.maximumf %38, %39 : vector<128x32xf32>
    %41 = vector.shape_cast %40 : vector<128x32xf32> to vector<8x16x32xf32>
    %42 = vector.extract_strided_slice %41 {offsets = [0, 0, 0], sizes = [8, 8, 32], strides = [1, 1, 1]} : vector<8x16x32xf32> to vector<8x8x32xf32>
    %43 = vector.extract_strided_slice %41 {offsets = [0, 8, 0], sizes = [8, 8, 32], strides = [1, 1, 1]} : vector<8x16x32xf32> to vector<8x8x32xf32>
    %44 = arith.maximumf %42, %43 : vector<8x8x32xf32>
    %c0_44 = arith.constant 0 : index
    %c0_45 = arith.constant 0 : index
    %c0_46 = arith.constant 0 : index
    %c0_47 = arith.constant 0 : index
    %45 = vector.load %arg4[%c0_44, %c0_45, %c0_46, %c0_47] : memref<1x8x8x32xf32, #tpu.memory_space<vmem>>, vector<1x8x8x32xf32>
    %46 = vector.shape_cast %45 : vector<1x8x8x32xf32> to vector<8x8x32xf32>
    %47 = vector.shape_cast %44 : vector<8x8x32xf32> to vector<1x8x8x32xf32>
    tpu.vector_store %arg4[%c0_44, %c0_45, %c0_46, %c0_47], %47 {strides = array<i32>} : memref<1x8x8x32xf32, #tpu.memory_space<vmem>>, vector<1x8x8x32xf32>,
    return
  }
  func.func @transform_0(%arg0: i32) -> (i32, i32, i32, i32) {
    %c0_i32 = arith.constant 0 : i32
    %c0_i32_0 = arith.constant 0 : i32
    %c0_i32_1 = arith.constant 0 : i32
    %c0_i32_2 = arith.constant 0 : i32
    return %arg0, %c0_i32, %c0_i32_0, %c0_i32_1 : i32, i32, i32, i32
  }
  func.func @transform_1(%arg0: i32) -> (i32, i32) {
    %c0_i32 = arith.constant 0 : i32
    %c0_i32_0 = arith.constant 0 : i32
    %c0_i32_1 = arith.constant 0 : i32
    return %c0_i32, %c0_i32_0 : i32, i32
  }
  func.func @transform_2(%arg0: i32) -> (i32, i32) {
    %c0_i32 = arith.constant 0 : i32
    %c0_i32_0 = arith.constant 0 : i32
    %c0_i32_1 = arith.constant 0 : i32
    return %c0_i32, %c0_i32_0 : i32, i32
  }
  func.func @transform_3(%arg0: i32) -> (i32, i32, i32, i32) {
    %c0_i32 = arith.constant 0 : i32
    %c0_i32_0 = arith.constant 0 : i32
    %c0_i32_1 = arith.constant 0 : i32
    %c0_i32_2 = arith.constant 0 : i32
    return %arg0, %c0_i32, %c0_i32_0, %c0_i32_1 : i32, i32, i32, i32
  }
}

module attributes {stable_mosaic.version = 11 : i64} {
  func.func @kernel(%arg0: i32, %arg1: memref<1x10x10x32xf32, #tpu.memory_space<vmem>>, %arg2: memref<288x32xf32, #tpu.memory_space<vmem>>, %arg3: memref<1x32xf32, #tpu.memory_space<vmem>>, %arg4: memref<1x4x4x32xf32, #tpu.memory_space<vmem>>, %arg5: memref<64x32xf32, #tpu.memory_space<vmem>>) attributes {dimension_semantics = [#tpu.dimension_semantics<parallel>], iteration_bounds = array<i64: 6>, scalar_prefetch = 0 : i64, scratch_operands = 1 : i64, tpu.core_type = #tpu.core_type<tc>, window_params = [{transform_indices = @transform_0, window_bounds = array<i64: 1, 10, 10, 32>}, {pipeline_mode = #tpu.pipeline_mode<synchronous>, transform_indices = @transform_1, window_bounds = array<i64: 288, 32>}, {pipeline_mode = #tpu.pipeline_mode<synchronous>, transform_indices = @transform_2, window_bounds = array<i64: 1, 32>}, {transform_indices = @transform_3, window_bounds = array<i64: 1, 4, 4, 32>}]} {
    %c0 = arith.constant 0 : index
    %c0_0 = arith.constant 0 : index
    %c0_1 = arith.constant 0 : index
    %c0_2 = arith.constant 0 : index
    %0 = vector.load %arg1[%c0, %c0_0, %c0_1, %c0_2] : memref<1x10x10x32xf32, #tpu.memory_space<vmem>>, vector<1x8x8x32xf32>
    %1 = vector.shape_cast %0 : vector<1x8x8x32xf32> to vector<8x8x32xf32>
    %2 = vector.shape_cast %1 : vector<8x8x32xf32> to vector<64x32xf32>
    %c0_3 = arith.constant 0 : index
    %c0_4 = arith.constant 0 : index
    %c1 = arith.constant 1 : index
    %c0_5 = arith.constant 0 : index
    %3 = vector.load %arg1[%c0_3, %c0_4, %c1, %c0_5] : memref<1x10x10x32xf32, #tpu.memory_space<vmem>>, vector<1x8x8x32xf32>
    %4 = vector.shape_cast %3 : vector<1x8x8x32xf32> to vector<8x8x32xf32>
    %5 = vector.shape_cast %4 : vector<8x8x32xf32> to vector<64x32xf32>
    %c0_6 = arith.constant 0 : index
    %c0_7 = arith.constant 0 : index
    %c2 = arith.constant 2 : index
    %c0_8 = arith.constant 0 : index
    %6 = vector.load %arg1[%c0_6, %c0_7, %c2, %c0_8] : memref<1x10x10x32xf32, #tpu.memory_space<vmem>>, vector<1x8x8x32xf32>
    %7 = vector.shape_cast %6 : vector<1x8x8x32xf32> to vector<8x8x32xf32>
    %8 = vector.shape_cast %7 : vector<8x8x32xf32> to vector<64x32xf32>
    %c0_9 = arith.constant 0 : index
    %c1_10 = arith.constant 1 : index
    %c0_11 = arith.constant 0 : index
    %c0_12 = arith.constant 0 : index
    %9 = vector.load %arg1[%c0_9, %c1_10, %c0_11, %c0_12] : memref<1x10x10x32xf32, #tpu.memory_space<vmem>>, vector<1x8x8x32xf32>
    %10 = vector.shape_cast %9 : vector<1x8x8x32xf32> to vector<8x8x32xf32>
    %11 = vector.shape_cast %10 : vector<8x8x32xf32> to vector<64x32xf32>
    %c0_13 = arith.constant 0 : index
    %c1_14 = arith.constant 1 : index
    %c1_15 = arith.constant 1 : index
    %c0_16 = arith.constant 0 : index
    %12 = vector.load %arg1[%c0_13, %c1_14, %c1_15, %c0_16] : memref<1x10x10x32xf32, #tpu.memory_space<vmem>>, vector<1x8x8x32xf32>
    %13 = vector.shape_cast %12 : vector<1x8x8x32xf32> to vector<8x8x32xf32>
    %14 = vector.shape_cast %13 : vector<8x8x32xf32> to vector<64x32xf32>
    %c0_17 = arith.constant 0 : index
    %c1_18 = arith.constant 1 : index
    %c2_19 = arith.constant 2 : index
    %c0_20 = arith.constant 0 : index
    %15 = vector.load %arg1[%c0_17, %c1_18, %c2_19, %c0_20] : memref<1x10x10x32xf32, #tpu.memory_space<vmem>>, vector<1x8x8x32xf32>
    %16 = vector.shape_cast %15 : vector<1x8x8x32xf32> to vector<8x8x32xf32>
    %17 = vector.shape_cast %16 : vector<8x8x32xf32> to vector<64x32xf32>
    %c0_21 = arith.constant 0 : index
    %c2_22 = arith.constant 2 : index
    %c0_23 = arith.constant 0 : index
    %c0_24 = arith.constant 0 : index
    %18 = vector.load %arg1[%c0_21, %c2_22, %c0_23, %c0_24] : memref<1x10x10x32xf32, #tpu.memory_space<vmem>>, vector<1x8x8x32xf32>
    %19 = vector.shape_cast %18 : vector<1x8x8x32xf32> to vector<8x8x32xf32>
    %20 = vector.shape_cast %19 : vector<8x8x32xf32> to vector<64x32xf32>
    %c0_25 = arith.constant 0 : index
    %c2_26 = arith.constant 2 : index
    %c1_27 = arith.constant 1 : index
    %c0_28 = arith.constant 0 : index
    %21 = vector.load %arg1[%c0_25, %c2_26, %c1_27, %c0_28] : memref<1x10x10x32xf32, #tpu.memory_space<vmem>>, vector<1x8x8x32xf32>
    %22 = vector.shape_cast %21 : vector<1x8x8x32xf32> to vector<8x8x32xf32>
    %23 = vector.shape_cast %22 : vector<8x8x32xf32> to vector<64x32xf32>
    %c0_29 = arith.constant 0 : index
    %c2_30 = arith.constant 2 : index
    %c2_31 = arith.constant 2 : index
    %c0_32 = arith.constant 0 : index
    %24 = vector.load %arg1[%c0_29, %c2_30, %c2_31, %c0_32] : memref<1x10x10x32xf32, #tpu.memory_space<vmem>>, vector<1x8x8x32xf32>
    %25 = vector.shape_cast %24 : vector<1x8x8x32xf32> to vector<8x8x32xf32>
    %26 = vector.shape_cast %25 : vector<8x8x32xf32> to vector<64x32xf32>
    %27 = tpu.concatenate %2, %5, %8, %11, %14, %17, %20, %23, %26 in 1 : vector<64x32xf32>, vector<64x32xf32>, vector<64x32xf32>, vector<64x32xf32>, vector<64x32xf32>, vector<64x32xf32>, vector<64x32xf32>, vector<64x32xf32>, vector<64x32xf32> -> vector<64x288xf32>
    %28 = arith.truncf %27 : vector<64x288xf32> to vector<64x288xbf16>
    %c0_33 = arith.constant 0 : index
    %c0_34 = arith.constant 0 : index
    %29 = vector.load %arg2[%c0_33, %c0_34] : memref<288x32xf32, #tpu.memory_space<vmem>>, vector<288x32xf32>
    %30 = arith.truncf %29 : vector<288x32xf32> to vector<288x32xbf16>
    %cst = arith.constant dense<0.000000e+00> : vector<64x32xf32>
    %31 = tpu.matmul %28, %30, %cst {dimension_numbers = #tpu.dot_dimension_numbers<[1], [0], [0], [1], [0, 0, 1, 1], [], []>} : vector<64x288xbf16>, vector<288x32xbf16>, vector<64x32xf32> -> vector<64x32xf32>
    %c0_35 = arith.constant 0 : index
    %c0_36 = arith.constant 0 : index
    %32 = vector.load %arg3[%c0_35, %c0_36] : memref<1x32xf32, #tpu.memory_space<vmem>>, vector<1x32xf32>
    %33 = vector.broadcast %32 : vector<1x32xf32> to vector<64x32xf32>
    %34 = arith.addf %31, %33 : vector<64x32xf32>
    %cst_37 = arith.constant 0.000000e+00 : f32
    %35 = vector.broadcast %cst_37 : f32 to vector<64x32xf32>
    %36 = arith.maximumf %34, %35 : vector<64x32xf32>
    %c0_38 = arith.constant 0 : index
    %c0_39 = arith.constant 0 : index
    %37 = vector.load %arg5[%c0_38, %c0_39] : memref<64x32xf32, #tpu.memory_space<vmem>>, vector<64x32xf32>
    tpu.vector_store %arg5[%c0_38, %c0_39], %36 {strides = array<i32>} : memref<64x32xf32, #tpu.memory_space<vmem>>, vector<64x32xf32>,
    %c0_40 = arith.constant 0 : index
    %c0_41 = arith.constant 0 : index
    %38 = tpu.strided_load %arg5[%c0_40, %c0_41] {strides = array<i32: 2, 1>} : memref<64x32xf32, #tpu.memory_space<vmem>>, vector<32x32xf32>
    %c1_42 = arith.constant 1 : index
    %c0_43 = arith.constant 0 : index
    %39 = tpu.strided_load %arg5[%c1_42, %c0_43] {strides = array<i32: 2, 1>} : memref<64x32xf32, #tpu.memory_space<vmem>>, vector<32x32xf32>
    %40 = arith.maximumf %38, %39 : vector<32x32xf32>
    %41 = vector.shape_cast %40 : vector<32x32xf32> to vector<4x8x32xf32>
    %42 = vector.extract_strided_slice %41 {offsets = [0, 0, 0], sizes = [4, 4, 32], strides = [1, 1, 1]} : vector<4x8x32xf32> to vector<4x4x32xf32>
    %43 = vector.extract_strided_slice %41 {offsets = [0, 4, 0], sizes = [4, 4, 32], strides = [1, 1, 1]} : vector<4x8x32xf32> to vector<4x4x32xf32>
    %44 = arith.maximumf %42, %43 : vector<4x4x32xf32>
    %c0_44 = arith.constant 0 : index
    %c0_45 = arith.constant 0 : index
    %c0_46 = arith.constant 0 : index
    %c0_47 = arith.constant 0 : index
    %45 = vector.load %arg4[%c0_44, %c0_45, %c0_46, %c0_47] : memref<1x4x4x32xf32, #tpu.memory_space<vmem>>, vector<1x4x4x32xf32>
    %46 = vector.shape_cast %45 : vector<1x4x4x32xf32> to vector<4x4x32xf32>
    %47 = vector.shape_cast %44 : vector<4x4x32xf32> to vector<1x4x4x32xf32>
    tpu.vector_store %arg4[%c0_44, %c0_45, %c0_46, %c0_47], %47 {strides = array<i32>} : memref<1x4x4x32xf32, #tpu.memory_space<vmem>>, vector<1x4x4x32xf32>,
    return
  }
  func.func @transform_0(%arg0: i32) -> (i32, i32, i32, i32) {
    %c0_i32 = arith.constant 0 : i32
    %c0_i32_0 = arith.constant 0 : i32
    %c0_i32_1 = arith.constant 0 : i32
    %c0_i32_2 = arith.constant 0 : i32
    return %arg0, %c0_i32, %c0_i32_0, %c0_i32_1 : i32, i32, i32, i32
  }
  func.func @transform_1(%arg0: i32) -> (i32, i32) {
    %c0_i32 = arith.constant 0 : i32
    %c0_i32_0 = arith.constant 0 : i32
    %c0_i32_1 = arith.constant 0 : i32
    return %c0_i32, %c0_i32_0 : i32, i32
  }
  func.func @transform_2(%arg0: i32) -> (i32, i32) {
    %c0_i32 = arith.constant 0 : i32
    %c0_i32_0 = arith.constant 0 : i32
    %c0_i32_1 = arith.constant 0 : i32
    return %c0_i32, %c0_i32_0 : i32, i32
  }
  func.func @transform_3(%arg0: i32) -> (i32, i32, i32, i32) {
    %c0_i32 = arith.constant 0 : i32
    %c0_i32_0 = arith.constant 0 : i32
    %c0_i32_1 = arith.constant 0 : i32
    %c0_i32_2 = arith.constant 0 : i32
    return %arg0, %c0_i32, %c0_i32_0, %c0_i32_1 : i32, i32, i32, i32
  }
}

module attributes {stable_mosaic.version = 11 : i64} {
  func.func @kernel(%arg0: i32, %arg1: i32, %arg2: memref<1x48x32xf32, #tpu.memory_space<vmem>>, %arg3: memref<1x48x32xf32, #tpu.memory_space<vmem>>, %arg4: memref<1x1x32xf32, #tpu.memory_space<vmem>>, %arg5: memref<1x1x32xf32, #tpu.memory_space<vmem>>, %arg6: memref<1x32x96xbf16, #tpu.memory_space<vmem>>, %arg7: memref<1x32x32xbf16, #tpu.memory_space<vmem>>, %arg8: memref<1x1x32xf32, #tpu.memory_space<vmem>>, %arg9: memref<1x1x32xf32, #tpu.memory_space<vmem>>, %arg10: memref<1x32x128xbf16, #tpu.memory_space<vmem>>, %arg11: memref<1x1x128xf32, #tpu.memory_space<vmem>>, %arg12: memref<1x128x32xbf16, #tpu.memory_space<vmem>>, %arg13: memref<1x1x32xf32, #tpu.memory_space<vmem>>, %arg14: memref<1x32xf32, #tpu.memory_space<vmem>>, %arg15: memref<1x32xf32, #tpu.memory_space<vmem>>, %arg16: memref<1x48x32xf32, #tpu.memory_space<vmem>>, %arg17: memref<48x32xf32, #tpu.memory_space<vmem>>) attributes {dimension_semantics = [#tpu.dimension_semantics<parallel>, #tpu.dimension_semantics<arbitrary>], iteration_bounds = array<i64: 2, 2>, scalar_prefetch = 0 : i64, scratch_operands = 1 : i64, tpu.core_type = #tpu.core_type<tc>, window_params = [{transform_indices = @transform_0, window_bounds = array<i64: 1, 48, 32>}, {pipeline_mode = #tpu.pipeline_mode<synchronous>, transform_indices = @transform_1, window_bounds = array<i64: 1, 48, 32>}, {transform_indices = @transform_2, window_bounds = array<i64: 1, 1, 32>}, {transform_indices = @transform_3, window_bounds = array<i64: 1, 1, 32>}, {transform_indices = @transform_4, window_bounds = array<i64: 1, 32, 96>}, {transform_indices = @transform_5, window_bounds = array<i64: 1, 32, 32>}, {transform_indices = @transform_6, window_bounds = array<i64: 1, 1, 32>}, {transform_indices = @transform_7, window_bounds = array<i64: 1, 1, 32>}, {transform_indices = @transform_8, window_bounds = array<i64: 1, 32, 128>}, {transform_indices = @transform_9, window_bounds = array<i64: 1, 1, 128>}, {transform_indices = @transform_10, window_bounds = array<i64: 1, 128, 32>}, {transform_indices = @transform_11, window_bounds = array<i64: 1, 1, 32>}, {pipeline_mode = #tpu.pipeline_mode<synchronous>, transform_indices = @transform_12, window_bounds = array<i64: 1, 32>}, {pipeline_mode = #tpu.pipeline_mode<synchronous>, transform_indices = @transform_13, window_bounds = array<i64: 1, 32>}, {transform_indices = @transform_14, window_bounds = array<i64: 1, 48, 32>}]} {
    %c0_i32 = arith.constant 0 : i32
    %0 = arith.cmpi eq, %arg1, %c0_i32 : i32
    %1 = arith.extui %0 : i1 to i32
    %c0_i32_0 = arith.constant 0 : i32
    %2 = arith.cmpi ne, %1, %c0_i32_0 : i32
    scf.if %2 {
      %c0_95 = arith.constant 0 : index
      %c0_96 = arith.constant 0 : index
      %c0_97 = arith.constant 0 : index
      %234 = vector.load %arg2[%c0_95, %c0_96, %c0_97] : memref<1x48x32xf32, #tpu.memory_space<vmem>>, vector<1x48x32xf32>
      %c0_98 = arith.constant 0 : index
      %c0_99 = arith.constant 0 : index
      %c0_100 = arith.constant 0 : index
      %235 = vector.load %arg3[%c0_98, %c0_99, %c0_100] : memref<1x48x32xf32, #tpu.memory_space<vmem>>, vector<1x48x32xf32>
      %236 = arith.addf %234, %235 : vector<1x48x32xf32>
      %237 = vector.shape_cast %236 : vector<1x48x32xf32> to vector<48x32xf32>
      %c0_101 = arith.constant 0 : index
      %c0_102 = arith.constant 0 : index
      %238 = vector.load %arg17[%c0_101, %c0_102] : memref<48x32xf32, #tpu.memory_space<vmem>>, vector<48x32xf32>
      tpu.vector_store %arg17[%c0_101, %c0_102], %237 {strides = array<i32>} : memref<48x32xf32, #tpu.memory_space<vmem>>, vector<48x32xf32>,
    } else {
    }
    %c0 = arith.constant 0 : index
    %c0_1 = arith.constant 0 : index
    %3 = vector.load %arg17[%c0, %c0_1] : memref<48x32xf32, #tpu.memory_space<vmem>>, vector<48x32xf32>
    %c0_2 = arith.constant 0 : index
    %c0_3 = arith.constant 0 : index
    %c0_4 = arith.constant 0 : index
    %4 = vector.load %arg4[%c0_2, %c0_3, %c0_4] : memref<1x1x32xf32, #tpu.memory_space<vmem>>, vector<1x1x32xf32>
    %5 = vector.shape_cast %4 : vector<1x1x32xf32> to vector<1x32xf32>
    %c0_5 = arith.constant 0 : index
    %c0_6 = arith.constant 0 : index
    %c0_7 = arith.constant 0 : index
    %6 = vector.load %arg5[%c0_5, %c0_6, %c0_7] : memref<1x1x32xf32, #tpu.memory_space<vmem>>, vector<1x1x32xf32>
    %7 = vector.shape_cast %6 : vector<1x1x32xf32> to vector<1x32xf32>
    %cst = arith.constant dense<0.000000e+00> : vector<48xf32>
    %8 = vector.multi_reduction <add>, %3, %cst [1] : vector<48x32xf32> to vector<48xf32>
    %9 = vector.shape_cast %8 : vector<48xf32> to vector<48x1xf32>
    %cst_8 = arith.constant 3.200000e+01 : f32
    %10 = vector.broadcast %cst_8 : f32 to vector<48x1xf32>
    %11 = arith.divf %9, %10 : vector<48x1xf32>
    %12 = vector.broadcast %11 : vector<48x1xf32> to vector<48x32xf32>
    %13 = arith.subf %3, %12 : vector<48x32xf32>
    %14 = arith.mulf %13, %13 : vector<48x32xf32>
    %cst_9 = arith.constant dense<0.000000e+00> : vector<48xf32>
    %15 = vector.multi_reduction <add>, %14, %cst_9 [1] : vector<48x32xf32> to vector<48xf32>
    %16 = vector.shape_cast %15 : vector<48xf32> to vector<48x1xf32>
    %cst_10 = arith.constant 3.200000e+01 : f32
    %17 = vector.broadcast %cst_10 : f32 to vector<48x1xf32>
    %18 = arith.divf %16, %17 : vector<48x1xf32>
    %cst_11 = arith.constant 9.99999997E-7 : f32
    %19 = vector.broadcast %cst_11 : f32 to vector<48x1xf32>
    %20 = arith.addf %18, %19 : vector<48x1xf32>
    %21 = math.rsqrt %20 : vector<48x1xf32>
    %22 = vector.broadcast %21 : vector<48x1xf32> to vector<48x32xf32>
    %23 = arith.mulf %13, %22 : vector<48x32xf32>
    %24 = vector.broadcast %5 : vector<1x32xf32> to vector<48x32xf32>
    %25 = arith.mulf %23, %24 : vector<48x32xf32>
    %26 = vector.broadcast %7 : vector<1x32xf32> to vector<48x32xf32>
    %27 = arith.addf %25, %26 : vector<48x32xf32>
    %28 = arith.truncf %27 : vector<48x32xf32> to vector<48x32xbf16>
    %c0_12 = arith.constant 0 : index
    %c0_13 = arith.constant 0 : index
    %c0_14 = arith.constant 0 : index
    %29 = vector.load %arg6[%c0_12, %c0_13, %c0_14] : memref<1x32x96xbf16, #tpu.memory_space<vmem>>, vector<1x32x96xbf16>
    %30 = vector.shape_cast %29 : vector<1x32x96xbf16> to vector<32x96xbf16>
    %cst_15 = arith.constant dense<0.000000e+00> : vector<48x96xf32>
    %31 = tpu.matmul %28, %30, %cst_15 {dimension_numbers = #tpu.dot_dimension_numbers<[1], [0], [0], [1], [0, 0, 1, 1], [], []>} : vector<48x32xbf16>, vector<32x96xbf16>, vector<48x96xf32> -> vector<48x96xf32>
    %32 = vector.shape_cast %31 : vector<48x96xf32> to vector<1x48x96xf32>
    %cst_16 = arith.constant 0.000000e+00 : f32
    %33 = vector.broadcast %cst_16 : f32 to vector<48x32xf32>
    %34 = vector.extract_strided_slice %32 {offsets = [0, 0, 0], sizes = [1, 48, 8], strides = [1, 1, 1]} : vector<1x48x96xf32> to vector<1x48x8xf32>
    %35 = vector.extract_strided_slice %32 {offsets = [0, 0, 32], sizes = [1, 48, 8], strides = [1, 1, 1]} : vector<1x48x96xf32> to vector<1x48x8xf32>
    %36 = vector.extract_strided_slice %32 {offsets = [0, 0, 64], sizes = [1, 48, 8], strides = [1, 1, 1]} : vector<1x48x96xf32> to vector<1x48x8xf32>
    %37 = arith.truncf %34 : vector<1x48x8xf32> to vector<1x48x8xbf16>
    %38 = arith.truncf %35 : vector<1x48x8xf32> to vector<1x48x8xbf16>
    "tpu.trace_start"() <{level = 10 : i32, message = "bqd,bkd->bqk"}> : () -> ()
    %cst_17 = arith.constant dense<0.000000e+00> : vector<1x48x48xf32>
    %39 = tpu.matmul %37, %38, %cst_17 {dimension_numbers = #tpu.dot_dimension_numbers<[2], [2], [1], [1], [0, 0, 0, 1, 1, 1], [0], [0]>} : vector<1x48x8xbf16>, vector<1x48x8xbf16>, vector<1x48x48xf32> -> vector<1x48x48xf32>
    "tpu.trace_stop"() : () -> ()
    %cst_18 = arith.constant 0.353553385 : f32
    %40 = vector.broadcast %cst_18 : f32 to vector<1x48x48xf32>
    %41 = arith.mulf %39, %40 : vector<1x48x48xf32>
    %cst_19 = arith.constant dense<0xFF800000> : vector<1x48xf32>
    %42 = vector.multi_reduction <maximumf>, %41, %cst_19 [2] : vector<1x48x48xf32> to vector<1x48xf32>
    %43 = vector.shape_cast %42 : vector<1x48xf32> to vector<1x48x1xf32>
    %44 = vector.broadcast %43 : vector<1x48x1xf32> to vector<1x48x48xf32>
    %45 = arith.subf %41, %44 : vector<1x48x48xf32>
    %46 = math.exp %45 : vector<1x48x48xf32>
    %cst_20 = arith.constant dense<0.000000e+00> : vector<1x48xf32>
    %47 = vector.multi_reduction <add>, %46, %cst_20 [2] : vector<1x48x48xf32> to vector<1x48xf32>
    %48 = vector.shape_cast %47 : vector<1x48xf32> to vector<1x48x1xf32>
    %49 = tpu.reciprocal %48 {approx = true} : vector<1x48x1xf32> -> vector<1x48x1xf32>
    %50 = vector.broadcast %49 : vector<1x48x1xf32> to vector<1x48x48xf32>
    %51 = arith.mulf %46, %50 : vector<1x48x48xf32>
    %52 = arith.truncf %51 : vector<1x48x48xf32> to vector<1x48x48xbf16>
    %53 = arith.truncf %36 : vector<1x48x8xf32> to vector<1x48x8xbf16>
    "tpu.trace_start"() <{level = 10 : i32, message = "bqk,bkd->bqd"}> : () -> ()
    %cst_21 = arith.constant dense<0.000000e+00> : vector<1x48x8xf32>
    %54 = tpu.matmul %52, %53, %cst_21 {dimension_numbers = #tpu.dot_dimension_numbers<[2], [1], [1], [2], [0, 0, 0, 1, 1, 2], [0], [0]>} : vector<1x48x48xbf16>, vector<1x48x8xbf16>, vector<1x48x8xf32> -> vector<1x48x8xf32>
    "tpu.trace_stop"() : () -> ()
    %55 = vector.shape_cast %54 : vector<1x48x8xf32> to vector<48x8xf32>
    %56 = arith.truncf %55 : vector<48x8xf32> to vector<48x8xbf16>
    %c0_22 = arith.constant 0 : index
    %c0_23 = arith.constant 0 : index
    %c0_24 = arith.constant 0 : index
    %57 = vector.load %arg7[%c0_22, %c0_23, %c0_24] : memref<1x32x32xbf16, #tpu.memory_space<vmem>>, vector<1x8x32xbf16>
    %58 = vector.shape_cast %57 : vector<1x8x32xbf16> to vector<8x32xbf16>
    %cst_25 = arith.constant dense<0.000000e+00> : vector<48x32xf32>
    %59 = tpu.matmul %56, %58, %cst_25 {dimension_numbers = #tpu.dot_dimension_numbers<[1], [0], [0], [1], [0, 0, 1, 1], [], []>} : vector<48x8xbf16>, vector<8x32xbf16>, vector<48x32xf32> -> vector<48x32xf32>
    %60 = arith.addf %33, %59 : vector<48x32xf32>
    %61 = vector.extract_strided_slice %32 {offsets = [0, 0, 8], sizes = [1, 48, 8], strides = [1, 1, 1]} : vector<1x48x96xf32> to vector<1x48x8xf32>
    %62 = vector.extract_strided_slice %32 {offsets = [0, 0, 40], sizes = [1, 48, 8], strides = [1, 1, 1]} : vector<1x48x96xf32> to vector<1x48x8xf32>
    %63 = vector.extract_strided_slice %32 {offsets = [0, 0, 72], sizes = [1, 48, 8], strides = [1, 1, 1]} : vector<1x48x96xf32> to vector<1x48x8xf32>
    %64 = arith.truncf %61 : vector<1x48x8xf32> to vector<1x48x8xbf16>
    %65 = arith.truncf %62 : vector<1x48x8xf32> to vector<1x48x8xbf16>
    "tpu.trace_start"() <{level = 10 : i32, message = "bqd,bkd->bqk"}> : () -> ()
    %cst_26 = arith.constant dense<0.000000e+00> : vector<1x48x48xf32>
    %66 = tpu.matmul %64, %65, %cst_26 {dimension_numbers = #tpu.dot_dimension_numbers<[2], [2], [1], [1], [0, 0, 0, 1, 1, 1], [0], [0]>} : vector<1x48x8xbf16>, vector<1x48x8xbf16>, vector<1x48x48xf32> -> vector<1x48x48xf32>
    "tpu.trace_stop"() : () -> ()
    %cst_27 = arith.constant 0.353553385 : f32
    %67 = vector.broadcast %cst_27 : f32 to vector<1x48x48xf32>
    %68 = arith.mulf %66, %67 : vector<1x48x48xf32>
    %cst_28 = arith.constant dense<0xFF800000> : vector<1x48xf32>
    %69 = vector.multi_reduction <maximumf>, %68, %cst_28 [2] : vector<1x48x48xf32> to vector<1x48xf32>
    %70 = vector.shape_cast %69 : vector<1x48xf32> to vector<1x48x1xf32>
    %71 = vector.broadcast %70 : vector<1x48x1xf32> to vector<1x48x48xf32>
    %72 = arith.subf %68, %71 : vector<1x48x48xf32>
    %73 = math.exp %72 : vector<1x48x48xf32>
    %cst_29 = arith.constant dense<0.000000e+00> : vector<1x48xf32>
    %74 = vector.multi_reduction <add>, %73, %cst_29 [2] : vector<1x48x48xf32> to vector<1x48xf32>
    %75 = vector.shape_cast %74 : vector<1x48xf32> to vector<1x48x1xf32>
    %76 = tpu.reciprocal %75 {approx = true} : vector<1x48x1xf32> -> vector<1x48x1xf32>
    %77 = vector.broadcast %76 : vector<1x48x1xf32> to vector<1x48x48xf32>
    %78 = arith.mulf %73, %77 : vector<1x48x48xf32>
    %79 = arith.truncf %78 : vector<1x48x48xf32> to vector<1x48x48xbf16>
    %80 = arith.truncf %63 : vector<1x48x8xf32> to vector<1x48x8xbf16>
    "tpu.trace_start"() <{level = 10 : i32, message = "bqk,bkd->bqd"}> : () -> ()
    %cst_30 = arith.constant dense<0.000000e+00> : vector<1x48x8xf32>
    %81 = tpu.matmul %79, %80, %cst_30 {dimension_numbers = #tpu.dot_dimension_numbers<[2], [1], [1], [2], [0, 0, 0, 1, 1, 2], [0], [0]>} : vector<1x48x48xbf16>, vector<1x48x8xbf16>, vector<1x48x8xf32> -> vector<1x48x8xf32>
    "tpu.trace_stop"() : () -> ()
    %82 = vector.shape_cast %81 : vector<1x48x8xf32> to vector<48x8xf32>
    %83 = arith.truncf %82 : vector<48x8xf32> to vector<48x8xbf16>
    %c0_31 = arith.constant 0 : index
    %c8 = arith.constant 8 : index
    %c0_32 = arith.constant 0 : index
    %84 = vector.load %arg7[%c0_31, %c8, %c0_32] : memref<1x32x32xbf16, #tpu.memory_space<vmem>>, vector<1x8x32xbf16>
    %85 = vector.shape_cast %84 : vector<1x8x32xbf16> to vector<8x32xbf16>
    %cst_33 = arith.constant dense<0.000000e+00> : vector<48x32xf32>
    %86 = tpu.matmul %83, %85, %cst_33 {dimension_numbers = #tpu.dot_dimension_numbers<[1], [0], [0], [1], [0, 0, 1, 1], [], []>} : vector<48x8xbf16>, vector<8x32xbf16>, vector<48x32xf32> -> vector<48x32xf32>
    %87 = arith.addf %60, %86 : vector<48x32xf32>
    %88 = vector.extract_strided_slice %32 {offsets = [0, 0, 16], sizes = [1, 48, 8], strides = [1, 1, 1]} : vector<1x48x96xf32> to vector<1x48x8xf32>
    %89 = vector.extract_strided_slice %32 {offsets = [0, 0, 48], sizes = [1, 48, 8], strides = [1, 1, 1]} : vector<1x48x96xf32> to vector<1x48x8xf32>
    %90 = vector.extract_strided_slice %32 {offsets = [0, 0, 80], sizes = [1, 48, 8], strides = [1, 1, 1]} : vector<1x48x96xf32> to vector<1x48x8xf32>
    %91 = arith.truncf %88 : vector<1x48x8xf32> to vector<1x48x8xbf16>
    %92 = arith.truncf %89 : vector<1x48x8xf32> to vector<1x48x8xbf16>
    "tpu.trace_start"() <{level = 10 : i32, message = "bqd,bkd->bqk"}> : () -> ()
    %cst_34 = arith.constant dense<0.000000e+00> : vector<1x48x48xf32>
    %93 = tpu.matmul %91, %92, %cst_34 {dimension_numbers = #tpu.dot_dimension_numbers<[2], [2], [1], [1], [0, 0, 0, 1, 1, 1], [0], [0]>} : vector<1x48x8xbf16>, vector<1x48x8xbf16>, vector<1x48x48xf32> -> vector<1x48x48xf32>
    "tpu.trace_stop"() : () -> ()
    %cst_35 = arith.constant 0.353553385 : f32
    %94 = vector.broadcast %cst_35 : f32 to vector<1x48x48xf32>
    %95 = arith.mulf %93, %94 : vector<1x48x48xf32>
    %cst_36 = arith.constant dense<0xFF800000> : vector<1x48xf32>
    %96 = vector.multi_reduction <maximumf>, %95, %cst_36 [2] : vector<1x48x48xf32> to vector<1x48xf32>
    %97 = vector.shape_cast %96 : vector<1x48xf32> to vector<1x48x1xf32>
    %98 = vector.broadcast %97 : vector<1x48x1xf32> to vector<1x48x48xf32>
    %99 = arith.subf %95, %98 : vector<1x48x48xf32>
    %100 = math.exp %99 : vector<1x48x48xf32>
    %cst_37 = arith.constant dense<0.000000e+00> : vector<1x48xf32>
    %101 = vector.multi_reduction <add>, %100, %cst_37 [2] : vector<1x48x48xf32> to vector<1x48xf32>
    %102 = vector.shape_cast %101 : vector<1x48xf32> to vector<1x48x1xf32>
    %103 = tpu.reciprocal %102 {approx = true} : vector<1x48x1xf32> -> vector<1x48x1xf32>
    %104 = vector.broadcast %103 : vector<1x48x1xf32> to vector<1x48x48xf32>
    %105 = arith.mulf %100, %104 : vector<1x48x48xf32>
    %106 = arith.truncf %105 : vector<1x48x48xf32> to vector<1x48x48xbf16>
    %107 = arith.truncf %90 : vector<1x48x8xf32> to vector<1x48x8xbf16>
    "tpu.trace_start"() <{level = 10 : i32, message = "bqk,bkd->bqd"}> : () -> ()
    %cst_38 = arith.constant dense<0.000000e+00> : vector<1x48x8xf32>
    %108 = tpu.matmul %106, %107, %cst_38 {dimension_numbers = #tpu.dot_dimension_numbers<[2], [1], [1], [2], [0, 0, 0, 1, 1, 2], [0], [0]>} : vector<1x48x48xbf16>, vector<1x48x8xbf16>, vector<1x48x8xf32> -> vector<1x48x8xf32>
    "tpu.trace_stop"() : () -> ()
    %109 = vector.shape_cast %108 : vector<1x48x8xf32> to vector<48x8xf32>
    %110 = arith.truncf %109 : vector<48x8xf32> to vector<48x8xbf16>
    %c0_39 = arith.constant 0 : index
    %c16 = arith.constant 16 : index
    %c0_40 = arith.constant 0 : index
    %111 = vector.load %arg7[%c0_39, %c16, %c0_40] : memref<1x32x32xbf16, #tpu.memory_space<vmem>>, vector<1x8x32xbf16>
    %112 = vector.shape_cast %111 : vector<1x8x32xbf16> to vector<8x32xbf16>
    %cst_41 = arith.constant dense<0.000000e+00> : vector<48x32xf32>
    %113 = tpu.matmul %110, %112, %cst_41 {dimension_numbers = #tpu.dot_dimension_numbers<[1], [0], [0], [1], [0, 0, 1, 1], [], []>} : vector<48x8xbf16>, vector<8x32xbf16>, vector<48x32xf32> -> vector<48x32xf32>
    %114 = arith.addf %87, %113 : vector<48x32xf32>
    %115 = vector.extract_strided_slice %32 {offsets = [0, 0, 24], sizes = [1, 48, 8], strides = [1, 1, 1]} : vector<1x48x96xf32> to vector<1x48x8xf32>
    %116 = vector.extract_strided_slice %32 {offsets = [0, 0, 56], sizes = [1, 48, 8], strides = [1, 1, 1]} : vector<1x48x96xf32> to vector<1x48x8xf32>
    %117 = vector.extract_strided_slice %32 {offsets = [0, 0, 88], sizes = [1, 48, 8], strides = [1, 1, 1]} : vector<1x48x96xf32> to vector<1x48x8xf32>
    %118 = arith.truncf %115 : vector<1x48x8xf32> to vector<1x48x8xbf16>
    %119 = arith.truncf %116 : vector<1x48x8xf32> to vector<1x48x8xbf16>
    "tpu.trace_start"() <{level = 10 : i32, message = "bqd,bkd->bqk"}> : () -> ()
    %cst_42 = arith.constant dense<0.000000e+00> : vector<1x48x48xf32>
    %120 = tpu.matmul %118, %119, %cst_42 {dimension_numbers = #tpu.dot_dimension_numbers<[2], [2], [1], [1], [0, 0, 0, 1, 1, 1], [0], [0]>} : vector<1x48x8xbf16>, vector<1x48x8xbf16>, vector<1x48x48xf32> -> vector<1x48x48xf32>
    "tpu.trace_stop"() : () -> ()
    %cst_43 = arith.constant 0.353553385 : f32
    %121 = vector.broadcast %cst_43 : f32 to vector<1x48x48xf32>
    %122 = arith.mulf %120, %121 : vector<1x48x48xf32>
    %cst_44 = arith.constant dense<0xFF800000> : vector<1x48xf32>
    %123 = vector.multi_reduction <maximumf>, %122, %cst_44 [2] : vector<1x48x48xf32> to vector<1x48xf32>
    %124 = vector.shape_cast %123 : vector<1x48xf32> to vector<1x48x1xf32>
    %125 = vector.broadcast %124 : vector<1x48x1xf32> to vector<1x48x48xf32>
    %126 = arith.subf %122, %125 : vector<1x48x48xf32>
    %127 = math.exp %126 : vector<1x48x48xf32>
    %cst_45 = arith.constant dense<0.000000e+00> : vector<1x48xf32>
    %128 = vector.multi_reduction <add>, %127, %cst_45 [2] : vector<1x48x48xf32> to vector<1x48xf32>
    %129 = vector.shape_cast %128 : vector<1x48xf32> to vector<1x48x1xf32>
    %130 = tpu.reciprocal %129 {approx = true} : vector<1x48x1xf32> -> vector<1x48x1xf32>
    %131 = vector.broadcast %130 : vector<1x48x1xf32> to vector<1x48x48xf32>
    %132 = arith.mulf %127, %131 : vector<1x48x48xf32>
    %133 = arith.truncf %132 : vector<1x48x48xf32> to vector<1x48x48xbf16>
    %134 = arith.truncf %117 : vector<1x48x8xf32> to vector<1x48x8xbf16>
    "tpu.trace_start"() <{level = 10 : i32, message = "bqk,bkd->bqd"}> : () -> ()
    %cst_46 = arith.constant dense<0.000000e+00> : vector<1x48x8xf32>
    %135 = tpu.matmul %133, %134, %cst_46 {dimension_numbers = #tpu.dot_dimension_numbers<[2], [1], [1], [2], [0, 0, 0, 1, 1, 2], [0], [0]>} : vector<1x48x48xbf16>, vector<1x48x8xbf16>, vector<1x48x8xf32> -> vector<1x48x8xf32>
    "tpu.trace_stop"() : () -> ()
    %136 = vector.shape_cast %135 : vector<1x48x8xf32> to vector<48x8xf32>
    %137 = arith.truncf %136 : vector<48x8xf32> to vector<48x8xbf16>
    %c0_47 = arith.constant 0 : index
    %c24 = arith.constant 24 : index
    %c0_48 = arith.constant 0 : index
    %138 = vector.load %arg7[%c0_47, %c24, %c0_48] : memref<1x32x32xbf16, #tpu.memory_space<vmem>>, vector<1x8x32xbf16>
    %139 = vector.shape_cast %138 : vector<1x8x32xbf16> to vector<8x32xbf16>
    %cst_49 = arith.constant dense<0.000000e+00> : vector<48x32xf32>
    %140 = tpu.matmul %137, %139, %cst_49 {dimension_numbers = #tpu.dot_dimension_numbers<[1], [0], [0], [1], [0, 0, 1, 1], [], []>} : vector<48x8xbf16>, vector<8x32xbf16>, vector<48x32xf32> -> vector<48x32xf32>
    %141 = arith.addf %114, %140 : vector<48x32xf32>
    %142 = arith.addf %3, %141 : vector<48x32xf32>
    %c0_50 = arith.constant 0 : index
    %c0_51 = arith.constant 0 : index
    %c0_52 = arith.constant 0 : index
    %143 = vector.load %arg8[%c0_50, %c0_51, %c0_52] : memref<1x1x32xf32, #tpu.memory_space<vmem>>, vector<1x1x32xf32>
    %144 = vector.shape_cast %143 : vector<1x1x32xf32> to vector<1x32xf32>
    %c0_53 = arith.constant 0 : index
    %c0_54 = arith.constant 0 : index
    %c0_55 = arith.constant 0 : index
    %145 = vector.load %arg9[%c0_53, %c0_54, %c0_55] : memref<1x1x32xf32, #tpu.memory_space<vmem>>, vector<1x1x32xf32>
    %146 = vector.shape_cast %145 : vector<1x1x32xf32> to vector<1x32xf32>
    %cst_56 = arith.constant dense<0.000000e+00> : vector<48xf32>
    %147 = vector.multi_reduction <add>, %142, %cst_56 [1] : vector<48x32xf32> to vector<48xf32>
    %148 = vector.shape_cast %147 : vector<48xf32> to vector<48x1xf32>
    %cst_57 = arith.constant 3.200000e+01 : f32
    %149 = vector.broadcast %cst_57 : f32 to vector<48x1xf32>
    %150 = arith.divf %148, %149 : vector<48x1xf32>
    %151 = vector.broadcast %150 : vector<48x1xf32> to vector<48x32xf32>
    %152 = arith.subf %142, %151 : vector<48x32xf32>
    %153 = arith.mulf %152, %152 : vector<48x32xf32>
    %cst_58 = arith.constant dense<0.000000e+00> : vector<48xf32>
    %154 = vector.multi_reduction <add>, %153, %cst_58 [1] : vector<48x32xf32> to vector<48xf32>
    %155 = vector.shape_cast %154 : vector<48xf32> to vector<48x1xf32>
    %cst_59 = arith.constant 3.200000e+01 : f32
    %156 = vector.broadcast %cst_59 : f32 to vector<48x1xf32>
    %157 = arith.divf %155, %156 : vector<48x1xf32>
    %cst_60 = arith.constant 9.99999997E-7 : f32
    %158 = vector.broadcast %cst_60 : f32 to vector<48x1xf32>
    %159 = arith.addf %157, %158 : vector<48x1xf32>
    %160 = math.rsqrt %159 : vector<48x1xf32>
    %161 = vector.broadcast %160 : vector<48x1xf32> to vector<48x32xf32>
    %162 = arith.mulf %152, %161 : vector<48x32xf32>
    %163 = vector.broadcast %144 : vector<1x32xf32> to vector<48x32xf32>
    %164 = arith.mulf %162, %163 : vector<48x32xf32>
    %165 = vector.broadcast %146 : vector<1x32xf32> to vector<48x32xf32>
    %166 = arith.addf %164, %165 : vector<48x32xf32>
    %167 = arith.truncf %166 : vector<48x32xf32> to vector<48x32xbf16>
    %c0_61 = arith.constant 0 : index
    %c0_62 = arith.constant 0 : index
    %c0_63 = arith.constant 0 : index
    %168 = vector.load %arg10[%c0_61, %c0_62, %c0_63] : memref<1x32x128xbf16, #tpu.memory_space<vmem>>, vector<1x32x128xbf16>
    %169 = vector.shape_cast %168 : vector<1x32x128xbf16> to vector<32x128xbf16>
    %cst_64 = arith.constant dense<0.000000e+00> : vector<48x128xf32>
    %170 = tpu.matmul %167, %169, %cst_64 {dimension_numbers = #tpu.dot_dimension_numbers<[1], [0], [0], [1], [0, 0, 1, 1], [], []>} : vector<48x32xbf16>, vector<32x128xbf16>, vector<48x128xf32> -> vector<48x128xf32>
    %c0_65 = arith.constant 0 : index
    %c0_66 = arith.constant 0 : index
    %c0_67 = arith.constant 0 : index
    %171 = vector.load %arg11[%c0_65, %c0_66, %c0_67] : memref<1x1x128xf32, #tpu.memory_space<vmem>>, vector<1x1x128xf32>
    %172 = vector.shape_cast %171 : vector<1x1x128xf32> to vector<1x128xf32>
    %173 = vector.broadcast %172 : vector<1x128xf32> to vector<48x128xf32>
    %174 = arith.addf %170, %173 : vector<48x128xf32>
    %cst_68 = arith.constant 5.000000e-01 : f32
    %175 = vector.broadcast %cst_68 : f32 to vector<48x128xf32>
    %176 = arith.mulf %175, %174 : vector<48x128xf32>
    %cst_69 = arith.constant 0.707106769 : f32
    %177 = vector.broadcast %cst_69 : f32 to vector<48x128xf32>
    %178 = arith.mulf %174, %177 : vector<48x128xf32>
    %cst_70 = arith.constant -4.000000e+00 : f32
    %cst_71 = arith.constant 4.000000e+00 : f32
    %179 = vector.broadcast %cst_70 : f32 to vector<48x128xf32>
    %180 = arith.maximumf %179, %178 : vector<48x128xf32>
    %181 = vector.broadcast %cst_71 : f32 to vector<48x128xf32>
    %182 = arith.minimumf %181, %180 : vector<48x128xf32>
    %183 = arith.mulf %182, %182 : vector<48x128xf32>
    %cst_72 = arith.constant -2.72614237E-10 : f32
    %184 = vector.broadcast %cst_72 : f32 to vector<48x128xf32>
    %185 = arith.mulf %184, %183 : vector<48x128xf32>
    %cst_73 = arith.constant 2.77068146E-8 : f32
    %186 = vector.broadcast %cst_73 : f32 to vector<48x128xf32>
    %187 = arith.addf %185, %186 : vector<48x128xf32>
    %188 = arith.mulf %187, %183 : vector<48x128xf32>
    %cst_74 = arith.constant -2.10102394E-6 : f32
    %189 = vector.broadcast %cst_74 : f32 to vector<48x128xf32>
    %190 = arith.addf %188, %189 : vector<48x128xf32>
    %191 = arith.mulf %190, %183 : vector<48x128xf32>
    %cst_75 = arith.constant -5.69250624E-5 : f32
    %192 = vector.broadcast %cst_75 : f32 to vector<48x128xf32>
    %193 = arith.addf %191, %192 : vector<48x128xf32>
    %194 = arith.mulf %193, %183 : vector<48x128xf32>
    %cst_76 = arith.constant -7.34990637E-4 : f32
    %195 = vector.broadcast %cst_76 : f32 to vector<48x128xf32>
    %196 = arith.addf %194, %195 : vector<48x128xf32>
    %197 = arith.mulf %196, %183 : vector<48x128xf32>
    %cst_77 = arith.constant -2.954600e-03 : f32
    %198 = vector.broadcast %cst_77 : f32 to vector<48x128xf32>
    %199 = arith.addf %197, %198 : vector<48x128xf32>
    %200 = arith.mulf %199, %183 : vector<48x128xf32>
    %cst_78 = arith.constant -0.0160960332 : f32
    %201 = vector.broadcast %cst_78 : f32 to vector<48x128xf32>
    %202 = arith.addf %200, %201 : vector<48x128xf32>
    %cst_79 = arith.constant -1.45660715E-5 : f32
    %203 = vector.broadcast %cst_79 : f32 to vector<48x128xf32>
    %204 = arith.mulf %203, %183 : vector<48x128xf32>
    %cst_80 = arith.constant -2.13374049E-4 : f32
    %205 = vector.broadcast %cst_80 : f32 to vector<48x128xf32>
    %206 = arith.addf %204, %205 : vector<48x128xf32>
    %207 = arith.mulf %206, %183 : vector<48x128xf32>
    %cst_81 = arith.constant -0.00168282702 : f32
    %208 = vector.broadcast %cst_81 : f32 to vector<48x128xf32>
    %209 = arith.addf %207, %208 : vector<48x128xf32>
    %210 = arith.mulf %209, %183 : vector<48x128xf32>
    %cst_82 = arith.constant -0.00737332925 : f32
    %211 = vector.broadcast %cst_82 : f32 to vector<48x128xf32>
    %212 = arith.addf %210, %211 : vector<48x128xf32>
    %213 = arith.mulf %212, %183 : vector<48x128xf32>
    %cst_83 = arith.constant -0.0142647391 : f32
    %214 = vector.broadcast %cst_83 : f32 to vector<48x128xf32>
    %215 = arith.addf %213, %214 : vector<48x128xf32>
    %216 = arith.mulf %182, %202 : vector<48x128xf32>
    %217 = arith.divf %216, %215 : vector<48x128xf32>
    %cst_84 = arith.constant 1.000000e+00 : f32
    %218 = vector.broadcast %cst_84 : f32 to vector<48x128xf32>
    %219 = arith.addf %218, %217 : vector<48x128xf32>
    %220 = arith.mulf %176, %219 : vector<48x128xf32>
    %221 = arith.truncf %220 : vector<48x128xf32> to vector<48x128xbf16>
    %c0_85 = arith.constant 0 : index
    %c0_86 = arith.constant 0 : index
    %c0_87 = arith.constant 0 : index
    %222 = vector.load %arg12[%c0_85, %c0_86, %c0_87] : memref<1x128x32xbf16, #tpu.memory_space<vmem>>, vector<1x128x32xbf16>
    %223 = vector.shape_cast %222 : vector<1x128x32xbf16> to vector<128x32xbf16>
    %cst_88 = arith.constant dense<0.000000e+00> : vector<48x32xf32>
    %224 = tpu.matmul %221, %223, %cst_88 {dimension_numbers = #tpu.dot_dimension_numbers<[1], [0], [0], [1], [0, 0, 1, 1], [], []>} : vector<48x128xbf16>, vector<128x32xbf16>, vector<48x32xf32> -> vector<48x32xf32>
    %225 = arith.addf %142, %224 : vector<48x32xf32>
    %c0_89 = arith.constant 0 : index
    %c0_90 = arith.constant 0 : index
    %c0_91 = arith.constant 0 : index
    %226 = vector.load %arg13[%c0_89, %c0_90, %c0_91] : memref<1x1x32xf32, #tpu.memory_space<vmem>>, vector<1x1x32xf32>
    %227 = vector.shape_cast %226 : vector<1x1x32xf32> to vector<1x32xf32>
    %228 = vector.broadcast %227 : vector<1x32xf32> to vector<48x32xf32>
    %229 = arith.addf %225, %228 : vector<48x32xf32>
    %c0_92 = arith.constant 0 : index
    %c0_93 = arith.constant 0 : index
    %230 = vector.load %arg17[%c0_92, %c0_93] : memref<48x32xf32, #tpu.memory_space<vmem>>, vector<48x32xf32>
    tpu.vector_store %arg17[%c0_92, %c0_93], %229 {strides = array<i32>} : memref<48x32xf32, #tpu.memory_space<vmem>>, vector<48x32xf32>,
    %c1_i32 = arith.constant 1 : i32
    %231 = arith.cmpi eq, %arg1, %c1_i32 : i32
    %232 = arith.extui %231 : i1 to i32
    %c0_i32_94 = arith.constant 0 : i32
    %233 = arith.cmpi ne, %232, %c0_i32_94 : i32
    scf.if %233 {
      %c0_95 = arith.constant 0 : index
      %c0_96 = arith.constant 0 : index
      %234 = vector.load %arg14[%c0_95, %c0_96] : memref<1x32xf32, #tpu.memory_space<vmem>>, vector<1x32xf32>
      %c0_97 = arith.constant 0 : index
      %c0_98 = arith.constant 0 : index
      %235 = vector.load %arg15[%c0_97, %c0_98] : memref<1x32xf32, #tpu.memory_space<vmem>>, vector<1x32xf32>
      %cst_99 = arith.constant dense<0.000000e+00> : vector<48xf32>
      %236 = vector.multi_reduction <add>, %229, %cst_99 [1] : vector<48x32xf32> to vector<48xf32>
      %237 = vector.shape_cast %236 : vector<48xf32> to vector<48x1xf32>
      %cst_100 = arith.constant 3.200000e+01 : f32
      %238 = vector.broadcast %cst_100 : f32 to vector<48x1xf32>
      %239 = arith.divf %237, %238 : vector<48x1xf32>
      %240 = vector.broadcast %239 : vector<48x1xf32> to vector<48x32xf32>
      %241 = arith.subf %229, %240 : vector<48x32xf32>
      %242 = arith.mulf %241, %241 : vector<48x32xf32>
      %cst_101 = arith.constant dense<0.000000e+00> : vector<48xf32>
      %243 = vector.multi_reduction <add>, %242, %cst_101 [1] : vector<48x32xf32> to vector<48xf32>
      %244 = vector.shape_cast %243 : vector<48xf32> to vector<48x1xf32>
      %cst_102 = arith.constant 3.200000e+01 : f32
      %245 = vector.broadcast %cst_102 : f32 to vector<48x1xf32>
      %246 = arith.divf %244, %245 : vector<48x1xf32>
      %cst_103 = arith.constant 9.99999997E-7 : f32
      %247 = vector.broadcast %cst_103 : f32 to vector<48x1xf32>
      %248 = arith.addf %246, %247 : vector<48x1xf32>
      %249 = math.rsqrt %248 : vector<48x1xf32>
      %250 = vector.broadcast %249 : vector<48x1xf32> to vector<48x32xf32>
      %251 = arith.mulf %241, %250 : vector<48x32xf32>
      %252 = vector.broadcast %234 : vector<1x32xf32> to vector<48x32xf32>
      %253 = arith.mulf %251, %252 : vector<48x32xf32>
      %254 = vector.broadcast %235 : vector<1x32xf32> to vector<48x32xf32>
      %255 = arith.addf %253, %254 : vector<48x32xf32>
      %256 = vector.shape_cast %255 : vector<48x32xf32> to vector<1x48x32xf32>
      %c0_104 = arith.constant 0 : index
      %c0_105 = arith.constant 0 : index
      %c0_106 = arith.constant 0 : index
      %257 = vector.load %arg16[%c0_104, %c0_105, %c0_106] : memref<1x48x32xf32, #tpu.memory_space<vmem>>, vector<1x48x32xf32>
      tpu.vector_store %arg16[%c0_104, %c0_105, %c0_106], %256 {strides = array<i32>} : memref<1x48x32xf32, #tpu.memory_space<vmem>>, vector<1x48x32xf32>,
    } else {
    }
    return
  }
  func.func @transform_0(%arg0: i32, %arg1: i32) -> (i32, i32, i32) {
    %c0_i32 = arith.constant 0 : i32
    %c0_i32_0 = arith.constant 0 : i32
    %c0_i32_1 = arith.constant 0 : i32
    return %arg0, %c0_i32, %c0_i32_0 : i32, i32, i32
  }
  func.func @transform_1(%arg0: i32, %arg1: i32) -> (i32, i32, i32) {
    %c0_i32 = arith.constant 0 : i32
    %c0_i32_0 = arith.constant 0 : i32
    %c0_i32_1 = arith.constant 0 : i32
    %c0_i32_2 = arith.constant 0 : i32
    return %c0_i32, %c0_i32_0, %c0_i32_1 : i32, i32, i32
  }
  func.func @transform_2(%arg0: i32, %arg1: i32) -> (i32, i32, i32) {
    %c0_i32 = arith.constant 0 : i32
    %c0_i32_0 = arith.constant 0 : i32
    %c0_i32_1 = arith.constant 0 : i32
    return %arg1, %c0_i32, %c0_i32_0 : i32, i32, i32
  }
  func.func @transform_3(%arg0: i32, %arg1: i32) -> (i32, i32, i32) {
    %c0_i32 = arith.constant 0 : i32
    %c0_i32_0 = arith.constant 0 : i32
    %c0_i32_1 = arith.constant 0 : i32
    return %arg1, %c0_i32, %c0_i32_0 : i32, i32, i32
  }
  func.func @transform_4(%arg0: i32, %arg1: i32) -> (i32, i32, i32) {
    %c0_i32 = arith.constant 0 : i32
    %c0_i32_0 = arith.constant 0 : i32
    %c0_i32_1 = arith.constant 0 : i32
    return %arg1, %c0_i32, %c0_i32_0 : i32, i32, i32
  }
  func.func @transform_5(%arg0: i32, %arg1: i32) -> (i32, i32, i32) {
    %c0_i32 = arith.constant 0 : i32
    %c0_i32_0 = arith.constant 0 : i32
    %c0_i32_1 = arith.constant 0 : i32
    return %arg1, %c0_i32, %c0_i32_0 : i32, i32, i32
  }
  func.func @transform_6(%arg0: i32, %arg1: i32) -> (i32, i32, i32) {
    %c0_i32 = arith.constant 0 : i32
    %c0_i32_0 = arith.constant 0 : i32
    %c0_i32_1 = arith.constant 0 : i32
    return %arg1, %c0_i32, %c0_i32_0 : i32, i32, i32
  }
  func.func @transform_7(%arg0: i32, %arg1: i32) -> (i32, i32, i32) {
    %c0_i32 = arith.constant 0 : i32
    %c0_i32_0 = arith.constant 0 : i32
    %c0_i32_1 = arith.constant 0 : i32
    return %arg1, %c0_i32, %c0_i32_0 : i32, i32, i32
  }
  func.func @transform_8(%arg0: i32, %arg1: i32) -> (i32, i32, i32) {
    %c0_i32 = arith.constant 0 : i32
    %c0_i32_0 = arith.constant 0 : i32
    %c0_i32_1 = arith.constant 0 : i32
    return %arg1, %c0_i32, %c0_i32_0 : i32, i32, i32
  }
  func.func @transform_9(%arg0: i32, %arg1: i32) -> (i32, i32, i32) {
    %c0_i32 = arith.constant 0 : i32
    %c0_i32_0 = arith.constant 0 : i32
    %c0_i32_1 = arith.constant 0 : i32
    return %arg1, %c0_i32, %c0_i32_0 : i32, i32, i32
  }
  func.func @transform_10(%arg0: i32, %arg1: i32) -> (i32, i32, i32) {
    %c0_i32 = arith.constant 0 : i32
    %c0_i32_0 = arith.constant 0 : i32
    %c0_i32_1 = arith.constant 0 : i32
    return %arg1, %c0_i32, %c0_i32_0 : i32, i32, i32
  }
  func.func @transform_11(%arg0: i32, %arg1: i32) -> (i32, i32, i32) {
    %c0_i32 = arith.constant 0 : i32
    %c0_i32_0 = arith.constant 0 : i32
    %c0_i32_1 = arith.constant 0 : i32
    return %arg1, %c0_i32, %c0_i32_0 : i32, i32, i32
  }
  func.func @transform_12(%arg0: i32, %arg1: i32) -> (i32, i32) {
    %c0_i32 = arith.constant 0 : i32
    %c0_i32_0 = arith.constant 0 : i32
    %c0_i32_1 = arith.constant 0 : i32
    return %c0_i32, %c0_i32_0 : i32, i32
  }
  func.func @transform_13(%arg0: i32, %arg1: i32) -> (i32, i32) {
    %c0_i32 = arith.constant 0 : i32
    %c0_i32_0 = arith.constant 0 : i32
    %c0_i32_1 = arith.constant 0 : i32
    return %c0_i32, %c0_i32_0 : i32, i32
  }
  func.func @transform_14(%arg0: i32, %arg1: i32) -> (i32, i32, i32) {
    %c0_i32 = arith.constant 0 : i32
    %c0_i32_0 = arith.constant 0 : i32
    %c0_i32_1 = arith.constant 0 : i32
    return %arg0, %c0_i32, %c0_i32_0 : i32, i32, i32
  }
}

module attributes {stable_mosaic.version = 11 : i64} {
  func.func @_mm_bias_kernel(%arg0: i32, %arg1: memref<96x32xf32, #tpu.memory_space<vmem>>, %arg2: memref<32x256xf32, #tpu.memory_space<vmem>>, %arg3: memref<1x256xf32, #tpu.memory_space<vmem>>, %arg4: memref<96x256xf32, #tpu.memory_space<vmem>>) attributes {dimension_semantics = [#tpu.dimension_semantics<parallel>], iteration_bounds = array<i64: 1>, scalar_prefetch = 0 : i64, scratch_operands = 0 : i64, tpu.core_type = #tpu.core_type<tc>, window_params = [{transform_indices = @transform_0, window_bounds = array<i64: 96, 32>}, {pipeline_mode = #tpu.pipeline_mode<synchronous>, transform_indices = @transform_1, window_bounds = array<i64: 32, 256>}, {pipeline_mode = #tpu.pipeline_mode<synchronous>, transform_indices = @transform_2, window_bounds = array<i64: 1, 256>}, {transform_indices = @transform_3, window_bounds = array<i64: 96, 256>}]} {
    %c0 = arith.constant 0 : index
    %c0_0 = arith.constant 0 : index
    %0 = vector.load %arg1[%c0, %c0_0] : memref<96x32xf32, #tpu.memory_space<vmem>>, vector<96x32xf32>
    %1 = arith.truncf %0 : vector<96x32xf32> to vector<96x32xbf16>
    %c0_1 = arith.constant 0 : index
    %c0_2 = arith.constant 0 : index
    %2 = vector.load %arg2[%c0_1, %c0_2] : memref<32x256xf32, #tpu.memory_space<vmem>>, vector<32x256xf32>
    %3 = arith.truncf %2 : vector<32x256xf32> to vector<32x256xbf16>
    %cst = arith.constant dense<0.000000e+00> : vector<96x256xf32>
    %4 = tpu.matmul %1, %3, %cst {dimension_numbers = #tpu.dot_dimension_numbers<[1], [0], [0], [1], [0, 0, 1, 1], [], []>} : vector<96x32xbf16>, vector<32x256xbf16>, vector<96x256xf32> -> vector<96x256xf32>
    %c0_3 = arith.constant 0 : index
    %c0_4 = arith.constant 0 : index
    %5 = vector.load %arg3[%c0_3, %c0_4] : memref<1x256xf32, #tpu.memory_space<vmem>>, vector<1x256xf32>
    %6 = vector.broadcast %5 : vector<1x256xf32> to vector<96x256xf32>
    %7 = arith.addf %4, %6 : vector<96x256xf32>
    %c0_5 = arith.constant 0 : index
    %c0_6 = arith.constant 0 : index
    %8 = vector.load %arg4[%c0_5, %c0_6] : memref<96x256xf32, #tpu.memory_space<vmem>>, vector<96x256xf32>
    tpu.vector_store %arg4[%c0_5, %c0_6], %7 {strides = array<i32>} : memref<96x256xf32, #tpu.memory_space<vmem>>, vector<96x256xf32>,
    return
  }
  func.func @transform_0(%arg0: i32) -> (i32, i32) {
    %c0_i32 = arith.constant 0 : i32
    %c0_i32_0 = arith.constant 0 : i32
    return %arg0, %c0_i32 : i32, i32
  }
  func.func @transform_1(%arg0: i32) -> (i32, i32) {
    %c0_i32 = arith.constant 0 : i32
    %c0_i32_0 = arith.constant 0 : i32
    %c0_i32_1 = arith.constant 0 : i32
    return %c0_i32, %c0_i32_0 : i32, i32
  }
  func.func @transform_2(%arg0: i32) -> (i32, i32) {
    %c0_i32 = arith.constant 0 : i32
    %c0_i32_0 = arith.constant 0 : i32
    %c0_i32_1 = arith.constant 0 : i32
    return %c0_i32, %c0_i32_0 : i32, i32
  }
  func.func @transform_3(%arg0: i32) -> (i32, i32) {
    %c0_i32 = arith.constant 0 : i32
    %c0_i32_0 = arith.constant 0 : i32
    return %arg0, %c0_i32 : i32, i32
  }
}

module attributes {stable_mosaic.version = 11 : i64} {
  func.func @_mlp_res_kernel(%arg0: i32, %arg1: memref<512x8xf32, #tpu.memory_space<vmem>>, %arg2: memref<8x16xf32, #tpu.memory_space<vmem>>, %arg3: memref<1x16xf32, #tpu.memory_space<vmem>>, %arg4: memref<16x16xf32, #tpu.memory_space<vmem>>, %arg5: memref<1x16xf32, #tpu.memory_space<vmem>>, %arg6: memref<512x16xf32, #tpu.memory_space<vmem>>, %arg7: memref<512x16xf32, #tpu.memory_space<vmem>>) attributes {dimension_semantics = [#tpu.dimension_semantics<parallel>], iteration_bounds = array<i64: 3>, scalar_prefetch = 0 : i64, scratch_operands = 0 : i64, tpu.core_type = #tpu.core_type<tc>, window_params = [{transform_indices = @transform_0, window_bounds = array<i64: 512, 8>}, {pipeline_mode = #tpu.pipeline_mode<synchronous>, transform_indices = @transform_1, window_bounds = array<i64: 8, 16>}, {pipeline_mode = #tpu.pipeline_mode<synchronous>, transform_indices = @transform_2, window_bounds = array<i64: 1, 16>}, {pipeline_mode = #tpu.pipeline_mode<synchronous>, transform_indices = @transform_3, window_bounds = array<i64: 16, 16>}, {pipeline_mode = #tpu.pipeline_mode<synchronous>, transform_indices = @transform_4, window_bounds = array<i64: 1, 16>}, {transform_indices = @transform_5, window_bounds = array<i64: 512, 16>}, {transform_indices = @transform_6, window_bounds = array<i64: 512, 16>}]} {
    %c0 = arith.constant 0 : index
    %c0_0 = arith.constant 0 : index
    %0 = vector.load %arg1[%c0, %c0_0] : memref<512x8xf32, #tpu.memory_space<vmem>>, vector<512x8xf32>
    %1 = arith.truncf %0 : vector<512x8xf32> to vector<512x8xbf16>
    %c0_1 = arith.constant 0 : index
    %c0_2 = arith.constant 0 : index
    %2 = vector.load %arg2[%c0_1, %c0_2] : memref<8x16xf32, #tpu.memory_space<vmem>>, vector<8x16xf32>
    %3 = arith.truncf %2 : vector<8x16xf32> to vector<8x16xbf16>
    %cst = arith.constant dense<0.000000e+00> : vector<512x16xf32>
    %4 = tpu.matmul %1, %3, %cst {dimension_numbers = #tpu.dot_dimension_numbers<[1], [0], [0], [1], [0, 0, 1, 1], [], []>} : vector<512x8xbf16>, vector<8x16xbf16>, vector<512x16xf32> -> vector<512x16xf32>
    %c0_3 = arith.constant 0 : index
    %c0_4 = arith.constant 0 : index
    %5 = vector.load %arg3[%c0_3, %c0_4] : memref<1x16xf32, #tpu.memory_space<vmem>>, vector<1x16xf32>
    %6 = vector.broadcast %5 : vector<1x16xf32> to vector<512x16xf32>
    %7 = arith.addf %4, %6 : vector<512x16xf32>
    %cst_5 = arith.constant 0.000000e+00 : f32
    %8 = vector.broadcast %cst_5 : f32 to vector<512x16xf32>
    %9 = arith.maximumf %7, %8 : vector<512x16xf32>
    %10 = arith.truncf %9 : vector<512x16xf32> to vector<512x16xbf16>
    %c0_6 = arith.constant 0 : index
    %c0_7 = arith.constant 0 : index
    %11 = vector.load %arg4[%c0_6, %c0_7] : memref<16x16xf32, #tpu.memory_space<vmem>>, vector<16x16xf32>
    %12 = arith.truncf %11 : vector<16x16xf32> to vector<16x16xbf16>
    %cst_8 = arith.constant dense<0.000000e+00> : vector<512x16xf32>
    %13 = tpu.matmul %10, %12, %cst_8 {dimension_numbers = #tpu.dot_dimension_numbers<[1], [0], [0], [1], [0, 0, 1, 1], [], []>} : vector<512x16xbf16>, vector<16x16xbf16>, vector<512x16xf32> -> vector<512x16xf32>
    %c0_9 = arith.constant 0 : index
    %c0_10 = arith.constant 0 : index
    %14 = vector.load %arg5[%c0_9, %c0_10] : memref<1x16xf32, #tpu.memory_space<vmem>>, vector<1x16xf32>
    %15 = vector.broadcast %14 : vector<1x16xf32> to vector<512x16xf32>
    %16 = arith.addf %13, %15 : vector<512x16xf32>
    %c0_11 = arith.constant 0 : index
    %c0_12 = arith.constant 0 : index
    %17 = vector.load %arg6[%c0_11, %c0_12] : memref<512x16xf32, #tpu.memory_space<vmem>>, vector<512x16xf32>
    %18 = arith.addf %16, %17 : vector<512x16xf32>
    %c0_13 = arith.constant 0 : index
    %c0_14 = arith.constant 0 : index
    %19 = vector.load %arg7[%c0_13, %c0_14] : memref<512x16xf32, #tpu.memory_space<vmem>>, vector<512x16xf32>
    tpu.vector_store %arg7[%c0_13, %c0_14], %18 {strides = array<i32>} : memref<512x16xf32, #tpu.memory_space<vmem>>, vector<512x16xf32>,
    return
  }
  func.func @transform_0(%arg0: i32) -> (i32, i32) {
    %c0_i32 = arith.constant 0 : i32
    %c0_i32_0 = arith.constant 0 : i32
    return %arg0, %c0_i32 : i32, i32
  }
  func.func @transform_1(%arg0: i32) -> (i32, i32) {
    %c0_i32 = arith.constant 0 : i32
    %c0_i32_0 = arith.constant 0 : i32
    %c0_i32_1 = arith.constant 0 : i32
    return %c0_i32, %c0_i32_0 : i32, i32
  }
  func.func @transform_2(%arg0: i32) -> (i32, i32) {
    %c0_i32 = arith.constant 0 : i32
    %c0_i32_0 = arith.constant 0 : i32
    %c0_i32_1 = arith.constant 0 : i32
    return %c0_i32, %c0_i32_0 : i32, i32
  }
  func.func @transform_3(%arg0: i32) -> (i32, i32) {
    %c0_i32 = arith.constant 0 : i32
    %c0_i32_0 = arith.constant 0 : i32
    %c0_i32_1 = arith.constant 0 : i32
    return %c0_i32, %c0_i32_0 : i32, i32
  }
  func.func @transform_4(%arg0: i32) -> (i32, i32) {
    %c0_i32 = arith.constant 0 : i32
    %c0_i32_0 = arith.constant 0 : i32
    %c0_i32_1 = arith.constant 0 : i32
    return %c0_i32, %c0_i32_0 : i32, i32
  }
  func.func @transform_5(%arg0: i32) -> (i32, i32) {
    %c0_i32 = arith.constant 0 : i32
    %c0_i32_0 = arith.constant 0 : i32
    return %arg0, %c0_i32 : i32, i32
  }
  func.func @transform_6(%arg0: i32) -> (i32, i32) {
    %c0_i32 = arith.constant 0 : i32
    %c0_i32_0 = arith.constant 0 : i32
    return %arg0, %c0_i32 : i32, i32
  }
}

</mosaic_0001>

<llo_original>
// kernel: tile.8
$region0: #{tile.8}
  #allocation0 [shape = 's32[1]{0}', space=sflag, size = 0x4, scoped, tag = 'scoped memory for tile.8']
  %s0 = inlined_call_operand.vmem [shape: f32[16], index: 0, kind: input, shape index: {}]
  %s1 = inlined_call_operand.vmem [shape: f32[16,16], index: 1, kind: output, shape index: {}]
  // Predicated region
  $region2: #{tile.8} parent=0 // pred_check
    _
  $region3: #{tile.8} parent=0 // pred_check_branch
    %3 = sbr.rel (0) target = $region5
  $region4: #{tile.8} parent=0 // pred_region
    _
  $region5: #{tile.8} parent=0 // pred_fallthru
    _
  %v4 = vld [vmem:[%s0] ss:$0 sm:$0xff]
  %5 = vst [vmem:[%s1] sm:$0xff] %v4
  %s6 = scalar_lea.vmem %s1, 8
  %7 = vst [vmem:[%s6] sm:$0xff] %v4

// kernel: tile.9
$region0: #{tile.9}
  %s0 = inlined_call_operand.vmem [shape: f32[16,16], index: 0, kind: input, shape index: {}]
  %s1 = inlined_call_operand.vmem [shape: f32[1,256], index: 1, kind: output, shape index: {}]
  $region1: #{tile.9} parent=0
    #allocation0 [shape = 'u8[8192]{0}', space=vmem, size = 0x2000, scoped, tag = 'scoped mem for output reshape']
    %s2 = smov 3
    %v3 = vld [vmem:[%s0] ss:$8 sm:%s2]
    %vm4 = vcmask 130048
    %5 = vst.msk [vmem:[#allocation0] ss:$8 sm:$0x3] %vm4, %v3
    %s6 = scalar_lea.vmem %s0, 7
    %s7 = smov 3
    %v8 = vld [vmem:[%s6] ss:$8 sm:%s7]
    %9 = vrot.lane.b32.xlu0 %v8, 112
    %v10 = vpop.permute.xlu0 %9
    %vm11 = vcmask 1048448
    %12 = vst.msk [vmem:[#allocation0] ss:$8 sm:$0x3] %vm11, %v10
    %s13 = scalar_lea.vmem %s0, 6
    %s14 = smov 3
    %v15 = vld [vmem:[%s13] ss:$8 sm:%s14]
    %16 = vrot.lane.b32.xlu0 %v15, 96
    %v17 = vpop.permute.xlu0 %16
    %vm18 = vcmask 917248
    %19 = vst.msk [vmem:[#allocation0] ss:$8 sm:$0x3] %vm18, %v17
    %s20 = scalar_lea.vmem %s0, 5
    %s21 = smov 3
    %v22 = vld [vmem:[%s20] ss:$8 sm:%s21]
    %23 = vrot.lane.b32.xlu0 %v22, 80
    %v24 = vpop.permute.xlu0 %23
    %vm25 = vcmask 786048
    %26 = vst.msk [vmem:[#allocation0] ss:$8 sm:$0x3] %vm25, %v24
    %s27 = scalar_lea.vmem %s0, 4
    %s28 = smov 3
    %v29 = vld [vmem:[%s27] ss:$8 sm:%s28]
    %30 = vrot.lane.b32.xlu0 %v29, 64
    %v31 = vpop.permute.xlu0 %30
    %vm32 = vcmask 654848
    %33 = vst.msk [vmem:[#allocation0] ss:$8 sm:$0x3] %vm32, %v31
    %s34 = scalar_lea.vmem %s0, 3
    %s35 = smov 3
    %v36 = vld [vmem:[%s34] ss:$8 sm:%s35]
    %37 = vrot.lane.b32.xlu0 %v36, 48
    %v38 = vpop.permute.xlu0 %37
    %vm39 = vcmask 523648
    %40 = vst.msk [vmem:[#allocation0] ss:$8 sm:$0x3] %vm39, %v38
    %s41 = scalar_lea.vmem %s0, 2
    %s42 = smov 3
    %v43 = vld [vmem:[%s41] ss:$8 sm:%s42]
    %44 = vrot.lane.b32.xlu0 %v43, 32
    %v45 = vpop.permute.xlu0 %44
    %vm46 = vcmask 392448
    %47 = vst.msk [vmem:[#allocation0] ss:$8 sm:$0x3] %vm46, %v45
    %s48 = scalar_lea.vmem %s0, 1
    %s49 = smov 3
    %v50 = vld [vmem:[%s48] ss:$8 sm:%s49]
    %51 = vrot.lane.b32.xlu0 %v50, 16
    %v52 = vpop.permute.xlu0 %51
    %vm53 = vcmask 261248
    %54 = vst.msk [vmem:[#allocation0] ss:$8 sm:$0x3] %vm53, %v52
    %s56 = sshll.u32 1, 1
    %s57 = ssub.s32 %s56, 1
    %v59 = vld [vmem:[#allocation0] sm:%s57]
    %s60 = sshll.u32 1, 1
    %s61 = ssub.s32 %s60, 1
    %62 = vst [vmem:[%s1] sm:%s61] %v59
    %s63 = scalar_lea.vmem [#allocation0], 8
    %v64 = vld [vmem:[%s63] sm:%s57]
    %s65 = sshll.u32 1, 1
    %s66 = ssub.s32 %s65, 1
    %s67 = scalar_lea.vmem %s1, 1
    %68 = vst [vmem:[%s67] sm:%s66] %v64

// kernel: triplane_transformer_forward.6
$region0: #{triplane_transformer_forward.6}
  #allocation0 [shape = 'u32[]', space=smem, size = 0x4, offset = 0x4, fixed_abs, tag = 'smem constant byte address 0x4 - core index']
  #allocation1 [shape = 'u32[144,128]{1,0:T(1,128)}', space=vmem, size = 0x12000, scoped, tag = 'internal scratch']
  #allocation2 [shape = 'f32[64,32]{1,0:T(8,128)}', space=vmem, size = 0x8000, scoped, tag = 'scratch operand']
  %s0 = inlined_call_operand.vmem [shape: f32[6,10,10,32], index: 0, kind: input, shape index: {}]
  %s1 = inlined_call_operand.vmem [shape: f32[288,32], index: 1, kind: input, shape index: {}]
  %s2 = inlined_call_operand.vmem [shape: f32[1,32], index: 2, kind: input, shape index: {}]
  %s3 = inlined_call_operand.vmem [shape: f32[6,4,4,32], index: 3, kind: output, shape index: {}]
  %s4 = sld [smem:[#allocation0]]
  $region45: #{triplane_transformer_forward.6} parent=0
    _
  %s6 = ssub.s32 1, %s4
  %s7 = scalar_select 0, %s6, %s4
  loop: start=0, step=1, limit=8
  $region2: #{triplane_transformer_forward.6} parent=0 // loop_pre_header
    _
  $region3: #{triplane_transformer_forward.6} parent=0 // loop_header
    %s9 = sphi 0, %s13
    %p10 = scmp.ge.s32.totalorder %s9, 8
    %s19 = sphi 0, %s21
    %s22 = sphi 0, %s19
    %s23 = sphi 0, %s22
    %s39 = sphi 0, %s23
    %s43 = sphi 0, %s43
    %s45 = sphi 0, %s43
    %s46 = sphi 0, %s45
    %s60 = sphi 0, %s46
    %s64 = sphi 0, %s64
    %s66 = sphi 0, %s64
    %s67 = sphi 0, %s66
    %s81 = sphi 0, %s67
    %s87 = sphi 0, %s89
    %s90 = sphi 0, %s87
    %s91 = sphi 0, %s90
    %s107 = sphi 0, %s91
  $region4: #{triplane_transformer_forward.6} parent=0 // loop_header_branch
    %12 = sbr.rel (%p10) target = $region8
  $region5: #{triplane_transformer_forward.6} parent=0 // loop_body
    %s14 = ssub.s32 %s9, 1
    %s15 = ssub.s32 %s9, 2
    %s16 = sadd.s32 %s9, 1
    %s17 = ssub.s32 %s9, %s16
    %p18 = scmp.eq.s32.totalorder %s17, 0
    %s20 = sadd.s32 %s19, 1
    %s21 = scalar_select %p18, %s19, %s20
    %p24 = pneg %p18
    %p25 = scmp.eq.s32.totalorder %s9, 5
    %p26 = por %p24, %p25
    %p27 = scmp.ne.s32.totalorder %s19, %s22
    %p28 = scmp.eq.s32.totalorder %s9, 0
    %p29 = por %p27, %p28
    %p30 = scmp.ne.s32.totalorder %s19, %s22
    %p31 = scmp.eq.s32.totalorder %s14, 5
    %p32 = por %p30, %p31
    %p33 = scmp.ne.s32.totalorder %s22, %s23
    %p34 = scmp.eq.s32.totalorder %s14, 0
    %p35 = por %p33, %p34
    %p36 = scmp.ne.s32.totalorder %s22, %s23
    %p37 = scmp.eq.s32.totalorder %s15, 5
    %p38 = por %p36, %p37
    %p40 = scmp.ne.s32.totalorder %s23, %s39
    %p41 = scmp.eq.s32.totalorder %s15, 0
    %p42 = por %p40, %p41
    %s44 = sadd.s32 %s43, 1
    %p47 = scmp.eq.s32.totalorder %s9, 5
    %p48 = scmp.ne.s32.totalorder %s43, %s45
    %p49 = scmp.eq.s32.totalorder %s9, 0
    %p50 = por %p48, %p49
    %p51 = scmp.ne.s32.totalorder %s43, %s45
    %p52 = scmp.eq.s32.totalorder %s14, 5
    %p53 = por %p51, %p52
    %p54 = scmp.ne.s32.totalorder %s45, %s46
    %p55 = scmp.eq.s32.totalorder %s14, 0
    %p56 = por %p54, %p55
    %p57 = scmp.ne.s32.totalorder %s45, %s46
    %p58 = scmp.eq.s32.totalorder %s15, 5
    %p59 = por %p57, %p58
    %p61 = scmp.ne.s32.totalorder %s46, %s60
    %p62 = scmp.eq.s32.totalorder %s15, 0
    %p63 = por %p61, %p62
    %s65 = sadd.s32 %s64, 1
    %p68 = scmp.eq.s32.totalorder %s9, 5
    %p69 = scmp.ne.s32.totalorder %s64, %s66
    %p70 = scmp.eq.s32.totalorder %s9, 0
    %p71 = por %p69, %p70
    %p72 = scmp.ne.s32.totalorder %s64, %s66
    %p73 = scmp.eq.s32.totalorder %s14, 5
    %p74 = por %p72, %p73
    %p75 = scmp.ne.s32.totalorder %s66, %s67
    %p76 = scmp.eq.s32.totalorder %s14, 0
    %p77 = por %p75, %p76
    %p78 = scmp.ne.s32.totalorder %s66, %s67
    %p79 = scmp.eq.s32.totalorder %s15, 5
    %p80 = por %p78, %p79
    %p82 = scmp.ne.s32.totalorder %s67, %s81
    %p83 = scmp.eq.s32.totalorder %s15, 0
    %p84 = por %p82, %p83
    %s85 = ssub.s32 %s9, %s16
    %p86 = scmp.eq.s32.totalorder %s85, 0
    %s88 = sadd.s32 %s87, 1
    %s89 = scalar_select %p86, %s87, %s88
    %p92 = pneg %p86
    %p93 = scmp.eq.s32.totalorder %s9, 5
    %p94 = por %p92, %p93
    %p95 = scmp.ne.s32.totalorder %s87, %s90
    %p96 = scmp.eq.s32.totalorder %s9, 0
    %p97 = por %p95, %p96
    %p98 = scmp.ne.s32.totalorder %s87, %s90
    %p99 = scmp.eq.s32.totalorder %s14, 5
    %p100 = por %p98, %p99
    %p101 = scmp.ne.s32.totalorder %s90, %s91
    %p102 = scmp.eq.s32.totalorder %s14, 0
    %p103 = por %p101, %p102
    %p104 = scmp.ne.s32.totalorder %s90, %s91
    %p105 = scmp.eq.s32.totalorder %s15, 5
    %p106 = por %p104, %p105
    %p108 = scmp.ne.s32.totalorder %s91, %s107
    %p109 = scmp.eq.s32.totalorder %s15, 0
    %p110 = por %p108, %p109
    %p111 = scmp.le.s32.totalorder 1, %s9
    %p112 = scmp.lt.s32.totalorder %s9, 7
    %p113 = pnand %p111, %p112
    %p114 = pneg %p113
    // Predicated region
    $region9: #{triplane_transformer_forward.6} parent=5 // pred_check
      _
    $region10: #{triplane_transformer_forward.6} parent=5 // pred_check_branch
      %116 = sbr.rel (%p113) target = $region12
    $region11: #{triplane_transformer_forward.6} parent=5 // pred_region
      %s117 = ssub.s32 %s9, 1
      // Predicated region
      $region13: #{triplane_transformer_forward.6} parent=11 // pred_check
        %p118 = pneg %p56
      $region14: #{triplane_transformer_forward.6} parent=11 // pred_check_branch
        %120 = sbr.rel (%p118) target = $region16
      $region15: #{triplane_transformer_forward.6} parent=11 // pred_region
        _
      $region16: #{triplane_transformer_forward.6} parent=11 // pred_fallthru
        _
      // Predicated region
      $region17: #{triplane_transformer_forward.6} parent=11 // pred_check
        %p121 = pneg %p77
      $region18: #{triplane_transformer_forward.6} parent=11 // pred_check_branch
        %123 = sbr.rel (%p121) target = $region20
      $region19: #{triplane_transformer_forward.6} parent=11 // pred_region
        _
      $region20: #{triplane_transformer_forward.6} parent=11 // pred_fallthru
        _
    $region12: #{triplane_transformer_forward.6} parent=5 // pred_fallthru
      _
    %p124 = scmp.lt.s32.totalorder %s9, 6
    // Predicated region
    $region21: #{triplane_transformer_forward.6} parent=5 // pred_check
      %p125 = pneg %p124
    $region22: #{triplane_transformer_forward.6} parent=5 // pred_check_branch
      %127 = sbr.rel (%p125) target = $region24
    $region23: #{triplane_transformer_forward.6} parent=5 // pred_region
      // Predicated region
      $region25: #{triplane_transformer_forward.6} parent=23 // pred_check
        %p128 = pneg %p29
      $region26: #{triplane_transformer_forward.6} parent=23 // pred_check_branch
        %130 = sbr.rel (%p128) target = $region28
      $region27: #{triplane_transformer_forward.6} parent=23 // pred_region
        %p131 = scmp.lt.s32.totalorder %s9, 5
        %s132 = scalar_select %p131, %s9, 5
        %s133 = smul.addr %s132, 20
        %s134 = smul.addr %s133, 8
        %s135 = scalar_lea.vmem %s0, %s134
      $region28: #{triplane_transformer_forward.6} parent=23 // pred_fallthru
        _
    $region24: #{triplane_transformer_forward.6} parent=5 // pred_fallthru
      _
    %p136 = scmp.le.s32.totalorder 1, %s9
    %p137 = scmp.lt.s32.totalorder %s9, 7
    %p138 = pnand %p136, %p137
    %p139 = pneg %p138
    // Predicated region
    $region29: #{triplane_transformer_forward.6} parent=5 // pred_check
      _
    $region30: #{triplane_transformer_forward.6} parent=5 // pred_check_branch
      %141 = sbr.rel (%p138) target = $region32
    $region31: #{triplane_transformer_forward.6} parent=5 // pred_region
      %s142 = ssub.s32 %s9, 1
      %p143 = scmp.lt.s32.totalorder %s14, 5
      %s144 = scalar_select %p143, %s14, 5
      %s145 = smul.addr %s144, 20
      %s146 = smul.addr %s145, 8
      %s147 = scalar_lea.vmem %s0, %s146
      %p148 = pneg %p35
      %p149 = pneg %p32
      %p150 = pneg %p56
      %p151 = pneg %p53
      %p152 = pneg %p77
      %p153 = pneg %p74
      %p154 = pneg %p103
      %p155 = pneg %p100
      %p156 = scmp.lt.s32.totalorder %s14, 5
      %s157 = scalar_select %p156, %s14, 5
      %s158 = smul.addr %s157, 4
      %s159 = smul.addr %s158, 4
      %s160 = scalar_lea.vmem %s3, %s159
      %p161 = scmp.lt.s32.totalorder %s14, 5
      %s162 = scalar_select %p161, %s14, 5
      %s163 = smul.addr %s162, 20
      %s164 = smul.addr %s163, 8
      %s165 = scalar_lea.vmem %s0, %s164
      %p166 = scmp.lt.s32.totalorder %s14, 5
      %s167 = scalar_select %p166, %s14, 5
      %s168 = smul.addr %s167, 4
      %s169 = smul.addr %s168, 4
      %s170 = scalar_lea.vmem %s3, %s169
      %v172 = vld [vmem:[%s165] sm:$0xff]
      %v173 = vld [vmem:[%s165 + $0x10] sm:$0xff]
      %v174 = vld [vmem:[%s165 + $0x20] sm:$0xff]
      %v175 = vld [vmem:[%s165 + $0x30] sm:$0xff]
      %v176 = vld [vmem:[%s165 + $0x40] sm:$0xff]
      %v177 = vld [vmem:[%s165 + $0x50] sm:$0xff]
      %v178 = vld [vmem:[%s165 + $0x60] sm:$0xff]
      %v179 = vld [vmem:[%s165 + $0x70] sm:$0xff]
      %v180 = vld [vmem:[%s165 + $0x1] sm:$0xff]
      %v181 = vld [vmem:[%s165 + $0x11] sm:$0xff]
      %v182 = vld [vmem:[%s165 + $0x21] sm:$0xff]
      %v183 = vld [vmem:[%s165 + $0x31] sm:$0xff]
      %v184 = vld [vmem:[%s165 + $0x41] sm:$0xff]
      %v185 = vld [vmem:[%s165 + $0x51] sm:$0xff]
      %v186 = vld [vmem:[%s165 + $0x61] sm:$0xff]
      %v187 = vld [vmem:[%s165 + $0x71] sm:$0xff]
      %v188 = vld [vmem:[%s165 + $0x2] sm:$0xff]
      %v189 = vld [vmem:[%s165 + $0x12] sm:$0xff]
      %v190 = vld [vmem:[%s165 + $0x22] sm:$0xff]
      %v191 = vld [vmem:[%s165 + $0x32] sm:$0xff]
      %v192 = vld [vmem:[%s165 + $0x42] sm:$0xff]
      %v193 = vld [vmem:[%s165 + $0x52] sm:$0xff]
      %v194 = vld [vmem:[%s165 + $0x62] sm:$0xff]
      %v195 = vld [vmem:[%s165 + $0x72] sm:$0xff]
      %s196 = scalar_lea.vmem %s165, 16
      %v197 = vld [vmem:[%s196] sm:$0xff]
      %v198 = vld [vmem:[%s196 + $0x10] sm:$0xff]
      %v199 = vld [vmem:[%s196 + $0x20] sm:$0xff]
      %v200 = vld [vmem:[%s196 + $0x30] sm:$0xff]
      %v201 = vld [vmem:[%s196 + $0x40] sm:$0xff]
      %v202 = vld [vmem:[%s196 + $0x50] sm:$0xff]
      %v203 = vld [vmem:[%s196 + $0x60] sm:$0xff]
      %v204 = vld [vmem:[%s196 + $0x70] sm:$0xff]
      %v205 = vld [vmem:[%s196 + $0x1] sm:$0xff]
      %v206 = vld [vmem:[%s196 + $0x11] sm:$0xff]
      %v207 = vld [vmem:[%s196 + $0x21] sm:$0xff]
      %v208 = vld [vmem:[%s196 + $0x31] sm:$0xff]
      %v209 = vld [vmem:[%s196 + $0x41] sm:$0xff]
      %v210 = vld [vmem:[%s196 + $0x51] sm:$0xff]
      %v211 = vld [vmem:[%s196 + $0x61] sm:$0xff]
      %v212 = vld [vmem:[%s196 + $0x71] sm:$0xff]
      %v213 = vld [vmem:[%s196 + $0x2] sm:$0xff]
      %v214 = vld [vmem:[%s196 + $0x12] sm:$0xff]
      %v215 = vld [vmem:[%s196 + $0x22] sm:$0xff]
      %v216 = vld [vmem:[%s196 + $0x32] sm:$0xff]
      %v217 = vld [vmem:[%s196 + $0x42] sm:$0xff]
      %v218 = vld [vmem:[%s196 + $0x52] sm:$0xff]
      %v219 = vld [vmem:[%s196 + $0x62] sm:$0xff]
      %v220 = vld [vmem:[%s196 + $0x72] sm:$0xff]
      %s221 = scalar_lea.vmem %s165, 32
      %v222 = vld [vmem:[%s221] sm:$0xff]
      %v223 = vld [vmem:[%s221 + $0x10] sm:$0xff]
      %v224 = vld [vmem:[%s221 + $0x20] sm:$0xff]
      %v225 = vld [vmem:[%s221 + $0x30] sm:$0xff]
      %v226 = vld [vmem:[%s221 + $0x40] sm:$0xff]
      %v227 = vld [vmem:[%s221 + $0x50] sm:$0xff]
      %v228 = vld [vmem:[%s221 + $0x60] sm:$0xff]
      %v229 = vld [vmem:[%s221 + $0x70] sm:$0xff]
      %v230 = vld [vmem:[%s221 + $0x1] sm:$0xff]
      %v231 = vld [vmem:[%s221 + $0x11] sm:$0xff]
      %v232 = vld [vmem:[%s221 + $0x21] sm:$0xff]
      %v233 = vld [vmem:[%s221 + $0x31] sm:$0xff]
      %v234 = vld [vmem:[%s221 + $0x41] sm:$0xff]
      %v235 = vld [vmem:[%s221 + $0x51] sm:$0xff]
      %v236 = vld [vmem:[%s221 + $0x61] sm:$0xff]
      %v237 = vld [vmem:[%s221 + $0x71] sm:$0xff]
      %v238 = vld [vmem:[%s221 + $0x2] sm:$0xff]
      %v239 = vld [vmem:[%s221 + $0x12] sm:$0xff]
      %v240 = vld [vmem:[%s221 + $0x22] sm:$0xff]
      %v241 = vld [vmem:[%s221 + $0x32] sm:$0xff]
      %v242 = vld [vmem:[%s221 + $0x42] sm:$0xff]
      %v243 = vld [vmem:[%s221 + $0x52] sm:$0xff]
      %v244 = vld [vmem:[%s221 + $0x62] sm:$0xff]
      %v245 = vld [vmem:[%s221 + $0x72] sm:$0xff]
      %254 = vrot.lane.b32.xlu0 %v180, 32
      %v255 = vpop.permute.xlu0 %254
      %256 = vrot.lane.b32.xlu0 %v181, 32
      %v257 = vpop.permute.xlu0 %256
      %258 = vrot.lane.b32.xlu0 %v182, 32
      %v259 = vpop.permute.xlu0 %258
      %260 = vrot.lane.b32.xlu0 %v183, 32
      %v261 = vpop.permute.xlu0 %260
      %262 = vrot.lane.b32.xlu0 %v184, 32
      %v263 = vpop.permute.xlu0 %262
      %264 = vrot.lane.b32.xlu0 %v185, 32
      %v265 = vpop.permute.xlu0 %264
      %266 = vrot.lane.b32.xlu0 %v186, 32
      %v267 = vpop.permute.xlu0 %266
      %268 = vrot.lane.b32.xlu0 %v187, 32
      %v269 = vpop.permute.xlu0 %268
      %286 = vrot.lane.b32.xlu0 %v188, 64
      %v287 = vpop.permute.xlu0 %286
      %288 = vrot.lane.b32.xlu0 %v189, 64
      %v289 = vpop.permute.xlu0 %288
      %290 = vrot.lane.b32.xlu0 %v190, 64
      %v291 = vpop.permute.xlu0 %290
      %292 = vrot.lane.b32.xlu0 %v191, 64
      %v293 = vpop.permute.xlu0 %292
      %294 = vrot.lane.b32.xlu0 %v192, 64
      %v295 = vpop.permute.xlu0 %294
      %296 = vrot.lane.b32.xlu0 %v193, 64
      %v297 = vpop.permute.xlu0 %296
      %298 = vrot.lane.b32.xlu0 %v194, 64
      %v299 = vpop.permute.xlu0 %298
      %300 = vrot.lane.b32.xlu0 %v195, 64
      %v301 = vpop.permute.xlu0 %300
      %318 = vrot.lane.b32.xlu0 %v197, 96
      %v319 = vpop.permute.xlu0 %318
      %320 = vrot.lane.b32.xlu0 %v198, 96
      %v321 = vpop.permute.xlu0 %320
      %322 = vrot.lane.b32.xlu0 %v199, 96
      %v323 = vpop.permute.xlu0 %322
      %324 = vrot.lane.b32.xlu0 %v200, 96
      %v325 = vpop.permute.xlu0 %324
      %326 = vrot.lane.b32.xlu0 %v201, 96
      %v327 = vpop.permute.xlu0 %326
      %328 = vrot.lane.b32.xlu0 %v202, 96
      %v329 = vpop.permute.xlu0 %328
      %330 = vrot.lane.b32.xlu0 %v203, 96
      %v331 = vpop.permute.xlu0 %330
      %332 = vrot.lane.b32.xlu0 %v204, 96
      %v333 = vpop.permute.xlu0 %332
      %350 = vrot.lane.b32.xlu0 %v213, 32
      %v351 = vpop.permute.xlu0 %350
      %352 = vrot.lane.b32.xlu0 %v214, 32
      %v353 = vpop.permute.xlu0 %352
      %354 = vrot.lane.b32.xlu0 %v215, 32
      %v355 = vpop.permute.xlu0 %354
      %356 = vrot.lane.b32.xlu0 %v216, 32
      %v357 = vpop.permute.xlu0 %356
      %358 = vrot.lane.b32.xlu0 %v217, 32
      %v359 = vpop.permute.xlu0 %358
      %360 = vrot.lane.b32.xlu0 %v218, 32
      %v361 = vpop.permute.xlu0 %360
      %362 = vrot.lane.b32.xlu0 %v219, 32
      %v363 = vpop.permute.xlu0 %362
      %364 = vrot.lane.b32.xlu0 %v220, 32
      %v365 = vpop.permute.xlu0 %364
      %382 = vrot.lane.b32.xlu0 %v222, 64
      %v383 = vpop.permute.xlu0 %382
      %384 = vrot.lane.b32.xlu0 %v223, 64
      %v385 = vpop.permute.xlu0 %384
      %386 = vrot.lane.b32.xlu0 %v224, 64
      %v387 = vpop.permute.xlu0 %386
      %388 = vrot.lane.b32.xlu0 %v225, 64
      %v389 = vpop.permute.xlu0 %388
      %390 = vrot.lane.b32.xlu0 %v226, 64
      %v391 = vpop.permute.xlu0 %390
      %392 = vrot.lane.b32.xlu0 %v227, 64
      %v393 = vpop.permute.xlu0 %392
      %394 = vrot.lane.b32.xlu0 %v228, 64
      %v395 = vpop.permute.xlu0 %394
      %396 = vrot.lane.b32.xlu0 %v229, 64
      %v397 = vpop.permute.xlu0 %396
      %414 = vrot.lane.b32.xlu0 %v230, 96
      %v415 = vpop.permute.xlu0 %414
      %416 = vrot.lane.b32.xlu0 %v231, 96
      %v417 = vpop.permute.xlu0 %416
      %418 = vrot.lane.b32.xlu0 %v232, 96
      %v419 = vpop.permute.xlu0 %418
      %420 = vrot.lane.b32.xlu0 %v233, 96
      %v421 = vpop.permute.xlu0 %420
      %422 = vrot.lane.b32.xlu0 %v234, 96
      %v423 = vpop.permute.xlu0 %422
      %424 = vrot.lane.b32.xlu0 %v235, 96
      %v425 = vpop.permute.xlu0 %424
      %426 = vrot.lane.b32.xlu0 %v236, 96
      %v427 = vpop.permute.xlu0 %426
      %428 = vrot.lane.b32.xlu0 %v237, 96
      %v429 = vpop.permute.xlu0 %428
      %vm438 = vcmask 261120
      %v439 = vsel %vm438, %v172, %v255
      %v440 = vsel %vm438, %v173, %v257
      %v441 = vsel %vm438, %v174, %v259
      %v442 = vsel %vm438, %v175, %v261
      %v443 = vsel %vm438, %v176, %v263
      %v444 = vsel %vm438, %v177, %v265
      %v445 = vsel %vm438, %v178, %v267
      %v446 = vsel %vm438, %v179, %v269
      %vm447 = vcmask 523264
      %v448 = vsel %vm447, %v439, %v287
      %v449 = vsel %vm447, %v440, %v289
      %v450 = vsel %vm447, %v441, %v291
      %v451 = vsel %vm447, %v442, %v293
      %v452 = vsel %vm447, %v443, %v295
      %v453 = vsel %vm447, %v444, %v297
      %v454 = vsel %vm447, %v445, %v299
      %v455 = vsel %vm447, %v446, %v301
      %vm456 = vcmask 785408
      %v457 = vsel %vm456, %v448, %v319
      %v458 = vsel %vm456, %v449, %v321
      %v459 = vsel %vm456, %v450, %v323
      %v460 = vsel %vm456, %v451, %v325
      %v461 = vsel %vm456, %v452, %v327
      %v462 = vsel %vm456, %v453, %v329
      %v463 = vsel %vm456, %v454, %v331
      %v464 = vsel %vm456, %v455, %v333
      %v465 = vsel %vm438, %v205, %v351
      %v466 = vsel %vm438, %v206, %v353
      %v467 = vsel %vm438, %v207, %v355
      %v468 = vsel %vm438, %v208, %v357
      %v469 = vsel %vm438, %v209, %v359
      %v470 = vsel %vm438, %v210, %v361
      %v471 = vsel %vm438, %v211, %v363
      %v472 = vsel %vm438, %v212, %v365
      %v473 = vsel %vm447, %v465, %v383
      %v474 = vsel %vm447, %v466, %v385
      %v475 = vsel %vm447, %v467, %v387
      %v476 = vsel %vm447, %v468, %v389
      %v477 = vsel %vm447, %v469, %v391
      %v478 = vsel %vm447, %v470, %v393
      %v479 = vsel %vm447, %v471, %v395
      %v480 = vsel %vm447, %v472, %v397
      %v481 = vsel %vm456, %v473, %v415
      %v482 = vsel %vm456, %v474, %v417
      %v483 = vsel %vm456, %v475, %v419
      %v484 = vsel %vm456, %v476, %v421
      %v485 = vsel %vm456, %v477, %v423
      %v486 = vsel %vm456, %v478, %v425
      %v487 = vsel %vm456, %v479, %v427
      %v488 = vsel %vm456, %v480, %v429
      %v489 = vpack.c.bf16 %v458, %v457
      %v490 = vpack.c.bf16 %v482, %v481
      %v491 = vpack.c.bf16 %v239, %v238
      %v492 = vpack.c.bf16 %v460, %v459
      %v493 = vpack.c.bf16 %v484, %v483
      %v494 = vpack.c.bf16 %v241, %v240
      %v495 = vpack.c.bf16 %v462, %v461
      %v496 = vpack.c.bf16 %v486, %v485
      %v497 = vpack.c.bf16 %v243, %v242
      %v498 = vpack.c.bf16 %v464, %v463
      %v499 = vpack.c.bf16 %v488, %v487
      %v500 = vpack.c.bf16 %v245, %v244
      %v501 = vld [vmem:[%s1] sm:$0xff]
      %v502 = vld [vmem:[%s1 + $0x8] sm:$0xff]
      %v503 = vld [vmem:[%s1 + $0x10] sm:$0xff]
      %v504 = vld [vmem:[%s1 + $0x18] sm:$0xff]
      %v505 = vld [vmem:[%s1 + $0x20] sm:$0xff]
      %v506 = vld [vmem:[%s1 + $0x28] sm:$0xff]
      %v507 = vld [vmem:[%s1 + $0x30] sm:$0xff]
      %v508 = vld [vmem:[%s1 + $0x38] sm:$0xff]
      %v509 = vld [vmem:[%s1 + $0x40] sm:$0xff]
      %v510 = vld [vmem:[%s1 + $0x48] sm:$0xff]
      %v511 = vld [vmem:[%s1 + $0x50] sm:$0xff]
      %v512 = vld [vmem:[%s1 + $0x58] sm:$0xff]
      %v513 = vld [vmem:[%s1 + $0x60] sm:$0xff]
      %v514 = vld [vmem:[%s1 + $0x68] sm:$0xff]
      %v515 = vld [vmem:[%s1 + $0x70] sm:$0xff]
      %v516 = vld [vmem:[%s1 + $0x78] sm:$0xff]
      %v517 = vld [vmem:[%s1 + $0x80] sm:$0xff]
      %v518 = vld [vmem:[%s1 + $0x88] sm:$0xff]
      %v519 = vld [vmem:[%s1 + $0x90] sm:$0xff]
      %v520 = vld [vmem:[%s1 + $0x98] sm:$0xff]
      %v521 = vld [vmem:[%s1 + $0xa0] sm:$0xff]
      %v522 = vld [vmem:[%s1 + $0xa8] sm:$0xff]
      %v523 = vld [vmem:[%s1 + $0xb0] sm:$0xff]
      %v524 = vld [vmem:[%s1 + $0xb8] sm:$0xff]
      %v525 = vld [vmem:[%s1 + $0xc0] sm:$0xff]
      %v526 = vld [vmem:[%s1 + $0xc8] sm:$0xff]
      %v527 = vld [vmem:[%s1 + $0xd0] sm:$0xff]
      %v528 = vld [vmem:[%s1 + $0xd8] sm:$0xff]
      %v529 = vld [vmem:[%s1 + $0xe0] sm:$0xff]
      %v530 = vld [vmem:[%s1 + $0xe8] sm:$0xff]
      %v531 = vld [vmem:[%s1 + $0xf0] sm:$0xff]
      %v532 = vld [vmem:[%s1 + $0xf8] sm:$0xff]
      %v533 = vld [vmem:[%s1 + $0x100] sm:$0xff]
      %v534 = vld [vmem:[%s1 + $0x108] sm:$0xff]
      %v535 = vld [vmem:[%s1 + $0x110] sm:$0xff]
      %v536 = vld [vmem:[%s1 + $0x118] sm:$0xff]
      %v537 = vpack.c.bf16 %v502, %v501
      %v538 = vpack.c.bf16 %v504, %v503
      %v539 = vpack.c.bf16 %v506, %v505
      %v540 = vpack.c.bf16 %v508, %v507
      %v541 = vpack.c.bf16 %v510, %v509
      %v542 = vpack.c.bf16 %v512, %v511
      %v543 = vpack.c.bf16 %v514, %v513
      %v544 = vpack.c.bf16 %v516, %v515
      %v545 = vpack.c.bf16 %v518, %v517
      %v546 = vpack.c.bf16 %v520, %v519
      %v547 = vpack.c.bf16 %v522, %v521
      %v548 = vpack.c.bf16 %v524, %v523
      %v549 = vpack.c.bf16 %v526, %v525
      %v550 = vpack.c.bf16 %v528, %v527
      %v551 = vpack.c.bf16 %v530, %v529
      %v552 = vpack.c.bf16 %v532, %v531
      %v553 = vpack.c.bf16 %v534, %v533
      %v554 = vpack.c.bf16 %v536, %v535
      %v555 = vld [vmem:[%s2] sm:$0x1]
      %v557 = vlaneseq
      %v558 = vshrl.u32 %v557, 7
      %v559 = vsub.s32 0, %v558
      %v560 = vrot.slane %v555, %v559
      %v563 = vsel %vm438, %v491, 0
      %v566 = vsel %vm438, %v494, 0
      %v569 = vsel %vm438, %v497, 0
      %v572 = vsel %vm438, %v500, 0
      %574 = vmatprep.subr.bf16.mxu0 0
      %575 = vmatpush1.bf16.msra.mxu0 %v544
      %576 = vmatprep.subr.bf16.mxu0 0
      %577 = vmatpush1.bf16.msra.mxu0 %v543
      %578 = vmatprep.subr.bf16.mxu0 0
      %579 = vmatpush1.bf16.msra.mxu0 %v542
      %580 = vmatprep.subr.bf16.mxu0 0
      %581 = vmatpush1.bf16.msra.mxu0 %v541
      %582 = vmatprep.subr.bf16.mxu0 0
      %583 = vmatpush1.bf16.msra.mxu0 %v540
      %584 = vmatprep.subr.bf16.mxu0 0
      %585 = vmatpush1.bf16.msra.mxu0 %v539
      %586 = vmatprep.subr.bf16.mxu0 0
      %587 = vmatpush1.bf16.msra.mxu0 %v538
      %588 = vmatprep.subr.bf16.mxu0 0
      %589 = vmatpush1.bf16.msra.mxu0 %v537
      %590 = vmatprep.subr.bf16.mxu0 0
      %591 = vmatpush2.bf16.msra.mxu0 %v552
      %592 = vmatprep.subr.bf16.mxu0 0
      %593 = vmatpush2.bf16.msra.mxu0 %v551
      %594 = vmatprep.subr.bf16.mxu0 0
      %595 = vmatpush2.bf16.msra.mxu0 %v550
      %596 = vmatprep.subr.bf16.mxu0 0
      %597 = vmatpush2.bf16.msra.mxu0 %v549
      %598 = vmatprep.subr.bf16.mxu0 0
      %599 = vmatpush2.bf16.msra.mxu0 %v548
      %600 = vmatprep.subr.bf16.mxu0 0
      %601 = vmatpush2.bf16.msra.mxu0 %v547
      %602 = vmatprep.subr.bf16.mxu0 0
      %603 = vmatpush2.bf16.msra.mxu0 %v546
      %604 = vmatprep.subr.bf16.mxu0 0
      %605 = vmatpush2.bf16.msra.mxu0 %v545
      %606 = vmatprep.mubr.bf16.mxu0 %v490
      %607 = vmatmul.mubr.bf16.gmra.mxu0 %v489
      %v608 = vpop.f32.mrf.mxu0
      %v609 = vadd.f32 %v560, %v608
      %v610 = vpop.f32.mrf.mxu0
      %v611 = vpop.f32.mrf.mxu0
      %v612 = vadd.f32 %v560, %v611
      %v613 = vpop.f32.mrf.mxu0
      %614 = vmatprep.mubr.bf16.mxu0 %v493
      %615 = vmatmul.mubr.bf16.gmra.mxu0 %v492
      %v616 = vpop.f32.mrf.mxu0
      %v617 = vadd.f32 %v560, %v616
      %v618 = vpop.f32.mrf.mxu0
      %v619 = vpop.f32.mrf.mxu0
      %v620 = vadd.f32 %v560, %v619
      %v621 = vpop.f32.mrf.mxu0
      %622 = vmatprep.mubr.bf16.mxu0 %v496
      %623 = vmatmul.mubr.bf16.gmra.mxu0 %v495
      %v624 = vpop.f32.mrf.mxu0
      %v625 = vadd.f32 %v560, %v624
      %v626 = vpop.f32.mrf.mxu0
      %v627 = vpop.f32.mrf.mxu0
      %v628 = vadd.f32 %v560, %v627
      %v629 = vpop.f32.mrf.mxu0
      %630 = vmatprep.mubr.bf16.mxu0 %v499
      %631 = vmatmul.mubr.bf16.gmra.mxu0 %v498
      %v632 = vpop.f32.mrf.mxu0
      %v633 = vadd.f32 %v560, %v632
      %v634 = vpop.f32.mrf.mxu0
      %v635 = vpop.f32.mrf.mxu0
      %v636 = vadd.f32 %v560, %v635
      %v637 = vpop.f32.mrf.mxu0
      %638 = vdwg.mxu0
      %639 = vmatprep.subr.bf16.mxu0 0
      %640 = vmatpush1.bf16.msra.mxu0 0
      %641 = vmatprep.subr.bf16.mxu0 0
      %642 = vmatpush1.bf16.msra.mxu0 0
      %643 = vmatprep.subr.bf16.mxu0 0
      %644 = vmatpush1.bf16.msra.mxu0 0
      %645 = vmatprep.subr.bf16.mxu0 0
      %646 = vmatpush1.bf16.msra.mxu0 0
      %647 = vmatprep.subr.bf16.mxu0 0
      %648 = vmatpush1.bf16.msra.mxu0 0
      %649 = vmatprep.subr.bf16.mxu0 0
      %650 = vmatpush1.bf16.msra.mxu0 0
      %651 = vmatprep.subr.bf16.mxu0 0
      %652 = vmatpush1.bf16.msra.mxu0 %v554
      %653 = vmatprep.subr.bf16.mxu0 0
      %654 = vmatpush1.bf16.msra.mxu0 %v553
      %655 = vmatprep.subr.bf16.mxu0 0
      %656 = vmatpush2.bf16.msra.mxu0 0
      %657 = vmatprep.subr.bf16.mxu0 0
      %658 = vmatpush2.bf16.msra.mxu0 0
      %659 = vmatprep.subr.bf16.mxu0 0
      %660 = vmatpush2.bf16.msra.mxu0 0
      %661 = vmatprep.subr.bf16.mxu0 0
      %662 = vmatpush2.bf16.msra.mxu0 0
      %663 = vmatprep.subr.bf16.mxu0 0
      %664 = vmatpush2.bf16.msra.mxu0 0
      %665 = vmatprep.subr.bf16.mxu0 0
      %666 = vmatpush2.bf16.msra.mxu0 0
      %667 = vmatprep.subr.bf16.mxu0 0
      %668 = vmatpush2.bf16.msra.mxu0 0
      %669 = vmatprep.subr.bf16.mxu0 0
      %670 = vmatpush2.bf16.msra.mxu0 0
      %671 = vmatprep.mubr.bf16.mxu0 0
      %672 = vmatmul.mubr.bf16.gmra.mxu0 %v563
      %v673 = vpop.f32.mrf.mxu0
      %v674 = vadd.f32 %v609, %v673
      %v675 = vpop.f32.mrf.mxu0
      %v676 = vpop.f32.mrf.mxu0
      %v677 = vadd.f32 %v612, %v676
      %v678 = vpop.f32.mrf.mxu0
      %679 = vmatprep.mubr.bf16.mxu0 0
      %680 = vmatmul.mubr.bf16.gmra.mxu0 %v566
      %v681 = vpop.f32.mrf.mxu0
      %v682 = vadd.f32 %v617, %v681
      %v683 = vpop.f32.mrf.mxu0
      %v684 = vpop.f32.mrf.mxu0
      %v685 = vadd.f32 %v620, %v684
      %v686 = vpop.f32.mrf.mxu0
      %687 = vmatprep.mubr.bf16.mxu0 0
      %688 = vmatmul.mubr.bf16.gmra.mxu0 %v569
      %v689 = vpop.f32.mrf.mxu0
      %v690 = vadd.f32 %v625, %v689
      %v691 = vpop.f32.mrf.mxu0
      %v692 = vpop.f32.mrf.mxu0
      %v693 = vadd.f32 %v628, %v692
      %v694 = vpop.f32.mrf.mxu0
      %695 = vmatprep.mubr.bf16.mxu0 0
      %696 = vmatmul.mubr.bf16.gmra.mxu0 %v572
      %v697 = vpop.f32.mrf.mxu0
      %v698 = vadd.f32 %v633, %v697
      %v699 = vpop.f32.mrf.mxu0
      %v700 = vpop.f32.mrf.mxu0
      %v701 = vadd.f32 %v636, %v700
      %v702 = vpop.f32.mrf.mxu0
      %703 = vdwg.mxu0
      %v704 = vmax.f32 %v674, 0.0
      %v705 = vmax.f32 %v677, 0.0
      %v706 = vmax.f32 %v682, 0.0
      %v707 = vmax.f32 %v685, 0.0
      %v708 = vmax.f32 %v690, 0.0
      %v709 = vmax.f32 %v693, 0.0
      %v710 = vmax.f32 %v698, 0.0
      %v711 = vmax.f32 %v701, 0.0
      %712 = vst.msk [vmem:[#allocation2] sm:$0xff] %vm438, %v704
      %713 = vst.msk [vmem:[#allocation2 + $0x8] sm:$0xff] %vm438, %v705
      %714 = vst.msk [vmem:[#allocation2 + $0x10] sm:$0xff] %vm438, %v706
      %715 = vst.msk [vmem:[#allocation2 + $0x18] sm:$0xff] %vm438, %v707
      %716 = vst.msk [vmem:[#allocation2 + $0x20] sm:$0xff] %vm438, %v708
      %717 = vst.msk [vmem:[#allocation2 + $0x28] sm:$0xff] %vm438, %v709
      %718 = vst.msk [vmem:[#allocation2 + $0x30] sm:$0xff] %vm438, %v710
      %719 = vst.msk [vmem:[#allocation2 + $0x38] sm:$0xff] %vm438, %v711
      %v720 = vld [vmem:[#allocation2] ss:$2 sm:$0xff]
      %s721 = scalar_lea.vmem [#allocation2], 16
      %v722 = vld [vmem:[%s721] ss:$2 sm:$0xff]
      %s723 = scalar_lea.vmem [#allocation2], 32
      %v724 = vld [vmem:[%s723] ss:$2 sm:$0xff]
      %s725 = scalar_lea.vmem [#allocation2], 48
      %v726 = vld [vmem:[%s725] ss:$2 sm:$0xff]
      %s727 = scalar_lea.vmem [#allocation2], 1
      %v728 = vld [vmem:[%s727] ss:$2 sm:$0xff]
      %s729 = scalar_lea.vmem [#allocation2], 17
      %v730 = vld [vmem:[%s729] ss:$2 sm:$0xff]
      %s731 = scalar_lea.vmem [#allocation2], 33
      %v732 = vld [vmem:[%s731] ss:$2 sm:$0xff]
      %s733 = scalar_lea.vmem [#allocation2], 49
      %v734 = vld [vmem:[%s733] ss:$2 sm:$0xff]
      %v735 = vmax.f32 %v720, %v728
      %v736 = vmax.f32 %v722, %v730
      %v737 = vmax.f32 %v724, %v732
      %v738 = vmax.f32 %v726, %v734
      %v743 = vrot.slane %v735, 4
      %v744 = vrot.slane %v736, 4
      %v745 = vrot.slane %v737, 4
      %v746 = vrot.slane %v738, 4
      %v751 = vmax.f32 %v735, %v743
      %v752 = vmax.f32 %v736, %v744
      %v753 = vmax.f32 %v737, %v745
      %v754 = vmax.f32 %v738, %v746
      %vm755 = vcmask 257024
      %756 = vst.msk [vmem:[%s170] sm:$0xf] %vm755, %v751
      %757 = vst.msk [vmem:[%s170 + $0x4] sm:$0xf] %vm755, %v752
      %758 = vst.msk [vmem:[%s170 + $0x8] sm:$0xf] %vm755, %v753
      %759 = vst.msk [vmem:[%s170 + $0xc] sm:$0xf] %vm755, %v754
      %p760 = scmp.lt.s32.totalorder %s14, 5
      %s761 = scalar_select %p760, %s14, 5
      %s762 = smul.addr %s761, 4
      %s763 = smul.addr %s762, 4
      %s764 = scalar_lea.vmem %s3, %s763
      // Predicated region
      $region33: #{triplane_transformer_forward.6} parent=31 // pred_check
        %p765 = pneg %p100
      $region34: #{triplane_transformer_forward.6} parent=31 // pred_check_branch
        %767 = sbr.rel (%p765) target = $region36
      $region35: #{triplane_transformer_forward.6} parent=31 // pred_region
        _
      $region36: #{triplane_transformer_forward.6} parent=31 // pred_fallthru
        _
    $region32: #{triplane_transformer_forward.6} parent=5 // pred_fallthru
      _
    %p768 = scmp.le.s32.totalorder 2, %s9
    // Predicated region
    $region37: #{triplane_transformer_forward.6} parent=5 // pred_check
      %p769 = pneg %p768
    $region38: #{triplane_transformer_forward.6} parent=5 // pred_check_branch
      %771 = sbr.rel (%p769) target = $region40
    $region39: #{triplane_transformer_forward.6} parent=5 // pred_region
      %s772 = ssub.s32 %s9, 2
      // Predicated region
      $region41: #{triplane_transformer_forward.6} parent=39 // pred_check
        %p773 = pneg %p106
      $region42: #{triplane_transformer_forward.6} parent=39 // pred_check_branch
        %775 = sbr.rel (%p773) target = $region44
      $region43: #{triplane_transformer_forward.6} parent=39 // pred_region
        %p776 = scmp.lt.s32.totalorder %s15, 5
        %s777 = scalar_select %p776, %s15, 5
        %s778 = smul.addr %s777, 4
        %s779 = smul.addr %s778, 4
        %s780 = scalar_lea.vmem %s3, %s779
      $region44: #{triplane_transformer_forward.6} parent=39 // pred_fallthru
        _
    $region40: #{triplane_transformer_forward.6} parent=5 // pred_fallthru
      _
  $region6: #{triplane_transformer_forward.6} parent=0 // loop_footer
    %s13 = sadd.s32 1, %s9
  $region7: #{triplane_transformer_forward.6} parent=0 // loop_footer_branch
    %8 = sbr.rel target = $region3
  $region8: #{triplane_transformer_forward.6} parent=0 // loop_exit
    _

// kernel: triplane_transformer_forward.5
$region0: #{triplane_transformer_forward.5}
  #allocation0 [shape = 'u32[]', space=smem, size = 0x4, offset = 0x4, fixed_abs, tag = 'smem constant byte address 0x4 - core index']
  #allocation1 [shape = 'u32[144,128]{1,0:T(1,128)}', space=vmem, size = 0x12000, scoped, tag = 'internal scratch']
  #allocation2 [shape = 'f32[256,32]{1,0:T(8,128)}', space=vmem, size = 0x20000, scoped, tag = 'scratch operand']
  %s0 = inlined_call_operand.vmem [shape: f32[6,18,18,8], index: 0, kind: input, shape index: {}]
  %s1 = inlined_call_operand.vmem [shape: f32[72,32], index: 1, kind: input, shape index: {}]
  %s2 = inlined_call_operand.vmem [shape: f32[1,32], index: 2, kind: input, shape index: {}]
  %s3 = inlined_call_operand.vmem [shape: f32[6,8,8,32], index: 3, kind: output, shape index: {}]
  %s4 = sld [smem:[#allocation0]]
  $region45: #{triplane_transformer_forward.5} parent=0
    _
  %s6 = ssub.s32 1, %s4
  %s7 = scalar_select 0, %s6, %s4
  loop: start=0, step=1, limit=8
  $region2: #{triplane_transformer_forward.5} parent=0 // loop_pre_header
    _
  $region3: #{triplane_transformer_forward.5} parent=0 // loop_header
    %s9 = sphi 0, %s13
    %p10 = scmp.ge.s32.totalorder %s9, 8
    %s19 = sphi 0, %s21
    %s22 = sphi 0, %s19
    %s23 = sphi 0, %s22
    %s39 = sphi 0, %s23
    %s43 = sphi 0, %s43
    %s45 = sphi 0, %s43
    %s46 = sphi 0, %s45
    %s60 = sphi 0, %s46
    %s64 = sphi 0, %s64
    %s66 = sphi 0, %s64
    %s67 = sphi 0, %s66
    %s81 = sphi 0, %s67
    %s87 = sphi 0, %s89
    %s90 = sphi 0, %s87
    %s91 = sphi 0, %s90
    %s107 = sphi 0, %s91
  $region4: #{triplane_transformer_forward.5} parent=0 // loop_header_branch
    %12 = sbr.rel (%p10) target = $region8
  $region5: #{triplane_transformer_forward.5} parent=0 // loop_body
    %s14 = ssub.s32 %s9, 1
    %s15 = ssub.s32 %s9, 2
    %s16 = sadd.s32 %s9, 1
    %s17 = ssub.s32 %s9, %s16
    %p18 = scmp.eq.s32.totalorder %s17, 0
    %s20 = sadd.s32 %s19, 1
    %s21 = scalar_select %p18, %s19, %s20
    %p24 = pneg %p18
    %p25 = scmp.eq.s32.totalorder %s9, 5
    %p26 = por %p24, %p25
    %p27 = scmp.ne.s32.totalorder %s19, %s22
    %p28 = scmp.eq.s32.totalorder %s9, 0
    %p29 = por %p27, %p28
    %p30 = scmp.ne.s32.totalorder %s19, %s22
    %p31 = scmp.eq.s32.totalorder %s14, 5
    %p32 = por %p30, %p31
    %p33 = scmp.ne.s32.totalorder %s22, %s23
    %p34 = scmp.eq.s32.totalorder %s14, 0
    %p35 = por %p33, %p34
    %p36 = scmp.ne.s32.totalorder %s22, %s23
    %p37 = scmp.eq.s32.totalorder %s15, 5
    %p38 = por %p36, %p37
    %p40 = scmp.ne.s32.totalorder %s23, %s39
    %p41 = scmp.eq.s32.totalorder %s15, 0
    %p42 = por %p40, %p41
    %s44 = sadd.s32 %s43, 1
    %p47 = scmp.eq.s32.totalorder %s9, 5
    %p48 = scmp.ne.s32.totalorder %s43, %s45
    %p49 = scmp.eq.s32.totalorder %s9, 0
    %p50 = por %p48, %p49
    %p51 = scmp.ne.s32.totalorder %s43, %s45
    %p52 = scmp.eq.s32.totalorder %s14, 5
    %p53 = por %p51, %p52
    %p54 = scmp.ne.s32.totalorder %s45, %s46
    %p55 = scmp.eq.s32.totalorder %s14, 0
    %p56 = por %p54, %p55
    %p57 = scmp.ne.s32.totalorder %s45, %s46
    %p58 = scmp.eq.s32.totalorder %s15, 5
    %p59 = por %p57, %p58
    %p61 = scmp.ne.s32.totalorder %s46, %s60
    %p62 = scmp.eq.s32.totalorder %s15, 0
    %p63 = por %p61, %p62
    %s65 = sadd.s32 %s64, 1
    %p68 = scmp.eq.s32.totalorder %s9, 5
    %p69 = scmp.ne.s32.totalorder %s64, %s66
    %p70 = scmp.eq.s32.totalorder %s9, 0
    %p71 = por %p69, %p70
    %p72 = scmp.ne.s32.totalorder %s64, %s66
    %p73 = scmp.eq.s32.totalorder %s14, 5
    %p74 = por %p72, %p73
    %p75 = scmp.ne.s32.totalorder %s66, %s67
    %p76 = scmp.eq.s32.totalorder %s14, 0
    %p77 = por %p75, %p76
    %p78 = scmp.ne.s32.totalorder %s66, %s67
    %p79 = scmp.eq.s32.totalorder %s15, 5
    %p80 = por %p78, %p79
    %p82 = scmp.ne.s32.totalorder %s67, %s81
    %p83 = scmp.eq.s32.totalorder %s15, 0
    %p84 = por %p82, %p83
    %s85 = ssub.s32 %s9, %s16
    %p86 = scmp.eq.s32.totalorder %s85, 0
    %s88 = sadd.s32 %s87, 1
    %s89 = scalar_select %p86, %s87, %s88
    %p92 = pneg %p86
    %p93 = scmp.eq.s32.totalorder %s9, 5
    %p94 = por %p92, %p93
    %p95 = scmp.ne.s32.totalorder %s87, %s90
    %p96 = scmp.eq.s32.totalorder %s9, 0
    %p97 = por %p95, %p96
    %p98 = scmp.ne.s32.totalorder %s87, %s90
    %p99 = scmp.eq.s32.totalorder %s14, 5
    %p100 = por %p98, %p99
    %p101 = scmp.ne.s32.totalorder %s90, %s91
    %p102 = scmp.eq.s32.totalorder %s14, 0
    %p103 = por %p101, %p102
    %p104 = scmp.ne.s32.totalorder %s90, %s91
    %p105 = scmp.eq.s32.totalorder %s15, 5
    %p106 = por %p104, %p105
    %p108 = scmp.ne.s32.totalorder %s91, %s107
    %p109 = scmp.eq.s32.totalorder %s15, 0
    %p110 = por %p108, %p109
    %p111 = scmp.le.s32.totalorder 1, %s9
    %p112 = scmp.lt.s32.totalorder %s9, 7
    %p113 = pnand %p111, %p112
    %p114 = pneg %p113
    // Predicated region
    $region9: #{triplane_transformer_forward.5} parent=5 // pred_check
      _
    $region10: #{triplane_transformer_forward.5} parent=5 // pred_check_branch
      %116 = sbr.rel (%p113) target = $region12
    $region11: #{triplane_transformer_forward.5} parent=5 // pred_region
      %s117 = ssub.s32 %s9, 1
      // Predicated region
      $region13: #{triplane_transformer_forward.5} parent=11 // pred_check
        %p118 = pneg %p56
      $region14: #{triplane_transformer_forward.5} parent=11 // pred_check_branch
        %120 = sbr.rel (%p118) target = $region16
      $region15: #{triplane_transformer_forward.5} parent=11 // pred_region
        _
      $region16: #{triplane_transformer_forward.5} parent=11 // pred_fallthru
        _
      // Predicated region
      $region17: #{triplane_transformer_forward.5} parent=11 // pred_check
        %p121 = pneg %p77
      $region18: #{triplane_transformer_forward.5} parent=11 // pred_check_branch
        %123 = sbr.rel (%p121) target = $region20
      $region19: #{triplane_transformer_forward.5} parent=11 // pred_region
        _
      $region20: #{triplane_transformer_forward.5} parent=11 // pred_fallthru
        _
    $region12: #{triplane_transformer_forward.5} parent=5 // pred_fallthru
      _
    %p124 = scmp.lt.s32.totalorder %s9, 6
    // Predicated region
    $region21: #{triplane_transformer_forward.5} parent=5 // pred_check
      %p125 = pneg %p124
    $region22: #{triplane_transformer_forward.5} parent=5 // pred_check_branch
      %127 = sbr.rel (%p125) target = $region24
    $region23: #{triplane_transformer_forward.5} parent=5 // pred_region
      // Predicated region
      $region25: #{triplane_transformer_forward.5} parent=23 // pred_check
        %p128 = pneg %p29
      $region26: #{triplane_transformer_forward.5} parent=23 // pred_check_branch
        %130 = sbr.rel (%p128) target = $region28
      $region27: #{triplane_transformer_forward.5} parent=23 // pred_region
        %p131 = scmp.lt.s32.totalorder %s9, 5
        %s132 = scalar_select %p131, %s9, 5
        %s133 = smul.addr %s132, 54
        %s134 = smul.addr %s133, 8
        %s135 = scalar_lea.vmem %s0, %s134
      $region28: #{triplane_transformer_forward.5} parent=23 // pred_fallthru
        _
    $region24: #{triplane_transformer_forward.5} parent=5 // pred_fallthru
      _
    %p136 = scmp.le.s32.totalorder 1, %s9
    %p137 = scmp.lt.s32.totalorder %s9, 7
    %p138 = pnand %p136, %p137
    %p139 = pneg %p138
    // Predicated region
    $region29: #{triplane_transformer_forward.5} parent=5 // pred_check
      _
    $region30: #{triplane_transformer_forward.5} parent=5 // pred_check_branch
      %141 = sbr.rel (%p138) target = $region32
    $region31: #{triplane_transformer_forward.5} parent=5 // pred_region
      %s142 = ssub.s32 %s9, 1
      %p143 = scmp.lt.s32.totalorder %s14, 5
      %s144 = scalar_select %p143, %s14, 5
      %s145 = smul.addr %s144, 54
      %s146 = smul.addr %s145, 8
      %s147 = scalar_lea.vmem %s0, %s146
      %p148 = pneg %p35
      %p149 = pneg %p32
      %p150 = pneg %p56
      %p151 = pneg %p53
      %p152 = pneg %p77
      %p153 = pneg %p74
      %p154 = pneg %p103
      %p155 = pneg %p100
      %p156 = scmp.lt.s32.totalorder %s14, 5
      %s157 = scalar_select %p156, %s14, 5
      %s158 = smul.addr %s157, 8
      %s159 = smul.addr %s158, 8
      %s160 = scalar_lea.vmem %s3, %s159
      %p161 = scmp.lt.s32.totalorder %s14, 5
      %s162 = scalar_select %p161, %s14, 5
      %s163 = smul.addr %s162, 54
      %s164 = smul.addr %s163, 8
      %s165 = scalar_lea.vmem %s0, %s164
      %p166 = scmp.lt.s32.totalorder %s14, 5
      %s167 = scalar_select %p166, %s14, 5
      %s168 = smul.addr %s167, 8
      %s169 = smul.addr %s168, 8
      %s170 = scalar_lea.vmem %s3, %s169
      %v172 = vld [vmem:[%s165] sm:$0xff]
      %v173 = vld [vmem:[%s165 + $0x8] sm:$0xff]
      %v174 = vld [vmem:[%s165 + $0x18] sm:$0xff]
      %v175 = vld [vmem:[%s165 + $0x20] sm:$0xff]
      %v176 = vld [vmem:[%s165 + $0x30] sm:$0xff]
      %v177 = vld [vmem:[%s165 + $0x38] sm:$0xff]
      %v178 = vld [vmem:[%s165 + $0x48] sm:$0xff]
      %v179 = vld [vmem:[%s165 + $0x50] sm:$0xff]
      %v180 = vld [vmem:[%s165 + $0x60] sm:$0xff]
      %v181 = vld [vmem:[%s165 + $0x68] sm:$0xff]
      %v182 = vld [vmem:[%s165 + $0x78] sm:$0xff]
      %v183 = vld [vmem:[%s165 + $0x80] sm:$0xff]
      %v184 = vld [vmem:[%s165 + $0x90] sm:$0xff]
      %v185 = vld [vmem:[%s165 + $0x98] sm:$0xff]
      %v186 = vld [vmem:[%s165 + $0xa8] sm:$0xff]
      %v187 = vld [vmem:[%s165 + $0xb0] sm:$0xff]
      %v188 = vld [vmem:[%s165 + $0xc0] sm:$0xff]
      %v189 = vld [vmem:[%s165 + $0xc8] sm:$0xff]
      %v190 = vld [vmem:[%s165 + $0xd8] sm:$0xff]
      %v191 = vld [vmem:[%s165 + $0xe0] sm:$0xff]
      %v192 = vld [vmem:[%s165 + $0xf0] sm:$0xff]
      %v193 = vld [vmem:[%s165 + $0xf8] sm:$0xff]
      %v194 = vld [vmem:[%s165 + $0x108] sm:$0xff]
      %v195 = vld [vmem:[%s165 + $0x110] sm:$0xff]
      %v196 = vld [vmem:[%s165 + $0x120] sm:$0xff]
      %v197 = vld [vmem:[%s165 + $0x128] sm:$0xff]
      %v198 = vld [vmem:[%s165 + $0x138] sm:$0xff]
      %v199 = vld [vmem:[%s165 + $0x140] sm:$0xff]
      %v200 = vld [vmem:[%s165 + $0x150] sm:$0xff]
      %v201 = vld [vmem:[%s165 + $0x158] sm:$0xff]
      %v202 = vld [vmem:[%s165 + $0x168] sm:$0xff]
      %v203 = vld [vmem:[%s165 + $0x170] sm:$0xff]
      %v204 = vld [vmem:[%s165 + $0x1] sm:$0xff]
      %v205 = vld [vmem:[%s165 + $0x9] sm:$0xff]
      %v206 = vld [vmem:[%s165 + $0x19] sm:$0xff]
      %v207 = vld [vmem:[%s165 + $0x21] sm:$0xff]
      %v208 = vld [vmem:[%s165 + $0x31] sm:$0xff]
      %v209 = vld [vmem:[%s165 + $0x39] sm:$0xff]
      %v210 = vld [vmem:[%s165 + $0x49] sm:$0xff]
      %v211 = vld [vmem:[%s165 + $0x51] sm:$0xff]
      %v212 = vld [vmem:[%s165 + $0x61] sm:$0xff]
      %v213 = vld [vmem:[%s165 + $0x69] sm:$0xff]
      %v214 = vld [vmem:[%s165 + $0x79] sm:$0xff]
      %v215 = vld [vmem:[%s165 + $0x81] sm:$0xff]
      %v216 = vld [vmem:[%s165 + $0x91] sm:$0xff]
      %v217 = vld [vmem:[%s165 + $0x99] sm:$0xff]
      %v218 = vld [vmem:[%s165 + $0xa9] sm:$0xff]
      %v219 = vld [vmem:[%s165 + $0xb1] sm:$0xff]
      %v220 = vld [vmem:[%s165 + $0xc1] sm:$0xff]
      %v221 = vld [vmem:[%s165 + $0xc9] sm:$0xff]
      %v222 = vld [vmem:[%s165 + $0xd9] sm:$0xff]
      %v223 = vld [vmem:[%s165 + $0xe1] sm:$0xff]
      %v224 = vld [vmem:[%s165 + $0xf1] sm:$0xff]
      %v225 = vld [vmem:[%s165 + $0xf9] sm:$0xff]
      %v226 = vld [vmem:[%s165 + $0x109] sm:$0xff]
      %v227 = vld [vmem:[%s165 + $0x111] sm:$0xff]
      %v228 = vld [vmem:[%s165 + $0x121] sm:$0xff]
      %v229 = vld [vmem:[%s165 + $0x129] sm:$0xff]
      %v230 = vld [vmem:[%s165 + $0x139] sm:$0xff]
      %v231 = vld [vmem:[%s165 + $0x141] sm:$0xff]
      %v232 = vld [vmem:[%s165 + $0x151] sm:$0xff]
      %v233 = vld [vmem:[%s165 + $0x159] sm:$0xff]
      %v234 = vld [vmem:[%s165 + $0x169] sm:$0xff]
      %v235 = vld [vmem:[%s165 + $0x171] sm:$0xff]
      %v236 = vld [vmem:[%s165 + $0x2] sm:$0xff]
      %v237 = vld [vmem:[%s165 + $0xa] sm:$0xff]
      %v238 = vld [vmem:[%s165 + $0x1a] sm:$0xff]
      %v239 = vld [vmem:[%s165 + $0x22] sm:$0xff]
      %v240 = vld [vmem:[%s165 + $0x32] sm:$0xff]
      %v241 = vld [vmem:[%s165 + $0x3a] sm:$0xff]
      %v242 = vld [vmem:[%s165 + $0x4a] sm:$0xff]
      %v243 = vld [vmem:[%s165 + $0x52] sm:$0xff]
      %v244 = vld [vmem:[%s165 + $0x62] sm:$0xff]
      %v245 = vld [vmem:[%s165 + $0x6a] sm:$0xff]
      %v246 = vld [vmem:[%s165 + $0x7a] sm:$0xff]
      %v247 = vld [vmem:[%s165 + $0x82] sm:$0xff]
      %v248 = vld [vmem:[%s165 + $0x92] sm:$0xff]
      %v249 = vld [vmem:[%s165 + $0x9a] sm:$0xff]
      %v250 = vld [vmem:[%s165 + $0xaa] sm:$0xff]
      %v251 = vld [vmem:[%s165 + $0xb2] sm:$0xff]
      %v252 = vld [vmem:[%s165 + $0xc2] sm:$0xff]
      %v253 = vld [vmem:[%s165 + $0xca] sm:$0xff]
      %v254 = vld [vmem:[%s165 + $0xda] sm:$0xff]
      %v255 = vld [vmem:[%s165 + $0xe2] sm:$0xff]
      %v256 = vld [vmem:[%s165 + $0xf2] sm:$0xff]
      %v257 = vld [vmem:[%s165 + $0xfa] sm:$0xff]
      %v258 = vld [vmem:[%s165 + $0x10a] sm:$0xff]
      %v259 = vld [vmem:[%s165 + $0x112] sm:$0xff]
      %v260 = vld [vmem:[%s165 + $0x122] sm:$0xff]
      %v261 = vld [vmem:[%s165 + $0x12a] sm:$0xff]
      %v262 = vld [vmem:[%s165 + $0x13a] sm:$0xff]
      %v263 = vld [vmem:[%s165 + $0x142] sm:$0xff]
      %v264 = vld [vmem:[%s165 + $0x152] sm:$0xff]
      %v265 = vld [vmem:[%s165 + $0x15a] sm:$0xff]
      %v266 = vld [vmem:[%s165 + $0x16a] sm:$0xff]
      %v267 = vld [vmem:[%s165 + $0x172] sm:$0xff]
      %s268 = scalar_lea.vmem %s165, 24
      %v269 = vld [vmem:[%s268] sm:$0xff]
      %v270 = vld [vmem:[%s268 + $0x8] sm:$0xff]
      %v271 = vld [vmem:[%s268 + $0x18] sm:$0xff]
      %v272 = vld [vmem:[%s268 + $0x20] sm:$0xff]
      %v273 = vld [vmem:[%s268 + $0x30] sm:$0xff]
      %v274 = vld [vmem:[%s268 + $0x38] sm:$0xff]
      %v275 = vld [vmem:[%s268 + $0x48] sm:$0xff]
      %v276 = vld [vmem:[%s268 + $0x50] sm:$0xff]
      %v277 = vld [vmem:[%s268 + $0x60] sm:$0xff]
      %v278 = vld [vmem:[%s268 + $0x68] sm:$0xff]
      %v279 = vld [vmem:[%s268 + $0x78] sm:$0xff]
      %v280 = vld [vmem:[%s268 + $0x80] sm:$0xff]
      %v281 = vld [vmem:[%s268 + $0x90] sm:$0xff]
      %v282 = vld [vmem:[%s268 + $0x98] sm:$0xff]
      %v283 = vld [vmem:[%s268 + $0xa8] sm:$0xff]
      %v284 = vld [vmem:[%s268 + $0xb0] sm:$0xff]
      %v285 = vld [vmem:[%s268 + $0xc0] sm:$0xff]
      %v286 = vld [vmem:[%s268 + $0xc8] sm:$0xff]
      %v287 = vld [vmem:[%s268 + $0xd8] sm:$0xff]
      %v288 = vld [vmem:[%s268 + $0xe0] sm:$0xff]
      %v289 = vld [vmem:[%s268 + $0xf0] sm:$0xff]
      %v290 = vld [vmem:[%s268 + $0xf8] sm:$0xff]
      %v291 = vld [vmem:[%s268 + $0x108] sm:$0xff]
      %v292 = vld [vmem:[%s268 + $0x110] sm:$0xff]
      %v293 = vld [vmem:[%s268 + $0x120] sm:$0xff]
      %v294 = vld [vmem:[%s268 + $0x128] sm:$0xff]
      %v295 = vld [vmem:[%s268 + $0x138] sm:$0xff]
      %v296 = vld [vmem:[%s268 + $0x140] sm:$0xff]
      %v297 = vld [vmem:[%s268 + $0x150] sm:$0xff]
      %v298 = vld [vmem:[%s268 + $0x158] sm:$0xff]
      %v299 = vld [vmem:[%s268 + $0x168] sm:$0xff]
      %v300 = vld [vmem:[%s268 + $0x170] sm:$0xff]
      %v301 = vld [vmem:[%s268 + $0x1] sm:$0xff]
      %v302 = vld [vmem:[%s268 + $0x9] sm:$0xff]
      %v303 = vld [vmem:[%s268 + $0x19] sm:$0xff]
      %v304 = vld [vmem:[%s268 + $0x21] sm:$0xff]
      %v305 = vld [vmem:[%s268 + $0x31] sm:$0xff]
      %v306 = vld [vmem:[%s268 + $0x39] sm:$0xff]
      %v307 = vld [vmem:[%s268 + $0x49] sm:$0xff]
      %v308 = vld [vmem:[%s268 + $0x51] sm:$0xff]
      %v309 = vld [vmem:[%s268 + $0x61] sm:$0xff]
      %v310 = vld [vmem:[%s268 + $0x69] sm:$0xff]
      %v311 = vld [vmem:[%s268 + $0x79] sm:$0xff]
      %v312 = vld [vmem:[%s268 + $0x81] sm:$0xff]
      %v313 = vld [vmem:[%s268 + $0x91] sm:$0xff]
      %v314 = vld [vmem:[%s268 + $0x99] sm:$0xff]
      %v315 = vld [vmem:[%s268 + $0xa9] sm:$0xff]
      %v316 = vld [vmem:[%s268 + $0xb1] sm:$0xff]
      %v317 = vld [vmem:[%s268 + $0xc1] sm:$0xff]
      %v318 = vld [vmem:[%s268 + $0xc9] sm:$0xff]
      %v319 = vld [vmem:[%s268 + $0xd9] sm:$0xff]
      %v320 = vld [vmem:[%s268 + $0xe1] sm:$0xff]
      %v321 = vld [vmem:[%s268 + $0xf1] sm:$0xff]
      %v322 = vld [vmem:[%s268 + $0xf9] sm:$0xff]
      %v323 = vld [vmem:[%s268 + $0x109] sm:$0xff]
      %v324 = vld [vmem:[%s268 + $0x111] sm:$0xff]
      %v325 = vld [vmem:[%s268 + $0x121] sm:$0xff]
      %v326 = vld [vmem:[%s268 + $0x129] sm:$0xff]
      %v327 = vld [vmem:[%s268 + $0x139] sm:$0xff]
      %v328 = vld [vmem:[%s268 + $0x141] sm:$0xff]
      %v329 = vld [vmem:[%s268 + $0x151] sm:$0xff]
      %v330 = vld [vmem:[%s268 + $0x159] sm:$0xff]
      %v331 = vld [vmem:[%s268 + $0x169] sm:$0xff]
      %v332 = vld [vmem:[%s268 + $0x171] sm:$0xff]
      %v333 = vld [vmem:[%s268 + $0x2] sm:$0xff]
      %v334 = vld [vmem:[%s268 + $0xa] sm:$0xff]
      %v335 = vld [vmem:[%s268 + $0x1a] sm:$0xff]
      %v336 = vld [vmem:[%s268 + $0x22] sm:$0xff]
      %v337 = vld [vmem:[%s268 + $0x32] sm:$0xff]
      %v338 = vld [vmem:[%s268 + $0x3a] sm:$0xff]
      %v339 = vld [vmem:[%s268 + $0x4a] sm:$0xff]
      %v340 = vld [vmem:[%s268 + $0x52] sm:$0xff]
      %v341 = vld [vmem:[%s268 + $0x62] sm:$0xff]
      %v342 = vld [vmem:[%s268 + $0x6a] sm:$0xff]
      %v343 = vld [vmem:[%s268 + $0x7a] sm:$0xff]
      %v344 = vld [vmem:[%s268 + $0x82] sm:$0xff]
      %v345 = vld [vmem:[%s268 + $0x92] sm:$0xff]
      %v346 = vld [vmem:[%s268 + $0x9a] sm:$0xff]
      %v347 = vld [vmem:[%s268 + $0xaa] sm:$0xff]
      %v348 = vld [vmem:[%s268 + $0xb2] sm:$0xff]
      %v349 = vld [vmem:[%s268 + $0xc2] sm:$0xff]
      %v350 = vld [vmem:[%s268 + $0xca] sm:$0xff]
      %v351 = vld [vmem:[%s268 + $0xda] sm:$0xff]
      %v352 = vld [vmem:[%s268 + $0xe2] sm:$0xff]
      %v353 = vld [vmem:[%s268 + $0xf2] sm:$0xff]
      %v354 = vld [vmem:[%s268 + $0xfa] sm:$0xff]
      %v355 = vld [vmem:[%s268 + $0x10a] sm:$0xff]
      %v356 = vld [vmem:[%s268 + $0x112] sm:$0xff]
      %v357 = vld [vmem:[%s268 + $0x122] sm:$0xff]
      %v358 = vld [vmem:[%s268 + $0x12a] sm:$0xff]
      %v359 = vld [vmem:[%s268 + $0x13a] sm:$0xff]
      %v360 = vld [vmem:[%s268 + $0x142] sm:$0xff]
      %v361 = vld [vmem:[%s268 + $0x152] sm:$0xff]
      %v362 = vld [vmem:[%s268 + $0x15a] sm:$0xff]
      %v363 = vld [vmem:[%s268 + $0x16a] sm:$0xff]
      %v364 = vld [vmem:[%s268 + $0x172] sm:$0xff]
      %s365 = scalar_lea.vmem %s165, 48
      %v366 = vld [vmem:[%s365] sm:$0xff]
      %v367 = vld [vmem:[%s365 + $0x8] sm:$0xff]
      %v368 = vld [vmem:[%s365 + $0x18] sm:$0xff]
      %v369 = vld [vmem:[%s365 + $0x20] sm:$0xff]
      %v370 = vld [vmem:[%s365 + $0x30] sm:$0xff]
      %v371 = vld [vmem:[%s365 + $0x38] sm:$0xff]
      %v372 = vld [vmem:[%s365 + $0x48] sm:$0xff]
      %v373 = vld [vmem:[%s365 + $0x50] sm:$0xff]
      %v374 = vld [vmem:[%s365 + $0x60] sm:$0xff]
      %v375 = vld [vmem:[%s365 + $0x68] sm:$0xff]
      %v376 = vld [vmem:[%s365 + $0x78] sm:$0xff]
      %v377 = vld [vmem:[%s365 + $0x80] sm:$0xff]
      %v378 = vld [vmem:[%s365 + $0x90] sm:$0xff]
      %v379 = vld [vmem:[%s365 + $0x98] sm:$0xff]
      %v380 = vld [vmem:[%s365 + $0xa8] sm:$0xff]
      %v381 = vld [vmem:[%s365 + $0xb0] sm:$0xff]
      %v382 = vld [vmem:[%s365 + $0xc0] sm:$0xff]
      %v383 = vld [vmem:[%s365 + $0xc8] sm:$0xff]
      %v384 = vld [vmem:[%s365 + $0xd8] sm:$0xff]
      %v385 = vld [vmem:[%s365 + $0xe0] sm:$0xff]
      %v386 = vld [vmem:[%s365 + $0xf0] sm:$0xff]
      %v387 = vld [vmem:[%s365 + $0xf8] sm:$0xff]
      %v388 = vld [vmem:[%s365 + $0x108] sm:$0xff]
      %v389 = vld [vmem:[%s365 + $0x110] sm:$0xff]
      %v390 = vld [vmem:[%s365 + $0x120] sm:$0xff]
      %v391 = vld [vmem:[%s365 + $0x128] sm:$0xff]
      %v392 = vld [vmem:[%s365 + $0x138] sm:$0xff]
      %v393 = vld [vmem:[%s365 + $0x140] sm:$0xff]
      %v394 = vld [vmem:[%s365 + $0x150] sm:$0xff]
      %v395 = vld [vmem:[%s365 + $0x158] sm:$0xff]
      %v396 = vld [vmem:[%s365 + $0x168] sm:$0xff]
      %v397 = vld [vmem:[%s365 + $0x170] sm:$0xff]
      %v398 = vld [vmem:[%s365 + $0x1] sm:$0xff]
      %v399 = vld [vmem:[%s365 + $0x9] sm:$0xff]
      %v400 = vld [vmem:[%s365 + $0x19] sm:$0xff]
      %v401 = vld [vmem:[%s365 + $0x21] sm:$0xff]
      %v402 = vld [vmem:[%s365 + $0x31] sm:$0xff]
      %v403 = vld [vmem:[%s365 + $0x39] sm:$0xff]
      %v404 = vld [vmem:[%s365 + $0x49] sm:$0xff]
      %v405 = vld [vmem:[%s365 + $0x51] sm:$0xff]
      %v406 = vld [vmem:[%s365 + $0x61] sm:$0xff]
      %v407 = vld [vmem:[%s365 + $0x69] sm:$0xff]
      %v408 = vld [vmem:[%s365 + $0x79] sm:$0xff]
      %v409 = vld [vmem:[%s365 + $0x81] sm:$0xff]
      %v410 = vld [vmem:[%s365 + $0x91] sm:$0xff]
      %v411 = vld [vmem:[%s365 + $0x99] sm:$0xff]
      %v412 = vld [vmem:[%s365 + $0xa9] sm:$0xff]
      %v413 = vld [vmem:[%s365 + $0xb1] sm:$0xff]
      %v414 = vld [vmem:[%s365 + $0xc1] sm:$0xff]
      %v415 = vld [vmem:[%s365 + $0xc9] sm:$0xff]
      %v416 = vld [vmem:[%s365 + $0xd9] sm:$0xff]
      %v417 = vld [vmem:[%s365 + $0xe1] sm:$0xff]
      %v418 = vld [vmem:[%s365 + $0xf1] sm:$0xff]
      %v419 = vld [vmem:[%s365 + $0xf9] sm:$0xff]
      %v420 = vld [vmem:[%s365 + $0x109] sm:$0xff]
      %v421 = vld [vmem:[%s365 + $0x111] sm:$0xff]
      %v422 = vld [vmem:[%s365 + $0x121] sm:$0xff]
      %v423 = vld [vmem:[%s365 + $0x129] sm:$0xff]
      %v424 = vld [vmem:[%s365 + $0x139] sm:$0xff]
      %v425 = vld [vmem:[%s365 + $0x141] sm:$0xff]
      %v426 = vld [vmem:[%s365 + $0x151] sm:$0xff]
      %v427 = vld [vmem:[%s365 + $0x159] sm:$0xff]
      %v428 = vld [vmem:[%s365 + $0x169] sm:$0xff]
      %v429 = vld [vmem:[%s365 + $0x171] sm:$0xff]
      %v430 = vld [vmem:[%s365 + $0x2] sm:$0xff]
      %v431 = vld [vmem:[%s365 + $0xa] sm:$0xff]
      %v432 = vld [vmem:[%s365 + $0x1a] sm:$0xff]
      %v433 = vld [vmem:[%s365 + $0x22] sm:$0xff]
      %v434 = vld [vmem:[%s365 + $0x32] sm:$0xff]
      %v435 = vld [vmem:[%s365 + $0x3a] sm:$0xff]
      %v436 = vld [vmem:[%s365 + $0x4a] sm:$0xff]
      %v437 = vld [vmem:[%s365 + $0x52] sm:$0xff]
      %v438 = vld [vmem:[%s365 + $0x62] sm:$0xff]
      %v439 = vld [vmem:[%s365 + $0x6a] sm:$0xff]
      %v440 = vld [vmem:[%s365 + $0x7a] sm:$0xff]
      %v441 = vld [vmem:[%s365 + $0x82] sm:$0xff]
      %v442 = vld [vmem:[%s365 + $0x92] sm:$0xff]
      %v443 = vld [vmem:[%s365 + $0x9a] sm:$0xff]
      %v444 = vld [vmem:[%s365 + $0xaa] sm:$0xff]
      %v445 = vld [vmem:[%s365 + $0xb2] sm:$0xff]
      %v446 = vld [vmem:[%s365 + $0xc2] sm:$0xff]
      %v447 = vld [vmem:[%s365 + $0xca] sm:$0xff]
      %v448 = vld [vmem:[%s365 + $0xda] sm:$0xff]
      %v449 = vld [vmem:[%s365 + $0xe2] sm:$0xff]
      %v450 = vld [vmem:[%s365 + $0xf2] sm:$0xff]
      %v451 = vld [vmem:[%s365 + $0xfa] sm:$0xff]
      %v452 = vld [vmem:[%s365 + $0x10a] sm:$0xff]
      %v453 = vld [vmem:[%s365 + $0x112] sm:$0xff]
      %v454 = vld [vmem:[%s365 + $0x122] sm:$0xff]
      %v455 = vld [vmem:[%s365 + $0x12a] sm:$0xff]
      %v456 = vld [vmem:[%s365 + $0x13a] sm:$0xff]
      %v457 = vld [vmem:[%s365 + $0x142] sm:$0xff]
      %v458 = vld [vmem:[%s365 + $0x152] sm:$0xff]
      %v459 = vld [vmem:[%s365 + $0x15a] sm:$0xff]
      %v460 = vld [vmem:[%s365 + $0x16a] sm:$0xff]
      %v461 = vld [vmem:[%s365 + $0x172] sm:$0xff]
      %494 = vrot.lane.b32.xlu0 %v204, 8
      %v495 = vpop.permute.xlu0 %494
      %496 = vrot.lane.b32.xlu0 %v205, 8
      %v497 = vpop.permute.xlu0 %496
      %498 = vrot.lane.b32.xlu0 %v206, 8
      %v499 = vpop.permute.xlu0 %498
      %500 = vrot.lane.b32.xlu0 %v207, 8
      %v501 = vpop.permute.xlu0 %500
      %502 = vrot.lane.b32.xlu0 %v208, 8
      %v503 = vpop.permute.xlu0 %502
      %504 = vrot.lane.b32.xlu0 %v209, 8
      %v505 = vpop.permute.xlu0 %504
      %506 = vrot.lane.b32.xlu0 %v210, 8
      %v507 = vpop.permute.xlu0 %506
      %508 = vrot.lane.b32.xlu0 %v211, 8
      %v509 = vpop.permute.xlu0 %508
      %510 = vrot.lane.b32.xlu0 %v212, 8
      %v511 = vpop.permute.xlu0 %510
      %512 = vrot.lane.b32.xlu0 %v213, 8
      %v513 = vpop.permute.xlu0 %512
      %514 = vrot.lane.b32.xlu0 %v214, 8
      %v515 = vpop.permute.xlu0 %514
      %516 = vrot.lane.b32.xlu0 %v215, 8
      %v517 = vpop.permute.xlu0 %516
      %518 = vrot.lane.b32.xlu0 %v216, 8
      %v519 = vpop.permute.xlu0 %518
      %520 = vrot.lane.b32.xlu0 %v217, 8
      %v521 = vpop.permute.xlu0 %520
      %522 = vrot.lane.b32.xlu0 %v218, 8
      %v523 = vpop.permute.xlu0 %522
      %524 = vrot.lane.b32.xlu0 %v219, 8
      %v525 = vpop.permute.xlu0 %524
      %526 = vrot.lane.b32.xlu0 %v220, 8
      %v527 = vpop.permute.xlu0 %526
      %528 = vrot.lane.b32.xlu0 %v221, 8
      %v529 = vpop.permute.xlu0 %528
      %530 = vrot.lane.b32.xlu0 %v222, 8
      %v531 = vpop.permute.xlu0 %530
      %532 = vrot.lane.b32.xlu0 %v223, 8
      %v533 = vpop.permute.xlu0 %532
      %534 = vrot.lane.b32.xlu0 %v224, 8
      %v535 = vpop.permute.xlu0 %534
      %536 = vrot.lane.b32.xlu0 %v225, 8
      %v537 = vpop.permute.xlu0 %536
      %538 = vrot.lane.b32.xlu0 %v226, 8
      %v539 = vpop.permute.xlu0 %538
      %540 = vrot.lane.b32.xlu0 %v227, 8
      %v541 = vpop.permute.xlu0 %540
      %542 = vrot.lane.b32.xlu0 %v228, 8
      %v543 = vpop.permute.xlu0 %542
      %544 = vrot.lane.b32.xlu0 %v229, 8
      %v545 = vpop.permute.xlu0 %544
      %546 = vrot.lane.b32.xlu0 %v230, 8
      %v547 = vpop.permute.xlu0 %546
      %548 = vrot.lane.b32.xlu0 %v231, 8
      %v549 = vpop.permute.xlu0 %548
      %550 = vrot.lane.b32.xlu0 %v232, 8
      %v551 = vpop.permute.xlu0 %550
      %552 = vrot.lane.b32.xlu0 %v233, 8
      %v553 = vpop.permute.xlu0 %552
      %554 = vrot.lane.b32.xlu0 %v234, 8
      %v555 = vpop.permute.xlu0 %554
      %556 = vrot.lane.b32.xlu0 %v235, 8
      %v557 = vpop.permute.xlu0 %556
      %622 = vrot.lane.b32.xlu0 %v236, 16
      %v623 = vpop.permute.xlu0 %622
      %624 = vrot.lane.b32.xlu0 %v237, 16
      %v625 = vpop.permute.xlu0 %624
      %626 = vrot.lane.b32.xlu0 %v238, 16
      %v627 = vpop.permute.xlu0 %626
      %628 = vrot.lane.b32.xlu0 %v239, 16
      %v629 = vpop.permute.xlu0 %628
      %630 = vrot.lane.b32.xlu0 %v240, 16
      %v631 = vpop.permute.xlu0 %630
      %632 = vrot.lane.b32.xlu0 %v241, 16
      %v633 = vpop.permute.xlu0 %632
      %634 = vrot.lane.b32.xlu0 %v242, 16
      %v635 = vpop.permute.xlu0 %634
      %636 = vrot.lane.b32.xlu0 %v243, 16
      %v637 = vpop.permute.xlu0 %636
      %638 = vrot.lane.b32.xlu0 %v244, 16
      %v639 = vpop.permute.xlu0 %638
      %640 = vrot.lane.b32.xlu0 %v245, 16
      %v641 = vpop.permute.xlu0 %640
      %642 = vrot.lane.b32.xlu0 %v246, 16
      %v643 = vpop.permute.xlu0 %642
      %644 = vrot.lane.b32.xlu0 %v247, 16
      %v645 = vpop.permute.xlu0 %644
      %646 = vrot.lane.b32.xlu0 %v248, 16
      %v647 = vpop.permute.xlu0 %646
      %648 = vrot.lane.b32.xlu0 %v249, 16
      %v649 = vpop.permute.xlu0 %648
      %650 = vrot.lane.b32.xlu0 %v250, 16
      %v651 = vpop.permute.xlu0 %650
      %652 = vrot.lane.b32.xlu0 %v251, 16
      %v653 = vpop.permute.xlu0 %652
      %654 = vrot.lane.b32.xlu0 %v252, 16
      %v655 = vpop.permute.xlu0 %654
      %656 = vrot.lane.b32.xlu0 %v253, 16
      %v657 = vpop.permute.xlu0 %656
      %658 = vrot.lane.b32.xlu0 %v254, 16
      %v659 = vpop.permute.xlu0 %658
      %660 = vrot.lane.b32.xlu0 %v255, 16
      %v661 = vpop.permute.xlu0 %660
      %662 = vrot.lane.b32.xlu0 %v256, 16
      %v663 = vpop.permute.xlu0 %662
      %664 = vrot.lane.b32.xlu0 %v257, 16
      %v665 = vpop.permute.xlu0 %664
      %666 = vrot.lane.b32.xlu0 %v258, 16
      %v667 = vpop.permute.xlu0 %666
      %668 = vrot.lane.b32.xlu0 %v259, 16
      %v669 = vpop.permute.xlu0 %668
      %670 = vrot.lane.b32.xlu0 %v260, 16
      %v671 = vpop.permute.xlu0 %670
      %672 = vrot.lane.b32.xlu0 %v261, 16
      %v673 = vpop.permute.xlu0 %672
      %674 = vrot.lane.b32.xlu0 %v262, 16
      %v675 = vpop.permute.xlu0 %674
      %676 = vrot.lane.b32.xlu0 %v263, 16
      %v677 = vpop.permute.xlu0 %676
      %678 = vrot.lane.b32.xlu0 %v264, 16
      %v679 = vpop.permute.xlu0 %678
      %680 = vrot.lane.b32.xlu0 %v265, 16
      %v681 = vpop.permute.xlu0 %680
      %682 = vrot.lane.b32.xlu0 %v266, 16
      %v683 = vpop.permute.xlu0 %682
      %684 = vrot.lane.b32.xlu0 %v267, 16
      %v685 = vpop.permute.xlu0 %684
      %750 = vrot.lane.b32.xlu0 %v269, 24
      %v751 = vpop.permute.xlu0 %750
      %752 = vrot.lane.b32.xlu0 %v270, 24
      %v753 = vpop.permute.xlu0 %752
      %754 = vrot.lane.b32.xlu0 %v271, 24
      %v755 = vpop.permute.xlu0 %754
      %756 = vrot.lane.b32.xlu0 %v272, 24
      %v757 = vpop.permute.xlu0 %756
      %758 = vrot.lane.b32.xlu0 %v273, 24
      %v759 = vpop.permute.xlu0 %758
      %760 = vrot.lane.b32.xlu0 %v274, 24
      %v761 = vpop.permute.xlu0 %760
      %762 = vrot.lane.b32.xlu0 %v275, 24
      %v763 = vpop.permute.xlu0 %762
      %764 = vrot.lane.b32.xlu0 %v276, 24
      %v765 = vpop.permute.xlu0 %764
      %766 = vrot.lane.b32.xlu0 %v277, 24
      %v767 = vpop.permute.xlu0 %766
      %768 = vrot.lane.b32.xlu0 %v278, 24
      %v769 = vpop.permute.xlu0 %768
      %770 = vrot.lane.b32.xlu0 %v279, 24
      %v771 = vpop.permute.xlu0 %770
      %772 = vrot.lane.b32.xlu0 %v280, 24
      %v773 = vpop.permute.xlu0 %772
      %774 = vrot.lane.b32.xlu0 %v281, 24
      %v775 = vpop.permute.xlu0 %774
      %776 = vrot.lane.b32.xlu0 %v282, 24
      %v777 = vpop.permute.xlu0 %776
      %778 = vrot.lane.b32.xlu0 %v283, 24
      %v779 = vpop.permute.xlu0 %778
      %780 = vrot.lane.b32.xlu0 %v284, 24
      %v781 = vpop.permute.xlu0 %780
      %782 = vrot.lane.b32.xlu0 %v285, 24
      %v783 = vpop.permute.xlu0 %782
      %784 = vrot.lane.b32.xlu0 %v286, 24
      %v785 = vpop.permute.xlu0 %784
      %786 = vrot.lane.b32.xlu0 %v287, 24
      %v787 = vpop.permute.xlu0 %786
      %788 = vrot.lane.b32.xlu0 %v288, 24
      %v789 = vpop.permute.xlu0 %788
      %790 = vrot.lane.b32.xlu0 %v289, 24
      %v791 = vpop.permute.xlu0 %790
      %792 = vrot.lane.b32.xlu0 %v290, 24
      %v793 = vpop.permute.xlu0 %792
      %794 = vrot.lane.b32.xlu0 %v291, 24
      %v795 = vpop.permute.xlu0 %794
      %796 = vrot.lane.b32.xlu0 %v292, 24
      %v797 = vpop.permute.xlu0 %796
      %798 = vrot.lane.b32.xlu0 %v293, 24
      %v799 = vpop.permute.xlu0 %798
      %800 = vrot.lane.b32.xlu0 %v294, 24
      %v801 = vpop.permute.xlu0 %800
      %802 = vrot.lane.b32.xlu0 %v295, 24
      %v803 = vpop.permute.xlu0 %802
      %804 = vrot.lane.b32.xlu0 %v296, 24
      %v805 = vpop.permute.xlu0 %804
      %806 = vrot.lane.b32.xlu0 %v297, 24
      %v807 = vpop.permute.xlu0 %806
      %808 = vrot.lane.b32.xlu0 %v298, 24
      %v809 = vpop.permute.xlu0 %808
      %810 = vrot.lane.b32.xlu0 %v299, 24
      %v811 = vpop.permute.xlu0 %810
      %812 = vrot.lane.b32.xlu0 %v300, 24
      %v813 = vpop.permute.xlu0 %812
      %878 = vrot.lane.b32.xlu0 %v301, 32
      %v879 = vpop.permute.xlu0 %878
      %880 = vrot.lane.b32.xlu0 %v302, 32
      %v881 = vpop.permute.xlu0 %880
      %882 = vrot.lane.b32.xlu0 %v303, 32
      %v883 = vpop.permute.xlu0 %882
      %884 = vrot.lane.b32.xlu0 %v304, 32
      %v885 = vpop.permute.xlu0 %884
      %886 = vrot.lane.b32.xlu0 %v305, 32
      %v887 = vpop.permute.xlu0 %886
      %888 = vrot.lane.b32.xlu0 %v306, 32
      %v889 = vpop.permute.xlu0 %888
      %890 = vrot.lane.b32.xlu0 %v307, 32
      %v891 = vpop.permute.xlu0 %890
      %892 = vrot.lane.b32.xlu0 %v308, 32
      %v893 = vpop.permute.xlu0 %892
      %894 = vrot.lane.b32.xlu0 %v309, 32
      %v895 = vpop.permute.xlu0 %894
      %896 = vrot.lane.b32.xlu0 %v310, 32
      %v897 = vpop.permute.xlu0 %896
      %898 = vrot.lane.b32.xlu0 %v311, 32
      %v899 = vpop.permute.xlu0 %898
      %900 = vrot.lane.b32.xlu0 %v312, 32
      %v901 = vpop.permute.xlu0 %900
      %902 = vrot.lane.b32.xlu0 %v313, 32
      %v903 = vpop.permute.xlu0 %902
      %904 = vrot.lane.b32.xlu0 %v314, 32
      %v905 = vpop.permute.xlu0 %904
      %906 = vrot.lane.b32.xlu0 %v315, 32
      %v907 = vpop.permute.xlu0 %906
      %908 = vrot.lane.b32.xlu0 %v316, 32
      %v909 = vpop.permute.xlu0 %908
      %910 = vrot.lane.b32.xlu0 %v317, 32
      %v911 = vpop.permute.xlu0 %910
      %912 = vrot.lane.b32.xlu0 %v318, 32
      %v913 = vpop.permute.xlu0 %912
      %914 = vrot.lane.b32.xlu0 %v319, 32
      %v915 = vpop.permute.xlu0 %914
      %916 = vrot.lane.b32.xlu0 %v320, 32
      %v917 = vpop.permute.xlu0 %916
      %918 = vrot.lane.b32.xlu0 %v321, 32
      %v919 = vpop.permute.xlu0 %918
      %920 = vrot.lane.b32.xlu0 %v322, 32
      %v921 = vpop.permute.xlu0 %920
      %922 = vrot.lane.b32.xlu0 %v323, 32
      %v923 = vpop.permute.xlu0 %922
      %924 = vrot.lane.b32.xlu0 %v324, 32
      %v925 = vpop.permute.xlu0 %924
      %926 = vrot.lane.b32.xlu0 %v325, 32
      %v927 = vpop.permute.xlu0 %926
      %928 = vrot.lane.b32.xlu0 %v326, 32
      %v929 = vpop.permute.xlu0 %928
      %930 = vrot.lane.b32.xlu0 %v327, 32
      %v931 = vpop.permute.xlu0 %930
      %932 = vrot.lane.b32.xlu0 %v328, 32
      %v933 = vpop.permute.xlu0 %932
      %934 = vrot.lane.b32.xlu0 %v329, 32
      %v935 = vpop.permute.xlu0 %934
      %936 = vrot.lane.b32.xlu0 %v330, 32
      %v937 = vpop.permute.xlu0 %936
      %938 = vrot.lane.b32.xlu0 %v331, 32
      %v939 = vpop.permute.xlu0 %938
      %940 = vrot.lane.b32.xlu0 %v332, 32
      %v941 = vpop.permute.xlu0 %940
      %1006 = vrot.lane.b32.xlu0 %v333, 40
      %v1007 = vpop.permute.xlu0 %1006
      %1008 = vrot.lane.b32.xlu0 %v334, 40
      %v1009 = vpop.permute.xlu0 %1008
      %1010 = vrot.lane.b32.xlu0 %v335, 40
      %v1011 = vpop.permute.xlu0 %1010
      %1012 = vrot.lane.b32.xlu0 %v336, 40
      %v1013 = vpop.permute.xlu0 %1012
      %1014 = vrot.lane.b32.xlu0 %v337, 40
      %v1015 = vpop.permute.xlu0 %1014
      %1016 = vrot.lane.b32.xlu0 %v338, 40
      %v1017 = vpop.permute.xlu0 %1016
      %1018 = vrot.lane.b32.xlu0 %v339, 40
      %v1019 = vpop.permute.xlu0 %1018
      %1020 = vrot.lane.b32.xlu0 %v340, 40
      %v1021 = vpop.permute.xlu0 %1020
      %1022 = vrot.lane.b32.xlu0 %v341, 40
      %v1023 = vpop.permute.xlu0 %1022
      %1024 = vrot.lane.b32.xlu0 %v342, 40
      %v1025 = vpop.permute.xlu0 %1024
      %1026 = vrot.lane.b32.xlu0 %v343, 40
      %v1027 = vpop.permute.xlu0 %1026
      %1028 = vrot.lane.b32.xlu0 %v344, 40
      %v1029 = vpop.permute.xlu0 %1028
      %1030 = vrot.lane.b32.xlu0 %v345, 40
      %v1031 = vpop.permute.xlu0 %1030
      %1032 = vrot.lane.b32.xlu0 %v346, 40
      %v1033 = vpop.permute.xlu0 %1032
      %1034 = vrot.lane.b32.xlu0 %v347, 40
      %v1035 = vpop.permute.xlu0 %1034
      %1036 = vrot.lane.b32.xlu0 %v348, 40
      %v1037 = vpop.permute.xlu0 %1036
      %1038 = vrot.lane.b32.xlu0 %v349, 40
      %v1039 = vpop.permute.xlu0 %1038
      %1040 = vrot.lane.b32.xlu0 %v350, 40
      %v1041 = vpop.permute.xlu0 %1040
      %1042 = vrot.lane.b32.xlu0 %v351, 40
      %v1043 = vpop.permute.xlu0 %1042
      %1044 = vrot.lane.b32.xlu0 %v352, 40
      %v1045 = vpop.permute.xlu0 %1044
      %1046 = vrot.lane.b32.xlu0 %v353, 40
      %v1047 = vpop.permute.xlu0 %1046
      %1048 = vrot.lane.b32.xlu0 %v354, 40
      %v1049 = vpop.permute.xlu0 %1048
      %1050 = vrot.lane.b32.xlu0 %v355, 40
      %v1051 = vpop.permute.xlu0 %1050
      %1052 = vrot.lane.b32.xlu0 %v356, 40
      %v1053 = vpop.permute.xlu0 %1052
      %1054 = vrot.lane.b32.xlu0 %v357, 40
      %v1055 = vpop.permute.xlu0 %1054
      %1056 = vrot.lane.b32.xlu0 %v358, 40
      %v1057 = vpop.permute.xlu0 %1056
      %1058 = vrot.lane.b32.xlu0 %v359, 40
      %v1059 = vpop.permute.xlu0 %1058
      %1060 = vrot.lane.b32.xlu0 %v360, 40
      %v1061 = vpop.permute.xlu0 %1060
      %1062 = vrot.lane.b32.xlu0 %v361, 40
      %v1063 = vpop.permute.xlu0 %1062
      %1064 = vrot.lane.b32.xlu0 %v362, 40
      %v1065 = vpop.permute.xlu0 %1064
      %1066 = vrot.lane.b32.xlu0 %v363, 40
      %v1067 = vpop.permute.xlu0 %1066
      %1068 = vrot.lane.b32.xlu0 %v364, 40
      %v1069 = vpop.permute.xlu0 %1068
      %1134 = vrot.lane.b32.xlu0 %v366, 48
      %v1135 = vpop.permute.xlu0 %1134
      %1136 = vrot.lane.b32.xlu0 %v367, 48
      %v1137 = vpop.permute.xlu0 %1136
      %1138 = vrot.lane.b32.xlu0 %v368, 48
      %v1139 = vpop.permute.xlu0 %1138
      %1140 = vrot.lane.b32.xlu0 %v369, 48
      %v1141 = vpop.permute.xlu0 %1140
      %1142 = vrot.lane.b32.xlu0 %v370, 48
      %v1143 = vpop.permute.xlu0 %1142
      %1144 = vrot.lane.b32.xlu0 %v371, 48
      %v1145 = vpop.permute.xlu0 %1144
      %1146 = vrot.lane.b32.xlu0 %v372, 48
      %v1147 = vpop.permute.xlu0 %1146
      %1148 = vrot.lane.b32.xlu0 %v373, 48
      %v1149 = vpop.permute.xlu0 %1148
      %1150 = vrot.lane.b32.xlu0 %v374, 48
      %v1151 = vpop.permute.xlu0 %1150
      %1152 = vrot.lane.b32.xlu0 %v375, 48
      %v1153 = vpop.permute.xlu0 %1152
      %1154 = vrot.lane.b32.xlu0 %v376, 48
      %v1155 = vpop.permute.xlu0 %1154
      %1156 = vrot.lane.b32.xlu0 %v377, 48
      %v1157 = vpop.permute.xlu0 %1156
      %1158 = vrot.lane.b32.xlu0 %v378, 48
      %v1159 = vpop.permute.xlu0 %1158
      %1160 = vrot.lane.b32.xlu0 %v379, 48
      %v1161 = vpop.permute.xlu0 %1160
      %1162 = vrot.lane.b32.xlu0 %v380, 48
      %v1163 = vpop.permute.xlu0 %1162
      %1164 = vrot.lane.b32.xlu0 %v381, 48
      %v1165 = vpop.permute.xlu0 %1164
      %1166 = vrot.lane.b32.xlu0 %v382, 48
      %v1167 = vpop.permute.xlu0 %1166
      %1168 = vrot.lane.b32.xlu0 %v383, 48
      %v1169 = vpop.permute.xlu0 %1168
      %1170 = vrot.lane.b32.xlu0 %v384, 48
      %v1171 = vpop.permute.xlu0 %1170
      %1172 = vrot.lane.b32.xlu0 %v385, 48
      %v1173 = vpop.permute.xlu0 %1172
      %1174 = vrot.lane.b32.xlu0 %v386, 48
      %v1175 = vpop.permute.xlu0 %1174
      %1176 = vrot.lane.b32.xlu0 %v387, 48
      %v1177 = vpop.permute.xlu0 %1176
      %1178 = vrot.lane.b32.xlu0 %v388, 48
      %v1179 = vpop.permute.xlu0 %1178
      %1180 = vrot.lane.b32.xlu0 %v389, 48
      %v1181 = vpop.permute.xlu0 %1180
      %1182 = vrot.lane.b32.xlu0 %v390, 48
      %v1183 = vpop.permute.xlu0 %1182
      %1184 = vrot.lane.b32.xlu0 %v391, 48
      %v1185 = vpop.permute.xlu0 %1184
      %1186 = vrot.lane.b32.xlu0 %v392, 48
      %v1187 = vpop.permute.xlu0 %1186
      %1188 = vrot.lane.b32.xlu0 %v393, 48
      %v1189 = vpop.permute.xlu0 %1188
      %1190 = vrot.lane.b32.xlu0 %v394, 48
      %v1191 = vpop.permute.xlu0 %1190
      %1192 = vrot.lane.b32.xlu0 %v395, 48
      %v1193 = vpop.permute.xlu0 %1192
      %1194 = vrot.lane.b32.xlu0 %v396, 48
      %v1195 = vpop.permute.xlu0 %1194
      %1196 = vrot.lane.b32.xlu0 %v397, 48
      %v1197 = vpop.permute.xlu0 %1196
      %1262 = vrot.lane.b32.xlu0 %v398, 56
      %v1263 = vpop.permute.xlu0 %1262
      %1264 = vrot.lane.b32.xlu0 %v399, 56
      %v1265 = vpop.permute.xlu0 %1264
      %1266 = vrot.lane.b32.xlu0 %v400, 56
      %v1267 = vpop.permute.xlu0 %1266
      %1268 = vrot.lane.b32.xlu0 %v401, 56
      %v1269 = vpop.permute.xlu0 %1268
      %1270 = vrot.lane.b32.xlu0 %v402, 56
      %v1271 = vpop.permute.xlu0 %1270
      %1272 = vrot.lane.b32.xlu0 %v403, 56
      %v1273 = vpop.permute.xlu0 %1272
      %1274 = vrot.lane.b32.xlu0 %v404, 56
      %v1275 = vpop.permute.xlu0 %1274
      %1276 = vrot.lane.b32.xlu0 %v405, 56
      %v1277 = vpop.permute.xlu0 %1276
      %1278 = vrot.lane.b32.xlu0 %v406, 56
      %v1279 = vpop.permute.xlu0 %1278
      %1280 = vrot.lane.b32.xlu0 %v407, 56
      %v1281 = vpop.permute.xlu0 %1280
      %1282 = vrot.lane.b32.xlu0 %v408, 56
      %v1283 = vpop.permute.xlu0 %1282
      %1284 = vrot.lane.b32.xlu0 %v409, 56
      %v1285 = vpop.permute.xlu0 %1284
      %1286 = vrot.lane.b32.xlu0 %v410, 56
      %v1287 = vpop.permute.xlu0 %1286
      %1288 = vrot.lane.b32.xlu0 %v411, 56
      %v1289 = vpop.permute.xlu0 %1288
      %1290 = vrot.lane.b32.xlu0 %v412, 56
      %v1291 = vpop.permute.xlu0 %1290
      %1292 = vrot.lane.b32.xlu0 %v413, 56
      %v1293 = vpop.permute.xlu0 %1292
      %1294 = vrot.lane.b32.xlu0 %v414, 56
      %v1295 = vpop.permute.xlu0 %1294
      %1296 = vrot.lane.b32.xlu0 %v415, 56
      %v1297 = vpop.permute.xlu0 %1296
      %1298 = vrot.lane.b32.xlu0 %v416, 56
      %v1299 = vpop.permute.xlu0 %1298
      %1300 = vrot.lane.b32.xlu0 %v417, 56
      %v1301 = vpop.permute.xlu0 %1300
      %1302 = vrot.lane.b32.xlu0 %v418, 56
      %v1303 = vpop.permute.xlu0 %1302
      %1304 = vrot.lane.b32.xlu0 %v419, 56
      %v1305 = vpop.permute.xlu0 %1304
      %1306 = vrot.lane.b32.xlu0 %v420, 56
      %v1307 = vpop.permute.xlu0 %1306
      %1308 = vrot.lane.b32.xlu0 %v421, 56
      %v1309 = vpop.permute.xlu0 %1308
      %1310 = vrot.lane.b32.xlu0 %v422, 56
      %v1311 = vpop.permute.xlu0 %1310
      %1312 = vrot.lane.b32.xlu0 %v423, 56
      %v1313 = vpop.permute.xlu0 %1312
      %1314 = vrot.lane.b32.xlu0 %v424, 56
      %v1315 = vpop.permute.xlu0 %1314
      %1316 = vrot.lane.b32.xlu0 %v425, 56
      %v1317 = vpop.permute.xlu0 %1316
      %1318 = vrot.lane.b32.xlu0 %v426, 56
      %v1319 = vpop.permute.xlu0 %1318
      %1320 = vrot.lane.b32.xlu0 %v427, 56
      %v1321 = vpop.permute.xlu0 %1320
      %1322 = vrot.lane.b32.xlu0 %v428, 56
      %v1323 = vpop.permute.xlu0 %1322
      %1324 = vrot.lane.b32.xlu0 %v429, 56
      %v1325 = vpop.permute.xlu0 %1324
      %1390 = vrot.lane.b32.xlu0 %v430, 64
      %v1391 = vpop.permute.xlu0 %1390
      %1392 = vrot.lane.b32.xlu0 %v431, 64
      %v1393 = vpop.permute.xlu0 %1392
      %1394 = vrot.lane.b32.xlu0 %v432, 64
      %v1395 = vpop.permute.xlu0 %1394
      %1396 = vrot.lane.b32.xlu0 %v433, 64
      %v1397 = vpop.permute.xlu0 %1396
      %1398 = vrot.lane.b32.xlu0 %v434, 64
      %v1399 = vpop.permute.xlu0 %1398
      %1400 = vrot.lane.b32.xlu0 %v435, 64
      %v1401 = vpop.permute.xlu0 %1400
      %1402 = vrot.lane.b32.xlu0 %v436, 64
      %v1403 = vpop.permute.xlu0 %1402
      %1404 = vrot.lane.b32.xlu0 %v437, 64
      %v1405 = vpop.permute.xlu0 %1404
      %1406 = vrot.lane.b32.xlu0 %v438, 64
      %v1407 = vpop.permute.xlu0 %1406
      %1408 = vrot.lane.b32.xlu0 %v439, 64
      %v1409 = vpop.permute.xlu0 %1408
      %1410 = vrot.lane.b32.xlu0 %v440, 64
      %v1411 = vpop.permute.xlu0 %1410
      %1412 = vrot.lane.b32.xlu0 %v441, 64
      %v1413 = vpop.permute.xlu0 %1412
      %1414 = vrot.lane.b32.xlu0 %v442, 64
      %v1415 = vpop.permute.xlu0 %1414
      %1416 = vrot.lane.b32.xlu0 %v443, 64
      %v1417 = vpop.permute.xlu0 %1416
      %1418 = vrot.lane.b32.xlu0 %v444, 64
      %v1419 = vpop.permute.xlu0 %1418
      %1420 = vrot.lane.b32.xlu0 %v445, 64
      %v1421 = vpop.permute.xlu0 %1420
      %1422 = vrot.lane.b32.xlu0 %v446, 64
      %v1423 = vpop.permute.xlu0 %1422
      %1424 = vrot.lane.b32.xlu0 %v447, 64
      %v1425 = vpop.permute.xlu0 %1424
      %1426 = vrot.lane.b32.xlu0 %v448, 64
      %v1427 = vpop.permute.xlu0 %1426
      %1428 = vrot.lane.b32.xlu0 %v449, 64
      %v1429 = vpop.permute.xlu0 %1428
      %1430 = vrot.lane.b32.xlu0 %v450, 64
      %v1431 = vpop.permute.xlu0 %1430
      %1432 = vrot.lane.b32.xlu0 %v451, 64
      %v1433 = vpop.permute.xlu0 %1432
      %1434 = vrot.lane.b32.xlu0 %v452, 64
      %v1435 = vpop.permute.xlu0 %1434
      %1436 = vrot.lane.b32.xlu0 %v453, 64
      %v1437 = vpop.permute.xlu0 %1436
      %1438 = vrot.lane.b32.xlu0 %v454, 64
      %v1439 = vpop.permute.xlu0 %1438
      %1440 = vrot.lane.b32.xlu0 %v455, 64
      %v1441 = vpop.permute.xlu0 %1440
      %1442 = vrot.lane.b32.xlu0 %v456, 64
      %v1443 = vpop.permute.xlu0 %1442
      %1444 = vrot.lane.b32.xlu0 %v457, 64
      %v1445 = vpop.permute.xlu0 %1444
      %1446 = vrot.lane.b32.xlu0 %v458, 64
      %v1447 = vpop.permute.xlu0 %1446
      %1448 = vrot.lane.b32.xlu0 %v459, 64
      %v1449 = vpop.permute.xlu0 %1448
      %1450 = vrot.lane.b32.xlu0 %v460, 64
      %v1451 = vpop.permute.xlu0 %1450
      %1452 = vrot.lane.b32.xlu0 %v461, 64
      %v1453 = vpop.permute.xlu0 %1452
      %vm1486 = vcmask 64512
      %v1487 = vsel %vm1486, %v172, %v495
      %v1488 = vsel %vm1486, %v173, %v497
      %v1489 = vsel %vm1486, %v174, %v499
      %v1490 = vsel %vm1486, %v175, %v501
      %v1491 = vsel %vm1486, %v176, %v503
      %v1492 = vsel %vm1486, %v177, %v505
      %v1493 = vsel %vm1486, %v178, %v507
      %v1494 = vsel %vm1486, %v179, %v509
      %v1495 = vsel %vm1486, %v180, %v511
      %v1496 = vsel %vm1486, %v181, %v513
      %v1497 = vsel %vm1486, %v182, %v515
      %v1498 = vsel %vm1486, %v183, %v517
      %v1499 = vsel %vm1486, %v184, %v519
      %v1500 = vsel %vm1486, %v185, %v521
      %v1501 = vsel %vm1486, %v186, %v523
      %v1502 = vsel %vm1486, %v187, %v525
      %v1503 = vsel %vm1486, %v188, %v527
      %v1504 = vsel %vm1486, %v189, %v529
      %v1505 = vsel %vm1486, %v190, %v531
      %v1506 = vsel %vm1486, %v191, %v533
      %v1507 = vsel %vm1486, %v192, %v535
      %v1508 = vsel %vm1486, %v193, %v537
      %v1509 = vsel %vm1486, %v194, %v539
      %v1510 = vsel %vm1486, %v195, %v541
      %v1511 = vsel %vm1486, %v196, %v543
      %v1512 = vsel %vm1486, %v197, %v545
      %v1513 = vsel %vm1486, %v198, %v547
      %v1514 = vsel %vm1486, %v199, %v549
      %v1515 = vsel %vm1486, %v200, %v551
      %v1516 = vsel %vm1486, %v201, %v553
      %v1517 = vsel %vm1486, %v202, %v555
      %v1518 = vsel %vm1486, %v203, %v557
      %vm1519 = vcmask 130048
      %v1520 = vsel %vm1519, %v1487, %v623
      %v1521 = vsel %vm1519, %v1488, %v625
      %v1522 = vsel %vm1519, %v1489, %v627
      %v1523 = vsel %vm1519, %v1490, %v629
      %v1524 = vsel %vm1519, %v1491, %v631
      %v1525 = vsel %vm1519, %v1492, %v633
      %v1526 = vsel %vm1519, %v1493, %v635
      %v1527 = vsel %vm1519, %v1494, %v637
      %v1528 = vsel %vm1519, %v1495, %v639
      %v1529 = vsel %vm1519, %v1496, %v641
      %v1530 = vsel %vm1519, %v1497, %v643
      %v1531 = vsel %vm1519, %v1498, %v645
      %v1532 = vsel %vm1519, %v1499, %v647
      %v1533 = vsel %vm1519, %v1500, %v649
      %v1534 = vsel %vm1519, %v1501, %v651
      %v1535 = vsel %vm1519, %v1502, %v653
      %v1536 = vsel %vm1519, %v1503, %v655
      %v1537 = vsel %vm1519, %v1504, %v657
      %v1538 = vsel %vm1519, %v1505, %v659
      %v1539 = vsel %vm1519, %v1506, %v661
      %v1540 = vsel %vm1519, %v1507, %v663
      %v1541 = vsel %vm1519, %v1508, %v665
      %v1542 = vsel %vm1519, %v1509, %v667
      %v1543 = vsel %vm1519, %v1510, %v669
      %v1544 = vsel %vm1519, %v1511, %v671
      %v1545 = vsel %vm1519, %v1512, %v673
      %v1546 = vsel %vm1519, %v1513, %v675
      %v1547 = vsel %vm1519, %v1514, %v677
      %v1548 = vsel %vm1519, %v1515, %v679
      %v1549 = vsel %vm1519, %v1516, %v681
      %v1550 = vsel %vm1519, %v1517, %v683
      %v1551 = vsel %vm1519, %v1518, %v685
      %vm1552 = vcmask 195584
      %v1553 = vsel %vm1552, %v1520, %v751
      %v1554 = vsel %vm1552, %v1521, %v753
      %v1555 = vsel %vm1552, %v1522, %v755
      %v1556 = vsel %vm1552, %v1523, %v757
      %v1557 = vsel %vm1552, %v1524, %v759
      %v1558 = vsel %vm1552, %v1525, %v761
      %v1559 = vsel %vm1552, %v1526, %v763
      %v1560 = vsel %vm1552, %v1527, %v765
      %v1561 = vsel %vm1552, %v1528, %v767
      %v1562 = vsel %vm1552, %v1529, %v769
      %v1563 = vsel %vm1552, %v1530, %v771
      %v1564 = vsel %vm1552, %v1531, %v773
      %v1565 = vsel %vm1552, %v1532, %v775
      %v1566 = vsel %vm1552, %v1533, %v777
      %v1567 = vsel %vm1552, %v1534, %v779
      %v1568 = vsel %vm1552, %v1535, %v781
      %v1569 = vsel %vm1552, %v1536, %v783
      %v1570 = vsel %vm1552, %v1537, %v785
      %v1571 = vsel %vm1552, %v1538, %v787
      %v1572 = vsel %vm1552, %v1539, %v789
      %v1573 = vsel %vm1552, %v1540, %v791
      %v1574 = vsel %vm1552, %v1541, %v793
      %v1575 = vsel %vm1552, %v1542, %v795
      %v1576 = vsel %vm1552, %v1543, %v797
      %v1577 = vsel %vm1552, %v1544, %v799
      %v1578 = vsel %vm1552, %v1545, %v801
      %v1579 = vsel %vm1552, %v1546, %v803
      %v1580 = vsel %vm1552, %v1547, %v805
      %v1581 = vsel %vm1552, %v1548, %v807
      %v1582 = vsel %vm1552, %v1549, %v809
      %v1583 = vsel %vm1552, %v1550, %v811
      %v1584 = vsel %vm1552, %v1551, %v813
      %vm1585 = vcmask 261120
      %v1586 = vsel %vm1585, %v1553, %v879
      %v1587 = vsel %vm1585, %v1554, %v881
      %v1588 = vsel %vm1585, %v1555, %v883
      %v1589 = vsel %vm1585, %v1556, %v885
      %v1590 = vsel %vm1585, %v1557, %v887
      %v1591 = vsel %vm1585, %v1558, %v889
      %v1592 = vsel %vm1585, %v1559, %v891
      %v1593 = vsel %vm1585, %v1560, %v893
      %v1594 = vsel %vm1585, %v1561, %v895
      %v1595 = vsel %vm1585, %v1562, %v897
      %v1596 = vsel %vm1585, %v1563, %v899
      %v1597 = vsel %vm1585, %v1564, %v901
      %v1598 = vsel %vm1585, %v1565, %v903
      %v1599 = vsel %vm1585, %v1566, %v905
      %v1600 = vsel %vm1585, %v1567, %v907
      %v1601 = vsel %vm1585, %v1568, %v909
      %v1602 = vsel %vm1585, %v1569, %v911
      %v1603 = vsel %vm1585, %v1570, %v913
      %v1604 = vsel %vm1585, %v1571, %v915
      %v1605 = vsel %vm1585, %v1572, %v917
      %v1606 = vsel %vm1585, %v1573, %v919
      %v1607 = vsel %vm1585, %v1574, %v921
      %v1608 = vsel %vm1585, %v1575, %v923
      %v1609 = vsel %vm1585, %v1576, %v925
      %v1610 = vsel %vm1585, %v1577, %v927
      %v1611 = vsel %vm1585, %v1578, %v929
      %v1612 = vsel %vm1585, %v1579, %v931
      %v1613 = vsel %vm1585, %v1580, %v933
      %v1614 = vsel %vm1585, %v1581, %v935
      %v1615 = vsel %vm1585, %v1582, %v937
      %v1616 = vsel %vm1585, %v1583, %v939
      %v1617 = vsel %vm1585, %v1584, %v941
      %vm1618 = vcmask 326656
      %v1619 = vsel %vm1618, %v1586, %v1007
      %v1620 = vsel %vm1618, %v1587, %v1009
      %v1621 = vsel %vm1618, %v1588, %v1011
      %v1622 = vsel %vm1618, %v1589, %v1013
      %v1623 = vsel %vm1618, %v1590, %v1015
      %v1624 = vsel %vm1618, %v1591, %v1017
      %v1625 = vsel %vm1618, %v1592, %v1019
      %v1626 = vsel %vm1618, %v1593, %v1021
      %v1627 = vsel %vm1618, %v1594, %v1023
      %v1628 = vsel %vm1618, %v1595, %v1025
      %v1629 = vsel %vm1618, %v1596, %v1027
      %v1630 = vsel %vm1618, %v1597, %v1029
      %v1631 = vsel %vm1618, %v1598, %v1031
      %v1632 = vsel %vm1618, %v1599, %v1033
      %v1633 = vsel %vm1618, %v1600, %v1035
      %v1634 = vsel %vm1618, %v1601, %v1037
      %v1635 = vsel %vm1618, %v1602, %v1039
      %v1636 = vsel %vm1618, %v1603, %v1041
      %v1637 = vsel %vm1618, %v1604, %v1043
      %v1638 = vsel %vm1618, %v1605, %v1045
      %v1639 = vsel %vm1618, %v1606, %v1047
      %v1640 = vsel %vm1618, %v1607, %v1049
      %v1641 = vsel %vm1618, %v1608, %v1051
      %v1642 = vsel %vm1618, %v1609, %v1053
      %v1643 = vsel %vm1618, %v1610, %v1055
      %v1644 = vsel %vm1618, %v1611, %v1057
      %v1645 = vsel %vm1618, %v1612, %v1059
      %v1646 = vsel %vm1618, %v1613, %v1061
      %v1647 = vsel %vm1618, %v1614, %v1063
      %v1648 = vsel %vm1618, %v1615, %v1065
      %v1649 = vsel %vm1618, %v1616, %v1067
      %v1650 = vsel %vm1618, %v1617, %v1069
      %vm1651 = vcmask 392192
      %v1652 = vsel %vm1651, %v1619, %v1135
      %v1653 = vsel %vm1651, %v1620, %v1137
      %v1654 = vsel %vm1651, %v1621, %v1139
      %v1655 = vsel %vm1651, %v1622, %v1141
      %v1656 = vsel %vm1651, %v1623, %v1143
      %v1657 = vsel %vm1651, %v1624, %v1145
      %v1658 = vsel %vm1651, %v1625, %v1147
      %v1659 = vsel %vm1651, %v1626, %v1149
      %v1660 = vsel %vm1651, %v1627, %v1151
      %v1661 = vsel %vm1651, %v1628, %v1153
      %v1662 = vsel %vm1651, %v1629, %v1155
      %v1663 = vsel %vm1651, %v1630, %v1157
      %v1664 = vsel %vm1651, %v1631, %v1159
      %v1665 = vsel %vm1651, %v1632, %v1161
      %v1666 = vsel %vm1651, %v1633, %v1163
      %v1667 = vsel %vm1651, %v1634, %v1165
      %v1668 = vsel %vm1651, %v1635, %v1167
      %v1669 = vsel %vm1651, %v1636, %v1169
      %v1670 = vsel %vm1651, %v1637, %v1171
      %v1671 = vsel %vm1651, %v1638, %v1173
      %v1672 = vsel %vm1651, %v1639, %v1175
      %v1673 = vsel %vm1651, %v1640, %v1177
      %v1674 = vsel %vm1651, %v1641, %v1179
      %v1675 = vsel %vm1651, %v1642, %v1181
      %v1676 = vsel %vm1651, %v1643, %v1183
      %v1677 = vsel %vm1651, %v1644, %v1185
      %v1678 = vsel %vm1651, %v1645, %v1187
      %v1679 = vsel %vm1651, %v1646, %v1189
      %v1680 = vsel %vm1651, %v1647, %v1191
      %v1681 = vsel %vm1651, %v1648, %v1193
      %v1682 = vsel %vm1651, %v1649, %v1195
      %v1683 = vsel %vm1651, %v1650, %v1197
      %vm1684 = vcmask 457728
      %v1685 = vsel %vm1684, %v1652, %v1263
      %v1686 = vsel %vm1684, %v1653, %v1265
      %v1687 = vsel %vm1684, %v1654, %v1267
      %v1688 = vsel %vm1684, %v1655, %v1269
      %v1689 = vsel %vm1684, %v1656, %v1271
      %v1690 = vsel %vm1684, %v1657, %v1273
      %v1691 = vsel %vm1684, %v1658, %v1275
      %v1692 = vsel %vm1684, %v1659, %v1277
      %v1693 = vsel %vm1684, %v1660, %v1279
      %v1694 = vsel %vm1684, %v1661, %v1281
      %v1695 = vsel %vm1684, %v1662, %v1283
      %v1696 = vsel %vm1684, %v1663, %v1285
      %v1697 = vsel %vm1684, %v1664, %v1287
      %v1698 = vsel %vm1684, %v1665, %v1289
      %v1699 = vsel %vm1684, %v1666, %v1291
      %v1700 = vsel %vm1684, %v1667, %v1293
      %v1701 = vsel %vm1684, %v1668, %v1295
      %v1702 = vsel %vm1684, %v1669, %v1297
      %v1703 = vsel %vm1684, %v1670, %v1299
      %v1704 = vsel %vm1684, %v1671, %v1301
      %v1705 = vsel %vm1684, %v1672, %v1303
      %v1706 = vsel %vm1684, %v1673, %v1305
      %v1707 = vsel %vm1684, %v1674, %v1307
      %v1708 = vsel %vm1684, %v1675, %v1309
      %v1709 = vsel %vm1684, %v1676, %v1311
      %v1710 = vsel %vm1684, %v1677, %v1313
      %v1711 = vsel %vm1684, %v1678, %v1315
      %v1712 = vsel %vm1684, %v1679, %v1317
      %v1713 = vsel %vm1684, %v1680, %v1319
      %v1714 = vsel %vm1684, %v1681, %v1321
      %v1715 = vsel %vm1684, %v1682, %v1323
      %v1716 = vsel %vm1684, %v1683, %v1325
      %vm1717 = vcmask 523264
      %v1718 = vsel %vm1717, %v1685, %v1391
      %v1719 = vsel %vm1717, %v1686, %v1393
      %v1720 = vsel %vm1717, %v1687, %v1395
      %v1721 = vsel %vm1717, %v1688, %v1397
      %v1722 = vsel %vm1717, %v1689, %v1399
      %v1723 = vsel %vm1717, %v1690, %v1401
      %v1724 = vsel %vm1717, %v1691, %v1403
      %v1725 = vsel %vm1717, %v1692, %v1405
      %v1726 = vsel %vm1717, %v1693, %v1407
      %v1727 = vsel %vm1717, %v1694, %v1409
      %v1728 = vsel %vm1717, %v1695, %v1411
      %v1729 = vsel %vm1717, %v1696, %v1413
      %v1730 = vsel %vm1717, %v1697, %v1415
      %v1731 = vsel %vm1717, %v1698, %v1417
      %v1732 = vsel %vm1717, %v1699, %v1419
      %v1733 = vsel %vm1717, %v1700, %v1421
      %v1734 = vsel %vm1717, %v1701, %v1423
      %v1735 = vsel %vm1717, %v1702, %v1425
      %v1736 = vsel %vm1717, %v1703, %v1427
      %v1737 = vsel %vm1717, %v1704, %v1429
      %v1738 = vsel %vm1717, %v1705, %v1431
      %v1739 = vsel %vm1717, %v1706, %v1433
      %v1740 = vsel %vm1717, %v1707, %v1435
      %v1741 = vsel %vm1717, %v1708, %v1437
      %v1742 = vsel %vm1717, %v1709, %v1439
      %v1743 = vsel %vm1717, %v1710, %v1441
      %v1744 = vsel %vm1717, %v1711, %v1443
      %v1745 = vsel %vm1717, %v1712, %v1445
      %v1746 = vsel %vm1717, %v1713, %v1447
      %v1747 = vsel %vm1717, %v1714, %v1449
      %v1748 = vsel %vm1717, %v1715, %v1451
      %v1749 = vsel %vm1717, %v1716, %v1453
      %v1750 = vpack.c.bf16 %v1719, %v1718
      %v1751 = vpack.c.bf16 %v1721, %v1720
      %v1752 = vpack.c.bf16 %v1723, %v1722
      %v1753 = vpack.c.bf16 %v1725, %v1724
      %v1754 = vpack.c.bf16 %v1727, %v1726
      %v1755 = vpack.c.bf16 %v1729, %v1728
      %v1756 = vpack.c.bf16 %v1731, %v1730
      %v1757 = vpack.c.bf16 %v1733, %v1732
      %v1758 = vpack.c.bf16 %v1735, %v1734
      %v1759 = vpack.c.bf16 %v1737, %v1736
      %v1760 = vpack.c.bf16 %v1739, %v1738
      %v1761 = vpack.c.bf16 %v1741, %v1740
      %v1762 = vpack.c.bf16 %v1743, %v1742
      %v1763 = vpack.c.bf16 %v1745, %v1744
      %v1764 = vpack.c.bf16 %v1747, %v1746
      %v1765 = vpack.c.bf16 %v1749, %v1748
      %v1766 = vld [vmem:[%s1] sm:$0xff]
      %v1767 = vld [vmem:[%s1 + $0x8] sm:$0xff]
      %v1768 = vld [vmem:[%s1 + $0x10] sm:$0xff]
      %v1769 = vld [vmem:[%s1 + $0x18] sm:$0xff]
      %v1770 = vld [vmem:[%s1 + $0x20] sm:$0xff]
      %v1771 = vld [vmem:[%s1 + $0x28] sm:$0xff]
      %v1772 = vld [vmem:[%s1 + $0x30] sm:$0xff]
      %v1773 = vld [vmem:[%s1 + $0x38] sm:$0xff]
      %v1774 = vld [vmem:[%s1 + $0x40] sm:$0xff]
      %v1775 = vpack.c.bf16 %v1767, %v1766
      %v1776 = vpack.c.bf16 %v1769, %v1768
      %v1777 = vpack.c.bf16 %v1771, %v1770
      %v1778 = vpack.c.bf16 %v1773, %v1772
      %v1779 = vpack.c.bf16 %v1774, %v1774
      %v1780 = vld [vmem:[%s2] sm:$0x1]
      %v1782 = vlaneseq
      %v1783 = vshrl.u32 %v1782, 7
      %v1784 = vsub.s32 0, %v1783
      %v1785 = vrot.slane %v1780, %v1784
      %vm1787 = vcmask 588800
      %v1789 = vsel %vm1787, %v1750, 0
      %v1792 = vsel %vm1787, %v1751, 0
      %v1795 = vsel %vm1787, %v1752, 0
      %v1798 = vsel %vm1787, %v1753, 0
      %v1801 = vsel %vm1787, %v1754, 0
      %v1804 = vsel %vm1787, %v1755, 0
      %v1807 = vsel %vm1787, %v1756, 0
      %v1810 = vsel %vm1787, %v1757, 0
      %v1813 = vsel %vm1787, %v1758, 0
      %v1816 = vsel %vm1787, %v1759, 0
      %v1819 = vsel %vm1787, %v1760, 0
      %v1822 = vsel %vm1787, %v1761, 0
      %v1825 = vsel %vm1787, %v1762, 0
      %v1828 = vsel %vm1787, %v1763, 0
      %v1831 = vsel %vm1787, %v1764, 0
      %v1834 = vsel %vm1787, %v1765, 0
      %vm1836 = vcmask 1043456
      %v1838 = vsel %vm1836, %v1779, 0
      %1840 = vmatprep.subr.bf16.mxu0 0
      %1841 = vmatpush1.bf16.msra.mxu0 0
      %1842 = vmatprep.subr.bf16.mxu0 0
      %1843 = vmatpush1.bf16.msra.mxu0 0
      %1844 = vmatprep.subr.bf16.mxu0 0
      %1845 = vmatpush1.bf16.msra.mxu0 0
      %1846 = vmatprep.subr.bf16.mxu0 0
      %1847 = vmatpush1.bf16.msra.mxu0 %v1838
      %1848 = vmatprep.subr.bf16.mxu0 0
      %1849 = vmatpush1.bf16.msra.mxu0 %v1778
      %1850 = vmatprep.subr.bf16.mxu0 0
      %1851 = vmatpush1.bf16.msra.mxu0 %v1777
      %1852 = vmatprep.subr.bf16.mxu0 0
      %1853 = vmatpush1.bf16.msra.mxu0 %v1776
      %1854 = vmatprep.subr.bf16.mxu0 0
      %1855 = vmatpush1.bf16.msra.mxu0 %v1775
      %1856 = vmatprep.subr.bf16.mxu0 0
      %1857 = vmatpush2.bf16.msra.mxu0 0
      %1858 = vmatprep.subr.bf16.mxu0 0
      %1859 = vmatpush2.bf16.msra.mxu0 0
      %1860 = vmatprep.subr.bf16.mxu0 0
      %1861 = vmatpush2.bf16.msra.mxu0 0
      %1862 = vmatprep.subr.bf16.mxu0 0
      %1863 = vmatpush2.bf16.msra.mxu0 0
      %1864 = vmatprep.subr.bf16.mxu0 0
      %1865 = vmatpush2.bf16.msra.mxu0 0
      %1866 = vmatprep.subr.bf16.mxu0 0
      %1867 = vmatpush2.bf16.msra.mxu0 0
      %1868 = vmatprep.subr.bf16.mxu0 0
      %1869 = vmatpush2.bf16.msra.mxu0 0
      %1870 = vmatprep.subr.bf16.mxu0 0
      %1871 = vmatpush2.bf16.msra.mxu0 0
      %1872 = vmatprep.mubr.bf16.mxu0 0
      %1873 = vmatmul.mubr.bf16.gmra.mxu0 %v1789
      %v1874 = vpop.f32.mrf.mxu0
      %v1875 = vadd.f32 %v1785, %v1874
      %v1876 = vpop.f32.mrf.mxu0
      %v1877 = vpop.f32.mrf.mxu0
      %v1878 = vadd.f32 %v1785, %v1877
      %v1879 = vpop.f32.mrf.mxu0
      %1880 = vmatprep.mubr.bf16.mxu0 0
      %1881 = vmatmul.mubr.bf16.gmra.mxu0 %v1792
      %v1882 = vpop.f32.mrf.mxu0
      %v1883 = vadd.f32 %v1785, %v1882
      %v1884 = vpop.f32.mrf.mxu0
      %v1885 = vpop.f32.mrf.mxu0
      %v1886 = vadd.f32 %v1785, %v1885
      %v1887 = vpop.f32.mrf.mxu0
      %1888 = vmatprep.mubr.bf16.mxu0 0
      %1889 = vmatmul.mubr.bf16.gmra.mxu0 %v1795
      %v1890 = vpop.f32.mrf.mxu0
      %v1891 = vadd.f32 %v1785, %v1890
      %v1892 = vpop.f32.mrf.mxu0
      %v1893 = vpop.f32.mrf.mxu0
      %v1894 = vadd.f32 %v1785, %v1893
      %v1895 = vpop.f32.mrf.mxu0
      %1896 = vmatprep.mubr.bf16.mxu0 0
      %1897 = vmatmul.mubr.bf16.gmra.mxu0 %v1798
      %v1898 = vpop.f32.mrf.mxu0
      %v1899 = vadd.f32 %v1785, %v1898
      %v1900 = vpop.f32.mrf.mxu0
      %v1901 = vpop.f32.mrf.mxu0
      %v1902 = vadd.f32 %v1785, %v1901
      %v1903 = vpop.f32.mrf.mxu0
      %1904 = vmatprep.mubr.bf16.mxu0 0
      %1905 = vmatmul.mubr.bf16.gmra.mxu0 %v1801
      %v1906 = vpop.f32.mrf.mxu0
      %v1907 = vadd.f32 %v1785, %v1906
      %v1908 = vpop.f32.mrf.mxu0
      %v1909 = vpop.f32.mrf.mxu0
      %v1910 = vadd.f32 %v1785, %v1909
      %v1911 = vpop.f32.mrf.mxu0
      %1912 = vmatprep.mubr.bf16.mxu0 0
      %1913 = vmatmul.mubr.bf16.gmra.mxu0 %v1804
      %v1914 = vpop.f32.mrf.mxu0
      %v1915 = vadd.f32 %v1785, %v1914
      %v1916 = vpop.f32.mrf.mxu0
      %v1917 = vpop.f32.mrf.mxu0
      %v1918 = vadd.f32 %v1785, %v1917
      %v1919 = vpop.f32.mrf.mxu0
      %1920 = vmatprep.mubr.bf16.mxu0 0
      %1921 = vmatmul.mubr.bf16.gmra.mxu0 %v1807
      %v1922 = vpop.f32.mrf.mxu0
      %v1923 = vadd.f32 %v1785, %v1922
      %v1924 = vpop.f32.mrf.mxu0
      %v1925 = vpop.f32.mrf.mxu0
      %v1926 = vadd.f32 %v1785, %v1925
      %v1927 = vpop.f32.mrf.mxu0
      %1928 = vmatprep.mubr.bf16.mxu0 0
      %1929 = vmatmul.mubr.bf16.gmra.mxu0 %v1810
      %v1930 = vpop.f32.mrf.mxu0
      %v1931 = vadd.f32 %v1785, %v1930
      %v1932 = vpop.f32.mrf.mxu0
      %v1933 = vpop.f32.mrf.mxu0
      %v1934 = vadd.f32 %v1785, %v1933
      %v1935 = vpop.f32.mrf.mxu0
      %1936 = vmatprep.mubr.bf16.mxu0 0
      %1937 = vmatmul.mubr.bf16.gmra.mxu0 %v1813
      %v1938 = vpop.f32.mrf.mxu0
      %v1939 = vadd.f32 %v1785, %v1938
      %v1940 = vpop.f32.mrf.mxu0
      %v1941 = vpop.f32.mrf.mxu0
      %v1942 = vadd.f32 %v1785, %v1941
      %v1943 = vpop.f32.mrf.mxu0
      %1944 = vmatprep.mubr.bf16.mxu0 0
      %1945 = vmatmul.mubr.bf16.gmra.mxu0 %v1816
      %v1946 = vpop.f32.mrf.mxu0
      %v1947 = vadd.f32 %v1785, %v1946
      %v1948 = vpop.f32.mrf.mxu0
      %v1949 = vpop.f32.mrf.mxu0
      %v1950 = vadd.f32 %v1785, %v1949
      %v1951 = vpop.f32.mrf.mxu0
      %1952 = vmatprep.mubr.bf16.mxu0 0
      %1953 = vmatmul.mubr.bf16.gmra.mxu0 %v1819
      %v1954 = vpop.f32.mrf.mxu0
      %v1955 = vadd.f32 %v1785, %v1954
      %v1956 = vpop.f32.mrf.mxu0
      %v1957 = vpop.f32.mrf.mxu0
      %v1958 = vadd.f32 %v1785, %v1957
      %v1959 = vpop.f32.mrf.mxu0
      %1960 = vmatprep.mubr.bf16.mxu0 0
      %1961 = vmatmul.mubr.bf16.gmra.mxu0 %v1822
      %v1962 = vpop.f32.mrf.mxu0
      %v1963 = vadd.f32 %v1785, %v1962
      %v1964 = vpop.f32.mrf.mxu0
      %v1965 = vpop.f32.mrf.mxu0
      %v1966 = vadd.f32 %v1785, %v1965
      %v1967 = vpop.f32.mrf.mxu0
      %1968 = vmatprep.mubr.bf16.mxu0 0
      %1969 = vmatmul.mubr.bf16.gmra.mxu0 %v1825
      %v1970 = vpop.f32.mrf.mxu0
      %v1971 = vadd.f32 %v1785, %v1970
      %v1972 = vpop.f32.mrf.mxu0
      %v1973 = vpop.f32.mrf.mxu0
      %v1974 = vadd.f32 %v1785, %v1973
      %v1975 = vpop.f32.mrf.mxu0
      %1976 = vmatprep.mubr.bf16.mxu0 0
      %1977 = vmatmul.mubr.bf16.gmra.mxu0 %v1828
      %v1978 = vpop.f32.mrf.mxu0
      %v1979 = vadd.f32 %v1785, %v1978
      %v1980 = vpop.f32.mrf.mxu0
      %v1981 = vpop.f32.mrf.mxu0
      %v1982 = vadd.f32 %v1785, %v1981
      %v1983 = vpop.f32.mrf.mxu0
      %1984 = vmatprep.mubr.bf16.mxu0 0
      %1985 = vmatmul.mubr.bf16.gmra.mxu0 %v1831
      %v1986 = vpop.f32.mrf.mxu0
      %v1987 = vadd.f32 %v1785, %v1986
      %v1988 = vpop.f32.mrf.mxu0
      %v1989 = vpop.f32.mrf.mxu0
      %v1990 = vadd.f32 %v1785, %v1989
      %v1991 = vpop.f32.mrf.mxu0
      %1992 = vmatprep.mubr.bf16.mxu0 0
      %1993 = vmatmul.mubr.bf16.gmra.mxu0 %v1834
      %v1994 = vpop.f32.mrf.mxu0
      %v1995 = vadd.f32 %v1785, %v1994
      %v1996 = vpop.f32.mrf.mxu0
      %v1997 = vpop.f32.mrf.mxu0
      %v1998 = vadd.f32 %v1785, %v1997
      %v1999 = vpop.f32.mrf.mxu0
      %2000 = vdwg.mxu0
      %v2001 = vmax.f32 %v1875, 0.0
      %v2002 = vmax.f32 %v1878, 0.0
      %v2003 = vmax.f32 %v1883, 0.0
      %v2004 = vmax.f32 %v1886, 0.0
      %v2005 = vmax.f32 %v1891, 0.0
      %v2006 = vmax.f32 %v1894, 0.0
      %v2007 = vmax.f32 %v1899, 0.0
      %v2008 = vmax.f32 %v1902, 0.0
      %v2009 = vmax.f32 %v1907, 0.0
      %v2010 = vmax.f32 %v1910, 0.0
      %v2011 = vmax.f32 %v1915, 0.0
      %v2012 = vmax.f32 %v1918, 0.0
      %v2013 = vmax.f32 %v1923, 0.0
      %v2014 = vmax.f32 %v1926, 0.0
      %v2015 = vmax.f32 %v1931, 0.0
      %v2016 = vmax.f32 %v1934, 0.0
      %v2017 = vmax.f32 %v1939, 0.0
      %v2018 = vmax.f32 %v1942, 0.0
      %v2019 = vmax.f32 %v1947, 0.0
      %v2020 = vmax.f32 %v1950, 0.0
      %v2021 = vmax.f32 %v1955, 0.0
      %v2022 = vmax.f32 %v1958, 0.0
      %v2023 = vmax.f32 %v1963, 0.0
      %v2024 = vmax.f32 %v1966, 0.0
      %v2025 = vmax.f32 %v1971, 0.0
      %v2026 = vmax.f32 %v1974, 0.0
      %v2027 = vmax.f32 %v1979, 0.0
      %v2028 = vmax.f32 %v1982, 0.0
      %v2029 = vmax.f32 %v1987, 0.0
      %v2030 = vmax.f32 %v1990, 0.0
      %v2031 = vmax.f32 %v1995, 0.0
      %v2032 = vmax.f32 %v1998, 0.0
      %2033 = vst.msk [vmem:[#allocation2] sm:$0xff] %vm1585, %v2001
      %2034 = vst.msk [vmem:[#allocation2 + $0x8] sm:$0xff] %vm1585, %v2002
      %2035 = vst.msk [vmem:[#allocation2 + $0x10] sm:$0xff] %vm1585, %v2003
      %2036 = vst.msk [vmem:[#allocation2 + $0x18] sm:$0xff] %vm1585, %v2004
      %2037 = vst.msk [vmem:[#allocation2 + $0x20] sm:$0xff] %vm1585, %v2005
      %2038 = vst.msk [vmem:[#allocation2 + $0x28] sm:$0xff] %vm1585, %v2006
      %2039 = vst.msk [vmem:[#allocation2 + $0x30] sm:$0xff] %vm1585, %v2007
      %2040 = vst.msk [vmem:[#allocation2 + $0x38] sm:$0xff] %vm1585, %v2008
      %2041 = vst.msk [vmem:[#allocation2 + $0x40] sm:$0xff] %vm1585, %v2009
      %2042 = vst.msk [vmem:[#allocation2 + $0x48] sm:$0xff] %vm1585, %v2010
      %2043 = vst.msk [vmem:[#allocation2 + $0x50] sm:$0xff] %vm1585, %v2011
      %2044 = vst.msk [vmem:[#allocation2 + $0x58] sm:$0xff] %vm1585, %v2012
      %2045 = vst.msk [vmem:[#allocation2 + $0x60] sm:$0xff] %vm1585, %v2013
      %2046 = vst.msk [vmem:[#allocation2 + $0x68] sm:$0xff] %vm1585, %v2014
      %2047 = vst.msk [vmem:[#allocation2 + $0x70] sm:$0xff] %vm1585, %v2015
      %2048 = vst.msk [vmem:[#allocation2 + $0x78] sm:$0xff] %vm1585, %v2016
      %2049 = vst.msk [vmem:[#allocation2 + $0x80] sm:$0xff] %vm1585, %v2017
      %2050 = vst.msk [vmem:[#allocation2 + $0x88] sm:$0xff] %vm1585, %v2018
      %2051 = vst.msk [vmem:[#allocation2 + $0x90] sm:$0xff] %vm1585, %v2019
      %2052 = vst.msk [vmem:[#allocation2 + $0x98] sm:$0xff] %vm1585, %v2020
      %2053 = vst.msk [vmem:[#allocation2 + $0xa0] sm:$0xff] %vm1585, %v2021
      %2054 = vst.msk [vmem:[#allocation2 + $0xa8] sm:$0xff] %vm1585, %v2022
      %2055 = vst.msk [vmem:[#allocation2 + $0xb0] sm:$0xff] %vm1585, %v2023
      %2056 = vst.msk [vmem:[#allocation2 + $0xb8] sm:$0xff] %vm1585, %v2024
      %2057 = vst.msk [vmem:[#allocation2 + $0xc0] sm:$0xff] %vm1585, %v2025
      %2058 = vst.msk [vmem:[#allocation2 + $0xc8] sm:$0xff] %vm1585, %v2026
      %2059 = vst.msk [vmem:[#allocation2 + $0xd0] sm:$0xff] %vm1585, %v2027
      %2060 = vst.msk [vmem:[#allocation2 + $0xd8] sm:$0xff] %vm1585, %v2028
      %2061 = vst.msk [vmem:[#allocation2 + $0xe0] sm:$0xff] %vm1585, %v2029
      %2062 = vst.msk [vmem:[#allocation2 + $0xe8] sm:$0xff] %vm1585, %v2030
      %2063 = vst.msk [vmem:[#allocation2 + $0xf0] sm:$0xff] %vm1585, %v2031
      %2064 = vst.msk [vmem:[#allocation2 + $0xf8] sm:$0xff] %vm1585, %v2032
      %v2065 = vld [vmem:[#allocation2] ss:$2 sm:$0xff]
      %s2066 = scalar_lea.vmem [#allocation2], 16
      %v2067 = vld [vmem:[%s2066] ss:$2 sm:$0xff]
      %s2068 = scalar_lea.vmem [#allocation2], 32
      %v2069 = vld [vmem:[%s2068] ss:$2 sm:$0xff]
      %s2070 = scalar_lea.vmem [#allocation2], 48
      %v2071 = vld [vmem:[%s2070] ss:$2 sm:$0xff]
      %s2072 = scalar_lea.vmem [#allocation2], 64
      %v2073 = vld [vmem:[%s2072] ss:$2 sm:$0xff]
      %s2074 = scalar_lea.vmem [#allocation2], 80
      %v2075 = vld [vmem:[%s2074] ss:$2 sm:$0xff]
      %s2076 = scalar_lea.vmem [#allocation2], 96
      %v2077 = vld [vmem:[%s2076] ss:$2 sm:$0xff]
      %s2078 = scalar_lea.vmem [#allocation2], 112
      %v2079 = vld [vmem:[%s2078] ss:$2 sm:$0xff]
      %s2080 = scalar_lea.vmem [#allocation2], 128
      %v2081 = vld [vmem:[%s2080] ss:$2 sm:$0xff]
      %s2082 = scalar_lea.vmem [#allocation2], 144
      %v2083 = vld [vmem:[%s2082] ss:$2 sm:$0xff]
      %s2084 = scalar_lea.vmem [#allocation2], 160
      %v2085 = vld [vmem:[%s2084] ss:$2 sm:$0xff]
      %s2086 = scalar_lea.vmem [#allocation2], 176
      %v2087 = vld [vmem:[%s2086] ss:$2 sm:$0xff]
      %s2088 = scalar_lea.vmem [#allocation2], 192
      %v2089 = vld [vmem:[%s2088] ss:$2 sm:$0xff]
      %s2090 = scalar_lea.vmem [#allocation2], 208
      %v2091 = vld [vmem:[%s2090] ss:$2 sm:$0xff]
      %s2092 = scalar_lea.vmem [#allocation2], 224
      %v2093 = vld [vmem:[%s2092] ss:$2 sm:$0xff]
      %s2094 = scalar_lea.vmem [#allocation2], 240
      %v2095 = vld [vmem:[%s2094] ss:$2 sm:$0xff]
      %s2096 = scalar_lea.vmem [#allocation2], 1
      %v2097 = vld [vmem:[%s2096] ss:$2 sm:$0xff]
      %s2098 = scalar_lea.vmem [#allocation2], 17
      %v2099 = vld [vmem:[%s2098] ss:$2 sm:$0xff]
      %s2100 = scalar_lea.vmem [#allocation2], 33
      %v2101 = vld [vmem:[%s2100] ss:$2 sm:$0xff]
      %s2102 = scalar_lea.vmem [#allocation2], 49
      %v2103 = vld [vmem:[%s2102] ss:$2 sm:$0xff]
      %s2104 = scalar_lea.vmem [#allocation2], 65
      %v2105 = vld [vmem:[%s2104] ss:$2 sm:$0xff]
      %s2106 = scalar_lea.vmem [#allocation2], 81
      %v2107 = vld [vmem:[%s2106] ss:$2 sm:$0xff]
      %s2108 = scalar_lea.vmem [#allocation2], 97
      %v2109 = vld [vmem:[%s2108] ss:$2 sm:$0xff]
      %s2110 = scalar_lea.vmem [#allocation2], 113
      %v2111 = vld [vmem:[%s2110] ss:$2 sm:$0xff]
      %s2112 = scalar_lea.vmem [#allocation2], 129
      %v2113 = vld [vmem:[%s2112] ss:$2 sm:$0xff]
      %s2114 = scalar_lea.vmem [#allocation2], 145
      %v2115 = vld [vmem:[%s2114] ss:$2 sm:$0xff]
      %s2116 = scalar_lea.vmem [#allocation2], 161
      %v2117 = vld [vmem:[%s2116] ss:$2 sm:$0xff]
      %s2118 = scalar_lea.vmem [#allocation2], 177
      %v2119 = vld [vmem:[%s2118] ss:$2 sm:$0xff]
      %s2120 = scalar_lea.vmem [#allocation2], 193
      %v2121 = vld [vmem:[%s2120] ss:$2 sm:$0xff]
      %s2122 = scalar_lea.vmem [#allocation2], 209
      %v2123 = vld [vmem:[%s2122] ss:$2 sm:$0xff]
      %s2124 = scalar_lea.vmem [#allocation2], 225
      %v2125 = vld [vmem:[%s2124] ss:$2 sm:$0xff]
      %s2126 = scalar_lea.vmem [#allocation2], 241
      %v2127 = vld [vmem:[%s2126] ss:$2 sm:$0xff]
      %v2128 = vmax.f32 %v2065, %v2097
      %v2129 = vmax.f32 %v2067, %v2099
      %v2130 = vmax.f32 %v2069, %v2101
      %v2131 = vmax.f32 %v2071, %v2103
      %v2132 = vmax.f32 %v2073, %v2105
      %v2133 = vmax.f32 %v2075, %v2107
      %v2134 = vmax.f32 %v2077, %v2109
      %v2135 = vmax.f32 %v2079, %v2111
      %v2136 = vmax.f32 %v2081, %v2113
      %v2137 = vmax.f32 %v2083, %v2115
      %v2138 = vmax.f32 %v2085, %v2117
      %v2139 = vmax.f32 %v2087, %v2119
      %v2140 = vmax.f32 %v2089, %v2121
      %v2141 = vmax.f32 %v2091, %v2123
      %v2142 = vmax.f32 %v2093, %v2125
      %v2143 = vmax.f32 %v2095, %v2127
      %v2144 = vmax.f32 %v2128, %v2129
      %v2145 = vmax.f32 %v2130, %v2131
      %v2146 = vmax.f32 %v2132, %v2133
      %v2147 = vmax.f32 %v2134, %v2135
      %v2148 = vmax.f32 %v2136, %v2137
      %v2149 = vmax.f32 %v2138, %v2139
      %v2150 = vmax.f32 %v2140, %v2141
      %v2151 = vmax.f32 %v2142, %v2143
      %2152 = vst.msk [vmem:[%s170] sm:$0xff] %vm1585, %v2144
      %2153 = vst.msk [vmem:[%s170 + $0x8] sm:$0xff] %vm1585, %v2145
      %2154 = vst.msk [vmem:[%s170 + $0x10] sm:$0xff] %vm1585, %v2146
      %2155 = vst.msk [vmem:[%s170 + $0x18] sm:$0xff] %vm1585, %v2147
      %2156 = vst.msk [vmem:[%s170 + $0x20] sm:$0xff] %vm1585, %v2148
      %2157 = vst.msk [vmem:[%s170 + $0x28] sm:$0xff] %vm1585, %v2149
      %2158 = vst.msk [vmem:[%s170 + $0x30] sm:$0xff] %vm1585, %v2150
      %2159 = vst.msk [vmem:[%s170 + $0x38] sm:$0xff] %vm1585, %v2151
      %p2160 = scmp.lt.s32.totalorder %s14, 5
      %s2161 = scalar_select %p2160, %s14, 5
      %s2162 = smul.addr %s2161, 8
      %s2163 = smul.addr %s2162, 8
      %s2164 = scalar_lea.vmem %s3, %s2163
      // Predicated region
      $region33: #{triplane_transformer_forward.5} parent=31 // pred_check
        %p2165 = pneg %p100
      $region34: #{triplane_transformer_forward.5} parent=31 // pred_check_branch
        %2167 = sbr.rel (%p2165) target = $region36
      $region35: #{triplane_transformer_forward.5} parent=31 // pred_region
        _
      $region36: #{triplane_transformer_forward.5} parent=31 // pred_fallthru
        _
    $region32: #{triplane_transformer_forward.5} parent=5 // pred_fallthru
      _
    %p2168 = scmp.le.s32.totalorder 2, %s9
    // Predicated region
    $region37: #{triplane_transformer_forward.5} parent=5 // pred_check
      %p2169 = pneg %p2168
    $region38: #{triplane_transformer_forward.5} parent=5 // pred_check_branch
      %2171 = sbr.rel (%p2169) target = $region40
    $region39: #{triplane_transformer_forward.5} parent=5 // pred_region
      %s2172 = ssub.s32 %s9, 2
      // Predicated region
      $region41: #{triplane_transformer_forward.5} parent=39 // pred_check
        %p2173 = pneg %p106
      $region42: #{triplane_transformer_forward.5} parent=39 // pred_check_branch
        %2175 = sbr.rel (%p2173) target = $region44
      $region43: #{triplane_transformer_forward.5} parent=39 // pred_region
        %p2176 = scmp.lt.s32.totalorder %s15, 5
        %s2177 = scalar_select %p2176, %s15, 5
        %s2178 = smul.addr %s2177, 8
        %s2179 = smul.addr %s2178, 8
        %s2180 = scalar_lea.vmem %s3, %s2179
      $region44: #{triplane_transformer_forward.5} parent=39 // pred_fallthru
        _
    $region40: #{triplane_transformer_forward.5} parent=5 // pred_fallthru
      _
  $region6: #{triplane_transformer_forward.5} parent=0 // loop_footer
    %s13 = sadd.s32 1, %s9
  $region7: #{triplane_transformer_forward.5} parent=0 // loop_footer_branch
    %8 = sbr.rel target = $region3
  $region8: #{triplane_transformer_forward.5} parent=0 // loop_exit
    _

// kernel: triplane_transformer_forward.8
$region0: #{triplane_transformer_forward.8}
  #allocation0 [shape = 'u32[]', space=smem, size = 0x4, offset = 0x4, fixed_abs, tag = 'smem constant byte address 0x4 - core index']
  #allocation1 [shape = 'u32[144,128]{1,0:T(1,128)}', space=vmem, size = 0x12000, scoped, tag = 'internal scratch']
  %s0 = inlined_call_operand.vmem [shape: f32[96,32], index: 0, kind: input, shape index: {}]
  %s1 = inlined_call_operand.vmem [shape: f32[32,256], index: 1, kind: input, shape index: {}]
  %s2 = inlined_call_operand.vmem [shape: f32[1,256], index: 2, kind: input, shape index: {}]
  %s3 = inlined_call_operand.vmem [shape: f32[96,256], index: 3, kind: output, shape index: {}]
  %s4 = sld [smem:[#allocation0]]
  $region22: #{triplane_transformer_forward.8} parent=0
    _
  %s6 = ssub.s32 1, %s4
  %s7 = scalar_select 0, %s6, %s4
  // Predicated region
  $region2: #{triplane_transformer_forward.8} parent=0 // pred_check
    _
  $region3: #{triplane_transformer_forward.8} parent=0 // pred_check_branch
    %9 = sbr.rel (0) target = $region5
  $region4: #{triplane_transformer_forward.8} parent=0 // pred_region
    _
  $region5: #{triplane_transformer_forward.8} parent=0 // pred_fallthru
    _
  // Predicated region
  $region6: #{triplane_transformer_forward.8} parent=0 // pred_check
    _
  $region7: #{triplane_transformer_forward.8} parent=0 // pred_check_branch
    %11 = sbr.rel (0) target = $region9
  $region8: #{triplane_transformer_forward.8} parent=0 // pred_region
    _
  $region9: #{triplane_transformer_forward.8} parent=0 // pred_fallthru
    _
  // Predicated region
  $region10: #{triplane_transformer_forward.8} parent=0 // pred_check
    _
  $region11: #{triplane_transformer_forward.8} parent=0 // pred_check_branch
    %13 = sbr.rel (0) target = $region13
  $region12: #{triplane_transformer_forward.8} parent=0 // pred_region
    _
  $region13: #{triplane_transformer_forward.8} parent=0 // pred_fallthru
    _
  %v15 = vld [vmem:[%s0] sm:$0xff]
  %v16 = vld [vmem:[%s0 + $0x8] sm:$0xff]
  %v17 = vld [vmem:[%s0 + $0x10] sm:$0xff]
  %v18 = vld [vmem:[%s0 + $0x18] sm:$0xff]
  %v19 = vld [vmem:[%s0 + $0x20] sm:$0xff]
  %v20 = vld [vmem:[%s0 + $0x28] sm:$0xff]
  %v21 = vld [vmem:[%s0 + $0x30] sm:$0xff]
  %v22 = vld [vmem:[%s0 + $0x38] sm:$0xff]
  %v23 = vld [vmem:[%s0 + $0x40] sm:$0xff]
  %v24 = vld [vmem:[%s0 + $0x48] sm:$0xff]
  %v25 = vld [vmem:[%s0 + $0x50] sm:$0xff]
  %v26 = vld [vmem:[%s0 + $0x58] sm:$0xff]
  %v27 = vpack.c.bf16 %v16, %v15
  %v28 = vpack.c.bf16 %v18, %v17
  %v29 = vpack.c.bf16 %v20, %v19
  %v30 = vpack.c.bf16 %v22, %v21
  %v31 = vpack.c.bf16 %v24, %v23
  %v32 = vpack.c.bf16 %v26, %v25
  %v33 = vld [vmem:[%s1] sm:$0xff]
  %v34 = vld [vmem:[%s1 + $0x8] sm:$0xff]
  %v35 = vld [vmem:[%s1 + $0x10] sm:$0xff]
  %v36 = vld [vmem:[%s1 + $0x18] sm:$0xff]
  %v37 = vld [vmem:[%s1 + $0x20] sm:$0xff]
  %v38 = vld [vmem:[%s1 + $0x28] sm:$0xff]
  %v39 = vld [vmem:[%s1 + $0x30] sm:$0xff]
  %v40 = vld [vmem:[%s1 + $0x38] sm:$0xff]
  %v41 = vpack.c.bf16 %v35, %v33
  %v42 = vpack.c.bf16 %v36, %v34
  %v43 = vpack.c.bf16 %v39, %v37
  %v44 = vpack.c.bf16 %v40, %v38
  %v45 = vld [vmem:[%s2] sm:$0x3]
  %v47 = vlaneseq
  %v48 = vshrl.u32 %v47, 7
  %v49 = vsub.s32 0, %v48
  %v50 = vrot.slane %v45, %v49
  %v51 = vlaneseq
  %v52 = vshrl.u32 %v51, 7
  %v53 = vsub.s32 1, %v52
  %v54 = vrot.slane %v45, %v53
  %vm57 = vcmask 261120
  %v59 = vsel %vm57, %v27, 0
  %v62 = vsel %vm57, %v28, 0
  %v65 = vsel %vm57, %v29, 0
  %v68 = vsel %vm57, %v30, 0
  %v71 = vsel %vm57, %v31, 0
  %v74 = vsel %vm57, %v32, 0
  %76 = vmatprep.subr.bf16.mxu0 0
  %77 = vmatpush1.bf16.msra.mxu0 0
  %78 = vmatprep.subr.bf16.mxu0 0
  %79 = vmatpush1.bf16.msra.mxu0 0
  %80 = vmatprep.subr.bf16.mxu0 0
  %81 = vmatpush1.bf16.msra.mxu0 0
  %82 = vmatprep.subr.bf16.mxu0 0
  %83 = vmatpush1.bf16.msra.mxu0 0
  %84 = vmatprep.subr.bf16.mxu0 0
  %85 = vmatpush1.bf16.msra.mxu0 0
  %86 = vmatprep.subr.bf16.mxu0 0
  %87 = vmatpush1.bf16.msra.mxu0 0
  %88 = vmatprep.subr.bf16.mxu0 %v44
  %89 = vmatpush1.bf16.msra.mxu0 %v43
  %90 = vmatprep.subr.bf16.mxu0 %v42
  %91 = vmatpush1.bf16.msra.mxu0 %v41
  %92 = vmatprep.subr.bf16.mxu0 0
  %93 = vmatpush2.bf16.msra.mxu0 0
  %94 = vmatprep.subr.bf16.mxu0 0
  %95 = vmatpush2.bf16.msra.mxu0 0
  %96 = vmatprep.subr.bf16.mxu0 0
  %97 = vmatpush2.bf16.msra.mxu0 0
  %98 = vmatprep.subr.bf16.mxu0 0
  %99 = vmatpush2.bf16.msra.mxu0 0
  %100 = vmatprep.subr.bf16.mxu0 0
  %101 = vmatpush2.bf16.msra.mxu0 0
  %102 = vmatprep.subr.bf16.mxu0 0
  %103 = vmatpush2.bf16.msra.mxu0 0
  %104 = vmatprep.subr.bf16.mxu0 0
  %105 = vmatpush2.bf16.msra.mxu0 0
  %106 = vmatprep.subr.bf16.mxu0 0
  %107 = vmatpush2.bf16.msra.mxu0 0
  %108 = vmatprep.mubr.bf16.mxu0 0
  %109 = vmatmul.mubr.bf16.gmra.mxu0 %v59
  %v110 = vpop.f32.mrf.mxu0
  %v111 = vadd.f32 %v50, %v110
  %v112 = vpop.f32.mrf.mxu0
  %v113 = vadd.f32 %v54, %v112
  %v114 = vpop.f32.mrf.mxu0
  %v115 = vadd.f32 %v50, %v114
  %v116 = vpop.f32.mrf.mxu0
  %v117 = vadd.f32 %v54, %v116
  %118 = vmatprep.mubr.bf16.mxu0 0
  %119 = vmatmul.mubr.bf16.gmra.mxu0 %v62
  %v120 = vpop.f32.mrf.mxu0
  %v121 = vadd.f32 %v50, %v120
  %v122 = vpop.f32.mrf.mxu0
  %v123 = vadd.f32 %v54, %v122
  %v124 = vpop.f32.mrf.mxu0
  %v125 = vadd.f32 %v50, %v124
  %v126 = vpop.f32.mrf.mxu0
  %v127 = vadd.f32 %v54, %v126
  %128 = vmatprep.mubr.bf16.mxu0 0
  %129 = vmatmul.mubr.bf16.gmra.mxu0 %v65
  %v130 = vpop.f32.mrf.mxu0
  %v131 = vadd.f32 %v50, %v130
  %v132 = vpop.f32.mrf.mxu0
  %v133 = vadd.f32 %v54, %v132
  %v134 = vpop.f32.mrf.mxu0
  %v135 = vadd.f32 %v50, %v134
  %v136 = vpop.f32.mrf.mxu0
  %v137 = vadd.f32 %v54, %v136
  %138 = vmatprep.mubr.bf16.mxu0 0
  %139 = vmatmul.mubr.bf16.gmra.mxu0 %v68
  %v140 = vpop.f32.mrf.mxu0
  %v141 = vadd.f32 %v50, %v140
  %v142 = vpop.f32.mrf.mxu0
  %v143 = vadd.f32 %v54, %v142
  %v144 = vpop.f32.mrf.mxu0
  %v145 = vadd.f32 %v50, %v144
  %v146 = vpop.f32.mrf.mxu0
  %v147 = vadd.f32 %v54, %v146
  %148 = vmatprep.mubr.bf16.mxu0 0
  %149 = vmatmul.mubr.bf16.gmra.mxu0 %v71
  %v150 = vpop.f32.mrf.mxu0
  %v151 = vadd.f32 %v50, %v150
  %v152 = vpop.f32.mrf.mxu0
  %v153 = vadd.f32 %v54, %v152
  %v154 = vpop.f32.mrf.mxu0
  %v155 = vadd.f32 %v50, %v154
  %v156 = vpop.f32.mrf.mxu0
  %v157 = vadd.f32 %v54, %v156
  %158 = vmatprep.mubr.bf16.mxu0 0
  %159 = vmatmul.mubr.bf16.gmra.mxu0 %v74
  %v160 = vpop.f32.mrf.mxu0
  %v161 = vadd.f32 %v50, %v160
  %v162 = vpop.f32.mrf.mxu0
  %v163 = vadd.f32 %v54, %v162
  %v164 = vpop.f32.mrf.mxu0
  %v165 = vadd.f32 %v50, %v164
  %v166 = vpop.f32.mrf.mxu0
  %v167 = vadd.f32 %v54, %v166
  %168 = vdwg.mxu0
  %169 = vst [vmem:[%s3] sm:$0xff] %v111
  %170 = vst [vmem:[%s3 + $0x8] sm:$0xff] %v113
  %171 = vst [vmem:[%s3 + $0x10] sm:$0xff] %v115
  %172 = vst [vmem:[%s3 + $0x18] sm:$0xff] %v117
  %173 = vst [vmem:[%s3 + $0x20] sm:$0xff] %v121
  %174 = vst [vmem:[%s3 + $0x28] sm:$0xff] %v123
  %175 = vst [vmem:[%s3 + $0x30] sm:$0xff] %v125
  %176 = vst [vmem:[%s3 + $0x38] sm:$0xff] %v127
  %177 = vst [vmem:[%s3 + $0x40] sm:$0xff] %v131
  %178 = vst [vmem:[%s3 + $0x48] sm:$0xff] %v133
  %179 = vst [vmem:[%s3 + $0x50] sm:$0xff] %v135
  %180 = vst [vmem:[%s3 + $0x58] sm:$0xff] %v137
  %181 = vst [vmem:[%s3 + $0x60] sm:$0xff] %v141
  %182 = vst [vmem:[%s3 + $0x68] sm:$0xff] %v143
  %183 = vst [vmem:[%s3 + $0x70] sm:$0xff] %v145
  %184 = vst [vmem:[%s3 + $0x78] sm:$0xff] %v147
  %185 = vst [vmem:[%s3 + $0x80] sm:$0xff] %v151
  %186 = vst [vmem:[%s3 + $0x88] sm:$0xff] %v153
  %187 = vst [vmem:[%s3 + $0x90] sm:$0xff] %v155
  %188 = vst [vmem:[%s3 + $0x98] sm:$0xff] %v157
  %189 = vst [vmem:[%s3 + $0xa0] sm:$0xff] %v161
  %190 = vst [vmem:[%s3 + $0xa8] sm:$0xff] %v163
  %191 = vst [vmem:[%s3 + $0xb0] sm:$0xff] %v165
  %192 = vst [vmem:[%s3 + $0xb8] sm:$0xff] %v167
  // Predicated region
  $region14: #{triplane_transformer_forward.8} parent=0 // pred_check
    _
  $region15: #{triplane_transformer_forward.8} parent=0 // pred_check_branch
    %194 = sbr.rel (0) target = $region17
  $region16: #{triplane_transformer_forward.8} parent=0 // pred_region
    _
  $region17: #{triplane_transformer_forward.8} parent=0 // pred_fallthru
    _
  // Predicated region
  $region18: #{triplane_transformer_forward.8} parent=0 // pred_check
    _
  $region19: #{triplane_transformer_forward.8} parent=0 // pred_check_branch
    %196 = sbr.rel (0) target = $region21
  $region20: #{triplane_transformer_forward.8} parent=0 // pred_region
    _
  $region21: #{triplane_transformer_forward.8} parent=0 // pred_fallthru
    _

// kernel: triplane_transformer_forward.7
$region0: #{triplane_transformer_forward.7}
  #allocation0 [shape = 'u32[]', space=smem, size = 0x4, offset = 0x4, fixed_abs, tag = 'smem constant byte address 0x4 - core index']
  #allocation1 [shape = 'u32[144,128]{1,0:T(1,128)}', space=vmem, size = 0x12000, scoped, tag = 'internal scratch']
  #allocation2 [shape = 'f32[48,32]{1,0:T(8,128)}', space=vmem, size = 0x6000, scoped, tag = 'scratch operand']
  %s0 = inlined_call_operand.vmem [shape: f32[2,48,32], index: 0, kind: input, shape index: {}]
  %s1 = inlined_call_operand.vmem [shape: f32[1,48,32], index: 1, kind: input, shape index: {}]
  %s2 = inlined_call_operand.vmem [shape: f32[2,1,32], index: 2, kind: input, shape index: {}]
  %s3 = inlined_call_operand.vmem [shape: f32[2,1,32], index: 3, kind: input, shape index: {}]
  %s4 = inlined_call_operand.vmem [shape: bf16[2,32,96], index: 4, kind: input, shape index: {}]
  %s5 = inlined_call_operand.vmem [shape: bf16[2,32,32], index: 5, kind: input, shape index: {}]
  %s6 = inlined_call_operand.vmem [shape: f32[2,1,32], index: 6, kind: input, shape index: {}]
  %s7 = inlined_call_operand.vmem [shape: f32[2,1,32], index: 7, kind: input, shape index: {}]
  %s8 = inlined_call_operand.vmem [shape: bf16[2,32,128], index: 8, kind: input, shape index: {}]
  %s9 = inlined_call_operand.vmem [shape: f32[2,1,128], index: 9, kind: input, shape index: {}]
  %s10 = inlined_call_operand.vmem [shape: bf16[2,128,32], index: 10, kind: input, shape index: {}]
  %s11 = inlined_call_operand.vmem [shape: f32[2,1,32], index: 11, kind: input, shape index: {}]
  %s12 = inlined_call_operand.vmem [shape: f32[1,32], index: 12, kind: input, shape index: {}]
  %s13 = inlined_call_operand.vmem [shape: f32[1,32], index: 13, kind: input, shape index: {}]
  %s14 = inlined_call_operand.vmem [shape: f32[2,48,32], index: 14, kind: output, shape index: {}]
  %s15 = sld [smem:[#allocation0]]
  $region97: #{triplane_transformer_forward.7} parent=0
    _
  %s17 = ssub.s32 1, %s15
  %s18 = scalar_select 0, %s17, %s15
  loop: start=0, step=1, limit=6
  $region2: #{triplane_transformer_forward.7} parent=0 // loop_pre_header
    _
  $region3: #{triplane_transformer_forward.7} parent=0 // loop_header
    %s20 = sphi 0, %s24
    %p21 = scmp.ge.s32.totalorder %s20, 6
    %s27 = sphi 0, %s39
    %s28 = sphi 0, %s35
    %s29 = sphi 0, %s27
    %s30 = sphi 0, %s28
    %s31 = sphi 0, %s29
    %s32 = sphi 0, %s30
    %s42 = sphi 0, %s44
    %s45 = sphi 0, %s42
    %s46 = sphi 0, %s45
    %s62 = sphi 0, %s46
    %s66 = sphi 0, %s66
    %s68 = sphi 0, %s66
    %s69 = sphi 0, %s68
    %s83 = sphi 0, %s69
    %s89 = sphi 0, %s91
    %s92 = sphi 0, %s89
    %s93 = sphi 0, %s92
    %s109 = sphi 0, %s93
    %s115 = sphi 0, %s117
    %s118 = sphi 0, %s115
    %s119 = sphi 0, %s118
    %s135 = sphi 0, %s119
    %s141 = sphi 0, %s143
    %s144 = sphi 0, %s141
    %s145 = sphi 0, %s144
    %s161 = sphi 0, %s145
    %s167 = sphi 0, %s169
    %s170 = sphi 0, %s167
    %s171 = sphi 0, %s170
    %s187 = sphi 0, %s171
    %s193 = sphi 0, %s195
    %s196 = sphi 0, %s193
    %s197 = sphi 0, %s196
    %s213 = sphi 0, %s197
    %s219 = sphi 0, %s221
    %s222 = sphi 0, %s219
    %s223 = sphi 0, %s222
    %s239 = sphi 0, %s223
    %s245 = sphi 0, %s247
    %s248 = sphi 0, %s245
    %s249 = sphi 0, %s248
    %s265 = sphi 0, %s249
    %s271 = sphi 0, %s273
    %s274 = sphi 0, %s271
    %s275 = sphi 0, %s274
    %s291 = sphi 0, %s275
    %s297 = sphi 0, %s299
    %s300 = sphi 0, %s297
    %s301 = sphi 0, %s300
    %s317 = sphi 0, %s301
    %s323 = sphi 0, %s325
    %s326 = sphi 0, %s323
    %s327 = sphi 0, %s326
    %s343 = sphi 0, %s327
    %s347 = sphi 0, %s347
    %s349 = sphi 0, %s347
    %s350 = sphi 0, %s349
    %s364 = sphi 0, %s350
    %s368 = sphi 0, %s368
    %s370 = sphi 0, %s368
    %s371 = sphi 0, %s370
    %s385 = sphi 0, %s371
    %s391 = sphi 0, %s393
    %s394 = sphi 0, %s391
    %s395 = sphi 0, %s394
    %s411 = sphi 0, %s395
  $region4: #{triplane_transformer_forward.7} parent=0 // loop_header_branch
    %23 = sbr.rel (%p21) target = $region8
  $region5: #{triplane_transformer_forward.7} parent=0 // loop_body
    %s25 = ssub.s32 %s20, 1
    %s26 = ssub.s32 %s20, 2
    %s33 = sadd.s32 1, %s28
    %p34 = scmp.ge.s32.totalorder %s33, 2
    %s35 = scalar_select %p34, 0, %s33
    %s36 = sadd.s32 1, %s27
    %s37 = scalar_select %p34, %s36, %s27
    %p38 = scmp.ge.s32.totalorder %s37, 2
    %s39 = scalar_select %p38, 0, %s37
    %s40 = ssub.s32 %s27, %s39
    %p41 = scmp.eq.s32.totalorder %s40, 0
    %s43 = sadd.s32 %s42, 1
    %s44 = scalar_select %p41, %s42, %s43
    %p47 = pneg %p41
    %p48 = scmp.eq.s32.totalorder %s20, 3
    %p49 = por %p47, %p48
    %p50 = scmp.ne.s32.totalorder %s42, %s45
    %p51 = scmp.eq.s32.totalorder %s20, 0
    %p52 = por %p50, %p51
    %p53 = scmp.ne.s32.totalorder %s42, %s45
    %p54 = scmp.eq.s32.totalorder %s25, 3
    %p55 = por %p53, %p54
    %p56 = scmp.ne.s32.totalorder %s45, %s46
    %p57 = scmp.eq.s32.totalorder %s25, 0
    %p58 = por %p56, %p57
    %p59 = scmp.ne.s32.totalorder %s45, %s46
    %p60 = scmp.eq.s32.totalorder %s26, 3
    %p61 = por %p59, %p60
    %p63 = scmp.ne.s32.totalorder %s46, %s62
    %p64 = scmp.eq.s32.totalorder %s26, 0
    %p65 = por %p63, %p64
    %s67 = sadd.s32 %s66, 1
    %p70 = scmp.eq.s32.totalorder %s20, 3
    %p71 = scmp.ne.s32.totalorder %s66, %s68
    %p72 = scmp.eq.s32.totalorder %s20, 0
    %p73 = por %p71, %p72
    %p74 = scmp.ne.s32.totalorder %s66, %s68
    %p75 = scmp.eq.s32.totalorder %s25, 3
    %p76 = por %p74, %p75
    %p77 = scmp.ne.s32.totalorder %s68, %s69
    %p78 = scmp.eq.s32.totalorder %s25, 0
    %p79 = por %p77, %p78
    %p80 = scmp.ne.s32.totalorder %s68, %s69
    %p81 = scmp.eq.s32.totalorder %s26, 3
    %p82 = por %p80, %p81
    %p84 = scmp.ne.s32.totalorder %s69, %s83
    %p85 = scmp.eq.s32.totalorder %s26, 0
    %p86 = por %p84, %p85
    %s87 = ssub.s32 %s28, %s35
    %p88 = scmp.eq.s32.totalorder %s87, 0
    %s90 = sadd.s32 %s89, 1
    %s91 = scalar_select %p88, %s89, %s90
    %p94 = pneg %p88
    %p95 = scmp.eq.s32.totalorder %s20, 3
    %p96 = por %p94, %p95
    %p97 = scmp.ne.s32.totalorder %s89, %s92
    %p98 = scmp.eq.s32.totalorder %s20, 0
    %p99 = por %p97, %p98
    %p100 = scmp.ne.s32.totalorder %s89, %s92
    %p101 = scmp.eq.s32.totalorder %s25, 3
    %p102 = por %p100, %p101
    %p103 = scmp.ne.s32.totalorder %s92, %s93
    %p104 = scmp.eq.s32.totalorder %s25, 0
    %p105 = por %p103, %p104
    %p106 = scmp.ne.s32.totalorder %s92, %s93
    %p107 = scmp.eq.s32.totalorder %s26, 3
    %p108 = por %p106, %p107
    %p110 = scmp.ne.s32.totalorder %s93, %s109
    %p111 = scmp.eq.s32.totalorder %s26, 0
    %p112 = por %p110, %p111
    %s113 = ssub.s32 %s28, %s35
    %p114 = scmp.eq.s32.totalorder %s113, 0
    %s116 = sadd.s32 %s115, 1
    %s117 = scalar_select %p114, %s115, %s116
    %p120 = pneg %p114
    %p121 = scmp.eq.s32.totalorder %s20, 3
    %p122 = por %p120, %p121
    %p123 = scmp.ne.s32.totalorder %s115, %s118
    %p124 = scmp.eq.s32.totalorder %s20, 0
    %p125 = por %p123, %p124
    %p126 = scmp.ne.s32.totalorder %s115, %s118
    %p127 = scmp.eq.s32.totalorder %s25, 3
    %p128 = por %p126, %p127
    %p129 = scmp.ne.s32.totalorder %s118, %s119
    %p130 = scmp.eq.s32.totalorder %s25, 0
    %p131 = por %p129, %p130
    %p132 = scmp.ne.s32.totalorder %s118, %s119
    %p133 = scmp.eq.s32.totalorder %s26, 3
    %p134 = por %p132, %p133
    %p136 = scmp.ne.s32.totalorder %s119, %s135
    %p137 = scmp.eq.s32.totalorder %s26, 0
    %p138 = por %p136, %p137
    %s139 = ssub.s32 %s28, %s35
    %p140 = scmp.eq.s32.totalorder %s139, 0
    %s142 = sadd.s32 %s141, 1
    %s143 = scalar_select %p140, %s141, %s142
    %p146 = pneg %p140
    %p147 = scmp.eq.s32.totalorder %s20, 3
    %p148 = por %p146, %p147
    %p149 = scmp.ne.s32.totalorder %s141, %s144
    %p150 = scmp.eq.s32.totalorder %s20, 0
    %p151 = por %p149, %p150
    %p152 = scmp.ne.s32.totalorder %s141, %s144
    %p153 = scmp.eq.s32.totalorder %s25, 3
    %p154 = por %p152, %p153
    %p155 = scmp.ne.s32.totalorder %s144, %s145
    %p156 = scmp.eq.s32.totalorder %s25, 0
    %p157 = por %p155, %p156
    %p158 = scmp.ne.s32.totalorder %s144, %s145
    %p159 = scmp.eq.s32.totalorder %s26, 3
    %p160 = por %p158, %p159
    %p162 = scmp.ne.s32.totalorder %s145, %s161
    %p163 = scmp.eq.s32.totalorder %s26, 0
    %p164 = por %p162, %p163
    %s165 = ssub.s32 %s28, %s35
    %p166 = scmp.eq.s32.totalorder %s165, 0
    %s168 = sadd.s32 %s167, 1
    %s169 = scalar_select %p166, %s167, %s168
    %p172 = pneg %p166
    %p173 = scmp.eq.s32.totalorder %s20, 3
    %p174 = por %p172, %p173
    %p175 = scmp.ne.s32.totalorder %s167, %s170
    %p176 = scmp.eq.s32.totalorder %s20, 0
    %p177 = por %p175, %p176
    %p178 = scmp.ne.s32.totalorder %s167, %s170
    %p179 = scmp.eq.s32.totalorder %s25, 3
    %p180 = por %p178, %p179
    %p181 = scmp.ne.s32.totalorder %s170, %s171
    %p182 = scmp.eq.s32.totalorder %s25, 0
    %p183 = por %p181, %p182
    %p184 = scmp.ne.s32.totalorder %s170, %s171
    %p185 = scmp.eq.s32.totalorder %s26, 3
    %p186 = por %p184, %p185
    %p188 = scmp.ne.s32.totalorder %s171, %s187
    %p189 = scmp.eq.s32.totalorder %s26, 0
    %p190 = por %p188, %p189
    %s191 = ssub.s32 %s28, %s35
    %p192 = scmp.eq.s32.totalorder %s191, 0
    %s194 = sadd.s32 %s193, 1
    %s195 = scalar_select %p192, %s193, %s194
    %p198 = pneg %p192
    %p199 = scmp.eq.s32.totalorder %s20, 3
    %p200 = por %p198, %p199
    %p201 = scmp.ne.s32.totalorder %s193, %s196
    %p202 = scmp.eq.s32.totalorder %s20, 0
    %p203 = por %p201, %p202
    %p204 = scmp.ne.s32.totalorder %s193, %s196
    %p205 = scmp.eq.s32.totalorder %s25, 3
    %p206 = por %p204, %p205
    %p207 = scmp.ne.s32.totalorder %s196, %s197
    %p208 = scmp.eq.s32.totalorder %s25, 0
    %p209 = por %p207, %p208
    %p210 = scmp.ne.s32.totalorder %s196, %s197
    %p211 = scmp.eq.s32.totalorder %s26, 3
    %p212 = por %p210, %p211
    %p214 = scmp.ne.s32.totalorder %s197, %s213
    %p215 = scmp.eq.s32.totalorder %s26, 0
    %p216 = por %p214, %p215
    %s217 = ssub.s32 %s28, %s35
    %p218 = scmp.eq.s32.totalorder %s217, 0
    %s220 = sadd.s32 %s219, 1
    %s221 = scalar_select %p218, %s219, %s220
    %p224 = pneg %p218
    %p225 = scmp.eq.s32.totalorder %s20, 3
    %p226 = por %p224, %p225
    %p227 = scmp.ne.s32.totalorder %s219, %s222
    %p228 = scmp.eq.s32.totalorder %s20, 0
    %p229 = por %p227, %p228
    %p230 = scmp.ne.s32.totalorder %s219, %s222
    %p231 = scmp.eq.s32.totalorder %s25, 3
    %p232 = por %p230, %p231
    %p233 = scmp.ne.s32.totalorder %s222, %s223
    %p234 = scmp.eq.s32.totalorder %s25, 0
    %p235 = por %p233, %p234
    %p236 = scmp.ne.s32.totalorder %s222, %s223
    %p237 = scmp.eq.s32.totalorder %s26, 3
    %p238 = por %p236, %p237
    %p240 = scmp.ne.s32.totalorder %s223, %s239
    %p241 = scmp.eq.s32.totalorder %s26, 0
    %p242 = por %p240, %p241
    %s243 = ssub.s32 %s28, %s35
    %p244 = scmp.eq.s32.totalorder %s243, 0
    %s246 = sadd.s32 %s245, 1
    %s247 = scalar_select %p244, %s245, %s246
    %p250 = pneg %p244
    %p251 = scmp.eq.s32.totalorder %s20, 3
    %p252 = por %p250, %p251
    %p253 = scmp.ne.s32.totalorder %s245, %s248
    %p254 = scmp.eq.s32.totalorder %s20, 0
    %p255 = por %p253, %p254
    %p256 = scmp.ne.s32.totalorder %s245, %s248
    %p257 = scmp.eq.s32.totalorder %s25, 3
    %p258 = por %p256, %p257
    %p259 = scmp.ne.s32.totalorder %s248, %s249
    %p260 = scmp.eq.s32.totalorder %s25, 0
    %p261 = por %p259, %p260
    %p262 = scmp.ne.s32.totalorder %s248, %s249
    %p263 = scmp.eq.s32.totalorder %s26, 3
    %p264 = por %p262, %p263
    %p266 = scmp.ne.s32.totalorder %s249, %s265
    %p267 = scmp.eq.s32.totalorder %s26, 0
    %p268 = por %p266, %p267
    %s269 = ssub.s32 %s28, %s35
    %p270 = scmp.eq.s32.totalorder %s269, 0
    %s272 = sadd.s32 %s271, 1
    %s273 = scalar_select %p270, %s271, %s272
    %p276 = pneg %p270
    %p277 = scmp.eq.s32.totalorder %s20, 3
    %p278 = por %p276, %p277
    %p279 = scmp.ne.s32.totalorder %s271, %s274
    %p280 = scmp.eq.s32.totalorder %s20, 0
    %p281 = por %p279, %p280
    %p282 = scmp.ne.s32.totalorder %s271, %s274
    %p283 = scmp.eq.s32.totalorder %s25, 3
    %p284 = por %p282, %p283
    %p285 = scmp.ne.s32.totalorder %s274, %s275
    %p286 = scmp.eq.s32.totalorder %s25, 0
    %p287 = por %p285, %p286
    %p288 = scmp.ne.s32.totalorder %s274, %s275
    %p289 = scmp.eq.s32.totalorder %s26, 3
    %p290 = por %p288, %p289
    %p292 = scmp.ne.s32.totalorder %s275, %s291
    %p293 = scmp.eq.s32.totalorder %s26, 0
    %p294 = por %p292, %p293
    %s295 = ssub.s32 %s28, %s35
    %p296 = scmp.eq.s32.totalorder %s295, 0
    %s298 = sadd.s32 %s297, 1
    %s299 = scalar_select %p296, %s297, %s298
    %p302 = pneg %p296
    %p303 = scmp.eq.s32.totalorder %s20, 3
    %p304 = por %p302, %p303
    %p305 = scmp.ne.s32.totalorder %s297, %s300
    %p306 = scmp.eq.s32.totalorder %s20, 0
    %p307 = por %p305, %p306
    %p308 = scmp.ne.s32.totalorder %s297, %s300
    %p309 = scmp.eq.s32.totalorder %s25, 3
    %p310 = por %p308, %p309
    %p311 = scmp.ne.s32.totalorder %s300, %s301
    %p312 = scmp.eq.s32.totalorder %s25, 0
    %p313 = por %p311, %p312
    %p314 = scmp.ne.s32.totalorder %s300, %s301
    %p315 = scmp.eq.s32.totalorder %s26, 3
    %p316 = por %p314, %p315
    %p318 = scmp.ne.s32.totalorder %s301, %s317
    %p319 = scmp.eq.s32.totalorder %s26, 0
    %p320 = por %p318, %p319
    %s321 = ssub.s32 %s28, %s35
    %p322 = scmp.eq.s32.totalorder %s321, 0
    %s324 = sadd.s32 %s323, 1
    %s325 = scalar_select %p322, %s323, %s324
    %p328 = pneg %p322
    %p329 = scmp.eq.s32.totalorder %s20, 3
    %p330 = por %p328, %p329
    %p331 = scmp.ne.s32.totalorder %s323, %s326
    %p332 = scmp.eq.s32.totalorder %s20, 0
    %p333 = por %p331, %p332
    %p334 = scmp.ne.s32.totalorder %s323, %s326
    %p335 = scmp.eq.s32.totalorder %s25, 3
    %p336 = por %p334, %p335
    %p337 = scmp.ne.s32.totalorder %s326, %s327
    %p338 = scmp.eq.s32.totalorder %s25, 0
    %p339 = por %p337, %p338
    %p340 = scmp.ne.s32.totalorder %s326, %s327
    %p341 = scmp.eq.s32.totalorder %s26, 3
    %p342 = por %p340, %p341
    %p344 = scmp.ne.s32.totalorder %s327, %s343
    %p345 = scmp.eq.s32.totalorder %s26, 0
    %p346 = por %p344, %p345
    %s348 = sadd.s32 %s347, 1
    %p351 = scmp.eq.s32.totalorder %s20, 3
    %p352 = scmp.ne.s32.totalorder %s347, %s349
    %p353 = scmp.eq.s32.totalorder %s20, 0
    %p354 = por %p352, %p353
    %p355 = scmp.ne.s32.totalorder %s347, %s349
    %p356 = scmp.eq.s32.totalorder %s25, 3
    %p357 = por %p355, %p356
    %p358 = scmp.ne.s32.totalorder %s349, %s350
    %p359 = scmp.eq.s32.totalorder %s25, 0
    %p360 = por %p358, %p359
    %p361 = scmp.ne.s32.totalorder %s349, %s350
    %p362 = scmp.eq.s32.totalorder %s26, 3
    %p363 = por %p361, %p362
    %p365 = scmp.ne.s32.totalorder %s350, %s364
    %p366 = scmp.eq.s32.totalorder %s26, 0
    %p367 = por %p365, %p366
    %s369 = sadd.s32 %s368, 1
    %p372 = scmp.eq.s32.totalorder %s20, 3
    %p373 = scmp.ne.s32.totalorder %s368, %s370
    %p374 = scmp.eq.s32.totalorder %s20, 0
    %p375 = por %p373, %p374
    %p376 = scmp.ne.s32.totalorder %s368, %s370
    %p377 = scmp.eq.s32.totalorder %s25, 3
    %p378 = por %p376, %p377
    %p379 = scmp.ne.s32.totalorder %s370, %s371
    %p380 = scmp.eq.s32.totalorder %s25, 0
    %p381 = por %p379, %p380
    %p382 = scmp.ne.s32.totalorder %s370, %s371
    %p383 = scmp.eq.s32.totalorder %s26, 3
    %p384 = por %p382, %p383
    %p386 = scmp.ne.s32.totalorder %s371, %s385
    %p387 = scmp.eq.s32.totalorder %s26, 0
    %p388 = por %p386, %p387
    %s389 = ssub.s32 %s27, %s39
    %p390 = scmp.eq.s32.totalorder %s389, 0
    %s392 = sadd.s32 %s391, 1
    %s393 = scalar_select %p390, %s391, %s392
    %p396 = pneg %p390
    %p397 = scmp.eq.s32.totalorder %s20, 3
    %p398 = por %p396, %p397
    %p399 = scmp.ne.s32.totalorder %s391, %s394
    %p400 = scmp.eq.s32.totalorder %s20, 0
    %p401 = por %p399, %p400
    %p402 = scmp.ne.s32.totalorder %s391, %s394
    %p403 = scmp.eq.s32.totalorder %s25, 3
    %p404 = por %p402, %p403
    %p405 = scmp.ne.s32.totalorder %s394, %s395
    %p406 = scmp.eq.s32.totalorder %s25, 0
    %p407 = por %p405, %p406
    %p408 = scmp.ne.s32.totalorder %s394, %s395
    %p409 = scmp.eq.s32.totalorder %s26, 3
    %p410 = por %p408, %p409
    %p412 = scmp.ne.s32.totalorder %s395, %s411
    %p413 = scmp.eq.s32.totalorder %s26, 0
    %p414 = por %p412, %p413
    %p415 = scmp.le.s32.totalorder 1, %s20
    %p416 = scmp.lt.s32.totalorder %s20, 5
    %p417 = pnand %p415, %p416
    %p418 = pneg %p417
    // Predicated region
    $region9: #{triplane_transformer_forward.7} parent=5 // pred_check
      _
    $region10: #{triplane_transformer_forward.7} parent=5 // pred_check_branch
      %420 = sbr.rel (%p417) target = $region12
    $region11: #{triplane_transformer_forward.7} parent=5 // pred_region
      %s421 = ssub.s32 %s20, 1
      // Predicated region
      $region13: #{triplane_transformer_forward.7} parent=11 // pred_check
        %p422 = pneg %p79
      $region14: #{triplane_transformer_forward.7} parent=11 // pred_check_branch
        %424 = sbr.rel (%p422) target = $region16
      $region15: #{triplane_transformer_forward.7} parent=11 // pred_region
        _
      $region16: #{triplane_transformer_forward.7} parent=11 // pred_fallthru
        _
      // Predicated region
      $region17: #{triplane_transformer_forward.7} parent=11 // pred_check
        %p425 = pneg %p360
      $region18: #{triplane_transformer_forward.7} parent=11 // pred_check_branch
        %427 = sbr.rel (%p425) target = $region20
      $region19: #{triplane_transformer_forward.7} parent=11 // pred_region
        _
      $region20: #{triplane_transformer_forward.7} parent=11 // pred_fallthru
        _
      // Predicated region
      $region21: #{triplane_transformer_forward.7} parent=11 // pred_check
        %p428 = pneg %p381
      $region22: #{triplane_transformer_forward.7} parent=11 // pred_check_branch
        %430 = sbr.rel (%p428) target = $region24
      $region23: #{triplane_transformer_forward.7} parent=11 // pred_region
        _
      $region24: #{triplane_transformer_forward.7} parent=11 // pred_fallthru
        _
    $region12: #{triplane_transformer_forward.7} parent=5 // pred_fallthru
      _
    %p431 = scmp.lt.s32.totalorder %s20, 4
    // Predicated region
    $region25: #{triplane_transformer_forward.7} parent=5 // pred_check
      %p432 = pneg %p431
    $region26: #{triplane_transformer_forward.7} parent=5 // pred_check_branch
      %434 = sbr.rel (%p432) target = $region28
    $region27: #{triplane_transformer_forward.7} parent=5 // pred_region
      // Predicated region
      $region29: #{triplane_transformer_forward.7} parent=27 // pred_check
        %p435 = pneg %p52
      $region30: #{triplane_transformer_forward.7} parent=27 // pred_check_branch
        %437 = sbr.rel (%p435) target = $region32
      $region31: #{triplane_transformer_forward.7} parent=27 // pred_region
        %p438 = scmp.lt.s32.totalorder %s27, 1
        %s439 = scalar_select %p438, %s27, 1
        %s440 = smul.addr %s439, 6
        %s441 = smul.addr %s440, 8
        %s442 = scalar_lea.vmem %s0, %s441
      $region32: #{triplane_transformer_forward.7} parent=27 // pred_fallthru
        _
      // Predicated region
      $region33: #{triplane_transformer_forward.7} parent=27 // pred_check
        %p443 = pneg %p99
      $region34: #{triplane_transformer_forward.7} parent=27 // pred_check_branch
        %445 = sbr.rel (%p443) target = $region36
      $region35: #{triplane_transformer_forward.7} parent=27 // pred_region
        %p446 = scmp.lt.s32.totalorder %s28, 1
        %s447 = scalar_select %p446, %s28, 1
        %s448 = scalar_lea.vmem %s2, %s447
      $region36: #{triplane_transformer_forward.7} parent=27 // pred_fallthru
        _
      // Predicated region
      $region37: #{triplane_transformer_forward.7} parent=27 // pred_check
        %p449 = pneg %p125
      $region38: #{triplane_transformer_forward.7} parent=27 // pred_check_branch
        %451 = sbr.rel (%p449) target = $region40
      $region39: #{triplane_transformer_forward.7} parent=27 // pred_region
        %p452 = scmp.lt.s32.totalorder %s28, 1
        %s453 = scalar_select %p452, %s28, 1
        %s454 = scalar_lea.vmem %s3, %s453
      $region40: #{triplane_transformer_forward.7} parent=27 // pred_fallthru
        _
      // Predicated region
      $region41: #{triplane_transformer_forward.7} parent=27 // pred_check
        %p455 = pneg %p151
      $region42: #{triplane_transformer_forward.7} parent=27 // pred_check_branch
        %457 = sbr.rel (%p455) target = $region44
      $region43: #{triplane_transformer_forward.7} parent=27 // pred_region
        %p458 = scmp.lt.s32.totalorder %s28, 1
        %s459 = scalar_select %p458, %s28, 1
        %s460 = smul.addr %s459, 4
        %s461 = smul.addr %s460, 4
        %s462 = scalar_lea.vmem %s4, %s461
      $region44: #{triplane_transformer_forward.7} parent=27 // pred_fallthru
        _
      // Predicated region
      $region45: #{triplane_transformer_forward.7} parent=27 // pred_check
        %p463 = pneg %p177
      $region46: #{triplane_transformer_forward.7} parent=27 // pred_check_branch
        %465 = sbr.rel (%p463) target = $region48
      $region47: #{triplane_transformer_forward.7} parent=27 // pred_region
        %p466 = scmp.lt.s32.totalorder %s28, 1
        %s467 = scalar_select %p466, %s28, 1
        %s468 = smul.addr %s467, 4
        %s469 = smul.addr %s468, 4
        %s470 = scalar_lea.vmem %s5, %s469
      $region48: #{triplane_transformer_forward.7} parent=27 // pred_fallthru
        _
      // Predicated region
      $region49: #{triplane_transformer_forward.7} parent=27 // pred_check
        %p471 = pneg %p203
      $region50: #{triplane_transformer_forward.7} parent=27 // pred_check_branch
        %473 = sbr.rel (%p471) target = $region52
      $region51: #{triplane_transformer_forward.7} parent=27 // pred_region
        %p474 = scmp.lt.s32.totalorder %s28, 1
        %s475 = scalar_select %p474, %s28, 1
        %s476 = scalar_lea.vmem %s6, %s475
      $region52: #{triplane_transformer_forward.7} parent=27 // pred_fallthru
        _
      // Predicated region
      $region53: #{triplane_transformer_forward.7} parent=27 // pred_check
        %p477 = pneg %p229
      $region54: #{triplane_transformer_forward.7} parent=27 // pred_check_branch
        %479 = sbr.rel (%p477) target = $region56
      $region55: #{triplane_transformer_forward.7} parent=27 // pred_region
        %p480 = scmp.lt.s32.totalorder %s28, 1
        %s481 = scalar_select %p480, %s28, 1
        %s482 = scalar_lea.vmem %s7, %s481
      $region56: #{triplane_transformer_forward.7} parent=27 // pred_fallthru
        _
      // Predicated region
      $region57: #{triplane_transformer_forward.7} parent=27 // pred_check
        %p483 = pneg %p255
      $region58: #{triplane_transformer_forward.7} parent=27 // pred_check_branch
        %485 = sbr.rel (%p483) target = $region60
      $region59: #{triplane_transformer_forward.7} parent=27 // pred_region
        %p486 = scmp.lt.s32.totalorder %s28, 1
        %s487 = scalar_select %p486, %s28, 1
        %s488 = smul.addr %s487, 4
        %s489 = smul.addr %s488, 4
        %s490 = scalar_lea.vmem %s8, %s489
      $region60: #{triplane_transformer_forward.7} parent=27 // pred_fallthru
        _
      // Predicated region
      $region61: #{triplane_transformer_forward.7} parent=27 // pred_check
        %p491 = pneg %p281
      $region62: #{triplane_transformer_forward.7} parent=27 // pred_check_branch
        %493 = sbr.rel (%p491) target = $region64
      $region63: #{triplane_transformer_forward.7} parent=27 // pred_region
        %p494 = scmp.lt.s32.totalorder %s28, 1
        %s495 = scalar_select %p494, %s28, 1
        %s496 = scalar_lea.vmem %s9, %s495
      $region64: #{triplane_transformer_forward.7} parent=27 // pred_fallthru
        _
      // Predicated region
      $region65: #{triplane_transformer_forward.7} parent=27 // pred_check
        %p497 = pneg %p307
      $region66: #{triplane_transformer_forward.7} parent=27 // pred_check_branch
        %499 = sbr.rel (%p497) target = $region68
      $region67: #{triplane_transformer_forward.7} parent=27 // pred_region
        %p500 = scmp.lt.s32.totalorder %s28, 1
        %s501 = scalar_select %p500, %s28, 1
        %s502 = smul.addr %s501, 16
        %s503 = smul.addr %s502, 4
        %s504 = scalar_lea.vmem %s10, %s503
      $region68: #{triplane_transformer_forward.7} parent=27 // pred_fallthru
        _
      // Predicated region
      $region69: #{triplane_transformer_forward.7} parent=27 // pred_check
        %p505 = pneg %p333
      $region70: #{triplane_transformer_forward.7} parent=27 // pred_check_branch
        %507 = sbr.rel (%p505) target = $region72
      $region71: #{triplane_transformer_forward.7} parent=27 // pred_region
        %p508 = scmp.lt.s32.totalorder %s28, 1
        %s509 = scalar_select %p508, %s28, 1
        %s510 = scalar_lea.vmem %s11, %s509
      $region72: #{triplane_transformer_forward.7} parent=27 // pred_fallthru
        _
    $region28: #{triplane_transformer_forward.7} parent=5 // pred_fallthru
      _
    %p511 = scmp.le.s32.totalorder 1, %s20
    %p512 = scmp.lt.s32.totalorder %s20, 5
    %p513 = pnand %p511, %p512
    %p514 = pneg %p513
    // Predicated region
    $region73: #{triplane_transformer_forward.7} parent=5 // pred_check
      _
    $region74: #{triplane_transformer_forward.7} parent=5 // pred_check_branch
      %516 = sbr.rel (%p513) target = $region76
    $region75: #{triplane_transformer_forward.7} parent=5 // pred_region
      %s517 = ssub.s32 %s20, 1
      %p518 = scmp.lt.s32.totalorder %s29, 1
      %s519 = scalar_select %p518, %s29, 1
      %s520 = smul.addr %s519, 6
      %s521 = smul.addr %s520, 8
      %s522 = scalar_lea.vmem %s0, %s521
      %p523 = pneg %p58
      %p524 = pneg %p55
      %p525 = pneg %p79
      %p526 = pneg %p76
      %p527 = scmp.lt.s32.totalorder %s30, 1
      %s528 = scalar_select %p527, %s30, 1
      %s529 = scalar_lea.vmem %s2, %s528
      %p530 = pneg %p105
      %p531 = pneg %p102
      %p532 = scmp.lt.s32.totalorder %s30, 1
      %s533 = scalar_select %p532, %s30, 1
      %s534 = scalar_lea.vmem %s3, %s533
      %p535 = pneg %p131
      %p536 = pneg %p128
      %p537 = scmp.lt.s32.totalorder %s30, 1
      %s538 = scalar_select %p537, %s30, 1
      %s539 = smul.addr %s538, 4
      %s540 = smul.addr %s539, 4
      %s541 = scalar_lea.vmem %s4, %s540
      %p542 = pneg %p157
      %p543 = pneg %p154
      %p544 = scmp.lt.s32.totalorder %s30, 1
      %s545 = scalar_select %p544, %s30, 1
      %s546 = smul.addr %s545, 4
      %s547 = smul.addr %s546, 4
      %s548 = scalar_lea.vmem %s5, %s547
      %p549 = pneg %p183
      %p550 = pneg %p180
      %p551 = scmp.lt.s32.totalorder %s30, 1
      %s552 = scalar_select %p551, %s30, 1
      %s553 = scalar_lea.vmem %s6, %s552
      %p554 = pneg %p209
      %p555 = pneg %p206
      %p556 = scmp.lt.s32.totalorder %s30, 1
      %s557 = scalar_select %p556, %s30, 1
      %s558 = scalar_lea.vmem %s7, %s557
      %p559 = pneg %p235
      %p560 = pneg %p232
      %p561 = scmp.lt.s32.totalorder %s30, 1
      %s562 = scalar_select %p561, %s30, 1
      %s563 = smul.addr %s562, 4
      %s564 = smul.addr %s563, 4
      %s565 = scalar_lea.vmem %s8, %s564
      %p566 = pneg %p261
      %p567 = pneg %p258
      %p568 = scmp.lt.s32.totalorder %s30, 1
      %s569 = scalar_select %p568, %s30, 1
      %s570 = scalar_lea.vmem %s9, %s569
      %p571 = pneg %p287
      %p572 = pneg %p284
      %p573 = scmp.lt.s32.totalorder %s30, 1
      %s574 = scalar_select %p573, %s30, 1
      %s575 = smul.addr %s574, 16
      %s576 = smul.addr %s575, 4
      %s577 = scalar_lea.vmem %s10, %s576
      %p578 = pneg %p313
      %p579 = pneg %p310
      %p580 = scmp.lt.s32.totalorder %s30, 1
      %s581 = scalar_select %p580, %s30, 1
      %s582 = scalar_lea.vmem %s11, %s581
      %p583 = pneg %p339
      %p584 = pneg %p336
      %p585 = pneg %p360
      %p586 = pneg %p357
      %p587 = pneg %p381
      %p588 = pneg %p378
      %p589 = pneg %p407
      %p590 = pneg %p404
      %p591 = scmp.lt.s32.totalorder %s29, 1
      %s592 = scalar_select %p591, %s29, 1
      %s593 = smul.addr %s592, 6
      %s594 = smul.addr %s593, 8
      %s595 = scalar_lea.vmem %s14, %s594
      %p596 = scmp.lt.s32.totalorder %s29, 1
      %s597 = scalar_select %p596, %s29, 1
      %s598 = smul.addr %s597, 6
      %s599 = smul.addr %s598, 8
      %s600 = scalar_lea.vmem %s0, %s599
      %p601 = scmp.lt.s32.totalorder %s30, 1
      %s602 = scalar_select %p601, %s30, 1
      %s603 = scalar_lea.vmem %s2, %s602
      %p604 = scmp.lt.s32.totalorder %s30, 1
      %s605 = scalar_select %p604, %s30, 1
      %s606 = scalar_lea.vmem %s3, %s605
      %p607 = scmp.lt.s32.totalorder %s30, 1
      %s608 = scalar_select %p607, %s30, 1
      %s609 = smul.addr %s608, 4
      %s610 = smul.addr %s609, 4
      %s611 = scalar_lea.vmem %s4, %s610
      %p612 = scmp.lt.s32.totalorder %s30, 1
      %s613 = scalar_select %p612, %s30, 1
      %s614 = smul.addr %s613, 4
      %s615 = smul.addr %s614, 4
      %s616 = scalar_lea.vmem %s5, %s615
      %p617 = scmp.lt.s32.totalorder %s30, 1
      %s618 = scalar_select %p617, %s30, 1
      %s619 = scalar_lea.vmem %s6, %s618
      %p620 = scmp.lt.s32.totalorder %s30, 1
      %s621 = scalar_select %p620, %s30, 1
      %s622 = scalar_lea.vmem %s7, %s621
      %p623 = scmp.lt.s32.totalorder %s30, 1
      %s624 = scalar_select %p623, %s30, 1
      %s625 = smul.addr %s624, 4
      %s626 = smul.addr %s625, 4
      %s627 = scalar_lea.vmem %s8, %s626
      %p628 = scmp.lt.s32.totalorder %s30, 1
      %s629 = scalar_select %p628, %s30, 1
      %s630 = scalar_lea.vmem %s9, %s629
      %p631 = scmp.lt.s32.totalorder %s30, 1
      %s632 = scalar_select %p631, %s30, 1
      %s633 = smul.addr %s632, 16
      %s634 = smul.addr %s633, 4
      %s635 = scalar_lea.vmem %s10, %s634
      %p636 = scmp.lt.s32.totalorder %s30, 1
      %s637 = scalar_select %p636, %s30, 1
      %s638 = scalar_lea.vmem %s11, %s637
      %p639 = scmp.lt.s32.totalorder %s29, 1
      %s640 = scalar_select %p639, %s29, 1
      %s641 = smul.addr %s640, 6
      %s642 = smul.addr %s641, 8
      %s643 = scalar_lea.vmem %s14, %s642
      %p645 = scmp.eq.s32.totalorder %s30, 0
      // Predicated region
      $region77: #{triplane_transformer_forward.7} parent=75 // pred_check
        %p646 = pneg %p645
      $region78: #{triplane_transformer_forward.7} parent=75 // pred_check_branch
        %648 = sbr.rel (%p646) target = $region80
      $region79: #{triplane_transformer_forward.7} parent=75 // pred_region
        %v649 = vld [vmem:[%s600] sm:$0xff]
        %v650 = vld [vmem:[%s600 + $0x8] sm:$0xff]
        %v651 = vld [vmem:[%s600 + $0x10] sm:$0xff]
        %v652 = vld [vmem:[%s600 + $0x18] sm:$0xff]
        %v653 = vld [vmem:[%s600 + $0x20] sm:$0xff]
        %v654 = vld [vmem:[%s600 + $0x28] sm:$0xff]
        %v655 = vld [vmem:[%s1] sm:$0xff]
        %v656 = vld [vmem:[%s1 + $0x8] sm:$0xff]
        %v657 = vld [vmem:[%s1 + $0x10] sm:$0xff]
        %v658 = vld [vmem:[%s1 + $0x18] sm:$0xff]
        %v659 = vld [vmem:[%s1 + $0x20] sm:$0xff]
        %v660 = vld [vmem:[%s1 + $0x28] sm:$0xff]
        %v661 = vadd.f32 %v649, %v655
        %v662 = vadd.f32 %v650, %v656
        %v663 = vadd.f32 %v651, %v657
        %v664 = vadd.f32 %v652, %v658
        %v665 = vadd.f32 %v653, %v659
        %v666 = vadd.f32 %v654, %v660
        %vm667 = vcmask 261120
        %668 = vst.msk [vmem:[#allocation2] sm:$0xff] %vm667, %v661
        %669 = vst.msk [vmem:[#allocation2 + $0x8] sm:$0xff] %vm667, %v662
        %670 = vst.msk [vmem:[#allocation2 + $0x10] sm:$0xff] %vm667, %v663
        %671 = vst.msk [vmem:[#allocation2 + $0x18] sm:$0xff] %vm667, %v664
        %672 = vst.msk [vmem:[#allocation2 + $0x20] sm:$0xff] %vm667, %v665
        %673 = vst.msk [vmem:[#allocation2 + $0x28] sm:$0xff] %vm667, %v666
      $region80: #{triplane_transformer_forward.7} parent=75 // pred_fallthru
        _
      %v674 = vld [vmem:[#allocation2] sm:$0xff]
      %v675 = vld [vmem:[#allocation2 + $0x8] sm:$0xff]
      %v676 = vld [vmem:[#allocation2 + $0x10] sm:$0xff]
      %v677 = vld [vmem:[#allocation2 + $0x18] sm:$0xff]
      %v678 = vld [vmem:[#allocation2 + $0x20] sm:$0xff]
      %v679 = vld [vmem:[#allocation2 + $0x28] sm:$0xff]
      %v680 = vld [vmem:[%s603] sm:$0x1]
      %v681 = vld [vmem:[%s606] sm:$0x1]
      %vm682 = vcmask 261120
      %v683 = vsel %vm682, %v674, 0.0
      %684 = vadd.xlane.f32.xlu0 %v683
      %v685 = vpop.xlane.xlu0 %684
      %v686 = vsel %vm682, %v675, 0.0
      %687 = vadd.xlane.f32.xlu0 %v686
      %v688 = vpop.xlane.xlu0 %687
      %v689 = vsel %vm682, %v676, 0.0
      %690 = vadd.xlane.f32.xlu0 %v689
      %v691 = vpop.xlane.xlu0 %690
      %v692 = vsel %vm682, %v677, 0.0
      %693 = vadd.xlane.f32.xlu0 %v692
      %v694 = vpop.xlane.xlu0 %693
      %v695 = vsel %vm682, %v678, 0.0
      %696 = vadd.xlane.f32.xlu0 %v695
      %v697 = vpop.xlane.xlu0 %696
      %v698 = vsel %vm682, %v679, 0.0
      %699 = vadd.xlane.f32.xlu0 %v698
      %v700 = vpop.xlane.xlu0 %699
      %v701 = vrcp.pop 32.0
      %v702 = vmul.f32 %v685, %v701
      %v703 = vmul.f32 %v688, %v701
      %v704 = vmul.f32 %v691, %v701
      %v705 = vmul.f32 %v694, %v701
      %v706 = vmul.f32 %v697, %v701
      %v707 = vmul.f32 %v700, %v701
      %v708 = vsub.f32 %v674, %v702
      %v709 = vsub.f32 %v675, %v703
      %v710 = vsub.f32 %v676, %v704
      %v711 = vsub.f32 %v677, %v705
      %v712 = vsub.f32 %v678, %v706
      %v713 = vsub.f32 %v679, %v707
      %v714 = vmul.f32 %v708, %v708
      %v715 = vmul.f32 %v709, %v709
      %v716 = vmul.f32 %v710, %v710
      %v717 = vmul.f32 %v711, %v711
      %v718 = vmul.f32 %v712, %v712
      %v719 = vmul.f32 %v713, %v713
      %v720 = vsel %vm682, %v714, 0.0
      %721 = vadd.xlane.f32.xlu0 %v720
      %v722 = vpop.xlane.xlu0 %721
      %v723 = vsel %vm682, %v715, 0.0
      %724 = vadd.xlane.f32.xlu0 %v723
      %v725 = vpop.xlane.xlu0 %724
      %v726 = vsel %vm682, %v716, 0.0
      %727 = vadd.xlane.f32.xlu0 %v726
      %v728 = vpop.xlane.xlu0 %727
      %v729 = vsel %vm682, %v717, 0.0
      %730 = vadd.xlane.f32.xlu0 %v729
      %v731 = vpop.xlane.xlu0 %730
      %v732 = vsel %vm682, %v718, 0.0
      %733 = vadd.xlane.f32.xlu0 %v732
      %v734 = vpop.xlane.xlu0 %733
      %v735 = vsel %vm682, %v719, 0.0
      %736 = vadd.xlane.f32.xlu0 %v735
      %v737 = vpop.xlane.xlu0 %736
      %v738 = vmul.f32 %v722, %v701
      %v739 = vmul.f32 %v725, %v701
      %v740 = vmul.f32 %v728, %v701
      %v741 = vmul.f32 %v731, %v701
      %v742 = vmul.f32 %v734, %v701
      %v743 = vmul.f32 %v737, %v701
      %v744 = vadd.f32 %v738, 1e-06
      %v745 = vadd.f32 %v739, 1e-06
      %v746 = vadd.f32 %v740, 1e-06
      %v747 = vadd.f32 %v741, 1e-06
      %v748 = vadd.f32 %v742, 1e-06
      %v749 = vadd.f32 %v743, 1e-06
      %v750 = vrsqrt.pop %v744
      %v751 = vrsqrt.pop %v745
      %v752 = vrsqrt.pop %v746
      %v753 = vrsqrt.pop %v747
      %v754 = vrsqrt.pop %v748
      %v755 = vrsqrt.pop %v749
      %v756 = vmul.f32 %v708, %v750
      %v757 = vmul.f32 %v709, %v751
      %v758 = vmul.f32 %v710, %v752
      %v759 = vmul.f32 %v711, %v753
      %v760 = vmul.f32 %v712, %v754
      %v761 = vmul.f32 %v713, %v755
      %v763 = vlaneseq
      %v764 = vshrl.u32 %v763, 7
      %v765 = vsub.s32 0, %v764
      %v766 = vrot.slane %v680, %v765
      %v768 = vmul.f32 %v756, %v766
      %v769 = vmul.f32 %v757, %v766
      %v770 = vmul.f32 %v758, %v766
      %v771 = vmul.f32 %v759, %v766
      %v772 = vmul.f32 %v760, %v766
      %v773 = vmul.f32 %v761, %v766
      %v775 = vlaneseq
      %v776 = vshrl.u32 %v775, 7
      %v777 = vsub.s32 0, %v776
      %v778 = vrot.slane %v681, %v777
      %v780 = vadd.f32 %v768, %v778
      %v781 = vadd.f32 %v769, %v778
      %v782 = vadd.f32 %v770, %v778
      %v783 = vadd.f32 %v771, %v778
      %v784 = vadd.f32 %v772, %v778
      %v785 = vadd.f32 %v773, %v778
      %v786 = vpack.c.bf16 %v781, %v780
      %v787 = vpack.c.bf16 %v783, %v782
      %v788 = vpack.c.bf16 %v785, %v784
      %v789 = vld [vmem:[%s611] sm:$0xf]
      %v790 = vld [vmem:[%s611 + $0x4] sm:$0xf]
      %v791 = vld [vmem:[%s611 + $0x8] sm:$0xf]
      %v792 = vld [vmem:[%s611 + $0xc] sm:$0xf]
      %v797 = vunpack.c.l.b16 %v789
      %v798 = vunpack.c.l.b16 %v790
      %v799 = vunpack.c.l.b16 %v791
      %v800 = vunpack.c.l.b16 %v792
      %v801 = vpack.c.b16 %v798, %v797
      %v802 = vpack.c.b16 %v800, %v799
      %v806 = vsel %vm682, %v786, 0
      %v809 = vsel %vm682, %v787, 0
      %v812 = vsel %vm682, %v788, 0
      %814 = vmatprep.subr.bf16.mxu0 0
      %815 = vmatpush1.bf16.msra.mxu0 0
      %816 = vmatprep.subr.bf16.mxu0 0
      %817 = vmatpush1.bf16.msra.mxu0 0
      %818 = vmatprep.subr.bf16.mxu0 0
      %819 = vmatpush1.bf16.msra.mxu0 0
      %820 = vmatprep.subr.bf16.mxu0 0
      %821 = vmatpush1.bf16.msra.mxu0 0
      %822 = vmatprep.subr.bf16.mxu0 0
      %823 = vmatpush1.bf16.msra.mxu0 0
      %824 = vmatprep.subr.bf16.mxu0 0
      %825 = vmatpush1.bf16.msra.mxu0 0
      %826 = vmatprep.subr.bf16.mxu0 0
      %827 = vmatpush1.bf16.msra.mxu0 %v802
      %828 = vmatprep.subr.bf16.mxu0 0
      %829 = vmatpush1.bf16.msra.mxu0 %v801
      %830 = vmatprep.subr.bf16.mxu0 0
      %831 = vmatpush2.bf16.msra.mxu0 0
      %832 = vmatprep.subr.bf16.mxu0 0
      %833 = vmatpush2.bf16.msra.mxu0 0
      %834 = vmatprep.subr.bf16.mxu0 0
      %835 = vmatpush2.bf16.msra.mxu0 0
      %836 = vmatprep.subr.bf16.mxu0 0
      %837 = vmatpush2.bf16.msra.mxu0 0
      %838 = vmatprep.subr.bf16.mxu0 0
      %839 = vmatpush2.bf16.msra.mxu0 0
      %840 = vmatprep.subr.bf16.mxu0 0
      %841 = vmatpush2.bf16.msra.mxu0 0
      %842 = vmatprep.subr.bf16.mxu0 0
      %843 = vmatpush2.bf16.msra.mxu0 0
      %844 = vmatprep.subr.bf16.mxu0 0
      %845 = vmatpush2.bf16.msra.mxu0 0
      %846 = vmatprep.mubr.bf16.mxu0 0
      %847 = vmatmul.mubr.bf16.gmra.mxu0 %v806
      %v848 = vpop.f32.mrf.mxu0
      %v849 = vadd.f32 0.0, %v848
      %v850 = vpop.f32.mrf.mxu0
      %v851 = vpop.f32.mrf.mxu0
      %v852 = vadd.f32 0.0, %v851
      %v853 = vpop.f32.mrf.mxu0
      %854 = vmatprep.mubr.bf16.mxu0 0
      %855 = vmatmul.mubr.bf16.gmra.mxu0 %v809
      %v856 = vpop.f32.mrf.mxu0
      %v857 = vadd.f32 0.0, %v856
      %v858 = vpop.f32.mrf.mxu0
      %v859 = vpop.f32.mrf.mxu0
      %v860 = vadd.f32 0.0, %v859
      %v861 = vpop.f32.mrf.mxu0
      %862 = vmatprep.mubr.bf16.mxu0 0
      %863 = vmatmul.mubr.bf16.gmra.mxu0 %v812
      %v864 = vpop.f32.mrf.mxu0
      %v865 = vadd.f32 0.0, %v864
      %v866 = vpop.f32.mrf.mxu0
      %v867 = vpop.f32.mrf.mxu0
      %v868 = vadd.f32 0.0, %v867
      %v869 = vpop.f32.mrf.mxu0
      %870 = vdwg.mxu0
      %v871 = vpack.c.bf16 %v852, %v849
      %v872 = vpack.c.bf16 %v860, %v857
      %v873 = vpack.c.bf16 %v868, %v865
      %877 = vrot.lane.b32.xlu0 %v871, 96
      %v878 = vpop.permute.xlu0 %877
      %879 = vrot.lane.b32.xlu0 %v872, 96
      %v880 = vpop.permute.xlu0 %879
      %881 = vrot.lane.b32.xlu0 %v873, 96
      %v882 = vpop.permute.xlu0 %881
      %vm883 = vcmask 64512
      %v885 = vsel %vm883, %v871, 0
      %v888 = vsel %vm883, %v872, 0
      %v891 = vsel %vm883, %v873, 0
      %v894 = vsel %vm883, %v878, 0
      %v897 = vsel %vm883, %v880, 0
      %v900 = vsel %vm883, %v882, 0
      %902 = vmatprep.subr.bf16.mxu0 0
      %903 = vmatpush1.bf16.xpose.msra.mxu0 0
      %904 = vmatprep.subr.bf16.mxu0 0
      %905 = vmatpush1.bf16.xpose.msra.mxu0 0
      %906 = vmatprep.subr.bf16.mxu0 0
      %907 = vmatpush1.bf16.xpose.msra.mxu0 0
      %908 = vmatprep.subr.bf16.mxu0 0
      %909 = vmatpush1.bf16.xpose.msra.mxu0 0
      %910 = vmatprep.subr.bf16.mxu0 0
      %911 = vmatpush1.bf16.xpose.msra.mxu0 0
      %912 = vmatprep.subr.bf16.mxu0 0
      %913 = vmatpush1.bf16.xpose.msra.mxu0 %v900
      %914 = vmatprep.subr.bf16.mxu0 0
      %915 = vmatpush1.bf16.xpose.msra.mxu0 %v897
      %916 = vmatprep.subr.bf16.mxu0 0
      %917 = vmatpush1.bf16.xpose.msra.mxu0 %v894
      %918 = vmatprep.subr.bf16.mxu0 0
      %919 = vmatpush2.bf16.xpose.msra.mxu0 0
      %920 = vmatprep.subr.bf16.mxu0 0
      %921 = vmatpush2.bf16.xpose.msra.mxu0 0
      %922 = vmatprep.subr.bf16.mxu0 0
      %923 = vmatpush2.bf16.xpose.msra.mxu0 0
      %924 = vmatprep.subr.bf16.mxu0 0
      %925 = vmatpush2.bf16.xpose.msra.mxu0 0
      %926 = vmatprep.subr.bf16.mxu0 0
      %927 = vmatpush2.bf16.xpose.msra.mxu0 0
      %928 = vmatprep.subr.bf16.mxu0 0
      %929 = vmatpush2.bf16.xpose.msra.mxu0 0
      %930 = vmatprep.subr.bf16.mxu0 0
      %931 = vmatpush2.bf16.xpose.msra.mxu0 0
      %932 = vmatprep.subr.bf16.mxu0 0
      %933 = vmatpush2.bf16.xpose.msra.mxu0 0
      %934 = vmatprep.mubr.bf16.mxu0 0
      %935 = vmatmul.mubr.bf16.gmra.mxu0 %v885
      %v936 = vpop.f32.mrf.mxu0
      %v937 = vadd.f32 0.0, %v936
      %v938 = vpop.f32.mrf.mxu0
      %v939 = vpop.f32.mrf.mxu0
      %v940 = vadd.f32 0.0, %v939
      %v941 = vpop.f32.mrf.mxu0
      %942 = vmatprep.mubr.bf16.mxu0 0
      %943 = vmatmul.mubr.bf16.gmra.mxu0 %v888
      %v944 = vpop.f32.mrf.mxu0
      %v945 = vadd.f32 0.0, %v944
      %v946 = vpop.f32.mrf.mxu0
      %v947 = vpop.f32.mrf.mxu0
      %v948 = vadd.f32 0.0, %v947
      %v949 = vpop.f32.mrf.mxu0
      %950 = vmatprep.mubr.bf16.mxu0 0
      %951 = vmatmul.mubr.bf16.gmra.mxu0 %v891
      %v952 = vpop.f32.mrf.mxu0
      %v953 = vadd.f32 0.0, %v952
      %v954 = vpop.f32.mrf.mxu0
      %v955 = vpop.f32.mrf.mxu0
      %v956 = vadd.f32 0.0, %v955
      %v957 = vpop.f32.mrf.mxu0
      %958 = vdwg.mxu0
      %v959 = vmul.f32 %v937, 0.35355338
      %v960 = vmul.f32 %v940, 0.35355338
      %v961 = vmul.f32 %v945, 0.35355338
      %v962 = vmul.f32 %v948, 0.35355338
      %v963 = vmul.f32 %v953, 0.35355338
      %v964 = vmul.f32 %v956, 0.35355338
      %vm965 = vcmask 392192
      %v966 = vsel %vm965, %v959, -inf
      %967 = vmax.xlane.f32.xlu0 %v966
      %v968 = vpop.xlane.xlu0 %967
      %v969 = vsel %vm965, %v960, -inf
      %970 = vmax.xlane.f32.xlu0 %v969
      %v971 = vpop.xlane.xlu0 %970
      %v972 = vsel %vm965, %v961, -inf
      %973 = vmax.xlane.f32.xlu0 %v972
      %v974 = vpop.xlane.xlu0 %973
      %v975 = vsel %vm965, %v962, -inf
      %976 = vmax.xlane.f32.xlu0 %v975
      %v977 = vpop.xlane.xlu0 %976
      %v978 = vsel %vm965, %v963, -inf
      %979 = vmax.xlane.f32.xlu0 %v978
      %v980 = vpop.xlane.xlu0 %979
      %v981 = vsel %vm965, %v964, -inf
      %982 = vmax.xlane.f32.xlu0 %v981
      %v983 = vpop.xlane.xlu0 %982
      %v984 = vsub.f32 %v959, %v968
      %v985 = vsub.f32 %v960, %v971
      %v986 = vsub.f32 %v961, %v974
      %v987 = vsub.f32 %v962, %v977
      %v988 = vsub.f32 %v963, %v980
      %v989 = vsub.f32 %v964, %v983
      %v990 = vmul.f32 %v984, 1.442695
      %v991 = vpow.pop %v990
      %v992 = vmul.f32 %v985, 1.442695
      %v993 = vpow.pop %v992
      %v994 = vmul.f32 %v986, 1.442695
      %v995 = vpow.pop %v994
      %v996 = vmul.f32 %v987, 1.442695
      %v997 = vpow.pop %v996
      %v998 = vmul.f32 %v988, 1.442695
      %v999 = vpow.pop %v998
      %v1000 = vmul.f32 %v989, 1.442695
      %v1001 = vpow.pop %v1000
      %v1002 = vsel %vm965, %v991, 0.0
      %1003 = vadd.xlane.f32.xlu0 %v1002
      %v1004 = vpop.xlane.xlu0 %1003
      %v1005 = vsel %vm965, %v993, 0.0
      %1006 = vadd.xlane.f32.xlu0 %v1005
      %v1007 = vpop.xlane.xlu0 %1006
      %v1008 = vsel %vm965, %v995, 0.0
      %1009 = vadd.xlane.f32.xlu0 %v1008
      %v1010 = vpop.xlane.xlu0 %1009
      %v1011 = vsel %vm965, %v997, 0.0
      %1012 = vadd.xlane.f32.xlu0 %v1011
      %v1013 = vpop.xlane.xlu0 %1012
      %v1014 = vsel %vm965, %v999, 0.0
      %1015 = vadd.xlane.f32.xlu0 %v1014
      %v1016 = vpop.xlane.xlu0 %1015
      %v1017 = vsel %vm965, %v1001, 0.0
      %1018 = vadd.xlane.f32.xlu0 %v1017
      %v1019 = vpop.xlane.xlu0 %1018
      %v1020 = vrcp.pop %v1004
      %v1021 = vrcp.pop %v1007
      %v1022 = vrcp.pop %v1010
      %v1023 = vrcp.pop %v1013
      %v1024 = vrcp.pop %v1016
      %v1025 = vrcp.pop %v1019
      %v1026 = vmul.f32 %v991, %v1020
      %v1027 = vmul.f32 %v993, %v1021
      %v1028 = vmul.f32 %v995, %v1022
      %v1029 = vmul.f32 %v997, %v1023
      %v1030 = vmul.f32 %v999, %v1024
      %v1031 = vmul.f32 %v1001, %v1025
      %v1032 = vpack.c.bf16 %v1027, %v1026
      %v1033 = vpack.c.bf16 %v1029, %v1028
      %v1034 = vpack.c.bf16 %v1031, %v1030
      %1035 = vrot.lane.b32.xlu0 %v871, 64
      %v1036 = vpop.permute.xlu0 %1035
      %1037 = vrot.lane.b32.xlu0 %v872, 64
      %v1038 = vpop.permute.xlu0 %1037
      %1039 = vrot.lane.b32.xlu0 %v873, 64
      %v1040 = vpop.permute.xlu0 %1039
      %v1045 = vsel %vm965, %v1032, 0
      %v1048 = vsel %vm965, %v1033, 0
      %v1051 = vsel %vm965, %v1034, 0
      %1053 = vmatprep.subr.bf16.mxu0 0
      %1054 = vmatpush1.bf16.msra.mxu0 0
      %1055 = vmatprep.subr.bf16.mxu0 0
      %1056 = vmatpush1.bf16.msra.mxu0 0
      %1057 = vmatprep.subr.bf16.mxu0 0
      %1058 = vmatpush1.bf16.msra.mxu0 0
      %1059 = vmatprep.subr.bf16.mxu0 0
      %1060 = vmatpush1.bf16.msra.mxu0 0
      %1061 = vmatprep.subr.bf16.mxu0 0
      %1062 = vmatpush1.bf16.msra.mxu0 0
      %1063 = vmatprep.subr.bf16.mxu0 0
      %1064 = vmatpush1.bf16.msra.mxu0 %v1040
      %1065 = vmatprep.subr.bf16.mxu0 0
      %1066 = vmatpush1.bf16.msra.mxu0 %v1038
      %1067 = vmatprep.subr.bf16.mxu0 0
      %1068 = vmatpush1.bf16.msra.mxu0 %v1036
      %1069 = vmatprep.subr.bf16.mxu0 0
      %1070 = vmatpush2.bf16.msra.mxu0 0
      %1071 = vmatprep.subr.bf16.mxu0 0
      %1072 = vmatpush2.bf16.msra.mxu0 0
      %1073 = vmatprep.subr.bf16.mxu0 0
      %1074 = vmatpush2.bf16.msra.mxu0 0
      %1075 = vmatprep.subr.bf16.mxu0 0
      %1076 = vmatpush2.bf16.msra.mxu0 0
      %1077 = vmatprep.subr.bf16.mxu0 0
      %1078 = vmatpush2.bf16.msra.mxu0 0
      %1079 = vmatprep.subr.bf16.mxu0 0
      %1080 = vmatpush2.bf16.msra.mxu0 0
      %1081 = vmatprep.subr.bf16.mxu0 0
      %1082 = vmatpush2.bf16.msra.mxu0 0
      %1083 = vmatprep.subr.bf16.mxu0 0
      %1084 = vmatpush2.bf16.msra.mxu0 0
      %1085 = vmatprep.mubr.bf16.mxu0 0
      %1086 = vmatmul.mubr.bf16.gmra.mxu0 %v1045
      %v1087 = vpop.f32.mrf.mxu0
      %v1088 = vadd.f32 0.0, %v1087
      %v1089 = vpop.f32.mrf.mxu0
      %v1090 = vpop.f32.mrf.mxu0
      %v1091 = vadd.f32 0.0, %v1090
      %v1092 = vpop.f32.mrf.mxu0
      %1093 = vmatprep.mubr.bf16.mxu0 0
      %1094 = vmatmul.mubr.bf16.gmra.mxu0 %v1048
      %v1095 = vpop.f32.mrf.mxu0
      %v1096 = vadd.f32 0.0, %v1095
      %v1097 = vpop.f32.mrf.mxu0
      %v1098 = vpop.f32.mrf.mxu0
      %v1099 = vadd.f32 0.0, %v1098
      %v1100 = vpop.f32.mrf.mxu0
      %1101 = vmatprep.mubr.bf16.mxu0 0
      %1102 = vmatmul.mubr.bf16.gmra.mxu0 %v1051
      %v1103 = vpop.f32.mrf.mxu0
      %v1104 = vadd.f32 0.0, %v1103
      %v1105 = vpop.f32.mrf.mxu0
      %v1106 = vpop.f32.mrf.mxu0
      %v1107 = vadd.f32 0.0, %v1106
      %v1108 = vpop.f32.mrf.mxu0
      %1109 = vdwg.mxu0
      %v1110 = vpack.c.bf16 %v1091, %v1088
      %v1111 = vpack.c.bf16 %v1099, %v1096
      %v1112 = vpack.c.bf16 %v1107, %v1104
      %v1113 = vld [vmem:[%s616] sm:$0xf]
      %1114 = vrot.lane.b32.xlu0 %v871, 120
      %v1115 = vpop.permute.xlu0 %1114
      %1116 = vrot.lane.b32.xlu0 %v872, 120
      %v1117 = vpop.permute.xlu0 %1116
      %1118 = vrot.lane.b32.xlu0 %v873, 120
      %v1119 = vpop.permute.xlu0 %1118
      %1120 = vrot.lane.b32.xlu0 %v871, 88
      %v1121 = vpop.permute.xlu0 %1120
      %1122 = vrot.lane.b32.xlu0 %v872, 88
      %v1123 = vpop.permute.xlu0 %1122
      %1124 = vrot.lane.b32.xlu0 %v873, 88
      %v1125 = vpop.permute.xlu0 %1124
      %v1127 = vsel %vm883, %v1115, 0
      %v1130 = vsel %vm883, %v1117, 0
      %v1133 = vsel %vm883, %v1119, 0
      %v1136 = vsel %vm883, %v1121, 0
      %v1139 = vsel %vm883, %v1123, 0
      %v1142 = vsel %vm883, %v1125, 0
      %1144 = vmatprep.subr.bf16.mxu0 0
      %1145 = vmatpush1.bf16.xpose.msra.mxu0 0
      %1146 = vmatprep.subr.bf16.mxu0 0
      %1147 = vmatpush1.bf16.xpose.msra.mxu0 0
      %1148 = vmatprep.subr.bf16.mxu0 0
      %1149 = vmatpush1.bf16.xpose.msra.mxu0 0
      %1150 = vmatprep.subr.bf16.mxu0 0
      %1151 = vmatpush1.bf16.xpose.msra.mxu0 0
      %1152 = vmatprep.subr.bf16.mxu0 0
      %1153 = vmatpush1.bf16.xpose.msra.mxu0 0
      %1154 = vmatprep.subr.bf16.mxu0 0
      %1155 = vmatpush1.bf16.xpose.msra.mxu0 %v1142
      %1156 = vmatprep.subr.bf16.mxu0 0
      %1157 = vmatpush1.bf16.xpose.msra.mxu0 %v1139
      %1158 = vmatprep.subr.bf16.mxu0 0
      %1159 = vmatpush1.bf16.xpose.msra.mxu0 %v1136
      %1160 = vmatprep.subr.bf16.mxu0 0
      %1161 = vmatpush2.bf16.xpose.msra.mxu0 0
      %1162 = vmatprep.subr.bf16.mxu0 0
      %1163 = vmatpush2.bf16.xpose.msra.mxu0 0
      %1164 = vmatprep.subr.bf16.mxu0 0
      %1165 = vmatpush2.bf16.xpose.msra.mxu0 0
      %1166 = vmatprep.subr.bf16.mxu0 0
      %1167 = vmatpush2.bf16.xpose.msra.mxu0 0
      %1168 = vmatprep.subr.bf16.mxu0 0
      %1169 = vmatpush2.bf16.xpose.msra.mxu0 0
      %1170 = vmatprep.subr.bf16.mxu0 0
      %1171 = vmatpush2.bf16.xpose.msra.mxu0 0
      %1172 = vmatprep.subr.bf16.mxu0 0
      %1173 = vmatpush2.bf16.xpose.msra.mxu0 0
      %1174 = vmatprep.subr.bf16.mxu0 0
      %1175 = vmatpush2.bf16.xpose.msra.mxu0 0
      %1176 = vmatprep.mubr.bf16.mxu0 0
      %1177 = vmatmul.mubr.bf16.gmra.mxu0 %v1127
      %v1178 = vpop.f32.mrf.mxu0
      %v1179 = vadd.f32 0.0, %v1178
      %v1180 = vpop.f32.mrf.mxu0
      %v1181 = vpop.f32.mrf.mxu0
      %v1182 = vadd.f32 0.0, %v1181
      %v1183 = vpop.f32.mrf.mxu0
      %1184 = vmatprep.mubr.bf16.mxu0 0
      %1185 = vmatmul.mubr.bf16.gmra.mxu0 %v1130
      %v1186 = vpop.f32.mrf.mxu0
      %v1187 = vadd.f32 0.0, %v1186
      %v1188 = vpop.f32.mrf.mxu0
      %v1189 = vpop.f32.mrf.mxu0
      %v1190 = vadd.f32 0.0, %v1189
      %v1191 = vpop.f32.mrf.mxu0
      %1192 = vmatprep.mubr.bf16.mxu0 0
      %1193 = vmatmul.mubr.bf16.gmra.mxu0 %v1133
      %v1194 = vpop.f32.mrf.mxu0
      %v1195 = vadd.f32 0.0, %v1194
      %v1196 = vpop.f32.mrf.mxu0
      %v1197 = vpop.f32.mrf.mxu0
      %v1198 = vadd.f32 0.0, %v1197
      %v1199 = vpop.f32.mrf.mxu0
      %1200 = vdwg.mxu0
      %v1201 = vmul.f32 %v1179, 0.35355338
      %v1202 = vmul.f32 %v1182, 0.35355338
      %v1203 = vmul.f32 %v1187, 0.35355338
      %v1204 = vmul.f32 %v1190, 0.35355338
      %v1205 = vmul.f32 %v1195, 0.35355338
      %v1206 = vmul.f32 %v1198, 0.35355338
      %v1207 = vsel %vm965, %v1201, -inf
      %1208 = vmax.xlane.f32.xlu0 %v1207
      %v1209 = vpop.xlane.xlu0 %1208
      %v1210 = vsel %vm965, %v1202, -inf
      %1211 = vmax.xlane.f32.xlu0 %v1210
      %v1212 = vpop.xlane.xlu0 %1211
      %v1213 = vsel %vm965, %v1203, -inf
      %1214 = vmax.xlane.f32.xlu0 %v1213
      %v1215 = vpop.xlane.xlu0 %1214
      %v1216 = vsel %vm965, %v1204, -inf
      %1217 = vmax.xlane.f32.xlu0 %v1216
      %v1218 = vpop.xlane.xlu0 %1217
      %v1219 = vsel %vm965, %v1205, -inf
      %1220 = vmax.xlane.f32.xlu0 %v1219
      %v1221 = vpop.xlane.xlu0 %1220
      %v1222 = vsel %vm965, %v1206, -inf
      %1223 = vmax.xlane.f32.xlu0 %v1222
      %v1224 = vpop.xlane.xlu0 %1223
      %v1225 = vsub.f32 %v1201, %v1209
      %v1226 = vsub.f32 %v1202, %v1212
      %v1227 = vsub.f32 %v1203, %v1215
      %v1228 = vsub.f32 %v1204, %v1218
      %v1229 = vsub.f32 %v1205, %v1221
      %v1230 = vsub.f32 %v1206, %v1224
      %v1231 = vmul.f32 %v1225, 1.442695
      %v1232 = vpow.pop %v1231
      %v1233 = vmul.f32 %v1226, 1.442695
      %v1234 = vpow.pop %v1233
      %v1235 = vmul.f32 %v1227, 1.442695
      %v1236 = vpow.pop %v1235
      %v1237 = vmul.f32 %v1228, 1.442695
      %v1238 = vpow.pop %v1237
      %v1239 = vmul.f32 %v1229, 1.442695
      %v1240 = vpow.pop %v1239
      %v1241 = vmul.f32 %v1230, 1.442695
      %v1242 = vpow.pop %v1241
      %v1243 = vsel %vm965, %v1232, 0.0
      %1244 = vadd.xlane.f32.xlu0 %v1243
      %v1245 = vpop.xlane.xlu0 %1244
      %v1246 = vsel %vm965, %v1234, 0.0
      %1247 = vadd.xlane.f32.xlu0 %v1246
      %v1248 = vpop.xlane.xlu0 %1247
      %v1249 = vsel %vm965, %v1236, 0.0
      %1250 = vadd.xlane.f32.xlu0 %v1249
      %v1251 = vpop.xlane.xlu0 %1250
      %v1252 = vsel %vm965, %v1238, 0.0
      %1253 = vadd.xlane.f32.xlu0 %v1252
      %v1254 = vpop.xlane.xlu0 %1253
      %v1255 = vsel %vm965, %v1240, 0.0
      %1256 = vadd.xlane.f32.xlu0 %v1255
      %v1257 = vpop.xlane.xlu0 %1256
      %v1258 = vsel %vm965, %v1242, 0.0
      %1259 = vadd.xlane.f32.xlu0 %v1258
      %v1260 = vpop.xlane.xlu0 %1259
      %v1261 = vrcp.pop %v1245
      %v1262 = vrcp.pop %v1248
      %v1263 = vrcp.pop %v1251
      %v1264 = vrcp.pop %v1254
      %v1265 = vrcp.pop %v1257
      %v1266 = vrcp.pop %v1260
      %v1267 = vmul.f32 %v1232, %v1261
      %v1268 = vmul.f32 %v1234, %v1262
      %v1269 = vmul.f32 %v1236, %v1263
      %v1270 = vmul.f32 %v1238, %v1264
      %v1271 = vmul.f32 %v1240, %v1265
      %v1272 = vmul.f32 %v1242, %v1266
      %v1273 = vpack.c.bf16 %v1268, %v1267
      %v1274 = vpack.c.bf16 %v1270, %v1269
      %v1275 = vpack.c.bf16 %v1272, %v1271
      %1276 = vrot.lane.b32.xlu0 %v871, 56
      %v1277 = vpop.permute.xlu0 %1276
      %1278 = vrot.lane.b32.xlu0 %v872, 56
      %v1279 = vpop.permute.xlu0 %1278
      %1280 = vrot.lane.b32.xlu0 %v873, 56
      %v1281 = vpop.permute.xlu0 %1280
      %v1286 = vsel %vm965, %v1273, 0
      %v1289 = vsel %vm965, %v1274, 0
      %v1292 = vsel %vm965, %v1275, 0
      %1294 = vmatprep.subr.bf16.mxu0 0
      %1295 = vmatpush1.bf16.msra.mxu0 0
      %1296 = vmatprep.subr.bf16.mxu0 0
      %1297 = vmatpush1.bf16.msra.mxu0 0
      %1298 = vmatprep.subr.bf16.mxu0 0
      %1299 = vmatpush1.bf16.msra.mxu0 0
      %1300 = vmatprep.subr.bf16.mxu0 0
      %1301 = vmatpush1.bf16.msra.mxu0 0
      %1302 = vmatprep.subr.bf16.mxu0 0
      %1303 = vmatpush1.bf16.msra.mxu0 0
      %1304 = vmatprep.subr.bf16.mxu0 0
      %1305 = vmatpush1.bf16.msra.mxu0 %v1281
      %1306 = vmatprep.subr.bf16.mxu0 0
      %1307 = vmatpush1.bf16.msra.mxu0 %v1279
      %1308 = vmatprep.subr.bf16.mxu0 0
      %1309 = vmatpush1.bf16.msra.mxu0 %v1277
      %1310 = vmatprep.subr.bf16.mxu0 0
      %1311 = vmatpush2.bf16.msra.mxu0 0
      %1312 = vmatprep.subr.bf16.mxu0 0
      %1313 = vmatpush2.bf16.msra.mxu0 0
      %1314 = vmatprep.subr.bf16.mxu0 0
      %1315 = vmatpush2.bf16.msra.mxu0 0
      %1316 = vmatprep.subr.bf16.mxu0 0
      %1317 = vmatpush2.bf16.msra.mxu0 0
      %1318 = vmatprep.subr.bf16.mxu0 0
      %1319 = vmatpush2.bf16.msra.mxu0 0
      %1320 = vmatprep.subr.bf16.mxu0 0
      %1321 = vmatpush2.bf16.msra.mxu0 0
      %1322 = vmatprep.subr.bf16.mxu0 0
      %1323 = vmatpush2.bf16.msra.mxu0 0
      %1324 = vmatprep.subr.bf16.mxu0 0
      %1325 = vmatpush2.bf16.msra.mxu0 0
      %1326 = vmatprep.mubr.bf16.mxu0 0
      %1327 = vmatmul.mubr.bf16.gmra.mxu0 %v1286
      %v1328 = vpop.f32.mrf.mxu0
      %v1329 = vadd.f32 0.0, %v1328
      %v1330 = vpop.f32.mrf.mxu0
      %v1331 = vpop.f32.mrf.mxu0
      %v1332 = vadd.f32 0.0, %v1331
      %v1333 = vpop.f32.mrf.mxu0
      %1334 = vmatprep.mubr.bf16.mxu0 0
      %1335 = vmatmul.mubr.bf16.gmra.mxu0 %v1289
      %v1336 = vpop.f32.mrf.mxu0
      %v1337 = vadd.f32 0.0, %v1336
      %v1338 = vpop.f32.mrf.mxu0
      %v1339 = vpop.f32.mrf.mxu0
      %v1340 = vadd.f32 0.0, %v1339
      %v1341 = vpop.f32.mrf.mxu0
      %1342 = vmatprep.mubr.bf16.mxu0 0
      %1343 = vmatmul.mubr.bf16.gmra.mxu0 %v1292
      %v1344 = vpop.f32.mrf.mxu0
      %v1345 = vadd.f32 0.0, %v1344
      %v1346 = vpop.f32.mrf.mxu0
      %v1347 = vpop.f32.mrf.mxu0
      %v1348 = vadd.f32 0.0, %v1347
      %v1349 = vpop.f32.mrf.mxu0
      %1350 = vdwg.mxu0
      %v1351 = vpack.c.bf16 %v1332, %v1329
      %v1352 = vpack.c.bf16 %v1340, %v1337
      %v1353 = vpack.c.bf16 %v1348, %v1345
      %v1354 = vld [vmem:[%s616 + $0x4] sm:$0xf]
      %v1356 = vsel %vm883, %v1351, 0
      %v1359 = vsel %vm883, %v1352, 0
      %v1362 = vsel %vm883, %v1353, 0
      %vm1364 = vcmask 1043456
      %v1366 = vsel %vm1364, %v1354, 0
      %1368 = vmatprep.subr.bf16.mxu0 0
      %1369 = vmatpush1.bf16.msra.mxu0 0
      %1370 = vmatprep.subr.bf16.mxu0 0
      %1371 = vmatpush1.bf16.msra.mxu0 0
      %1372 = vmatprep.subr.bf16.mxu0 0
      %1373 = vmatpush1.bf16.msra.mxu0 0
      %1374 = vmatprep.subr.bf16.mxu0 0
      %1375 = vmatpush1.bf16.msra.mxu0 0
      %1376 = vmatprep.subr.bf16.mxu0 0
      %1377 = vmatpush1.bf16.msra.mxu0 0
      %1378 = vmatprep.subr.bf16.mxu0 0
      %1379 = vmatpush1.bf16.msra.mxu0 0
      %1380 = vmatprep.subr.bf16.mxu0 0
      %1381 = vmatpush1.bf16.msra.mxu0 0
      %1382 = vmatprep.subr.bf16.mxu0 0
      %1383 = vmatpush1.bf16.msra.mxu0 %v1366
      %1384 = vmatprep.subr.bf16.mxu0 0
      %1385 = vmatpush2.bf16.msra.mxu0 0
      %1386 = vmatprep.subr.bf16.mxu0 0
      %1387 = vmatpush2.bf16.msra.mxu0 0
      %1388 = vmatprep.subr.bf16.mxu0 0
      %1389 = vmatpush2.bf16.msra.mxu0 0
      %1390 = vmatprep.subr.bf16.mxu0 0
      %1391 = vmatpush2.bf16.msra.mxu0 0
      %1392 = vmatprep.subr.bf16.mxu0 0
      %1393 = vmatpush2.bf16.msra.mxu0 0
      %1394 = vmatprep.subr.bf16.mxu0 0
      %1395 = vmatpush2.bf16.msra.mxu0 0
      %1396 = vmatprep.subr.bf16.mxu0 0
      %1397 = vmatpush2.bf16.msra.mxu0 0
      %1398 = vmatprep.subr.bf16.mxu0 0
      %1399 = vmatpush2.bf16.msra.mxu0 0
      %1400 = vmatprep.mubr.bf16.mxu0 0
      %1401 = vmatmul.mubr.bf16.gmra.mxu0 %v1356
      %v1402 = vpop.f32.mrf.mxu0
      %v1403 = vadd.f32 0.0, %v1402
      %v1404 = vpop.f32.mrf.mxu0
      %v1405 = vpop.f32.mrf.mxu0
      %v1406 = vadd.f32 0.0, %v1405
      %v1407 = vpop.f32.mrf.mxu0
      %1408 = vmatprep.mubr.bf16.mxu0 0
      %1409 = vmatmul.mubr.bf16.gmra.mxu0 %v1359
      %v1410 = vpop.f32.mrf.mxu0
      %v1411 = vadd.f32 0.0, %v1410
      %v1412 = vpop.f32.mrf.mxu0
      %v1413 = vpop.f32.mrf.mxu0
      %v1414 = vadd.f32 0.0, %v1413
      %v1415 = vpop.f32.mrf.mxu0
      %1416 = vmatprep.mubr.bf16.mxu0 0
      %1417 = vmatmul.mubr.bf16.gmra.mxu0 %v1362
      %v1418 = vpop.f32.mrf.mxu0
      %v1419 = vadd.f32 0.0, %v1418
      %v1420 = vpop.f32.mrf.mxu0
      %v1421 = vpop.f32.mrf.mxu0
      %v1422 = vadd.f32 0.0, %v1421
      %v1423 = vpop.f32.mrf.mxu0
      %1424 = vdwg.mxu0
      %v1426 = vsel %vm883, %v1110, 0
      %v1429 = vsel %vm883, %v1111, 0
      %v1432 = vsel %vm883, %v1112, 0
      %v1435 = vsel %vm1364, %v1113, 0
      %1437 = vmatprep.subr.bf16.mxu0 0
      %1438 = vmatpush1.bf16.msra.mxu0 0
      %1439 = vmatprep.subr.bf16.mxu0 0
      %1440 = vmatpush1.bf16.msra.mxu0 0
      %1441 = vmatprep.subr.bf16.mxu0 0
      %1442 = vmatpush1.bf16.msra.mxu0 0
      %1443 = vmatprep.subr.bf16.mxu0 0
      %1444 = vmatpush1.bf16.msra.mxu0 0
      %1445 = vmatprep.subr.bf16.mxu0 0
      %1446 = vmatpush1.bf16.msra.mxu0 0
      %1447 = vmatprep.subr.bf16.mxu0 0
      %1448 = vmatpush1.bf16.msra.mxu0 0
      %1449 = vmatprep.subr.bf16.mxu0 0
      %1450 = vmatpush1.bf16.msra.mxu0 0
      %1451 = vmatprep.subr.bf16.mxu0 0
      %1452 = vmatpush1.bf16.msra.mxu0 %v1435
      %1453 = vmatprep.subr.bf16.mxu0 0
      %1454 = vmatpush2.bf16.msra.mxu0 0
      %1455 = vmatprep.subr.bf16.mxu0 0
      %1456 = vmatpush2.bf16.msra.mxu0 0
      %1457 = vmatprep.subr.bf16.mxu0 0
      %1458 = vmatpush2.bf16.msra.mxu0 0
      %1459 = vmatprep.subr.bf16.mxu0 0
      %1460 = vmatpush2.bf16.msra.mxu0 0
      %1461 = vmatprep.subr.bf16.mxu0 0
      %1462 = vmatpush2.bf16.msra.mxu0 0
      %1463 = vmatprep.subr.bf16.mxu0 0
      %1464 = vmatpush2.bf16.msra.mxu0 0
      %1465 = vmatprep.subr.bf16.mxu0 0
      %1466 = vmatpush2.bf16.msra.mxu0 0
      %1467 = vmatprep.subr.bf16.mxu0 0
      %1468 = vmatpush2.bf16.msra.mxu0 0
      %1469 = vmatprep.mubr.bf16.mxu0 0
      %1470 = vmatmul.mubr.bf16.gmra.mxu0 %v1426
      %v1471 = vpop.f32.mrf.mxu0
      %v1472 = vadd.f32 %v1403, %v1471
      %v1473 = vpop.f32.mrf.mxu0
      %v1474 = vpop.f32.mrf.mxu0
      %v1475 = vadd.f32 %v1406, %v1474
      %v1476 = vpop.f32.mrf.mxu0
      %1477 = vmatprep.mubr.bf16.mxu0 0
      %1478 = vmatmul.mubr.bf16.gmra.mxu0 %v1429
      %v1479 = vpop.f32.mrf.mxu0
      %v1480 = vadd.f32 %v1411, %v1479
      %v1481 = vpop.f32.mrf.mxu0
      %v1482 = vpop.f32.mrf.mxu0
      %v1483 = vadd.f32 %v1414, %v1482
      %v1484 = vpop.f32.mrf.mxu0
      %1485 = vmatprep.mubr.bf16.mxu0 0
      %1486 = vmatmul.mubr.bf16.gmra.mxu0 %v1432
      %v1487 = vpop.f32.mrf.mxu0
      %v1488 = vadd.f32 %v1419, %v1487
      %v1489 = vpop.f32.mrf.mxu0
      %v1490 = vpop.f32.mrf.mxu0
      %v1491 = vadd.f32 %v1422, %v1490
      %v1492 = vpop.f32.mrf.mxu0
      %1493 = vdwg.mxu0
      %1494 = vrot.lane.b32.xlu0 %v871, 112
      %v1495 = vpop.permute.xlu0 %1494
      %1496 = vrot.lane.b32.xlu0 %v872, 112
      %v1497 = vpop.permute.xlu0 %1496
      %1498 = vrot.lane.b32.xlu0 %v873, 112
      %v1499 = vpop.permute.xlu0 %1498
      %1500 = vrot.lane.b32.xlu0 %v871, 80
      %v1501 = vpop.permute.xlu0 %1500
      %1502 = vrot.lane.b32.xlu0 %v872, 80
      %v1503 = vpop.permute.xlu0 %1502
      %1504 = vrot.lane.b32.xlu0 %v873, 80
      %v1505 = vpop.permute.xlu0 %1504
      %v1507 = vsel %vm883, %v1495, 0
      %v1510 = vsel %vm883, %v1497, 0
      %v1513 = vsel %vm883, %v1499, 0
      %v1516 = vsel %vm883, %v1501, 0
      %v1519 = vsel %vm883, %v1503, 0
      %v1522 = vsel %vm883, %v1505, 0
      %1524 = vmatprep.subr.bf16.mxu0 0
      %1525 = vmatpush1.bf16.xpose.msra.mxu0 0
      %1526 = vmatprep.subr.bf16.mxu0 0
      %1527 = vmatpush1.bf16.xpose.msra.mxu0 0
      %1528 = vmatprep.subr.bf16.mxu0 0
      %1529 = vmatpush1.bf16.xpose.msra.mxu0 0
      %1530 = vmatprep.subr.bf16.mxu0 0
      %1531 = vmatpush1.bf16.xpose.msra.mxu0 0
      %1532 = vmatprep.subr.bf16.mxu0 0
      %1533 = vmatpush1.bf16.xpose.msra.mxu0 0
      %1534 = vmatprep.subr.bf16.mxu0 0
      %1535 = vmatpush1.bf16.xpose.msra.mxu0 %v1522
      %1536 = vmatprep.subr.bf16.mxu0 0
      %1537 = vmatpush1.bf16.xpose.msra.mxu0 %v1519
      %1538 = vmatprep.subr.bf16.mxu0 0
      %1539 = vmatpush1.bf16.xpose.msra.mxu0 %v1516
      %1540 = vmatprep.subr.bf16.mxu0 0
      %1541 = vmatpush2.bf16.xpose.msra.mxu0 0
      %1542 = vmatprep.subr.bf16.mxu0 0
      %1543 = vmatpush2.bf16.xpose.msra.mxu0 0
      %1544 = vmatprep.subr.bf16.mxu0 0
      %1545 = vmatpush2.bf16.xpose.msra.mxu0 0
      %1546 = vmatprep.subr.bf16.mxu0 0
      %1547 = vmatpush2.bf16.xpose.msra.mxu0 0
      %1548 = vmatprep.subr.bf16.mxu0 0
      %1549 = vmatpush2.bf16.xpose.msra.mxu0 0
      %1550 = vmatprep.subr.bf16.mxu0 0
      %1551 = vmatpush2.bf16.xpose.msra.mxu0 0
      %1552 = vmatprep.subr.bf16.mxu0 0
      %1553 = vmatpush2.bf16.xpose.msra.mxu0 0
      %1554 = vmatprep.subr.bf16.mxu0 0
      %1555 = vmatpush2.bf16.xpose.msra.mxu0 0
      %1556 = vmatprep.mubr.bf16.mxu0 0
      %1557 = vmatmul.mubr.bf16.gmra.mxu0 %v1507
      %v1558 = vpop.f32.mrf.mxu0
      %v1559 = vadd.f32 0.0, %v1558
      %v1560 = vpop.f32.mrf.mxu0
      %v1561 = vpop.f32.mrf.mxu0
      %v1562 = vadd.f32 0.0, %v1561
      %v1563 = vpop.f32.mrf.mxu0
      %1564 = vmatprep.mubr.bf16.mxu0 0
      %1565 = vmatmul.mubr.bf16.gmra.mxu0 %v1510
      %v1566 = vpop.f32.mrf.mxu0
      %v1567 = vadd.f32 0.0, %v1566
      %v1568 = vpop.f32.mrf.mxu0
      %v1569 = vpop.f32.mrf.mxu0
      %v1570 = vadd.f32 0.0, %v1569
      %v1571 = vpop.f32.mrf.mxu0
      %1572 = vmatprep.mubr.bf16.mxu0 0
      %1573 = vmatmul.mubr.bf16.gmra.mxu0 %v1513
      %v1574 = vpop.f32.mrf.mxu0
      %v1575 = vadd.f32 0.0, %v1574
      %v1576 = vpop.f32.mrf.mxu0
      %v1577 = vpop.f32.mrf.mxu0
      %v1578 = vadd.f32 0.0, %v1577
      %v1579 = vpop.f32.mrf.mxu0
      %1580 = vdwg.mxu0
      %v1581 = vmul.f32 %v1559, 0.35355338
      %v1582 = vmul.f32 %v1562, 0.35355338
      %v1583 = vmul.f32 %v1567, 0.35355338
      %v1584 = vmul.f32 %v1570, 0.35355338
      %v1585 = vmul.f32 %v1575, 0.35355338
      %v1586 = vmul.f32 %v1578, 0.35355338
      %v1587 = vsel %vm965, %v1581, -inf
      %1588 = vmax.xlane.f32.xlu0 %v1587
      %v1589 = vpop.xlane.xlu0 %1588
      %v1590 = vsel %vm965, %v1582, -inf
      %1591 = vmax.xlane.f32.xlu0 %v1590
      %v1592 = vpop.xlane.xlu0 %1591
      %v1593 = vsel %vm965, %v1583, -inf
      %1594 = vmax.xlane.f32.xlu0 %v1593
      %v1595 = vpop.xlane.xlu0 %1594
      %v1596 = vsel %vm965, %v1584, -inf
      %1597 = vmax.xlane.f32.xlu0 %v1596
      %v1598 = vpop.xlane.xlu0 %1597
      %v1599 = vsel %vm965, %v1585, -inf
      %1600 = vmax.xlane.f32.xlu0 %v1599
      %v1601 = vpop.xlane.xlu0 %1600
      %v1602 = vsel %vm965, %v1586, -inf
      %1603 = vmax.xlane.f32.xlu0 %v1602
      %v1604 = vpop.xlane.xlu0 %1603
      %v1605 = vsub.f32 %v1581, %v1589
      %v1606 = vsub.f32 %v1582, %v1592
      %v1607 = vsub.f32 %v1583, %v1595
      %v1608 = vsub.f32 %v1584, %v1598
      %v1609 = vsub.f32 %v1585, %v1601
      %v1610 = vsub.f32 %v1586, %v1604
      %v1611 = vmul.f32 %v1605, 1.442695
      %v1612 = vpow.pop %v1611
      %v1613 = vmul.f32 %v1606, 1.442695
      %v1614 = vpow.pop %v1613
      %v1615 = vmul.f32 %v1607, 1.442695
      %v1616 = vpow.pop %v1615
      %v1617 = vmul.f32 %v1608, 1.442695
      %v1618 = vpow.pop %v1617
      %v1619 = vmul.f32 %v1609, 1.442695
      %v1620 = vpow.pop %v1619
      %v1621 = vmul.f32 %v1610, 1.442695
      %v1622 = vpow.pop %v1621
      %v1623 = vsel %vm965, %v1612, 0.0
      %1624 = vadd.xlane.f32.xlu0 %v1623
      %v1625 = vpop.xlane.xlu0 %1624
      %v1626 = vsel %vm965, %v1614, 0.0
      %1627 = vadd.xlane.f32.xlu0 %v1626
      %v1628 = vpop.xlane.xlu0 %1627
      %v1629 = vsel %vm965, %v1616, 0.0
      %1630 = vadd.xlane.f32.xlu0 %v1629
      %v1631 = vpop.xlane.xlu0 %1630
      %v1632 = vsel %vm965, %v1618, 0.0
      %1633 = vadd.xlane.f32.xlu0 %v1632
      %v1634 = vpop.xlane.xlu0 %1633
      %v1635 = vsel %vm965, %v1620, 0.0
      %1636 = vadd.xlane.f32.xlu0 %v1635
      %v1637 = vpop.xlane.xlu0 %1636
      %v1638 = vsel %vm965, %v1622, 0.0
      %1639 = vadd.xlane.f32.xlu0 %v1638
      %v1640 = vpop.xlane.xlu0 %1639
      %v1641 = vrcp.pop %v1625
      %v1642 = vrcp.pop %v1628
      %v1643 = vrcp.pop %v1631
      %v1644 = vrcp.pop %v1634
      %v1645 = vrcp.pop %v1637
      %v1646 = vrcp.pop %v1640
      %v1647 = vmul.f32 %v1612, %v1641
      %v1648 = vmul.f32 %v1614, %v1642
      %v1649 = vmul.f32 %v1616, %v1643
      %v1650 = vmul.f32 %v1618, %v1644
      %v1651 = vmul.f32 %v1620, %v1645
      %v1652 = vmul.f32 %v1622, %v1646
      %v1653 = vpack.c.bf16 %v1648, %v1647
      %v1654 = vpack.c.bf16 %v1650, %v1649
      %v1655 = vpack.c.bf16 %v1652, %v1651
      %1656 = vrot.lane.b32.xlu0 %v871, 48
      %v1657 = vpop.permute.xlu0 %1656
      %1658 = vrot.lane.b32.xlu0 %v872, 48
      %v1659 = vpop.permute.xlu0 %1658
      %1660 = vrot.lane.b32.xlu0 %v873, 48
      %v1661 = vpop.permute.xlu0 %1660
      %v1666 = vsel %vm965, %v1653, 0
      %v1669 = vsel %vm965, %v1654, 0
      %v1672 = vsel %vm965, %v1655, 0
      %1674 = vmatprep.subr.bf16.mxu0 0
      %1675 = vmatpush1.bf16.msra.mxu0 0
      %1676 = vmatprep.subr.bf16.mxu0 0
      %1677 = vmatpush1.bf16.msra.mxu0 0
      %1678 = vmatprep.subr.bf16.mxu0 0
      %1679 = vmatpush1.bf16.msra.mxu0 0
      %1680 = vmatprep.subr.bf16.mxu0 0
      %1681 = vmatpush1.bf16.msra.mxu0 0
      %1682 = vmatprep.subr.bf16.mxu0 0
      %1683 = vmatpush1.bf16.msra.mxu0 0
      %1684 = vmatprep.subr.bf16.mxu0 0
      %1685 = vmatpush1.bf16.msra.mxu0 %v1661
      %1686 = vmatprep.subr.bf16.mxu0 0
      %1687 = vmatpush1.bf16.msra.mxu0 %v1659
      %1688 = vmatprep.subr.bf16.mxu0 0
      %1689 = vmatpush1.bf16.msra.mxu0 %v1657
      %1690 = vmatprep.subr.bf16.mxu0 0
      %1691 = vmatpush2.bf16.msra.mxu0 0
      %1692 = vmatprep.subr.bf16.mxu0 0
      %1693 = vmatpush2.bf16.msra.mxu0 0
      %1694 = vmatprep.subr.bf16.mxu0 0
      %1695 = vmatpush2.bf16.msra.mxu0 0
      %1696 = vmatprep.subr.bf16.mxu0 0
      %1697 = vmatpush2.bf16.msra.mxu0 0
      %1698 = vmatprep.subr.bf16.mxu0 0
      %1699 = vmatpush2.bf16.msra.mxu0 0
      %1700 = vmatprep.subr.bf16.mxu0 0
      %1701 = vmatpush2.bf16.msra.mxu0 0
      %1702 = vmatprep.subr.bf16.mxu0 0
      %1703 = vmatpush2.bf16.msra.mxu0 0
      %1704 = vmatprep.subr.bf16.mxu0 0
      %1705 = vmatpush2.bf16.msra.mxu0 0
      %1706 = vmatprep.mubr.bf16.mxu0 0
      %1707 = vmatmul.mubr.bf16.gmra.mxu0 %v1666
      %v1708 = vpop.f32.mrf.mxu0
      %v1709 = vadd.f32 0.0, %v1708
      %v1710 = vpop.f32.mrf.mxu0
      %v1711 = vpop.f32.mrf.mxu0
      %v1712 = vadd.f32 0.0, %v1711
      %v1713 = vpop.f32.mrf.mxu0
      %1714 = vmatprep.mubr.bf16.mxu0 0
      %1715 = vmatmul.mubr.bf16.gmra.mxu0 %v1669
      %v1716 = vpop.f32.mrf.mxu0
      %v1717 = vadd.f32 0.0, %v1716
      %v1718 = vpop.f32.mrf.mxu0
      %v1719 = vpop.f32.mrf.mxu0
      %v1720 = vadd.f32 0.0, %v1719
      %v1721 = vpop.f32.mrf.mxu0
      %1722 = vmatprep.mubr.bf16.mxu0 0
      %1723 = vmatmul.mubr.bf16.gmra.mxu0 %v1672
      %v1724 = vpop.f32.mrf.mxu0
      %v1725 = vadd.f32 0.0, %v1724
      %v1726 = vpop.f32.mrf.mxu0
      %v1727 = vpop.f32.mrf.mxu0
      %v1728 = vadd.f32 0.0, %v1727
      %v1729 = vpop.f32.mrf.mxu0
      %1730 = vdwg.mxu0
      %v1731 = vpack.c.bf16 %v1712, %v1709
      %v1732 = vpack.c.bf16 %v1720, %v1717
      %v1733 = vpack.c.bf16 %v1728, %v1725
      %v1734 = vld [vmem:[%s616 + $0x8] sm:$0xf]
      %v1736 = vsel %vm883, %v1731, 0
      %v1739 = vsel %vm883, %v1732, 0
      %v1742 = vsel %vm883, %v1733, 0
      %v1745 = vsel %vm1364, %v1734, 0
      %1747 = vmatprep.subr.bf16.mxu0 0
      %1748 = vmatpush1.bf16.msra.mxu0 0
      %1749 = vmatprep.subr.bf16.mxu0 0
      %1750 = vmatpush1.bf16.msra.mxu0 0
      %1751 = vmatprep.subr.bf16.mxu0 0
      %1752 = vmatpush1.bf16.msra.mxu0 0
      %1753 = vmatprep.subr.bf16.mxu0 0
      %1754 = vmatpush1.bf16.msra.mxu0 0
      %1755 = vmatprep.subr.bf16.mxu0 0
      %1756 = vmatpush1.bf16.msra.mxu0 0
      %1757 = vmatprep.subr.bf16.mxu0 0
      %1758 = vmatpush1.bf16.msra.mxu0 0
      %1759 = vmatprep.subr.bf16.mxu0 0
      %1760 = vmatpush1.bf16.msra.mxu0 0
      %1761 = vmatprep.subr.bf16.mxu0 0
      %1762 = vmatpush1.bf16.msra.mxu0 %v1745
      %1763 = vmatprep.subr.bf16.mxu0 0
      %1764 = vmatpush2.bf16.msra.mxu0 0
      %1765 = vmatprep.subr.bf16.mxu0 0
      %1766 = vmatpush2.bf16.msra.mxu0 0
      %1767 = vmatprep.subr.bf16.mxu0 0
      %1768 = vmatpush2.bf16.msra.mxu0 0
      %1769 = vmatprep.subr.bf16.mxu0 0
      %1770 = vmatpush2.bf16.msra.mxu0 0
      %1771 = vmatprep.subr.bf16.mxu0 0
      %1772 = vmatpush2.bf16.msra.mxu0 0
      %1773 = vmatprep.subr.bf16.mxu0 0
      %1774 = vmatpush2.bf16.msra.mxu0 0
      %1775 = vmatprep.subr.bf16.mxu0 0
      %1776 = vmatpush2.bf16.msra.mxu0 0
      %1777 = vmatprep.subr.bf16.mxu0 0
      %1778 = vmatpush2.bf16.msra.mxu0 0
      %1779 = vmatprep.mubr.bf16.mxu0 0
      %1780 = vmatmul.mubr.bf16.gmra.mxu0 %v1736
      %v1781 = vpop.f32.mrf.mxu0
      %v1782 = vadd.f32 0.0, %v1781
      %v1783 = vpop.f32.mrf.mxu0
      %v1784 = vpop.f32.mrf.mxu0
      %v1785 = vadd.f32 0.0, %v1784
      %v1786 = vpop.f32.mrf.mxu0
      %1787 = vmatprep.mubr.bf16.mxu0 0
      %1788 = vmatmul.mubr.bf16.gmra.mxu0 %v1739
      %v1789 = vpop.f32.mrf.mxu0
      %v1790 = vadd.f32 0.0, %v1789
      %v1791 = vpop.f32.mrf.mxu0
      %v1792 = vpop.f32.mrf.mxu0
      %v1793 = vadd.f32 0.0, %v1792
      %v1794 = vpop.f32.mrf.mxu0
      %1795 = vmatprep.mubr.bf16.mxu0 0
      %1796 = vmatmul.mubr.bf16.gmra.mxu0 %v1742
      %v1797 = vpop.f32.mrf.mxu0
      %v1798 = vadd.f32 0.0, %v1797
      %v1799 = vpop.f32.mrf.mxu0
      %v1800 = vpop.f32.mrf.mxu0
      %v1801 = vadd.f32 0.0, %v1800
      %v1802 = vpop.f32.mrf.mxu0
      %1803 = vdwg.mxu0
      %v1804 = vadd.f32 %v1472, %v1782
      %v1805 = vadd.f32 %v1475, %v1785
      %v1806 = vadd.f32 %v1480, %v1790
      %v1807 = vadd.f32 %v1483, %v1793
      %v1808 = vadd.f32 %v1488, %v1798
      %v1809 = vadd.f32 %v1491, %v1801
      %1810 = vrot.lane.b32.xlu0 %v871, 104
      %v1811 = vpop.permute.xlu0 %1810
      %1812 = vrot.lane.b32.xlu0 %v872, 104
      %v1813 = vpop.permute.xlu0 %1812
      %1814 = vrot.lane.b32.xlu0 %v873, 104
      %v1815 = vpop.permute.xlu0 %1814
      %1816 = vrot.lane.b32.xlu0 %v871, 72
      %v1817 = vpop.permute.xlu0 %1816
      %1818 = vrot.lane.b32.xlu0 %v872, 72
      %v1819 = vpop.permute.xlu0 %1818
      %1820 = vrot.lane.b32.xlu0 %v873, 72
      %v1821 = vpop.permute.xlu0 %1820
      %v1823 = vsel %vm883, %v1811, 0
      %v1826 = vsel %vm883, %v1813, 0
      %v1829 = vsel %vm883, %v1815, 0
      %v1832 = vsel %vm883, %v1817, 0
      %v1835 = vsel %vm883, %v1819, 0
      %v1838 = vsel %vm883, %v1821, 0
      %1840 = vmatprep.subr.bf16.mxu0 0
      %1841 = vmatpush1.bf16.xpose.msra.mxu0 0
      %1842 = vmatprep.subr.bf16.mxu0 0
      %1843 = vmatpush1.bf16.xpose.msra.mxu0 0
      %1844 = vmatprep.subr.bf16.mxu0 0
      %1845 = vmatpush1.bf16.xpose.msra.mxu0 0
      %1846 = vmatprep.subr.bf16.mxu0 0
      %1847 = vmatpush1.bf16.xpose.msra.mxu0 0
      %1848 = vmatprep.subr.bf16.mxu0 0
      %1849 = vmatpush1.bf16.xpose.msra.mxu0 0
      %1850 = vmatprep.subr.bf16.mxu0 0
      %1851 = vmatpush1.bf16.xpose.msra.mxu0 %v1838
      %1852 = vmatprep.subr.bf16.mxu0 0
      %1853 = vmatpush1.bf16.xpose.msra.mxu0 %v1835
      %1854 = vmatprep.subr.bf16.mxu0 0
      %1855 = vmatpush1.bf16.xpose.msra.mxu0 %v1832
      %1856 = vmatprep.subr.bf16.mxu0 0
      %1857 = vmatpush2.bf16.xpose.msra.mxu0 0
      %1858 = vmatprep.subr.bf16.mxu0 0
      %1859 = vmatpush2.bf16.xpose.msra.mxu0 0
      %1860 = vmatprep.subr.bf16.mxu0 0
      %1861 = vmatpush2.bf16.xpose.msra.mxu0 0
      %1862 = vmatprep.subr.bf16.mxu0 0
      %1863 = vmatpush2.bf16.xpose.msra.mxu0 0
      %1864 = vmatprep.subr.bf16.mxu0 0
      %1865 = vmatpush2.bf16.xpose.msra.mxu0 0
      %1866 = vmatprep.subr.bf16.mxu0 0
      %1867 = vmatpush2.bf16.xpose.msra.mxu0 0
      %1868 = vmatprep.subr.bf16.mxu0 0
      %1869 = vmatpush2.bf16.xpose.msra.mxu0 0
      %1870 = vmatprep.subr.bf16.mxu0 0
      %1871 = vmatpush2.bf16.xpose.msra.mxu0 0
      %1872 = vmatprep.mubr.bf16.mxu0 0
      %1873 = vmatmul.mubr.bf16.gmra.mxu0 %v1823
      %v1874 = vpop.f32.mrf.mxu0
      %v1875 = vadd.f32 0.0, %v1874
      %v1876 = vpop.f32.mrf.mxu0
      %v1877 = vpop.f32.mrf.mxu0
      %v1878 = vadd.f32 0.0, %v1877
      %v1879 = vpop.f32.mrf.mxu0
      %1880 = vmatprep.mubr.bf16.mxu0 0
      %1881 = vmatmul.mubr.bf16.gmra.mxu0 %v1826
      %v1882 = vpop.f32.mrf.mxu0
      %v1883 = vadd.f32 0.0, %v1882
      %v1884 = vpop.f32.mrf.mxu0
      %v1885 = vpop.f32.mrf.mxu0
      %v1886 = vadd.f32 0.0, %v1885
      %v1887 = vpop.f32.mrf.mxu0
      %1888 = vmatprep.mubr.bf16.mxu0 0
      %1889 = vmatmul.mubr.bf16.gmra.mxu0 %v1829
      %v1890 = vpop.f32.mrf.mxu0
      %v1891 = vadd.f32 0.0, %v1890
      %v1892 = vpop.f32.mrf.mxu0
      %v1893 = vpop.f32.mrf.mxu0
      %v1894 = vadd.f32 0.0, %v1893
      %v1895 = vpop.f32.mrf.mxu0
      %1896 = vdwg.mxu0
      %v1897 = vmul.f32 %v1875, 0.35355338
      %v1898 = vmul.f32 %v1878, 0.35355338
      %v1899 = vmul.f32 %v1883, 0.35355338
      %v1900 = vmul.f32 %v1886, 0.35355338
      %v1901 = vmul.f32 %v1891, 0.35355338
      %v1902 = vmul.f32 %v1894, 0.35355338
      %v1903 = vsel %vm965, %v1897, -inf
      %1904 = vmax.xlane.f32.xlu0 %v1903
      %v1905 = vpop.xlane.xlu0 %1904
      %v1906 = vsel %vm965, %v1898, -inf
      %1907 = vmax.xlane.f32.xlu0 %v1906
      %v1908 = vpop.xlane.xlu0 %1907
      %v1909 = vsel %vm965, %v1899, -inf
      %1910 = vmax.xlane.f32.xlu0 %v1909
      %v1911 = vpop.xlane.xlu0 %1910
      %v1912 = vsel %vm965, %v1900, -inf
      %1913 = vmax.xlane.f32.xlu0 %v1912
      %v1914 = vpop.xlane.xlu0 %1913
      %v1915 = vsel %vm965, %v1901, -inf
      %1916 = vmax.xlane.f32.xlu0 %v1915
      %v1917 = vpop.xlane.xlu0 %1916
      %v1918 = vsel %vm965, %v1902, -inf
      %1919 = vmax.xlane.f32.xlu0 %v1918
      %v1920 = vpop.xlane.xlu0 %1919
      %v1921 = vsub.f32 %v1897, %v1905
      %v1922 = vsub.f32 %v1898, %v1908
      %v1923 = vsub.f32 %v1899, %v1911
      %v1924 = vsub.f32 %v1900, %v1914
      %v1925 = vsub.f32 %v1901, %v1917
      %v1926 = vsub.f32 %v1902, %v1920
      %v1927 = vmul.f32 %v1921, 1.442695
      %v1928 = vpow.pop %v1927
      %v1929 = vmul.f32 %v1922, 1.442695
      %v1930 = vpow.pop %v1929
      %v1931 = vmul.f32 %v1923, 1.442695
      %v1932 = vpow.pop %v1931
      %v1933 = vmul.f32 %v1924, 1.442695
      %v1934 = vpow.pop %v1933
      %v1935 = vmul.f32 %v1925, 1.442695
      %v1936 = vpow.pop %v1935
      %v1937 = vmul.f32 %v1926, 1.442695
      %v1938 = vpow.pop %v1937
      %v1939 = vsel %vm965, %v1928, 0.0
      %1940 = vadd.xlane.f32.xlu0 %v1939
      %v1941 = vpop.xlane.xlu0 %1940
      %v1942 = vsel %vm965, %v1930, 0.0
      %1943 = vadd.xlane.f32.xlu0 %v1942
      %v1944 = vpop.xlane.xlu0 %1943
      %v1945 = vsel %vm965, %v1932, 0.0
      %1946 = vadd.xlane.f32.xlu0 %v1945
      %v1947 = vpop.xlane.xlu0 %1946
      %v1948 = vsel %vm965, %v1934, 0.0
      %1949 = vadd.xlane.f32.xlu0 %v1948
      %v1950 = vpop.xlane.xlu0 %1949
      %v1951 = vsel %vm965, %v1936, 0.0
      %1952 = vadd.xlane.f32.xlu0 %v1951
      %v1953 = vpop.xlane.xlu0 %1952
      %v1954 = vsel %vm965, %v1938, 0.0
      %1955 = vadd.xlane.f32.xlu0 %v1954
      %v1956 = vpop.xlane.xlu0 %1955
      %v1957 = vrcp.pop %v1941
      %v1958 = vrcp.pop %v1944
      %v1959 = vrcp.pop %v1947
      %v1960 = vrcp.pop %v1950
      %v1961 = vrcp.pop %v1953
      %v1962 = vrcp.pop %v1956
      %v1963 = vmul.f32 %v1928, %v1957
      %v1964 = vmul.f32 %v1930, %v1958
      %v1965 = vmul.f32 %v1932, %v1959
      %v1966 = vmul.f32 %v1934, %v1960
      %v1967 = vmul.f32 %v1936, %v1961
      %v1968 = vmul.f32 %v1938, %v1962
      %v1969 = vpack.c.bf16 %v1964, %v1963
      %v1970 = vpack.c.bf16 %v1966, %v1965
      %v1971 = vpack.c.bf16 %v1968, %v1967
      %1972 = vrot.lane.b32.xlu0 %v871, 40
      %v1973 = vpop.permute.xlu0 %1972
      %1974 = vrot.lane.b32.xlu0 %v872, 40
      %v1975 = vpop.permute.xlu0 %1974
      %1976 = vrot.lane.b32.xlu0 %v873, 40
      %v1977 = vpop.permute.xlu0 %1976
      %v1982 = vsel %vm965, %v1969, 0
      %v1985 = vsel %vm965, %v1970, 0
      %v1988 = vsel %vm965, %v1971, 0
      %1990 = vmatprep.subr.bf16.mxu0 0
      %1991 = vmatpush1.bf16.msra.mxu0 0
      %1992 = vmatprep.subr.bf16.mxu0 0
      %1993 = vmatpush1.bf16.msra.mxu0 0
      %1994 = vmatprep.subr.bf16.mxu0 0
      %1995 = vmatpush1.bf16.msra.mxu0 0
      %1996 = vmatprep.subr.bf16.mxu0 0
      %1997 = vmatpush1.bf16.msra.mxu0 0
      %1998 = vmatprep.subr.bf16.mxu0 0
      %1999 = vmatpush1.bf16.msra.mxu0 0
      %2000 = vmatprep.subr.bf16.mxu0 0
      %2001 = vmatpush1.bf16.msra.mxu0 %v1977
      %2002 = vmatprep.subr.bf16.mxu0 0
      %2003 = vmatpush1.bf16.msra.mxu0 %v1975
      %2004 = vmatprep.subr.bf16.mxu0 0
      %2005 = vmatpush1.bf16.msra.mxu0 %v1973
      %2006 = vmatprep.subr.bf16.mxu0 0
      %2007 = vmatpush2.bf16.msra.mxu0 0
      %2008 = vmatprep.subr.bf16.mxu0 0
      %2009 = vmatpush2.bf16.msra.mxu0 0
      %2010 = vmatprep.subr.bf16.mxu0 0
      %2011 = vmatpush2.bf16.msra.mxu0 0
      %2012 = vmatprep.subr.bf16.mxu0 0
      %2013 = vmatpush2.bf16.msra.mxu0 0
      %2014 = vmatprep.subr.bf16.mxu0 0
      %2015 = vmatpush2.bf16.msra.mxu0 0
      %2016 = vmatprep.subr.bf16.mxu0 0
      %2017 = vmatpush2.bf16.msra.mxu0 0
      %2018 = vmatprep.subr.bf16.mxu0 0
      %2019 = vmatpush2.bf16.msra.mxu0 0
      %2020 = vmatprep.subr.bf16.mxu0 0
      %2021 = vmatpush2.bf16.msra.mxu0 0
      %2022 = vmatprep.mubr.bf16.mxu0 0
      %2023 = vmatmul.mubr.bf16.gmra.mxu0 %v1982
      %v2024 = vpop.f32.mrf.mxu0
      %v2025 = vadd.f32 0.0, %v2024
      %v2026 = vpop.f32.mrf.mxu0
      %v2027 = vpop.f32.mrf.mxu0
      %v2028 = vadd.f32 0.0, %v2027
      %v2029 = vpop.f32.mrf.mxu0
      %2030 = vmatprep.mubr.bf16.mxu0 0
      %2031 = vmatmul.mubr.bf16.gmra.mxu0 %v1985
      %v2032 = vpop.f32.mrf.mxu0
      %v2033 = vadd.f32 0.0, %v2032
      %v2034 = vpop.f32.mrf.mxu0
      %v2035 = vpop.f32.mrf.mxu0
      %v2036 = vadd.f32 0.0, %v2035
      %v2037 = vpop.f32.mrf.mxu0
      %2038 = vmatprep.mubr.bf16.mxu0 0
      %2039 = vmatmul.mubr.bf16.gmra.mxu0 %v1988
      %v2040 = vpop.f32.mrf.mxu0
      %v2041 = vadd.f32 0.0, %v2040
      %v2042 = vpop.f32.mrf.mxu0
      %v2043 = vpop.f32.mrf.mxu0
      %v2044 = vadd.f32 0.0, %v2043
      %v2045 = vpop.f32.mrf.mxu0
      %2046 = vdwg.mxu0
      %v2047 = vpack.c.bf16 %v2028, %v2025
      %v2048 = vpack.c.bf16 %v2036, %v2033
      %v2049 = vpack.c.bf16 %v2044, %v2041
      %v2050 = vld [vmem:[%s616 + $0xc] sm:$0xf]
      %v2052 = vsel %vm883, %v2047, 0
      %v2055 = vsel %vm883, %v2048, 0
      %v2058 = vsel %vm883, %v2049, 0
      %v2061 = vsel %vm1364, %v2050, 0
      %2063 = vmatprep.subr.bf16.mxu0 0
      %2064 = vmatpush1.bf16.msra.mxu0 0
      %2065 = vmatprep.subr.bf16.mxu0 0
      %2066 = vmatpush1.bf16.msra.mxu0 0
      %2067 = vmatprep.subr.bf16.mxu0 0
      %2068 = vmatpush1.bf16.msra.mxu0 0
      %2069 = vmatprep.subr.bf16.mxu0 0
      %2070 = vmatpush1.bf16.msra.mxu0 0
      %2071 = vmatprep.subr.bf16.mxu0 0
      %2072 = vmatpush1.bf16.msra.mxu0 0
      %2073 = vmatprep.subr.bf16.mxu0 0
      %2074 = vmatpush1.bf16.msra.mxu0 0
      %2075 = vmatprep.subr.bf16.mxu0 0
      %2076 = vmatpush1.bf16.msra.mxu0 0
      %2077 = vmatprep.subr.bf16.mxu0 0
      %2078 = vmatpush1.bf16.msra.mxu0 %v2061
      %2079 = vmatprep.subr.bf16.mxu0 0
      %2080 = vmatpush2.bf16.msra.mxu0 0
      %2081 = vmatprep.subr.bf16.mxu0 0
      %2082 = vmatpush2.bf16.msra.mxu0 0
      %2083 = vmatprep.subr.bf16.mxu0 0
      %2084 = vmatpush2.bf16.msra.mxu0 0
      %2085 = vmatprep.subr.bf16.mxu0 0
      %2086 = vmatpush2.bf16.msra.mxu0 0
      %2087 = vmatprep.subr.bf16.mxu0 0
      %2088 = vmatpush2.bf16.msra.mxu0 0
      %2089 = vmatprep.subr.bf16.mxu0 0
      %2090 = vmatpush2.bf16.msra.mxu0 0
      %2091 = vmatprep.subr.bf16.mxu0 0
      %2092 = vmatpush2.bf16.msra.mxu0 0
      %2093 = vmatprep.subr.bf16.mxu0 0
      %2094 = vmatpush2.bf16.msra.mxu0 0
      %2095 = vmatprep.mubr.bf16.mxu0 0
      %2096 = vmatmul.mubr.bf16.gmra.mxu0 %v2052
      %v2097 = vpop.f32.mrf.mxu0
      %v2098 = vadd.f32 0.0, %v2097
      %v2099 = vpop.f32.mrf.mxu0
      %v2100 = vpop.f32.mrf.mxu0
      %v2101 = vadd.f32 0.0, %v2100
      %v2102 = vpop.f32.mrf.mxu0
      %2103 = vmatprep.mubr.bf16.mxu0 0
      %2104 = vmatmul.mubr.bf16.gmra.mxu0 %v2055
      %v2105 = vpop.f32.mrf.mxu0
      %v2106 = vadd.f32 0.0, %v2105
      %v2107 = vpop.f32.mrf.mxu0
      %v2108 = vpop.f32.mrf.mxu0
      %v2109 = vadd.f32 0.0, %v2108
      %v2110 = vpop.f32.mrf.mxu0
      %2111 = vmatprep.mubr.bf16.mxu0 0
      %2112 = vmatmul.mubr.bf16.gmra.mxu0 %v2058
      %v2113 = vpop.f32.mrf.mxu0
      %v2114 = vadd.f32 0.0, %v2113
      %v2115 = vpop.f32.mrf.mxu0
      %v2116 = vpop.f32.mrf.mxu0
      %v2117 = vadd.f32 0.0, %v2116
      %v2118 = vpop.f32.mrf.mxu0
      %2119 = vdwg.mxu0
      %v2120 = vadd.f32 %v1804, %v2098
      %v2121 = vadd.f32 %v1805, %v2101
      %v2122 = vadd.f32 %v1806, %v2106
      %v2123 = vadd.f32 %v1807, %v2109
      %v2124 = vadd.f32 %v1808, %v2114
      %v2125 = vadd.f32 %v1809, %v2117
      %v2126 = vadd.f32 %v674, %v2120
      %v2127 = vadd.f32 %v675, %v2121
      %v2128 = vadd.f32 %v676, %v2122
      %v2129 = vadd.f32 %v677, %v2123
      %v2130 = vadd.f32 %v678, %v2124
      %v2131 = vadd.f32 %v679, %v2125
      %v2132 = vld [vmem:[%s619] sm:$0x1]
      %v2133 = vld [vmem:[%s622] sm:$0x1]
      %v2134 = vsel %vm682, %v2126, 0.0
      %2135 = vadd.xlane.f32.xlu0 %v2134
      %v2136 = vpop.xlane.xlu0 %2135
      %v2137 = vsel %vm682, %v2127, 0.0
      %2138 = vadd.xlane.f32.xlu0 %v2137
      %v2139 = vpop.xlane.xlu0 %2138
      %v2140 = vsel %vm682, %v2128, 0.0
      %2141 = vadd.xlane.f32.xlu0 %v2140
      %v2142 = vpop.xlane.xlu0 %2141
      %v2143 = vsel %vm682, %v2129, 0.0
      %2144 = vadd.xlane.f32.xlu0 %v2143
      %v2145 = vpop.xlane.xlu0 %2144
      %v2146 = vsel %vm682, %v2130, 0.0
      %2147 = vadd.xlane.f32.xlu0 %v2146
      %v2148 = vpop.xlane.xlu0 %2147
      %v2149 = vsel %vm682, %v2131, 0.0
      %2150 = vadd.xlane.f32.xlu0 %v2149
      %v2151 = vpop.xlane.xlu0 %2150
      %v2152 = vmul.f32 %v2136, %v701
      %v2153 = vmul.f32 %v2139, %v701
      %v2154 = vmul.f32 %v2142, %v701
      %v2155 = vmul.f32 %v2145, %v701
      %v2156 = vmul.f32 %v2148, %v701
      %v2157 = vmul.f32 %v2151, %v701
      %v2158 = vsub.f32 %v2126, %v2152
      %v2159 = vsub.f32 %v2127, %v2153
      %v2160 = vsub.f32 %v2128, %v2154
      %v2161 = vsub.f32 %v2129, %v2155
      %v2162 = vsub.f32 %v2130, %v2156
      %v2163 = vsub.f32 %v2131, %v2157
      %v2164 = vmul.f32 %v2158, %v2158
      %v2165 = vmul.f32 %v2159, %v2159
      %v2166 = vmul.f32 %v2160, %v2160
      %v2167 = vmul.f32 %v2161, %v2161
      %v2168 = vmul.f32 %v2162, %v2162
      %v2169 = vmul.f32 %v2163, %v2163
      %v2170 = vsel %vm682, %v2164, 0.0
      %2171 = vadd.xlane.f32.xlu0 %v2170
      %v2172 = vpop.xlane.xlu0 %2171
      %v2173 = vsel %vm682, %v2165, 0.0
      %2174 = vadd.xlane.f32.xlu0 %v2173
      %v2175 = vpop.xlane.xlu0 %2174
      %v2176 = vsel %vm682, %v2166, 0.0
      %2177 = vadd.xlane.f32.xlu0 %v2176
      %v2178 = vpop.xlane.xlu0 %2177
      %v2179 = vsel %vm682, %v2167, 0.0
      %2180 = vadd.xlane.f32.xlu0 %v2179
      %v2181 = vpop.xlane.xlu0 %2180
      %v2182 = vsel %vm682, %v2168, 0.0
      %2183 = vadd.xlane.f32.xlu0 %v2182
      %v2184 = vpop.xlane.xlu0 %2183
      %v2185 = vsel %vm682, %v2169, 0.0
      %2186 = vadd.xlane.f32.xlu0 %v2185
      %v2187 = vpop.xlane.xlu0 %2186
      %v2188 = vmul.f32 %v2172, %v701
      %v2189 = vmul.f32 %v2175, %v701
      %v2190 = vmul.f32 %v2178, %v701
      %v2191 = vmul.f32 %v2181, %v701
      %v2192 = vmul.f32 %v2184, %v701
      %v2193 = vmul.f32 %v2187, %v701
      %v2194 = vadd.f32 %v2188, 1e-06
      %v2195 = vadd.f32 %v2189, 1e-06
      %v2196 = vadd.f32 %v2190, 1e-06
      %v2197 = vadd.f32 %v2191, 1e-06
      %v2198 = vadd.f32 %v2192, 1e-06
      %v2199 = vadd.f32 %v2193, 1e-06
      %v2200 = vrsqrt.pop %v2194
      %v2201 = vrsqrt.pop %v2195
      %v2202 = vrsqrt.pop %v2196
      %v2203 = vrsqrt.pop %v2197
      %v2204 = vrsqrt.pop %v2198
      %v2205 = vrsqrt.pop %v2199
      %v2206 = vmul.f32 %v2158, %v2200
      %v2207 = vmul.f32 %v2159, %v2201
      %v2208 = vmul.f32 %v2160, %v2202
      %v2209 = vmul.f32 %v2161, %v2203
      %v2210 = vmul.f32 %v2162, %v2204
      %v2211 = vmul.f32 %v2163, %v2205
      %v2213 = vlaneseq
      %v2214 = vshrl.u32 %v2213, 7
      %v2215 = vsub.s32 0, %v2214
      %v2216 = vrot.slane %v2132, %v2215
      %v2218 = vmul.f32 %v2206, %v2216
      %v2219 = vmul.f32 %v2207, %v2216
      %v2220 = vmul.f32 %v2208, %v2216
      %v2221 = vmul.f32 %v2209, %v2216
      %v2222 = vmul.f32 %v2210, %v2216
      %v2223 = vmul.f32 %v2211, %v2216
      %v2225 = vlaneseq
      %v2226 = vshrl.u32 %v2225, 7
      %v2227 = vsub.s32 0, %v2226
      %v2228 = vrot.slane %v2133, %v2227
      %v2230 = vadd.f32 %v2218, %v2228
      %v2231 = vadd.f32 %v2219, %v2228
      %v2232 = vadd.f32 %v2220, %v2228
      %v2233 = vadd.f32 %v2221, %v2228
      %v2234 = vadd.f32 %v2222, %v2228
      %v2235 = vadd.f32 %v2223, %v2228
      %v2236 = vpack.c.bf16 %v2231, %v2230
      %v2237 = vpack.c.bf16 %v2233, %v2232
      %v2238 = vpack.c.bf16 %v2235, %v2234
      %v2239 = vld [vmem:[%s627] sm:$0xf]
      %v2240 = vld [vmem:[%s627 + $0x4] sm:$0xf]
      %v2241 = vld [vmem:[%s627 + $0x8] sm:$0xf]
      %v2242 = vld [vmem:[%s627 + $0xc] sm:$0xf]
      %v2243 = vld [vmem:[%s630] sm:$0x1]
      %v2245 = vlaneseq
      %v2246 = vshrl.u32 %v2245, 7
      %v2247 = vsub.s32 0, %v2246
      %v2248 = vrot.slane %v2243, %v2247
      %v2254 = vunpack.c.l.b16 %v2239
      %v2255 = vunpack.c.l.b16 %v2240
      %v2256 = vunpack.c.l.b16 %v2241
      %v2257 = vunpack.c.l.b16 %v2242
      %v2258 = vpack.c.b16 %v2255, %v2254
      %v2259 = vpack.c.b16 %v2257, %v2256
      %v2263 = vsel %vm682, %v2236, 0
      %v2266 = vsel %vm682, %v2237, 0
      %v2269 = vsel %vm682, %v2238, 0
      %2271 = vmatprep.subr.bf16.mxu0 0
      %2272 = vmatpush1.bf16.msra.mxu0 0
      %2273 = vmatprep.subr.bf16.mxu0 0
      %2274 = vmatpush1.bf16.msra.mxu0 0
      %2275 = vmatprep.subr.bf16.mxu0 0
      %2276 = vmatpush1.bf16.msra.mxu0 0
      %2277 = vmatprep.subr.bf16.mxu0 0
      %2278 = vmatpush1.bf16.msra.mxu0 0
      %2279 = vmatprep.subr.bf16.mxu0 0
      %2280 = vmatpush1.bf16.msra.mxu0 0
      %2281 = vmatprep.subr.bf16.mxu0 0
      %2282 = vmatpush1.bf16.msra.mxu0 0
      %2283 = vmatprep.subr.bf16.mxu0 0
      %2284 = vmatpush1.bf16.msra.mxu0 %v2259
      %2285 = vmatprep.subr.bf16.mxu0 0
      %2286 = vmatpush1.bf16.msra.mxu0 %v2258
      %2287 = vmatprep.subr.bf16.mxu0 0
      %2288 = vmatpush2.bf16.msra.mxu0 0
      %2289 = vmatprep.subr.bf16.mxu0 0
      %2290 = vmatpush2.bf16.msra.mxu0 0
      %2291 = vmatprep.subr.bf16.mxu0 0
      %2292 = vmatpush2.bf16.msra.mxu0 0
      %2293 = vmatprep.subr.bf16.mxu0 0
      %2294 = vmatpush2.bf16.msra.mxu0 0
      %2295 = vmatprep.subr.bf16.mxu0 0
      %2296 = vmatpush2.bf16.msra.mxu0 0
      %2297 = vmatprep.subr.bf16.mxu0 0
      %2298 = vmatpush2.bf16.msra.mxu0 0
      %2299 = vmatprep.subr.bf16.mxu0 0
      %2300 = vmatpush2.bf16.msra.mxu0 0
      %2301 = vmatprep.subr.bf16.mxu0 0
      %2302 = vmatpush2.bf16.msra.mxu0 0
      %2303 = vmatprep.mubr.bf16.mxu0 0
      %2304 = vmatmul.mubr.bf16.gmra.mxu0 %v2263
      %v2305 = vpop.f32.mrf.mxu0
      %v2306 = vadd.f32 %v2248, %v2305
      %v2307 = vpop.f32.mrf.mxu0
      %v2308 = vpop.f32.mrf.mxu0
      %v2309 = vadd.f32 %v2248, %v2308
      %v2310 = vpop.f32.mrf.mxu0
      %2311 = vmatprep.mubr.bf16.mxu0 0
      %2312 = vmatmul.mubr.bf16.gmra.mxu0 %v2266
      %v2313 = vpop.f32.mrf.mxu0
      %v2314 = vadd.f32 %v2248, %v2313
      %v2315 = vpop.f32.mrf.mxu0
      %v2316 = vpop.f32.mrf.mxu0
      %v2317 = vadd.f32 %v2248, %v2316
      %v2318 = vpop.f32.mrf.mxu0
      %2319 = vmatprep.mubr.bf16.mxu0 0
      %2320 = vmatmul.mubr.bf16.gmra.mxu0 %v2269
      %v2321 = vpop.f32.mrf.mxu0
      %v2322 = vadd.f32 %v2248, %v2321
      %v2323 = vpop.f32.mrf.mxu0
      %v2324 = vpop.f32.mrf.mxu0
      %v2325 = vadd.f32 %v2248, %v2324
      %v2326 = vpop.f32.mrf.mxu0
      %2327 = vdwg.mxu0
      %v2328 = vmul.f32 %v2306, 0.5
      %v2329 = vmul.f32 %v2309, 0.5
      %v2330 = vmul.f32 %v2314, 0.5
      %v2331 = vmul.f32 %v2317, 0.5
      %v2332 = vmul.f32 %v2322, 0.5
      %v2333 = vmul.f32 %v2325, 0.5
      %v2334 = vmul.f32 %v2306, 0.70710677
      %v2335 = vmul.f32 %v2309, 0.70710677
      %v2336 = vmul.f32 %v2314, 0.70710677
      %v2337 = vmul.f32 %v2317, 0.70710677
      %v2338 = vmul.f32 %v2322, 0.70710677
      %v2339 = vmul.f32 %v2325, 0.70710677
      %v2340 = vmax.f32 %v2334, -4.0
      %v2341 = vmax.f32 %v2335, -4.0
      %v2342 = vmax.f32 %v2336, -4.0
      %v2343 = vmax.f32 %v2337, -4.0
      %v2344 = vmax.f32 %v2338, -4.0
      %v2345 = vmax.f32 %v2339, -4.0
      %v2346 = vmin.f32 %v2340, 4.0
      %v2347 = vmin.f32 %v2341, 4.0
      %v2348 = vmin.f32 %v2342, 4.0
      %v2349 = vmin.f32 %v2343, 4.0
      %v2350 = vmin.f32 %v2344, 4.0
      %v2351 = vmin.f32 %v2345, 4.0
      %v2352 = vmul.f32 %v2346, %v2346
      %v2353 = vmul.f32 %v2347, %v2347
      %v2354 = vmul.f32 %v2348, %v2348
      %v2355 = vmul.f32 %v2349, %v2349
      %v2356 = vmul.f32 %v2350, %v2350
      %v2357 = vmul.f32 %v2351, %v2351
      %v2358 = vmul.f32 %v2352, -2.7261424e-10
      %v2359 = vmul.f32 %v2353, -2.7261424e-10
      %v2360 = vmul.f32 %v2354, -2.7261424e-10
      %v2361 = vmul.f32 %v2355, -2.7261424e-10
      %v2362 = vmul.f32 %v2356, -2.7261424e-10
      %v2363 = vmul.f32 %v2357, -2.7261424e-10
      %v2364 = vadd.f32 %v2358, 2.7706815e-08
      %v2365 = vadd.f32 %v2359, 2.7706815e-08
      %v2366 = vadd.f32 %v2360, 2.7706815e-08
      %v2367 = vadd.f32 %v2361, 2.7706815e-08
      %v2368 = vadd.f32 %v2362, 2.7706815e-08
      %v2369 = vadd.f32 %v2363, 2.7706815e-08
      %v2370 = vmul.f32 %v2364, %v2352
      %v2371 = vmul.f32 %v2365, %v2353
      %v2372 = vmul.f32 %v2366, %v2354
      %v2373 = vmul.f32 %v2367, %v2355
      %v2374 = vmul.f32 %v2368, %v2356
      %v2375 = vmul.f32 %v2369, %v2357
      %v2376 = vadd.f32 %v2370, -2.101024e-06
      %v2377 = vadd.f32 %v2371, -2.101024e-06
      %v2378 = vadd.f32 %v2372, -2.101024e-06
      %v2379 = vadd.f32 %v2373, -2.101024e-06
      %v2380 = vadd.f32 %v2374, -2.101024e-06
      %v2381 = vadd.f32 %v2375, -2.101024e-06
      %v2382 = vmul.f32 %v2376, %v2352
      %v2383 = vmul.f32 %v2377, %v2353
      %v2384 = vmul.f32 %v2378, %v2354
      %v2385 = vmul.f32 %v2379, %v2355
      %v2386 = vmul.f32 %v2380, %v2356
      %v2387 = vmul.f32 %v2381, %v2357
      %v2388 = vadd.f32 %v2382, -5.6925062e-05
      %v2389 = vadd.f32 %v2383, -5.6925062e-05
      %v2390 = vadd.f32 %v2384, -5.6925062e-05
      %v2391 = vadd.f32 %v2385, -5.6925062e-05
      %v2392 = vadd.f32 %v2386, -5.6925062e-05
      %v2393 = vadd.f32 %v2387, -5.6925062e-05
      %v2394 = vmul.f32 %v2388, %v2352
      %v2395 = vmul.f32 %v2389, %v2353
      %v2396 = vmul.f32 %v2390, %v2354
      %v2397 = vmul.f32 %v2391, %v2355
      %v2398 = vmul.f32 %v2392, %v2356
      %v2399 = vmul.f32 %v2393, %v2357
      %v2400 = vadd.f32 %v2394, -0.00073499064
      %v2401 = vadd.f32 %v2395, -0.00073499064
      %v2402 = vadd.f32 %v2396, -0.00073499064
      %v2403 = vadd.f32 %v2397, -0.00073499064
      %v2404 = vadd.f32 %v2398, -0.00073499064
      %v2405 = vadd.f32 %v2399, -0.00073499064
      %v2406 = vmul.f32 %v2400, %v2352
      %v2407 = vmul.f32 %v2401, %v2353
      %v2408 = vmul.f32 %v2402, %v2354
      %v2409 = vmul.f32 %v2403, %v2355
      %v2410 = vmul.f32 %v2404, %v2356
      %v2411 = vmul.f32 %v2405, %v2357
      %v2412 = vadd.f32 %v2406, -0.0029546
      %v2413 = vadd.f32 %v2407, -0.0029546
      %v2414 = vadd.f32 %v2408, -0.0029546
      %v2415 = vadd.f32 %v2409, -0.0029546
      %v2416 = vadd.f32 %v2410, -0.0029546
      %v2417 = vadd.f32 %v2411, -0.0029546
      %v2418 = vmul.f32 %v2412, %v2352
      %v2419 = vmul.f32 %v2413, %v2353
      %v2420 = vmul.f32 %v2414, %v2354
      %v2421 = vmul.f32 %v2415, %v2355
      %v2422 = vmul.f32 %v2416, %v2356
      %v2423 = vmul.f32 %v2417, %v2357
      %v2424 = vadd.f32 %v2418, -0.016096033
      %v2425 = vadd.f32 %v2419, -0.016096033
      %v2426 = vadd.f32 %v2420, -0.016096033
      %v2427 = vadd.f32 %v2421, -0.016096033
      %v2428 = vadd.f32 %v2422, -0.016096033
      %v2429 = vadd.f32 %v2423, -0.016096033
      %v2430 = vmul.f32 %v2352, -1.45660715e-05
      %v2431 = vmul.f32 %v2353, -1.45660715e-05
      %v2432 = vmul.f32 %v2354, -1.45660715e-05
      %v2433 = vmul.f32 %v2355, -1.45660715e-05
      %v2434 = vmul.f32 %v2356, -1.45660715e-05
      %v2435 = vmul.f32 %v2357, -1.45660715e-05
      %v2436 = vadd.f32 %v2430, -0.00021337405
      %v2437 = vadd.f32 %v2431, -0.00021337405
      %v2438 = vadd.f32 %v2432, -0.00021337405
      %v2439 = vadd.f32 %v2433, -0.00021337405
      %v2440 = vadd.f32 %v2434, -0.00021337405
      %v2441 = vadd.f32 %v2435, -0.00021337405
      %v2442 = vmul.f32 %v2436, %v2352
      %v2443 = vmul.f32 %v2437, %v2353
      %v2444 = vmul.f32 %v2438, %v2354
      %v2445 = vmul.f32 %v2439, %v2355
      %v2446 = vmul.f32 %v2440, %v2356
      %v2447 = vmul.f32 %v2441, %v2357
      %v2448 = vadd.f32 %v2442, -0.001682827
      %v2449 = vadd.f32 %v2443, -0.001682827
      %v2450 = vadd.f32 %v2444, -0.001682827
      %v2451 = vadd.f32 %v2445, -0.001682827
      %v2452 = vadd.f32 %v2446, -0.001682827
      %v2453 = vadd.f32 %v2447, -0.001682827
      %v2454 = vmul.f32 %v2448, %v2352
      %v2455 = vmul.f32 %v2449, %v2353
      %v2456 = vmul.f32 %v2450, %v2354
      %v2457 = vmul.f32 %v2451, %v2355
      %v2458 = vmul.f32 %v2452, %v2356
      %v2459 = vmul.f32 %v2453, %v2357
      %v2460 = vadd.f32 %v2454, -0.0073733293
      %v2461 = vadd.f32 %v2455, -0.0073733293
      %v2462 = vadd.f32 %v2456, -0.0073733293
      %v2463 = vadd.f32 %v2457, -0.0073733293
      %v2464 = vadd.f32 %v2458, -0.0073733293
      %v2465 = vadd.f32 %v2459, -0.0073733293
      %v2466 = vmul.f32 %v2460, %v2352
      %v2467 = vmul.f32 %v2461, %v2353
      %v2468 = vmul.f32 %v2462, %v2354
      %v2469 = vmul.f32 %v2463, %v2355
      %v2470 = vmul.f32 %v2464, %v2356
      %v2471 = vmul.f32 %v2465, %v2357
      %v2472 = vadd.f32 %v2466, -0.014264739
      %v2473 = vadd.f32 %v2467, -0.014264739
      %v2474 = vadd.f32 %v2468, -0.014264739
      %v2475 = vadd.f32 %v2469, -0.014264739
      %v2476 = vadd.f32 %v2470, -0.014264739
      %v2477 = vadd.f32 %v2471, -0.014264739
      %v2478 = vmul.f32 %v2346, %v2424
      %v2479 = vmul.f32 %v2347, %v2425
      %v2480 = vmul.f32 %v2348, %v2426
      %v2481 = vmul.f32 %v2349, %v2427
      %v2482 = vmul.f32 %v2350, %v2428
      %v2483 = vmul.f32 %v2351, %v2429
      %v2484 = vrcp.pop %v2472
      %v2485 = vmul.f32 %v2478, %v2484
      %v2486 = vrcp.pop %v2473
      %v2487 = vmul.f32 %v2479, %v2486
      %v2488 = vrcp.pop %v2474
      %v2489 = vmul.f32 %v2480, %v2488
      %v2490 = vrcp.pop %v2475
      %v2491 = vmul.f32 %v2481, %v2490
      %v2492 = vrcp.pop %v2476
      %v2493 = vmul.f32 %v2482, %v2492
      %v2494 = vrcp.pop %v2477
      %v2495 = vmul.f32 %v2483, %v2494
      %v2496 = vadd.f32 %v2485, 1.0
      %v2497 = vadd.f32 %v2487, 1.0
      %v2498 = vadd.f32 %v2489, 1.0
      %v2499 = vadd.f32 %v2491, 1.0
      %v2500 = vadd.f32 %v2493, 1.0
      %v2501 = vadd.f32 %v2495, 1.0
      %v2502 = vmul.f32 %v2328, %v2496
      %v2503 = vmul.f32 %v2329, %v2497
      %v2504 = vmul.f32 %v2330, %v2498
      %v2505 = vmul.f32 %v2331, %v2499
      %v2506 = vmul.f32 %v2332, %v2500
      %v2507 = vmul.f32 %v2333, %v2501
      %v2508 = vpack.c.bf16 %v2503, %v2502
      %v2509 = vpack.c.bf16 %v2505, %v2504
      %v2510 = vpack.c.bf16 %v2507, %v2506
      %v2511 = vld [vmem:[%s635] sm:$0xf]
      %v2512 = vld [vmem:[%s635 + $0x4] sm:$0xf]
      %v2513 = vld [vmem:[%s635 + $0x8] sm:$0xf]
      %v2514 = vld [vmem:[%s635 + $0xc] sm:$0xf]
      %v2515 = vld [vmem:[%s635 + $0x10] sm:$0xf]
      %v2516 = vld [vmem:[%s635 + $0x14] sm:$0xf]
      %v2517 = vld [vmem:[%s635 + $0x18] sm:$0xf]
      %v2518 = vld [vmem:[%s635 + $0x1c] sm:$0xf]
      %v2519 = vld [vmem:[%s635 + $0x20] sm:$0xf]
      %v2520 = vld [vmem:[%s635 + $0x24] sm:$0xf]
      %v2521 = vld [vmem:[%s635 + $0x28] sm:$0xf]
      %v2522 = vld [vmem:[%s635 + $0x2c] sm:$0xf]
      %v2523 = vld [vmem:[%s635 + $0x30] sm:$0xf]
      %v2524 = vld [vmem:[%s635 + $0x34] sm:$0xf]
      %v2525 = vld [vmem:[%s635 + $0x38] sm:$0xf]
      %v2526 = vld [vmem:[%s635 + $0x3c] sm:$0xf]
      %v2543 = vunpack.c.l.b16 %v2511
      %v2544 = vunpack.c.l.b16 %v2512
      %v2545 = vunpack.c.l.b16 %v2513
      %v2546 = vunpack.c.l.b16 %v2514
      %v2547 = vunpack.c.l.b16 %v2515
      %v2548 = vunpack.c.l.b16 %v2516
      %v2549 = vunpack.c.l.b16 %v2517
      %v2550 = vunpack.c.l.b16 %v2518
      %v2551 = vunpack.c.l.b16 %v2519
      %v2552 = vunpack.c.l.b16 %v2520
      %v2553 = vunpack.c.l.b16 %v2521
      %v2554 = vunpack.c.l.b16 %v2522
      %v2555 = vunpack.c.l.b16 %v2523
      %v2556 = vunpack.c.l.b16 %v2524
      %v2557 = vunpack.c.l.b16 %v2525
      %v2558 = vunpack.c.l.b16 %v2526
      %v2559 = vpack.c.b16 %v2544, %v2543
      %v2560 = vpack.c.b16 %v2546, %v2545
      %v2561 = vpack.c.b16 %v2548, %v2547
      %v2562 = vpack.c.b16 %v2550, %v2549
      %v2563 = vpack.c.b16 %v2552, %v2551
      %v2564 = vpack.c.b16 %v2554, %v2553
      %v2565 = vpack.c.b16 %v2556, %v2555
      %v2566 = vpack.c.b16 %v2558, %v2557
      %2575 = vmatprep.subr.bf16.mxu0 0
      %2576 = vmatpush1.bf16.msra.mxu0 %v2566
      %2577 = vmatprep.subr.bf16.mxu0 0
      %2578 = vmatpush1.bf16.msra.mxu0 %v2565
      %2579 = vmatprep.subr.bf16.mxu0 0
      %2580 = vmatpush1.bf16.msra.mxu0 %v2564
      %2581 = vmatprep.subr.bf16.mxu0 0
      %2582 = vmatpush1.bf16.msra.mxu0 %v2563
      %2583 = vmatprep.subr.bf16.mxu0 0
      %2584 = vmatpush1.bf16.msra.mxu0 %v2562
      %2585 = vmatprep.subr.bf16.mxu0 0
      %2586 = vmatpush1.bf16.msra.mxu0 %v2561
      %2587 = vmatprep.subr.bf16.mxu0 0
      %2588 = vmatpush1.bf16.msra.mxu0 %v2560
      %2589 = vmatprep.subr.bf16.mxu0 0
      %2590 = vmatpush1.bf16.msra.mxu0 %v2559
      %2591 = vmatprep.subr.bf16.mxu0 0
      %2592 = vmatpush2.bf16.msra.mxu0 0
      %2593 = vmatprep.subr.bf16.mxu0 0
      %2594 = vmatpush2.bf16.msra.mxu0 0
      %2595 = vmatprep.subr.bf16.mxu0 0
      %2596 = vmatpush2.bf16.msra.mxu0 0
      %2597 = vmatprep.subr.bf16.mxu0 0
      %2598 = vmatpush2.bf16.msra.mxu0 0
      %2599 = vmatprep.subr.bf16.mxu0 0
      %2600 = vmatpush2.bf16.msra.mxu0 0
      %2601 = vmatprep.subr.bf16.mxu0 0
      %2602 = vmatpush2.bf16.msra.mxu0 0
      %2603 = vmatprep.subr.bf16.mxu0 0
      %2604 = vmatpush2.bf16.msra.mxu0 0
      %2605 = vmatprep.subr.bf16.mxu0 0
      %2606 = vmatpush2.bf16.msra.mxu0 0
      %2607 = vmatprep.mubr.bf16.mxu0 0
      %2608 = vmatmul.mubr.bf16.gmra.mxu0 %v2508
      %v2609 = vpop.f32.mrf.mxu0
      %v2610 = vadd.f32 0.0, %v2609
      %v2611 = vpop.f32.mrf.mxu0
      %v2612 = vpop.f32.mrf.mxu0
      %v2613 = vadd.f32 0.0, %v2612
      %v2614 = vpop.f32.mrf.mxu0
      %2615 = vmatprep.mubr.bf16.mxu0 0
      %2616 = vmatmul.mubr.bf16.gmra.mxu0 %v2509
      %v2617 = vpop.f32.mrf.mxu0
      %v2618 = vadd.f32 0.0, %v2617
      %v2619 = vpop.f32.mrf.mxu0
      %v2620 = vpop.f32.mrf.mxu0
      %v2621 = vadd.f32 0.0, %v2620
      %v2622 = vpop.f32.mrf.mxu0
      %2623 = vmatprep.mubr.bf16.mxu0 0
      %2624 = vmatmul.mubr.bf16.gmra.mxu0 %v2510
      %v2625 = vpop.f32.mrf.mxu0
      %v2626 = vadd.f32 0.0, %v2625
      %v2627 = vpop.f32.mrf.mxu0
      %v2628 = vpop.f32.mrf.mxu0
      %v2629 = vadd.f32 0.0, %v2628
      %v2630 = vpop.f32.mrf.mxu0
      %2631 = vdwg.mxu0
      %v2632 = vadd.f32 %v2126, %v2610
      %v2633 = vadd.f32 %v2127, %v2613
      %v2634 = vadd.f32 %v2128, %v2618
      %v2635 = vadd.f32 %v2129, %v2621
      %v2636 = vadd.f32 %v2130, %v2626
      %v2637 = vadd.f32 %v2131, %v2629
      %v2638 = vld [vmem:[%s638] sm:$0x1]
      %v2640 = vlaneseq
      %v2641 = vshrl.u32 %v2640, 7
      %v2642 = vsub.s32 0, %v2641
      %v2643 = vrot.slane %v2638, %v2642
      %v2645 = vadd.f32 %v2632, %v2643
      %v2646 = vadd.f32 %v2633, %v2643
      %v2647 = vadd.f32 %v2634, %v2643
      %v2648 = vadd.f32 %v2635, %v2643
      %v2649 = vadd.f32 %v2636, %v2643
      %v2650 = vadd.f32 %v2637, %v2643
      %2651 = vst.msk [vmem:[#allocation2] sm:$0xff] %vm682, %v2645
      %2652 = vst.msk [vmem:[#allocation2 + $0x8] sm:$0xff] %vm682, %v2646
      %2653 = vst.msk [vmem:[#allocation2 + $0x10] sm:$0xff] %vm682, %v2647
      %2654 = vst.msk [vmem:[#allocation2 + $0x18] sm:$0xff] %vm682, %v2648
      %2655 = vst.msk [vmem:[#allocation2 + $0x20] sm:$0xff] %vm682, %v2649
      %2656 = vst.msk [vmem:[#allocation2 + $0x28] sm:$0xff] %vm682, %v2650
      %p2657 = scmp.eq.s32.totalorder %s30, 1
      // Predicated region
      $region81: #{triplane_transformer_forward.7} parent=75 // pred_check
        %p2658 = pneg %p2657
      $region82: #{triplane_transformer_forward.7} parent=75 // pred_check_branch
        %2660 = sbr.rel (%p2658) target = $region84
      $region83: #{triplane_transformer_forward.7} parent=75 // pred_region
        %v2661 = vld [vmem:[%s12] sm:$0x1]
        %v2662 = vld [vmem:[%s13] sm:$0x1]
        %v2663 = vsel %vm682, %v2645, 0.0
        %2664 = vadd.xlane.f32.xlu0 %v2663
        %v2665 = vpop.xlane.xlu0 %2664
        %v2666 = vsel %vm682, %v2646, 0.0
        %2667 = vadd.xlane.f32.xlu0 %v2666
        %v2668 = vpop.xlane.xlu0 %2667
        %v2669 = vsel %vm682, %v2647, 0.0
        %2670 = vadd.xlane.f32.xlu0 %v2669
        %v2671 = vpop.xlane.xlu0 %2670
        %v2672 = vsel %vm682, %v2648, 0.0
        %2673 = vadd.xlane.f32.xlu0 %v2672
        %v2674 = vpop.xlane.xlu0 %2673
        %v2675 = vsel %vm682, %v2649, 0.0
        %2676 = vadd.xlane.f32.xlu0 %v2675
        %v2677 = vpop.xlane.xlu0 %2676
        %v2678 = vsel %vm682, %v2650, 0.0
        %2679 = vadd.xlane.f32.xlu0 %v2678
        %v2680 = vpop.xlane.xlu0 %2679
        %v2681 = vmul.f32 %v2665, %v701
        %v2682 = vmul.f32 %v2668, %v701
        %v2683 = vmul.f32 %v2671, %v701
        %v2684 = vmul.f32 %v2674, %v701
        %v2685 = vmul.f32 %v2677, %v701
        %v2686 = vmul.f32 %v2680, %v701
        %v2687 = vsub.f32 %v2645, %v2681
        %v2688 = vsub.f32 %v2646, %v2682
        %v2689 = vsub.f32 %v2647, %v2683
        %v2690 = vsub.f32 %v2648, %v2684
        %v2691 = vsub.f32 %v2649, %v2685
        %v2692 = vsub.f32 %v2650, %v2686
        %v2693 = vmul.f32 %v2687, %v2687
        %v2694 = vmul.f32 %v2688, %v2688
        %v2695 = vmul.f32 %v2689, %v2689
        %v2696 = vmul.f32 %v2690, %v2690
        %v2697 = vmul.f32 %v2691, %v2691
        %v2698 = vmul.f32 %v2692, %v2692
        %v2699 = vsel %vm682, %v2693, 0.0
        %2700 = vadd.xlane.f32.xlu0 %v2699
        %v2701 = vpop.xlane.xlu0 %2700
        %v2702 = vsel %vm682, %v2694, 0.0
        %2703 = vadd.xlane.f32.xlu0 %v2702
        %v2704 = vpop.xlane.xlu0 %2703
        %v2705 = vsel %vm682, %v2695, 0.0
        %2706 = vadd.xlane.f32.xlu0 %v2705
        %v2707 = vpop.xlane.xlu0 %2706
        %v2708 = vsel %vm682, %v2696, 0.0
        %2709 = vadd.xlane.f32.xlu0 %v2708
        %v2710 = vpop.xlane.xlu0 %2709
        %v2711 = vsel %vm682, %v2697, 0.0
        %2712 = vadd.xlane.f32.xlu0 %v2711
        %v2713 = vpop.xlane.xlu0 %2712
        %v2714 = vsel %vm682, %v2698, 0.0
        %2715 = vadd.xlane.f32.xlu0 %v2714
        %v2716 = vpop.xlane.xlu0 %2715
        %v2717 = vmul.f32 %v2701, %v701
        %v2718 = vmul.f32 %v2704, %v701
        %v2719 = vmul.f32 %v2707, %v701
        %v2720 = vmul.f32 %v2710, %v701
        %v2721 = vmul.f32 %v2713, %v701
        %v2722 = vmul.f32 %v2716, %v701
        %v2723 = vadd.f32 %v2717, 1e-06
        %v2724 = vadd.f32 %v2718, 1e-06
        %v2725 = vadd.f32 %v2719, 1e-06
        %v2726 = vadd.f32 %v2720, 1e-06
        %v2727 = vadd.f32 %v2721, 1e-06
        %v2728 = vadd.f32 %v2722, 1e-06
        %v2729 = vrsqrt.pop %v2723
        %v2730 = vrsqrt.pop %v2724
        %v2731 = vrsqrt.pop %v2725
        %v2732 = vrsqrt.pop %v2726
        %v2733 = vrsqrt.pop %v2727
        %v2734 = vrsqrt.pop %v2728
        %v2735 = vmul.f32 %v2687, %v2729
        %v2736 = vmul.f32 %v2688, %v2730
        %v2737 = vmul.f32 %v2689, %v2731
        %v2738 = vmul.f32 %v2690, %v2732
        %v2739 = vmul.f32 %v2691, %v2733
        %v2740 = vmul.f32 %v2692, %v2734
        %v2742 = vlaneseq
        %v2743 = vshrl.u32 %v2742, 7
        %v2744 = vsub.s32 0, %v2743
        %v2745 = vrot.slane %v2661, %v2744
        %v2747 = vmul.f32 %v2735, %v2745
        %v2748 = vmul.f32 %v2736, %v2745
        %v2749 = vmul.f32 %v2737, %v2745
        %v2750 = vmul.f32 %v2738, %v2745
        %v2751 = vmul.f32 %v2739, %v2745
        %v2752 = vmul.f32 %v2740, %v2745
        %v2754 = vlaneseq
        %v2755 = vshrl.u32 %v2754, 7
        %v2756 = vsub.s32 0, %v2755
        %v2757 = vrot.slane %v2662, %v2756
        %v2759 = vadd.f32 %v2747, %v2757
        %v2760 = vadd.f32 %v2748, %v2757
        %v2761 = vadd.f32 %v2749, %v2757
        %v2762 = vadd.f32 %v2750, %v2757
        %v2763 = vadd.f32 %v2751, %v2757
        %v2764 = vadd.f32 %v2752, %v2757
        %2765 = vst.msk [vmem:[%s643] sm:$0xff] %vm682, %v2759
        %2766 = vst.msk [vmem:[%s643 + $0x8] sm:$0xff] %vm682, %v2760
        %2767 = vst.msk [vmem:[%s643 + $0x10] sm:$0xff] %vm682, %v2761
        %2768 = vst.msk [vmem:[%s643 + $0x18] sm:$0xff] %vm682, %v2762
        %2769 = vst.msk [vmem:[%s643 + $0x20] sm:$0xff] %vm682, %v2763
        %2770 = vst.msk [vmem:[%s643 + $0x28] sm:$0xff] %vm682, %v2764
      $region84: #{triplane_transformer_forward.7} parent=75 // pred_fallthru
        _
      %p2771 = scmp.lt.s32.totalorder %s29, 1
      %s2772 = scalar_select %p2771, %s29, 1
      %s2773 = smul.addr %s2772, 6
      %s2774 = smul.addr %s2773, 8
      %s2775 = scalar_lea.vmem %s14, %s2774
      // Predicated region
      $region85: #{triplane_transformer_forward.7} parent=75 // pred_check
        %p2776 = pneg %p404
      $region86: #{triplane_transformer_forward.7} parent=75 // pred_check_branch
        %2778 = sbr.rel (%p2776) target = $region88
      $region87: #{triplane_transformer_forward.7} parent=75 // pred_region
        _
      $region88: #{triplane_transformer_forward.7} parent=75 // pred_fallthru
        _
    $region76: #{triplane_transformer_forward.7} parent=5 // pred_fallthru
      _
    %p2779 = scmp.le.s32.totalorder 2, %s20
    // Predicated region
    $region89: #{triplane_transformer_forward.7} parent=5 // pred_check
      %p2780 = pneg %p2779
    $region90: #{triplane_transformer_forward.7} parent=5 // pred_check_branch
      %2782 = sbr.rel (%p2780) target = $region92
    $region91: #{triplane_transformer_forward.7} parent=5 // pred_region
      %s2783 = ssub.s32 %s20, 2
      // Predicated region
      $region93: #{triplane_transformer_forward.7} parent=91 // pred_check
        %p2784 = pneg %p410
      $region94: #{triplane_transformer_forward.7} parent=91 // pred_check_branch
        %2786 = sbr.rel (%p2784) target = $region96
      $region95: #{triplane_transformer_forward.7} parent=91 // pred_region
        %p2787 = scmp.lt.s32.totalorder %s31, 1
        %s2788 = scalar_select %p2787, %s31, 1
        %s2789 = smul.addr %s2788, 6
        %s2790 = smul.addr %s2789, 8
        %s2791 = scalar_lea.vmem %s14, %s2790
      $region96: #{triplane_transformer_forward.7} parent=91 // pred_fallthru
        _
    $region92: #{triplane_transformer_forward.7} parent=5 // pred_fallthru
      _
  $region6: #{triplane_transformer_forward.7} parent=0 // loop_footer
    %s24 = sadd.s32 1, %s20
  $region7: #{triplane_transformer_forward.7} parent=0 // loop_footer_branch
    %19 = sbr.rel target = $region3
  $region8: #{triplane_transformer_forward.7} parent=0 // loop_exit
    _

// kernel: triplane_transformer_forward.9
$region0: #{triplane_transformer_forward.9}
  #allocation0 [shape = 'u32[]', space=smem, size = 0x4, offset = 0x4, fixed_abs, tag = 'smem constant byte address 0x4 - core index']
  #allocation1 [shape = 'u32[144,128]{1,0:T(1,128)}', space=vmem, size = 0x12000, scoped, tag = 'internal scratch']
  %s0 = inlined_call_operand.vmem [shape: f32[1536,8], index: 0, kind: input, shape index: {}]
  %s1 = inlined_call_operand.vmem [shape: f32[8,16], index: 1, kind: input, shape index: {}]
  %s2 = inlined_call_operand.vmem [shape: f32[1,16], index: 2, kind: input, shape index: {}]
  %s3 = inlined_call_operand.vmem [shape: f32[16,16], index: 3, kind: input, shape index: {}]
  %s4 = inlined_call_operand.vmem [shape: f32[1,16], index: 4, kind: input, shape index: {}]
  %s5 = inlined_call_operand.vmem [shape: f32[1536,16], index: 5, kind: input, shape index: {}]
  %s6 = inlined_call_operand.vmem [shape: f32[1536,16], index: 6, kind: output, shape index: {}]
  %s7 = sld [smem:[#allocation0]]
  $region57: #{triplane_transformer_forward.9} parent=0
    _
  %s9 = ssub.s32 1, %s7
  %s10 = scalar_select 0, %s9, %s7
  loop: start=0, step=1, limit=5
  $region2: #{triplane_transformer_forward.9} parent=0 // loop_pre_header
    _
  $region3: #{triplane_transformer_forward.9} parent=0 // loop_header
    %s12 = sphi 0, %s16
    %p13 = scmp.ge.s32.totalorder %s12, 5
    %s22 = sphi 0, %s24
    %s25 = sphi 0, %s22
    %s26 = sphi 0, %s25
    %s42 = sphi 0, %s26
    %s46 = sphi 0, %s46
    %s48 = sphi 0, %s46
    %s49 = sphi 0, %s48
    %s63 = sphi 0, %s49
    %s67 = sphi 0, %s67
    %s69 = sphi 0, %s67
    %s70 = sphi 0, %s69
    %s84 = sphi 0, %s70
    %s88 = sphi 0, %s88
    %s90 = sphi 0, %s88
    %s91 = sphi 0, %s90
    %s105 = sphi 0, %s91
    %s109 = sphi 0, %s109
    %s111 = sphi 0, %s109
    %s112 = sphi 0, %s111
    %s126 = sphi 0, %s112
    %s132 = sphi 0, %s134
    %s135 = sphi 0, %s132
    %s136 = sphi 0, %s135
    %s152 = sphi 0, %s136
    %s158 = sphi 0, %s160
    %s161 = sphi 0, %s158
    %s162 = sphi 0, %s161
    %s178 = sphi 0, %s162
  $region4: #{triplane_transformer_forward.9} parent=0 // loop_header_branch
    %15 = sbr.rel (%p13) target = $region8
  $region5: #{triplane_transformer_forward.9} parent=0 // loop_body
    %s17 = ssub.s32 %s12, 1
    %s18 = ssub.s32 %s12, 2
    %s19 = sadd.s32 %s12, 1
    %s20 = ssub.s32 %s12, %s19
    %p21 = scmp.eq.s32.totalorder %s20, 0
    %s23 = sadd.s32 %s22, 1
    %s24 = scalar_select %p21, %s22, %s23
    %p27 = pneg %p21
    %p28 = scmp.eq.s32.totalorder %s12, 2
    %p29 = por %p27, %p28
    %p30 = scmp.ne.s32.totalorder %s22, %s25
    %p31 = scmp.eq.s32.totalorder %s12, 0
    %p32 = por %p30, %p31
    %p33 = scmp.ne.s32.totalorder %s22, %s25
    %p34 = scmp.eq.s32.totalorder %s17, 2
    %p35 = por %p33, %p34
    %p36 = scmp.ne.s32.totalorder %s25, %s26
    %p37 = scmp.eq.s32.totalorder %s17, 0
    %p38 = por %p36, %p37
    %p39 = scmp.ne.s32.totalorder %s25, %s26
    %p40 = scmp.eq.s32.totalorder %s18, 2
    %p41 = por %p39, %p40
    %p43 = scmp.ne.s32.totalorder %s26, %s42
    %p44 = scmp.eq.s32.totalorder %s18, 0
    %p45 = por %p43, %p44
    %s47 = sadd.s32 %s46, 1
    %p50 = scmp.eq.s32.totalorder %s12, 2
    %p51 = scmp.ne.s32.totalorder %s46, %s48
    %p52 = scmp.eq.s32.totalorder %s12, 0
    %p53 = por %p51, %p52
    %p54 = scmp.ne.s32.totalorder %s46, %s48
    %p55 = scmp.eq.s32.totalorder %s17, 2
    %p56 = por %p54, %p55
    %p57 = scmp.ne.s32.totalorder %s48, %s49
    %p58 = scmp.eq.s32.totalorder %s17, 0
    %p59 = por %p57, %p58
    %p60 = scmp.ne.s32.totalorder %s48, %s49
    %p61 = scmp.eq.s32.totalorder %s18, 2
    %p62 = por %p60, %p61
    %p64 = scmp.ne.s32.totalorder %s49, %s63
    %p65 = scmp.eq.s32.totalorder %s18, 0
    %p66 = por %p64, %p65
    %s68 = sadd.s32 %s67, 1
    %p71 = scmp.eq.s32.totalorder %s12, 2
    %p72 = scmp.ne.s32.totalorder %s67, %s69
    %p73 = scmp.eq.s32.totalorder %s12, 0
    %p74 = por %p72, %p73
    %p75 = scmp.ne.s32.totalorder %s67, %s69
    %p76 = scmp.eq.s32.totalorder %s17, 2
    %p77 = por %p75, %p76
    %p78 = scmp.ne.s32.totalorder %s69, %s70
    %p79 = scmp.eq.s32.totalorder %s17, 0
    %p80 = por %p78, %p79
    %p81 = scmp.ne.s32.totalorder %s69, %s70
    %p82 = scmp.eq.s32.totalorder %s18, 2
    %p83 = por %p81, %p82
    %p85 = scmp.ne.s32.totalorder %s70, %s84
    %p86 = scmp.eq.s32.totalorder %s18, 0
    %p87 = por %p85, %p86
    %s89 = sadd.s32 %s88, 1
    %p92 = scmp.eq.s32.totalorder %s12, 2
    %p93 = scmp.ne.s32.totalorder %s88, %s90
    %p94 = scmp.eq.s32.totalorder %s12, 0
    %p95 = por %p93, %p94
    %p96 = scmp.ne.s32.totalorder %s88, %s90
    %p97 = scmp.eq.s32.totalorder %s17, 2
    %p98 = por %p96, %p97
    %p99 = scmp.ne.s32.totalorder %s90, %s91
    %p100 = scmp.eq.s32.totalorder %s17, 0
    %p101 = por %p99, %p100
    %p102 = scmp.ne.s32.totalorder %s90, %s91
    %p103 = scmp.eq.s32.totalorder %s18, 2
    %p104 = por %p102, %p103
    %p106 = scmp.ne.s32.totalorder %s91, %s105
    %p107 = scmp.eq.s32.totalorder %s18, 0
    %p108 = por %p106, %p107
    %s110 = sadd.s32 %s109, 1
    %p113 = scmp.eq.s32.totalorder %s12, 2
    %p114 = scmp.ne.s32.totalorder %s109, %s111
    %p115 = scmp.eq.s32.totalorder %s12, 0
    %p116 = por %p114, %p115
    %p117 = scmp.ne.s32.totalorder %s109, %s111
    %p118 = scmp.eq.s32.totalorder %s17, 2
    %p119 = por %p117, %p118
    %p120 = scmp.ne.s32.totalorder %s111, %s112
    %p121 = scmp.eq.s32.totalorder %s17, 0
    %p122 = por %p120, %p121
    %p123 = scmp.ne.s32.totalorder %s111, %s112
    %p124 = scmp.eq.s32.totalorder %s18, 2
    %p125 = por %p123, %p124
    %p127 = scmp.ne.s32.totalorder %s112, %s126
    %p128 = scmp.eq.s32.totalorder %s18, 0
    %p129 = por %p127, %p128
    %s130 = ssub.s32 %s12, %s19
    %p131 = scmp.eq.s32.totalorder %s130, 0
    %s133 = sadd.s32 %s132, 1
    %s134 = scalar_select %p131, %s132, %s133
    %p137 = pneg %p131
    %p138 = scmp.eq.s32.totalorder %s12, 2
    %p139 = por %p137, %p138
    %p140 = scmp.ne.s32.totalorder %s132, %s135
    %p141 = scmp.eq.s32.totalorder %s12, 0
    %p142 = por %p140, %p141
    %p143 = scmp.ne.s32.totalorder %s132, %s135
    %p144 = scmp.eq.s32.totalorder %s17, 2
    %p145 = por %p143, %p144
    %p146 = scmp.ne.s32.totalorder %s135, %s136
    %p147 = scmp.eq.s32.totalorder %s17, 0
    %p148 = por %p146, %p147
    %p149 = scmp.ne.s32.totalorder %s135, %s136
    %p150 = scmp.eq.s32.totalorder %s18, 2
    %p151 = por %p149, %p150
    %p153 = scmp.ne.s32.totalorder %s136, %s152
    %p154 = scmp.eq.s32.totalorder %s18, 0
    %p155 = por %p153, %p154
    %s156 = ssub.s32 %s12, %s19
    %p157 = scmp.eq.s32.totalorder %s156, 0
    %s159 = sadd.s32 %s158, 1
    %s160 = scalar_select %p157, %s158, %s159
    %p163 = pneg %p157
    %p164 = scmp.eq.s32.totalorder %s12, 2
    %p165 = por %p163, %p164
    %p166 = scmp.ne.s32.totalorder %s158, %s161
    %p167 = scmp.eq.s32.totalorder %s12, 0
    %p168 = por %p166, %p167
    %p169 = scmp.ne.s32.totalorder %s158, %s161
    %p170 = scmp.eq.s32.totalorder %s17, 2
    %p171 = por %p169, %p170
    %p172 = scmp.ne.s32.totalorder %s161, %s162
    %p173 = scmp.eq.s32.totalorder %s17, 0
    %p174 = por %p172, %p173
    %p175 = scmp.ne.s32.totalorder %s161, %s162
    %p176 = scmp.eq.s32.totalorder %s18, 2
    %p177 = por %p175, %p176
    %p179 = scmp.ne.s32.totalorder %s162, %s178
    %p180 = scmp.eq.s32.totalorder %s18, 0
    %p181 = por %p179, %p180
    %p182 = scmp.le.s32.totalorder 1, %s12
    %p183 = scmp.lt.s32.totalorder %s12, 4
    %p184 = pnand %p182, %p183
    %p185 = pneg %p184
    // Predicated region
    $region9: #{triplane_transformer_forward.9} parent=5 // pred_check
      _
    $region10: #{triplane_transformer_forward.9} parent=5 // pred_check_branch
      %187 = sbr.rel (%p184) target = $region12
    $region11: #{triplane_transformer_forward.9} parent=5 // pred_region
      %s188 = ssub.s32 %s12, 1
      // Predicated region
      $region13: #{triplane_transformer_forward.9} parent=11 // pred_check
        %p189 = pneg %p59
      $region14: #{triplane_transformer_forward.9} parent=11 // pred_check_branch
        %191 = sbr.rel (%p189) target = $region16
      $region15: #{triplane_transformer_forward.9} parent=11 // pred_region
        _
      $region16: #{triplane_transformer_forward.9} parent=11 // pred_fallthru
        _
      // Predicated region
      $region17: #{triplane_transformer_forward.9} parent=11 // pred_check
        %p192 = pneg %p80
      $region18: #{triplane_transformer_forward.9} parent=11 // pred_check_branch
        %194 = sbr.rel (%p192) target = $region20
      $region19: #{triplane_transformer_forward.9} parent=11 // pred_region
        _
      $region20: #{triplane_transformer_forward.9} parent=11 // pred_fallthru
        _
      // Predicated region
      $region21: #{triplane_transformer_forward.9} parent=11 // pred_check
        %p195 = pneg %p101
      $region22: #{triplane_transformer_forward.9} parent=11 // pred_check_branch
        %197 = sbr.rel (%p195) target = $region24
      $region23: #{triplane_transformer_forward.9} parent=11 // pred_region
        _
      $region24: #{triplane_transformer_forward.9} parent=11 // pred_fallthru
        _
      // Predicated region
      $region25: #{triplane_transformer_forward.9} parent=11 // pred_check
        %p198 = pneg %p122
      $region26: #{triplane_transformer_forward.9} parent=11 // pred_check_branch
        %200 = sbr.rel (%p198) target = $region28
      $region27: #{triplane_transformer_forward.9} parent=11 // pred_region
        _
      $region28: #{triplane_transformer_forward.9} parent=11 // pred_fallthru
        _
    $region12: #{triplane_transformer_forward.9} parent=5 // pred_fallthru
      _
    %p201 = scmp.lt.s32.totalorder %s12, 3
    // Predicated region
    $region29: #{triplane_transformer_forward.9} parent=5 // pred_check
      %p202 = pneg %p201
    $region30: #{triplane_transformer_forward.9} parent=5 // pred_check_branch
      %204 = sbr.rel (%p202) target = $region32
    $region31: #{triplane_transformer_forward.9} parent=5 // pred_region
      // Predicated region
      $region33: #{triplane_transformer_forward.9} parent=31 // pred_check
        %p205 = pneg %p32
      $region34: #{triplane_transformer_forward.9} parent=31 // pred_check_branch
        %207 = sbr.rel (%p205) target = $region36
      $region35: #{triplane_transformer_forward.9} parent=31 // pred_region
        %s208 = smul.u32 64, %s12
        %p209 = scmp.lt.s32.totalorder %s208, 191
        %s210 = scalar_select %p209, %s208, 191
        %s211 = smul.addr %s210, 8
        %s212 = scalar_lea.vmem %s0, %s211
        %s213 = smul.u32 64, %s12
      $region36: #{triplane_transformer_forward.9} parent=31 // pred_fallthru
        _
      // Predicated region
      $region37: #{triplane_transformer_forward.9} parent=31 // pred_check
        %p214 = pneg %p142
      $region38: #{triplane_transformer_forward.9} parent=31 // pred_check_branch
        %216 = sbr.rel (%p214) target = $region40
      $region39: #{triplane_transformer_forward.9} parent=31 // pred_region
        %s217 = smul.u32 64, %s12
        %p218 = scmp.lt.s32.totalorder %s217, 191
        %s219 = scalar_select %p218, %s217, 191
        %s220 = smul.addr %s219, 8
        %s221 = scalar_lea.vmem %s5, %s220
        %s222 = smul.u32 64, %s12
      $region40: #{triplane_transformer_forward.9} parent=31 // pred_fallthru
        _
    $region32: #{triplane_transformer_forward.9} parent=5 // pred_fallthru
      _
    %p223 = scmp.le.s32.totalorder 1, %s12
    %p224 = scmp.lt.s32.totalorder %s12, 4
    %p225 = pnand %p223, %p224
    %p226 = pneg %p225
    // Predicated region
    $region41: #{triplane_transformer_forward.9} parent=5 // pred_check
      _
    $region42: #{triplane_transformer_forward.9} parent=5 // pred_check_branch
      %228 = sbr.rel (%p225) target = $region44
    $region43: #{triplane_transformer_forward.9} parent=5 // pred_region
      %s229 = ssub.s32 %s12, 1
      %s230 = smul.u32 64, %s17
      %p231 = scmp.lt.s32.totalorder %s230, 191
      %s232 = scalar_select %p231, %s230, 191
      %s233 = smul.addr %s232, 8
      %s234 = scalar_lea.vmem %s0, %s233
      %p235 = pneg %p38
      %p236 = pneg %p35
      %p237 = pneg %p59
      %p238 = pneg %p56
      %p239 = pneg %p80
      %p240 = pneg %p77
      %p241 = pneg %p101
      %p242 = pneg %p98
      %p243 = pneg %p122
      %p244 = pneg %p119
      %s245 = smul.u32 64, %s17
      %p246 = scmp.lt.s32.totalorder %s245, 191
      %s247 = scalar_select %p246, %s245, 191
      %s248 = smul.addr %s247, 8
      %s249 = scalar_lea.vmem %s5, %s248
      %p250 = pneg %p148
      %p251 = pneg %p145
      %p252 = pneg %p174
      %p253 = pneg %p171
      %s254 = smul.u32 64, %s17
      %p255 = scmp.lt.s32.totalorder %s254, 191
      %s256 = scalar_select %p255, %s254, 191
      %s257 = smul.addr %s256, 8
      %s258 = scalar_lea.vmem %s6, %s257
      %s259 = smul.u32 64, %s17
      %p260 = scmp.lt.s32.totalorder %s259, 191
      %s261 = scalar_select %p260, %s259, 191
      %s262 = smul.addr %s261, 8
      %s263 = scalar_lea.vmem %s0, %s262
      %s264 = smul.u32 64, %s17
      %s265 = smul.u32 64, %s17
      %p266 = scmp.lt.s32.totalorder %s265, 191
      %s267 = scalar_select %p266, %s265, 191
      %s268 = smul.addr %s267, 8
      %s269 = scalar_lea.vmem %s5, %s268
      %s270 = smul.u32 64, %s17
      %s271 = smul.u32 64, %s17
      %p272 = scmp.lt.s32.totalorder %s271, 191
      %s273 = scalar_select %p272, %s271, 191
      %s274 = smul.addr %s273, 8
      %s275 = scalar_lea.vmem %s6, %s274
      %s276 = smul.u32 64, %s17
      %v278 = vld [vmem:[%s263] sm:$0xff]
      %v279 = vld [vmem:[%s263 + $0x8] sm:$0xff]
      %v280 = vld [vmem:[%s263 + $0x10] sm:$0xff]
      %v281 = vld [vmem:[%s263 + $0x18] sm:$0xff]
      %v282 = vld [vmem:[%s263 + $0x20] sm:$0xff]
      %v283 = vld [vmem:[%s263 + $0x28] sm:$0xff]
      %v284 = vld [vmem:[%s263 + $0x30] sm:$0xff]
      %v285 = vld [vmem:[%s263 + $0x38] sm:$0xff]
      %v286 = vld [vmem:[%s263 + $0x40] sm:$0xff]
      %v287 = vld [vmem:[%s263 + $0x48] sm:$0xff]
      %v288 = vld [vmem:[%s263 + $0x50] sm:$0xff]
      %v289 = vld [vmem:[%s263 + $0x58] sm:$0xff]
      %v290 = vld [vmem:[%s263 + $0x60] sm:$0xff]
      %v291 = vld [vmem:[%s263 + $0x68] sm:$0xff]
      %v292 = vld [vmem:[%s263 + $0x70] sm:$0xff]
      %v293 = vld [vmem:[%s263 + $0x78] sm:$0xff]
      %v294 = vld [vmem:[%s263 + $0x80] sm:$0xff]
      %v295 = vld [vmem:[%s263 + $0x88] sm:$0xff]
      %v296 = vld [vmem:[%s263 + $0x90] sm:$0xff]
      %v297 = vld [vmem:[%s263 + $0x98] sm:$0xff]
      %v298 = vld [vmem:[%s263 + $0xa0] sm:$0xff]
      %v299 = vld [vmem:[%s263 + $0xa8] sm:$0xff]
      %v300 = vld [vmem:[%s263 + $0xb0] sm:$0xff]
      %v301 = vld [vmem:[%s263 + $0xb8] sm:$0xff]
      %v302 = vld [vmem:[%s263 + $0xc0] sm:$0xff]
      %v303 = vld [vmem:[%s263 + $0xc8] sm:$0xff]
      %v304 = vld [vmem:[%s263 + $0xd0] sm:$0xff]
      %v305 = vld [vmem:[%s263 + $0xd8] sm:$0xff]
      %v306 = vld [vmem:[%s263 + $0xe0] sm:$0xff]
      %v307 = vld [vmem:[%s263 + $0xe8] sm:$0xff]
      %v308 = vld [vmem:[%s263 + $0xf0] sm:$0xff]
      %v309 = vld [vmem:[%s263 + $0xf8] sm:$0xff]
      %v310 = vld [vmem:[%s263 + $0x100] sm:$0xff]
      %v311 = vld [vmem:[%s263 + $0x108] sm:$0xff]
      %v312 = vld [vmem:[%s263 + $0x110] sm:$0xff]
      %v313 = vld [vmem:[%s263 + $0x118] sm:$0xff]
      %v314 = vld [vmem:[%s263 + $0x120] sm:$0xff]
      %v315 = vld [vmem:[%s263 + $0x128] sm:$0xff]
      %v316 = vld [vmem:[%s263 + $0x130] sm:$0xff]
      %v317 = vld [vmem:[%s263 + $0x138] sm:$0xff]
      %v318 = vld [vmem:[%s263 + $0x140] sm:$0xff]
      %v319 = vld [vmem:[%s263 + $0x148] sm:$0xff]
      %v320 = vld [vmem:[%s263 + $0x150] sm:$0xff]
      %v321 = vld [vmem:[%s263 + $0x158] sm:$0xff]
      %v322 = vld [vmem:[%s263 + $0x160] sm:$0xff]
      %v323 = vld [vmem:[%s263 + $0x168] sm:$0xff]
      %v324 = vld [vmem:[%s263 + $0x170] sm:$0xff]
      %v325 = vld [vmem:[%s263 + $0x178] sm:$0xff]
      %v326 = vld [vmem:[%s263 + $0x180] sm:$0xff]
      %v327 = vld [vmem:[%s263 + $0x188] sm:$0xff]
      %v328 = vld [vmem:[%s263 + $0x190] sm:$0xff]
      %v329 = vld [vmem:[%s263 + $0x198] sm:$0xff]
      %v330 = vld [vmem:[%s263 + $0x1a0] sm:$0xff]
      %v331 = vld [vmem:[%s263 + $0x1a8] sm:$0xff]
      %v332 = vld [vmem:[%s263 + $0x1b0] sm:$0xff]
      %v333 = vld [vmem:[%s263 + $0x1b8] sm:$0xff]
      %v334 = vld [vmem:[%s263 + $0x1c0] sm:$0xff]
      %v335 = vld [vmem:[%s263 + $0x1c8] sm:$0xff]
      %v336 = vld [vmem:[%s263 + $0x1d0] sm:$0xff]
      %v337 = vld [vmem:[%s263 + $0x1d8] sm:$0xff]
      %v338 = vld [vmem:[%s263 + $0x1e0] sm:$0xff]
      %v339 = vld [vmem:[%s263 + $0x1e8] sm:$0xff]
      %v340 = vld [vmem:[%s263 + $0x1f0] sm:$0xff]
      %v341 = vld [vmem:[%s263 + $0x1f8] sm:$0xff]
      %v342 = vpack.c.bf16 %v279, %v278
      %v343 = vpack.c.bf16 %v281, %v280
      %v344 = vpack.c.bf16 %v283, %v282
      %v345 = vpack.c.bf16 %v285, %v284
      %v346 = vpack.c.bf16 %v287, %v286
      %v347 = vpack.c.bf16 %v289, %v288
      %v348 = vpack.c.bf16 %v291, %v290
      %v349 = vpack.c.bf16 %v293, %v292
      %v350 = vpack.c.bf16 %v295, %v294
      %v351 = vpack.c.bf16 %v297, %v296
      %v352 = vpack.c.bf16 %v299, %v298
      %v353 = vpack.c.bf16 %v301, %v300
      %v354 = vpack.c.bf16 %v303, %v302
      %v355 = vpack.c.bf16 %v305, %v304
      %v356 = vpack.c.bf16 %v307, %v306
      %v357 = vpack.c.bf16 %v309, %v308
      %v358 = vpack.c.bf16 %v311, %v310
      %v359 = vpack.c.bf16 %v313, %v312
      %v360 = vpack.c.bf16 %v315, %v314
      %v361 = vpack.c.bf16 %v317, %v316
      %v362 = vpack.c.bf16 %v319, %v318
      %v363 = vpack.c.bf16 %v321, %v320
      %v364 = vpack.c.bf16 %v323, %v322
      %v365 = vpack.c.bf16 %v325, %v324
      %v366 = vpack.c.bf16 %v327, %v326
      %v367 = vpack.c.bf16 %v329, %v328
      %v368 = vpack.c.bf16 %v331, %v330
      %v369 = vpack.c.bf16 %v333, %v332
      %v370 = vpack.c.bf16 %v335, %v334
      %v371 = vpack.c.bf16 %v337, %v336
      %v372 = vpack.c.bf16 %v339, %v338
      %v373 = vpack.c.bf16 %v341, %v340
      %v374 = vld [vmem:[%s1] sm:$0xff]
      %v375 = vpack.c.bf16 %v374, %v374
      %v376 = vld [vmem:[%s2] sm:$0x1]
      %v378 = vlaneseq
      %v379 = vshrl.u32 %v378, 7
      %v380 = vsub.s32 0, %v379
      %v381 = vrot.slane %v376, %v380
      %vm383 = vcmask 64512
      %v385 = vsel %vm383, %v342, 0
      %v388 = vsel %vm383, %v343, 0
      %v391 = vsel %vm383, %v344, 0
      %v394 = vsel %vm383, %v345, 0
      %v397 = vsel %vm383, %v346, 0
      %v400 = vsel %vm383, %v347, 0
      %v403 = vsel %vm383, %v348, 0
      %v406 = vsel %vm383, %v349, 0
      %v409 = vsel %vm383, %v350, 0
      %v412 = vsel %vm383, %v351, 0
      %v415 = vsel %vm383, %v352, 0
      %v418 = vsel %vm383, %v353, 0
      %v421 = vsel %vm383, %v354, 0
      %v424 = vsel %vm383, %v355, 0
      %v427 = vsel %vm383, %v356, 0
      %v430 = vsel %vm383, %v357, 0
      %v433 = vsel %vm383, %v358, 0
      %v436 = vsel %vm383, %v359, 0
      %v439 = vsel %vm383, %v360, 0
      %v442 = vsel %vm383, %v361, 0
      %v445 = vsel %vm383, %v362, 0
      %v448 = vsel %vm383, %v363, 0
      %v451 = vsel %vm383, %v364, 0
      %v454 = vsel %vm383, %v365, 0
      %v457 = vsel %vm383, %v366, 0
      %v460 = vsel %vm383, %v367, 0
      %v463 = vsel %vm383, %v368, 0
      %v466 = vsel %vm383, %v369, 0
      %v469 = vsel %vm383, %v370, 0
      %v472 = vsel %vm383, %v371, 0
      %v475 = vsel %vm383, %v372, 0
      %v478 = vsel %vm383, %v373, 0
      %vm480 = vcmask 1043456
      %v482 = vsel %vm480, %v375, 0
      %484 = vmatprep.subr.bf16.mxu0 0
      %485 = vmatpush1.bf16.msra.mxu0 0
      %486 = vmatprep.subr.bf16.mxu0 0
      %487 = vmatpush1.bf16.msra.mxu0 0
      %488 = vmatprep.subr.bf16.mxu0 0
      %489 = vmatpush1.bf16.msra.mxu0 0
      %490 = vmatprep.subr.bf16.mxu0 0
      %491 = vmatpush1.bf16.msra.mxu0 0
      %492 = vmatprep.subr.bf16.mxu0 0
      %493 = vmatpush1.bf16.msra.mxu0 0
      %494 = vmatprep.subr.bf16.mxu0 0
      %495 = vmatpush1.bf16.msra.mxu0 0
      %496 = vmatprep.subr.bf16.mxu0 0
      %497 = vmatpush1.bf16.msra.mxu0 0
      %498 = vmatprep.subr.bf16.mxu0 0
      %499 = vmatpush1.bf16.msra.mxu0 %v482
      %500 = vmatprep.subr.bf16.mxu0 0
      %501 = vmatpush2.bf16.msra.mxu0 0
      %502 = vmatprep.subr.bf16.mxu0 0
      %503 = vmatpush2.bf16.msra.mxu0 0
      %504 = vmatprep.subr.bf16.mxu0 0
      %505 = vmatpush2.bf16.msra.mxu0 0
      %506 = vmatprep.subr.bf16.mxu0 0
      %507 = vmatpush2.bf16.msra.mxu0 0
      %508 = vmatprep.subr.bf16.mxu0 0
      %509 = vmatpush2.bf16.msra.mxu0 0
      %510 = vmatprep.subr.bf16.mxu0 0
      %511 = vmatpush2.bf16.msra.mxu0 0
      %512 = vmatprep.subr.bf16.mxu0 0
      %513 = vmatpush2.bf16.msra.mxu0 0
      %514 = vmatprep.subr.bf16.mxu0 0
      %515 = vmatpush2.bf16.msra.mxu0 0
      %516 = vmatprep.mubr.bf16.mxu0 0
      %517 = vmatmul.mubr.bf16.gmra.mxu0 %v385
      %v518 = vpop.f32.mrf.mxu0
      %v519 = vadd.f32 %v381, %v518
      %v520 = vpop.f32.mrf.mxu0
      %v521 = vpop.f32.mrf.mxu0
      %v522 = vadd.f32 %v381, %v521
      %v523 = vpop.f32.mrf.mxu0
      %524 = vmatprep.mubr.bf16.mxu0 0
      %525 = vmatmul.mubr.bf16.gmra.mxu0 %v388
      %v526 = vpop.f32.mrf.mxu0
      %v527 = vadd.f32 %v381, %v526
      %v528 = vpop.f32.mrf.mxu0
      %v529 = vpop.f32.mrf.mxu0
      %v530 = vadd.f32 %v381, %v529
      %v531 = vpop.f32.mrf.mxu0
      %532 = vmatprep.mubr.bf16.mxu0 0
      %533 = vmatmul.mubr.bf16.gmra.mxu0 %v391
      %v534 = vpop.f32.mrf.mxu0
      %v535 = vadd.f32 %v381, %v534
      %v536 = vpop.f32.mrf.mxu0
      %v537 = vpop.f32.mrf.mxu0
      %v538 = vadd.f32 %v381, %v537
      %v539 = vpop.f32.mrf.mxu0
      %540 = vmatprep.mubr.bf16.mxu0 0
      %541 = vmatmul.mubr.bf16.gmra.mxu0 %v394
      %v542 = vpop.f32.mrf.mxu0
      %v543 = vadd.f32 %v381, %v542
      %v544 = vpop.f32.mrf.mxu0
      %v545 = vpop.f32.mrf.mxu0
      %v546 = vadd.f32 %v381, %v545
      %v547 = vpop.f32.mrf.mxu0
      %548 = vmatprep.mubr.bf16.mxu0 0
      %549 = vmatmul.mubr.bf16.gmra.mxu0 %v397
      %v550 = vpop.f32.mrf.mxu0
      %v551 = vadd.f32 %v381, %v550
      %v552 = vpop.f32.mrf.mxu0
      %v553 = vpop.f32.mrf.mxu0
      %v554 = vadd.f32 %v381, %v553
      %v555 = vpop.f32.mrf.mxu0
      %556 = vmatprep.mubr.bf16.mxu0 0
      %557 = vmatmul.mubr.bf16.gmra.mxu0 %v400
      %v558 = vpop.f32.mrf.mxu0
      %v559 = vadd.f32 %v381, %v558
      %v560 = vpop.f32.mrf.mxu0
      %v561 = vpop.f32.mrf.mxu0
      %v562 = vadd.f32 %v381, %v561
      %v563 = vpop.f32.mrf.mxu0
      %564 = vmatprep.mubr.bf16.mxu0 0
      %565 = vmatmul.mubr.bf16.gmra.mxu0 %v403
      %v566 = vpop.f32.mrf.mxu0
      %v567 = vadd.f32 %v381, %v566
      %v568 = vpop.f32.mrf.mxu0
      %v569 = vpop.f32.mrf.mxu0
      %v570 = vadd.f32 %v381, %v569
      %v571 = vpop.f32.mrf.mxu0
      %572 = vmatprep.mubr.bf16.mxu0 0
      %573 = vmatmul.mubr.bf16.gmra.mxu0 %v406
      %v574 = vpop.f32.mrf.mxu0
      %v575 = vadd.f32 %v381, %v574
      %v576 = vpop.f32.mrf.mxu0
      %v577 = vpop.f32.mrf.mxu0
      %v578 = vadd.f32 %v381, %v577
      %v579 = vpop.f32.mrf.mxu0
      %580 = vmatprep.mubr.bf16.mxu0 0
      %581 = vmatmul.mubr.bf16.gmra.mxu0 %v409
      %v582 = vpop.f32.mrf.mxu0
      %v583 = vadd.f32 %v381, %v582
      %v584 = vpop.f32.mrf.mxu0
      %v585 = vpop.f32.mrf.mxu0
      %v586 = vadd.f32 %v381, %v585
      %v587 = vpop.f32.mrf.mxu0
      %588 = vmatprep.mubr.bf16.mxu0 0
      %589 = vmatmul.mubr.bf16.gmra.mxu0 %v412
      %v590 = vpop.f32.mrf.mxu0
      %v591 = vadd.f32 %v381, %v590
      %v592 = vpop.f32.mrf.mxu0
      %v593 = vpop.f32.mrf.mxu0
      %v594 = vadd.f32 %v381, %v593
      %v595 = vpop.f32.mrf.mxu0
      %596 = vmatprep.mubr.bf16.mxu0 0
      %597 = vmatmul.mubr.bf16.gmra.mxu0 %v415
      %v598 = vpop.f32.mrf.mxu0
      %v599 = vadd.f32 %v381, %v598
      %v600 = vpop.f32.mrf.mxu0
      %v601 = vpop.f32.mrf.mxu0
      %v602 = vadd.f32 %v381, %v601
      %v603 = vpop.f32.mrf.mxu0
      %604 = vmatprep.mubr.bf16.mxu0 0
      %605 = vmatmul.mubr.bf16.gmra.mxu0 %v418
      %v606 = vpop.f32.mrf.mxu0
      %v607 = vadd.f32 %v381, %v606
      %v608 = vpop.f32.mrf.mxu0
      %v609 = vpop.f32.mrf.mxu0
      %v610 = vadd.f32 %v381, %v609
      %v611 = vpop.f32.mrf.mxu0
      %612 = vmatprep.mubr.bf16.mxu0 0
      %613 = vmatmul.mubr.bf16.gmra.mxu0 %v421
      %v614 = vpop.f32.mrf.mxu0
      %v615 = vadd.f32 %v381, %v614
      %v616 = vpop.f32.mrf.mxu0
      %v617 = vpop.f32.mrf.mxu0
      %v618 = vadd.f32 %v381, %v617
      %v619 = vpop.f32.mrf.mxu0
      %620 = vmatprep.mubr.bf16.mxu0 0
      %621 = vmatmul.mubr.bf16.gmra.mxu0 %v424
      %v622 = vpop.f32.mrf.mxu0
      %v623 = vadd.f32 %v381, %v622
      %v624 = vpop.f32.mrf.mxu0
      %v625 = vpop.f32.mrf.mxu0
      %v626 = vadd.f32 %v381, %v625
      %v627 = vpop.f32.mrf.mxu0
      %628 = vmatprep.mubr.bf16.mxu0 0
      %629 = vmatmul.mubr.bf16.gmra.mxu0 %v427
      %v630 = vpop.f32.mrf.mxu0
      %v631 = vadd.f32 %v381, %v630
      %v632 = vpop.f32.mrf.mxu0
      %v633 = vpop.f32.mrf.mxu0
      %v634 = vadd.f32 %v381, %v633
      %v635 = vpop.f32.mrf.mxu0
      %636 = vmatprep.mubr.bf16.mxu0 0
      %637 = vmatmul.mubr.bf16.gmra.mxu0 %v430
      %v638 = vpop.f32.mrf.mxu0
      %v639 = vadd.f32 %v381, %v638
      %v640 = vpop.f32.mrf.mxu0
      %v641 = vpop.f32.mrf.mxu0
      %v642 = vadd.f32 %v381, %v641
      %v643 = vpop.f32.mrf.mxu0
      %644 = vmatprep.mubr.bf16.mxu0 0
      %645 = vmatmul.mubr.bf16.gmra.mxu0 %v433
      %v646 = vpop.f32.mrf.mxu0
      %v647 = vadd.f32 %v381, %v646
      %v648 = vpop.f32.mrf.mxu0
      %v649 = vpop.f32.mrf.mxu0
      %v650 = vadd.f32 %v381, %v649
      %v651 = vpop.f32.mrf.mxu0
      %652 = vmatprep.mubr.bf16.mxu0 0
      %653 = vmatmul.mubr.bf16.gmra.mxu0 %v436
      %v654 = vpop.f32.mrf.mxu0
      %v655 = vadd.f32 %v381, %v654
      %v656 = vpop.f32.mrf.mxu0
      %v657 = vpop.f32.mrf.mxu0
      %v658 = vadd.f32 %v381, %v657
      %v659 = vpop.f32.mrf.mxu0
      %660 = vmatprep.mubr.bf16.mxu0 0
      %661 = vmatmul.mubr.bf16.gmra.mxu0 %v439
      %v662 = vpop.f32.mrf.mxu0
      %v663 = vadd.f32 %v381, %v662
      %v664 = vpop.f32.mrf.mxu0
      %v665 = vpop.f32.mrf.mxu0
      %v666 = vadd.f32 %v381, %v665
      %v667 = vpop.f32.mrf.mxu0
      %668 = vmatprep.mubr.bf16.mxu0 0
      %669 = vmatmul.mubr.bf16.gmra.mxu0 %v442
      %v670 = vpop.f32.mrf.mxu0
      %v671 = vadd.f32 %v381, %v670
      %v672 = vpop.f32.mrf.mxu0
      %v673 = vpop.f32.mrf.mxu0
      %v674 = vadd.f32 %v381, %v673
      %v675 = vpop.f32.mrf.mxu0
      %676 = vmatprep.mubr.bf16.mxu0 0
      %677 = vmatmul.mubr.bf16.gmra.mxu0 %v445
      %v678 = vpop.f32.mrf.mxu0
      %v679 = vadd.f32 %v381, %v678
      %v680 = vpop.f32.mrf.mxu0
      %v681 = vpop.f32.mrf.mxu0
      %v682 = vadd.f32 %v381, %v681
      %v683 = vpop.f32.mrf.mxu0
      %684 = vmatprep.mubr.bf16.mxu0 0
      %685 = vmatmul.mubr.bf16.gmra.mxu0 %v448
      %v686 = vpop.f32.mrf.mxu0
      %v687 = vadd.f32 %v381, %v686
      %v688 = vpop.f32.mrf.mxu0
      %v689 = vpop.f32.mrf.mxu0
      %v690 = vadd.f32 %v381, %v689
      %v691 = vpop.f32.mrf.mxu0
      %692 = vmatprep.mubr.bf16.mxu0 0
      %693 = vmatmul.mubr.bf16.gmra.mxu0 %v451
      %v694 = vpop.f32.mrf.mxu0
      %v695 = vadd.f32 %v381, %v694
      %v696 = vpop.f32.mrf.mxu0
      %v697 = vpop.f32.mrf.mxu0
      %v698 = vadd.f32 %v381, %v697
      %v699 = vpop.f32.mrf.mxu0
      %700 = vmatprep.mubr.bf16.mxu0 0
      %701 = vmatmul.mubr.bf16.gmra.mxu0 %v454
      %v702 = vpop.f32.mrf.mxu0
      %v703 = vadd.f32 %v381, %v702
      %v704 = vpop.f32.mrf.mxu0
      %v705 = vpop.f32.mrf.mxu0
      %v706 = vadd.f32 %v381, %v705
      %v707 = vpop.f32.mrf.mxu0
      %708 = vmatprep.mubr.bf16.mxu0 0
      %709 = vmatmul.mubr.bf16.gmra.mxu0 %v457
      %v710 = vpop.f32.mrf.mxu0
      %v711 = vadd.f32 %v381, %v710
      %v712 = vpop.f32.mrf.mxu0
      %v713 = vpop.f32.mrf.mxu0
      %v714 = vadd.f32 %v381, %v713
      %v715 = vpop.f32.mrf.mxu0
      %716 = vmatprep.mubr.bf16.mxu0 0
      %717 = vmatmul.mubr.bf16.gmra.mxu0 %v460
      %v718 = vpop.f32.mrf.mxu0
      %v719 = vadd.f32 %v381, %v718
      %v720 = vpop.f32.mrf.mxu0
      %v721 = vpop.f32.mrf.mxu0
      %v722 = vadd.f32 %v381, %v721
      %v723 = vpop.f32.mrf.mxu0
      %724 = vmatprep.mubr.bf16.mxu0 0
      %725 = vmatmul.mubr.bf16.gmra.mxu0 %v463
      %v726 = vpop.f32.mrf.mxu0
      %v727 = vadd.f32 %v381, %v726
      %v728 = vpop.f32.mrf.mxu0
      %v729 = vpop.f32.mrf.mxu0
      %v730 = vadd.f32 %v381, %v729
      %v731 = vpop.f32.mrf.mxu0
      %732 = vmatprep.mubr.bf16.mxu0 0
      %733 = vmatmul.mubr.bf16.gmra.mxu0 %v466
      %v734 = vpop.f32.mrf.mxu0
      %v735 = vadd.f32 %v381, %v734
      %v736 = vpop.f32.mrf.mxu0
      %v737 = vpop.f32.mrf.mxu0
      %v738 = vadd.f32 %v381, %v737
      %v739 = vpop.f32.mrf.mxu0
      %740 = vmatprep.mubr.bf16.mxu0 0
      %741 = vmatmul.mubr.bf16.gmra.mxu0 %v469
      %v742 = vpop.f32.mrf.mxu0
      %v743 = vadd.f32 %v381, %v742
      %v744 = vpop.f32.mrf.mxu0
      %v745 = vpop.f32.mrf.mxu0
      %v746 = vadd.f32 %v381, %v745
      %v747 = vpop.f32.mrf.mxu0
      %748 = vmatprep.mubr.bf16.mxu0 0
      %749 = vmatmul.mubr.bf16.gmra.mxu0 %v472
      %v750 = vpop.f32.mrf.mxu0
      %v751 = vadd.f32 %v381, %v750
      %v752 = vpop.f32.mrf.mxu0
      %v753 = vpop.f32.mrf.mxu0
      %v754 = vadd.f32 %v381, %v753
      %v755 = vpop.f32.mrf.mxu0
      %756 = vmatprep.mubr.bf16.mxu0 0
      %757 = vmatmul.mubr.bf16.gmra.mxu0 %v475
      %v758 = vpop.f32.mrf.mxu0
      %v759 = vadd.f32 %v381, %v758
      %v760 = vpop.f32.mrf.mxu0
      %v761 = vpop.f32.mrf.mxu0
      %v762 = vadd.f32 %v381, %v761
      %v763 = vpop.f32.mrf.mxu0
      %764 = vmatprep.mubr.bf16.mxu0 0
      %765 = vmatmul.mubr.bf16.gmra.mxu0 %v478
      %v766 = vpop.f32.mrf.mxu0
      %v767 = vadd.f32 %v381, %v766
      %v768 = vpop.f32.mrf.mxu0
      %v769 = vpop.f32.mrf.mxu0
      %v770 = vadd.f32 %v381, %v769
      %v771 = vpop.f32.mrf.mxu0
      %772 = vdwg.mxu0
      %v773 = vmax.f32 %v519, 0.0
      %v774 = vmax.f32 %v522, 0.0
      %v775 = vmax.f32 %v527, 0.0
      %v776 = vmax.f32 %v530, 0.0
      %v777 = vmax.f32 %v535, 0.0
      %v778 = vmax.f32 %v538, 0.0
      %v779 = vmax.f32 %v543, 0.0
      %v780 = vmax.f32 %v546, 0.0
      %v781 = vmax.f32 %v551, 0.0
      %v782 = vmax.f32 %v554, 0.0
      %v783 = vmax.f32 %v559, 0.0
      %v784 = vmax.f32 %v562, 0.0
      %v785 = vmax.f32 %v567, 0.0
      %v786 = vmax.f32 %v570, 0.0
      %v787 = vmax.f32 %v575, 0.0
      %v788 = vmax.f32 %v578, 0.0
      %v789 = vmax.f32 %v583, 0.0
      %v790 = vmax.f32 %v586, 0.0
      %v791 = vmax.f32 %v591, 0.0
      %v792 = vmax.f32 %v594, 0.0
      %v793 = vmax.f32 %v599, 0.0
      %v794 = vmax.f32 %v602, 0.0
      %v795 = vmax.f32 %v607, 0.0
      %v796 = vmax.f32 %v610, 0.0
      %v797 = vmax.f32 %v615, 0.0
      %v798 = vmax.f32 %v618, 0.0
      %v799 = vmax.f32 %v623, 0.0
      %v800 = vmax.f32 %v626, 0.0
      %v801 = vmax.f32 %v631, 0.0
      %v802 = vmax.f32 %v634, 0.0
      %v803 = vmax.f32 %v639, 0.0
      %v804 = vmax.f32 %v642, 0.0
      %v805 = vmax.f32 %v647, 0.0
      %v806 = vmax.f32 %v650, 0.0
      %v807 = vmax.f32 %v655, 0.0
      %v808 = vmax.f32 %v658, 0.0
      %v809 = vmax.f32 %v663, 0.0
      %v810 = vmax.f32 %v666, 0.0
      %v811 = vmax.f32 %v671, 0.0
      %v812 = vmax.f32 %v674, 0.0
      %v813 = vmax.f32 %v679, 0.0
      %v814 = vmax.f32 %v682, 0.0
      %v815 = vmax.f32 %v687, 0.0
      %v816 = vmax.f32 %v690, 0.0
      %v817 = vmax.f32 %v695, 0.0
      %v818 = vmax.f32 %v698, 0.0
      %v819 = vmax.f32 %v703, 0.0
      %v820 = vmax.f32 %v706, 0.0
      %v821 = vmax.f32 %v711, 0.0
      %v822 = vmax.f32 %v714, 0.0
      %v823 = vmax.f32 %v719, 0.0
      %v824 = vmax.f32 %v722, 0.0
      %v825 = vmax.f32 %v727, 0.0
      %v826 = vmax.f32 %v730, 0.0
      %v827 = vmax.f32 %v735, 0.0
      %v828 = vmax.f32 %v738, 0.0
      %v829 = vmax.f32 %v743, 0.0
      %v830 = vmax.f32 %v746, 0.0
      %v831 = vmax.f32 %v751, 0.0
      %v832 = vmax.f32 %v754, 0.0
      %v833 = vmax.f32 %v759, 0.0
      %v834 = vmax.f32 %v762, 0.0
      %v835 = vmax.f32 %v767, 0.0
      %v836 = vmax.f32 %v770, 0.0
      %v837 = vpack.c.bf16 %v774, %v773
      %v838 = vpack.c.bf16 %v776, %v775
      %v839 = vpack.c.bf16 %v778, %v777
      %v840 = vpack.c.bf16 %v780, %v779
      %v841 = vpack.c.bf16 %v782, %v781
      %v842 = vpack.c.bf16 %v784, %v783
      %v843 = vpack.c.bf16 %v786, %v785
      %v844 = vpack.c.bf16 %v788, %v787
      %v845 = vpack.c.bf16 %v790, %v789
      %v846 = vpack.c.bf16 %v792, %v791
      %v847 = vpack.c.bf16 %v794, %v793
      %v848 = vpack.c.bf16 %v796, %v795
      %v849 = vpack.c.bf16 %v798, %v797
      %v850 = vpack.c.bf16 %v800, %v799
      %v851 = vpack.c.bf16 %v802, %v801
      %v852 = vpack.c.bf16 %v804, %v803
      %v853 = vpack.c.bf16 %v806, %v805
      %v854 = vpack.c.bf16 %v808, %v807
      %v855 = vpack.c.bf16 %v810, %v809
      %v856 = vpack.c.bf16 %v812, %v811
      %v857 = vpack.c.bf16 %v814, %v813
      %v858 = vpack.c.bf16 %v816, %v815
      %v859 = vpack.c.bf16 %v818, %v817
      %v860 = vpack.c.bf16 %v820, %v819
      %v861 = vpack.c.bf16 %v822, %v821
      %v862 = vpack.c.bf16 %v824, %v823
      %v863 = vpack.c.bf16 %v826, %v825
      %v864 = vpack.c.bf16 %v828, %v827
      %v865 = vpack.c.bf16 %v830, %v829
      %v866 = vpack.c.bf16 %v832, %v831
      %v867 = vpack.c.bf16 %v834, %v833
      %v868 = vpack.c.bf16 %v836, %v835
      %v869 = vld [vmem:[%s3] sm:$0xff]
      %v870 = vld [vmem:[%s3 + $0x8] sm:$0xff]
      %v871 = vpack.c.bf16 %v870, %v869
      %v872 = vld [vmem:[%s4] sm:$0x1]
      %v874 = vlaneseq
      %v875 = vshrl.u32 %v874, 7
      %v876 = vsub.s32 0, %v875
      %v877 = vrot.slane %v872, %v876
      %vm879 = vcmask 130048
      %v881 = vsel %vm879, %v837, 0
      %v884 = vsel %vm879, %v838, 0
      %v887 = vsel %vm879, %v839, 0
      %v890 = vsel %vm879, %v840, 0
      %v893 = vsel %vm879, %v841, 0
      %v896 = vsel %vm879, %v842, 0
      %v899 = vsel %vm879, %v843, 0
      %v902 = vsel %vm879, %v844, 0
      %v905 = vsel %vm879, %v845, 0
      %v908 = vsel %vm879, %v846, 0
      %v911 = vsel %vm879, %v847, 0
      %v914 = vsel %vm879, %v848, 0
      %v917 = vsel %vm879, %v849, 0
      %v920 = vsel %vm879, %v850, 0
      %v923 = vsel %vm879, %v851, 0
      %v926 = vsel %vm879, %v852, 0
      %v929 = vsel %vm879, %v853, 0
      %v932 = vsel %vm879, %v854, 0
      %v935 = vsel %vm879, %v855, 0
      %v938 = vsel %vm879, %v856, 0
      %v941 = vsel %vm879, %v857, 0
      %v944 = vsel %vm879, %v858, 0
      %v947 = vsel %vm879, %v859, 0
      %v950 = vsel %vm879, %v860, 0
      %v953 = vsel %vm879, %v861, 0
      %v956 = vsel %vm879, %v862, 0
      %v959 = vsel %vm879, %v863, 0
      %v962 = vsel %vm879, %v864, 0
      %v965 = vsel %vm879, %v865, 0
      %v968 = vsel %vm879, %v866, 0
      %v971 = vsel %vm879, %v867, 0
      %v974 = vsel %vm879, %v868, 0
      %976 = vmatprep.subr.bf16.mxu0 0
      %977 = vmatpush1.bf16.msra.mxu0 0
      %978 = vmatprep.subr.bf16.mxu0 0
      %979 = vmatpush1.bf16.msra.mxu0 0
      %980 = vmatprep.subr.bf16.mxu0 0
      %981 = vmatpush1.bf16.msra.mxu0 0
      %982 = vmatprep.subr.bf16.mxu0 0
      %983 = vmatpush1.bf16.msra.mxu0 0
      %984 = vmatprep.subr.bf16.mxu0 0
      %985 = vmatpush1.bf16.msra.mxu0 0
      %986 = vmatprep.subr.bf16.mxu0 0
      %987 = vmatpush1.bf16.msra.mxu0 0
      %988 = vmatprep.subr.bf16.mxu0 0
      %989 = vmatpush1.bf16.msra.mxu0 0
      %990 = vmatprep.subr.bf16.mxu0 0
      %991 = vmatpush1.bf16.msra.mxu0 %v871
      %992 = vmatprep.subr.bf16.mxu0 0
      %993 = vmatpush2.bf16.msra.mxu0 0
      %994 = vmatprep.subr.bf16.mxu0 0
      %995 = vmatpush2.bf16.msra.mxu0 0
      %996 = vmatprep.subr.bf16.mxu0 0
      %997 = vmatpush2.bf16.msra.mxu0 0
      %998 = vmatprep.subr.bf16.mxu0 0
      %999 = vmatpush2.bf16.msra.mxu0 0
      %1000 = vmatprep.subr.bf16.mxu0 0
      %1001 = vmatpush2.bf16.msra.mxu0 0
      %1002 = vmatprep.subr.bf16.mxu0 0
      %1003 = vmatpush2.bf16.msra.mxu0 0
      %1004 = vmatprep.subr.bf16.mxu0 0
      %1005 = vmatpush2.bf16.msra.mxu0 0
      %1006 = vmatprep.subr.bf16.mxu0 0
      %1007 = vmatpush2.bf16.msra.mxu0 0
      %1008 = vmatprep.mubr.bf16.mxu0 0
      %1009 = vmatmul.mubr.bf16.gmra.mxu0 %v881
      %v1010 = vpop.f32.mrf.mxu0
      %v1011 = vadd.f32 %v877, %v1010
      %v1012 = vpop.f32.mrf.mxu0
      %v1013 = vpop.f32.mrf.mxu0
      %v1014 = vadd.f32 %v877, %v1013
      %v1015 = vpop.f32.mrf.mxu0
      %1016 = vmatprep.mubr.bf16.mxu0 0
      %1017 = vmatmul.mubr.bf16.gmra.mxu0 %v884
      %v1018 = vpop.f32.mrf.mxu0
      %v1019 = vadd.f32 %v877, %v1018
      %v1020 = vpop.f32.mrf.mxu0
      %v1021 = vpop.f32.mrf.mxu0
      %v1022 = vadd.f32 %v877, %v1021
      %v1023 = vpop.f32.mrf.mxu0
      %1024 = vmatprep.mubr.bf16.mxu0 0
      %1025 = vmatmul.mubr.bf16.gmra.mxu0 %v887
      %v1026 = vpop.f32.mrf.mxu0
      %v1027 = vadd.f32 %v877, %v1026
      %v1028 = vpop.f32.mrf.mxu0
      %v1029 = vpop.f32.mrf.mxu0
      %v1030 = vadd.f32 %v877, %v1029
      %v1031 = vpop.f32.mrf.mxu0
      %1032 = vmatprep.mubr.bf16.mxu0 0
      %1033 = vmatmul.mubr.bf16.gmra.mxu0 %v890
      %v1034 = vpop.f32.mrf.mxu0
      %v1035 = vadd.f32 %v877, %v1034
      %v1036 = vpop.f32.mrf.mxu0
      %v1037 = vpop.f32.mrf.mxu0
      %v1038 = vadd.f32 %v877, %v1037
      %v1039 = vpop.f32.mrf.mxu0
      %1040 = vmatprep.mubr.bf16.mxu0 0
      %1041 = vmatmul.mubr.bf16.gmra.mxu0 %v893
      %v1042 = vpop.f32.mrf.mxu0
      %v1043 = vadd.f32 %v877, %v1042
      %v1044 = vpop.f32.mrf.mxu0
      %v1045 = vpop.f32.mrf.mxu0
      %v1046 = vadd.f32 %v877, %v1045
      %v1047 = vpop.f32.mrf.mxu0
      %1048 = vmatprep.mubr.bf16.mxu0 0
      %1049 = vmatmul.mubr.bf16.gmra.mxu0 %v896
      %v1050 = vpop.f32.mrf.mxu0
      %v1051 = vadd.f32 %v877, %v1050
      %v1052 = vpop.f32.mrf.mxu0
      %v1053 = vpop.f32.mrf.mxu0
      %v1054 = vadd.f32 %v877, %v1053
      %v1055 = vpop.f32.mrf.mxu0
      %1056 = vmatprep.mubr.bf16.mxu0 0
      %1057 = vmatmul.mubr.bf16.gmra.mxu0 %v899
      %v1058 = vpop.f32.mrf.mxu0
      %v1059 = vadd.f32 %v877, %v1058
      %v1060 = vpop.f32.mrf.mxu0
      %v1061 = vpop.f32.mrf.mxu0
      %v1062 = vadd.f32 %v877, %v1061
      %v1063 = vpop.f32.mrf.mxu0
      %1064 = vmatprep.mubr.bf16.mxu0 0
      %1065 = vmatmul.mubr.bf16.gmra.mxu0 %v902
      %v1066 = vpop.f32.mrf.mxu0
      %v1067 = vadd.f32 %v877, %v1066
      %v1068 = vpop.f32.mrf.mxu0
      %v1069 = vpop.f32.mrf.mxu0
      %v1070 = vadd.f32 %v877, %v1069
      %v1071 = vpop.f32.mrf.mxu0
      %1072 = vmatprep.mubr.bf16.mxu0 0
      %1073 = vmatmul.mubr.bf16.gmra.mxu0 %v905
      %v1074 = vpop.f32.mrf.mxu0
      %v1075 = vadd.f32 %v877, %v1074
      %v1076 = vpop.f32.mrf.mxu0
      %v1077 = vpop.f32.mrf.mxu0
      %v1078 = vadd.f32 %v877, %v1077
      %v1079 = vpop.f32.mrf.mxu0
      %1080 = vmatprep.mubr.bf16.mxu0 0
      %1081 = vmatmul.mubr.bf16.gmra.mxu0 %v908
      %v1082 = vpop.f32.mrf.mxu0
      %v1083 = vadd.f32 %v877, %v1082
      %v1084 = vpop.f32.mrf.mxu0
      %v1085 = vpop.f32.mrf.mxu0
      %v1086 = vadd.f32 %v877, %v1085
      %v1087 = vpop.f32.mrf.mxu0
      %1088 = vmatprep.mubr.bf16.mxu0 0
      %1089 = vmatmul.mubr.bf16.gmra.mxu0 %v911
      %v1090 = vpop.f32.mrf.mxu0
      %v1091 = vadd.f32 %v877, %v1090
      %v1092 = vpop.f32.mrf.mxu0
      %v1093 = vpop.f32.mrf.mxu0
      %v1094 = vadd.f32 %v877, %v1093
      %v1095 = vpop.f32.mrf.mxu0
      %1096 = vmatprep.mubr.bf16.mxu0 0
      %1097 = vmatmul.mubr.bf16.gmra.mxu0 %v914
      %v1098 = vpop.f32.mrf.mxu0
      %v1099 = vadd.f32 %v877, %v1098
      %v1100 = vpop.f32.mrf.mxu0
      %v1101 = vpop.f32.mrf.mxu0
      %v1102 = vadd.f32 %v877, %v1101
      %v1103 = vpop.f32.mrf.mxu0
      %1104 = vmatprep.mubr.bf16.mxu0 0
      %1105 = vmatmul.mubr.bf16.gmra.mxu0 %v917
      %v1106 = vpop.f32.mrf.mxu0
      %v1107 = vadd.f32 %v877, %v1106
      %v1108 = vpop.f32.mrf.mxu0
      %v1109 = vpop.f32.mrf.mxu0
      %v1110 = vadd.f32 %v877, %v1109
      %v1111 = vpop.f32.mrf.mxu0
      %1112 = vmatprep.mubr.bf16.mxu0 0
      %1113 = vmatmul.mubr.bf16.gmra.mxu0 %v920
      %v1114 = vpop.f32.mrf.mxu0
      %v1115 = vadd.f32 %v877, %v1114
      %v1116 = vpop.f32.mrf.mxu0
      %v1117 = vpop.f32.mrf.mxu0
      %v1118 = vadd.f32 %v877, %v1117
      %v1119 = vpop.f32.mrf.mxu0
      %1120 = vmatprep.mubr.bf16.mxu0 0
      %1121 = vmatmul.mubr.bf16.gmra.mxu0 %v923
      %v1122 = vpop.f32.mrf.mxu0
      %v1123 = vadd.f32 %v877, %v1122
      %v1124 = vpop.f32.mrf.mxu0
      %v1125 = vpop.f32.mrf.mxu0
      %v1126 = vadd.f32 %v877, %v1125
      %v1127 = vpop.f32.mrf.mxu0
      %1128 = vmatprep.mubr.bf16.mxu0 0
      %1129 = vmatmul.mubr.bf16.gmra.mxu0 %v926
      %v1130 = vpop.f32.mrf.mxu0
      %v1131 = vadd.f32 %v877, %v1130
      %v1132 = vpop.f32.mrf.mxu0
      %v1133 = vpop.f32.mrf.mxu0
      %v1134 = vadd.f32 %v877, %v1133
      %v1135 = vpop.f32.mrf.mxu0
      %1136 = vmatprep.mubr.bf16.mxu0 0
      %1137 = vmatmul.mubr.bf16.gmra.mxu0 %v929
      %v1138 = vpop.f32.mrf.mxu0
      %v1139 = vadd.f32 %v877, %v1138
      %v1140 = vpop.f32.mrf.mxu0
      %v1141 = vpop.f32.mrf.mxu0
      %v1142 = vadd.f32 %v877, %v1141
      %v1143 = vpop.f32.mrf.mxu0
      %1144 = vmatprep.mubr.bf16.mxu0 0
      %1145 = vmatmul.mubr.bf16.gmra.mxu0 %v932
      %v1146 = vpop.f32.mrf.mxu0
      %v1147 = vadd.f32 %v877, %v1146
      %v1148 = vpop.f32.mrf.mxu0
      %v1149 = vpop.f32.mrf.mxu0
      %v1150 = vadd.f32 %v877, %v1149
      %v1151 = vpop.f32.mrf.mxu0
      %1152 = vmatprep.mubr.bf16.mxu0 0
      %1153 = vmatmul.mubr.bf16.gmra.mxu0 %v935
      %v1154 = vpop.f32.mrf.mxu0
      %v1155 = vadd.f32 %v877, %v1154
      %v1156 = vpop.f32.mrf.mxu0
      %v1157 = vpop.f32.mrf.mxu0
      %v1158 = vadd.f32 %v877, %v1157
      %v1159 = vpop.f32.mrf.mxu0
      %1160 = vmatprep.mubr.bf16.mxu0 0
      %1161 = vmatmul.mubr.bf16.gmra.mxu0 %v938
      %v1162 = vpop.f32.mrf.mxu0
      %v1163 = vadd.f32 %v877, %v1162
      %v1164 = vpop.f32.mrf.mxu0
      %v1165 = vpop.f32.mrf.mxu0
      %v1166 = vadd.f32 %v877, %v1165
      %v1167 = vpop.f32.mrf.mxu0
      %1168 = vmatprep.mubr.bf16.mxu0 0
      %1169 = vmatmul.mubr.bf16.gmra.mxu0 %v941
      %v1170 = vpop.f32.mrf.mxu0
      %v1171 = vadd.f32 %v877, %v1170
      %v1172 = vpop.f32.mrf.mxu0
      %v1173 = vpop.f32.mrf.mxu0
      %v1174 = vadd.f32 %v877, %v1173
      %v1175 = vpop.f32.mrf.mxu0
      %1176 = vmatprep.mubr.bf16.mxu0 0
      %1177 = vmatmul.mubr.bf16.gmra.mxu0 %v944
      %v1178 = vpop.f32.mrf.mxu0
      %v1179 = vadd.f32 %v877, %v1178
      %v1180 = vpop.f32.mrf.mxu0
      %v1181 = vpop.f32.mrf.mxu0
      %v1182 = vadd.f32 %v877, %v1181
      %v1183 = vpop.f32.mrf.mxu0
      %1184 = vmatprep.mubr.bf16.mxu0 0
      %1185 = vmatmul.mubr.bf16.gmra.mxu0 %v947
      %v1186 = vpop.f32.mrf.mxu0
      %v1187 = vadd.f32 %v877, %v1186
      %v1188 = vpop.f32.mrf.mxu0
      %v1189 = vpop.f32.mrf.mxu0
      %v1190 = vadd.f32 %v877, %v1189
      %v1191 = vpop.f32.mrf.mxu0
      %1192 = vmatprep.mubr.bf16.mxu0 0
      %1193 = vmatmul.mubr.bf16.gmra.mxu0 %v950
      %v1194 = vpop.f32.mrf.mxu0
      %v1195 = vadd.f32 %v877, %v1194
      %v1196 = vpop.f32.mrf.mxu0
      %v1197 = vpop.f32.mrf.mxu0
      %v1198 = vadd.f32 %v877, %v1197
      %v1199 = vpop.f32.mrf.mxu0
      %1200 = vmatprep.mubr.bf16.mxu0 0
      %1201 = vmatmul.mubr.bf16.gmra.mxu0 %v953
      %v1202 = vpop.f32.mrf.mxu0
      %v1203 = vadd.f32 %v877, %v1202
      %v1204 = vpop.f32.mrf.mxu0
      %v1205 = vpop.f32.mrf.mxu0
      %v1206 = vadd.f32 %v877, %v1205
      %v1207 = vpop.f32.mrf.mxu0
      %1208 = vmatprep.mubr.bf16.mxu0 0
      %1209 = vmatmul.mubr.bf16.gmra.mxu0 %v956
      %v1210 = vpop.f32.mrf.mxu0
      %v1211 = vadd.f32 %v877, %v1210
      %v1212 = vpop.f32.mrf.mxu0
      %v1213 = vpop.f32.mrf.mxu0
      %v1214 = vadd.f32 %v877, %v1213
      %v1215 = vpop.f32.mrf.mxu0
      %1216 = vmatprep.mubr.bf16.mxu0 0
      %1217 = vmatmul.mubr.bf16.gmra.mxu0 %v959
      %v1218 = vpop.f32.mrf.mxu0
      %v1219 = vadd.f32 %v877, %v1218
      %v1220 = vpop.f32.mrf.mxu0
      %v1221 = vpop.f32.mrf.mxu0
      %v1222 = vadd.f32 %v877, %v1221
      %v1223 = vpop.f32.mrf.mxu0
      %1224 = vmatprep.mubr.bf16.mxu0 0
      %1225 = vmatmul.mubr.bf16.gmra.mxu0 %v962
      %v1226 = vpop.f32.mrf.mxu0
      %v1227 = vadd.f32 %v877, %v1226
      %v1228 = vpop.f32.mrf.mxu0
      %v1229 = vpop.f32.mrf.mxu0
      %v1230 = vadd.f32 %v877, %v1229
      %v1231 = vpop.f32.mrf.mxu0
      %1232 = vmatprep.mubr.bf16.mxu0 0
      %1233 = vmatmul.mubr.bf16.gmra.mxu0 %v965
      %v1234 = vpop.f32.mrf.mxu0
      %v1235 = vadd.f32 %v877, %v1234
      %v1236 = vpop.f32.mrf.mxu0
      %v1237 = vpop.f32.mrf.mxu0
      %v1238 = vadd.f32 %v877, %v1237
      %v1239 = vpop.f32.mrf.mxu0
      %1240 = vmatprep.mubr.bf16.mxu0 0
      %1241 = vmatmul.mubr.bf16.gmra.mxu0 %v968
      %v1242 = vpop.f32.mrf.mxu0
      %v1243 = vadd.f32 %v877, %v1242
      %v1244 = vpop.f32.mrf.mxu0
      %v1245 = vpop.f32.mrf.mxu0
      %v1246 = vadd.f32 %v877, %v1245
      %v1247 = vpop.f32.mrf.mxu0
      %1248 = vmatprep.mubr.bf16.mxu0 0
      %1249 = vmatmul.mubr.bf16.gmra.mxu0 %v971
      %v1250 = vpop.f32.mrf.mxu0
      %v1251 = vadd.f32 %v877, %v1250
      %v1252 = vpop.f32.mrf.mxu0
      %v1253 = vpop.f32.mrf.mxu0
      %v1254 = vadd.f32 %v877, %v1253
      %v1255 = vpop.f32.mrf.mxu0
      %1256 = vmatprep.mubr.bf16.mxu0 0
      %1257 = vmatmul.mubr.bf16.gmra.mxu0 %v974
      %v1258 = vpop.f32.mrf.mxu0
      %v1259 = vadd.f32 %v877, %v1258
      %v1260 = vpop.f32.mrf.mxu0
      %v1261 = vpop.f32.mrf.mxu0
      %v1262 = vadd.f32 %v877, %v1261
      %v1263 = vpop.f32.mrf.mxu0
      %1264 = vdwg.mxu0
      %v1265 = vld [vmem:[%s269] sm:$0xff]
      %v1266 = vld [vmem:[%s269 + $0x8] sm:$0xff]
      %v1267 = vld [vmem:[%s269 + $0x10] sm:$0xff]
      %v1268 = vld [vmem:[%s269 + $0x18] sm:$0xff]
      %v1269 = vld [vmem:[%s269 + $0x20] sm:$0xff]
      %v1270 = vld [vmem:[%s269 + $0x28] sm:$0xff]
      %v1271 = vld [vmem:[%s269 + $0x30] sm:$0xff]
      %v1272 = vld [vmem:[%s269 + $0x38] sm:$0xff]
      %v1273 = vld [vmem:[%s269 + $0x40] sm:$0xff]
      %v1274 = vld [vmem:[%s269 + $0x48] sm:$0xff]
      %v1275 = vld [vmem:[%s269 + $0x50] sm:$0xff]
      %v1276 = vld [vmem:[%s269 + $0x58] sm:$0xff]
      %v1277 = vld [vmem:[%s269 + $0x60] sm:$0xff]
      %v1278 = vld [vmem:[%s269 + $0x68] sm:$0xff]
      %v1279 = vld [vmem:[%s269 + $0x70] sm:$0xff]
      %v1280 = vld [vmem:[%s269 + $0x78] sm:$0xff]
      %v1281 = vld [vmem:[%s269 + $0x80] sm:$0xff]
      %v1282 = vld [vmem:[%s269 + $0x88] sm:$0xff]
      %v1283 = vld [vmem:[%s269 + $0x90] sm:$0xff]
      %v1284 = vld [vmem:[%s269 + $0x98] sm:$0xff]
      %v1285 = vld [vmem:[%s269 + $0xa0] sm:$0xff]
      %v1286 = vld [vmem:[%s269 + $0xa8] sm:$0xff]
      %v1287 = vld [vmem:[%s269 + $0xb0] sm:$0xff]
      %v1288 = vld [vmem:[%s269 + $0xb8] sm:$0xff]
      %v1289 = vld [vmem:[%s269 + $0xc0] sm:$0xff]
      %v1290 = vld [vmem:[%s269 + $0xc8] sm:$0xff]
      %v1291 = vld [vmem:[%s269 + $0xd0] sm:$0xff]
      %v1292 = vld [vmem:[%s269 + $0xd8] sm:$0xff]
      %v1293 = vld [vmem:[%s269 + $0xe0] sm:$0xff]
      %v1294 = vld [vmem:[%s269 + $0xe8] sm:$0xff]
      %v1295 = vld [vmem:[%s269 + $0xf0] sm:$0xff]
      %v1296 = vld [vmem:[%s269 + $0xf8] sm:$0xff]
      %v1297 = vld [vmem:[%s269 + $0x100] sm:$0xff]
      %v1298 = vld [vmem:[%s269 + $0x108] sm:$0xff]
      %v1299 = vld [vmem:[%s269 + $0x110] sm:$0xff]
      %v1300 = vld [vmem:[%s269 + $0x118] sm:$0xff]
      %v1301 = vld [vmem:[%s269 + $0x120] sm:$0xff]
      %v1302 = vld [vmem:[%s269 + $0x128] sm:$0xff]
      %v1303 = vld [vmem:[%s269 + $0x130] sm:$0xff]
      %v1304 = vld [vmem:[%s269 + $0x138] sm:$0xff]
      %v1305 = vld [vmem:[%s269 + $0x140] sm:$0xff]
      %v1306 = vld [vmem:[%s269 + $0x148] sm:$0xff]
      %v1307 = vld [vmem:[%s269 + $0x150] sm:$0xff]
      %v1308 = vld [vmem:[%s269 + $0x158] sm:$0xff]
      %v1309 = vld [vmem:[%s269 + $0x160] sm:$0xff]
      %v1310 = vld [vmem:[%s269 + $0x168] sm:$0xff]
      %v1311 = vld [vmem:[%s269 + $0x170] sm:$0xff]
      %v1312 = vld [vmem:[%s269 + $0x178] sm:$0xff]
      %v1313 = vld [vmem:[%s269 + $0x180] sm:$0xff]
      %v1314 = vld [vmem:[%s269 + $0x188] sm:$0xff]
      %v1315 = vld [vmem:[%s269 + $0x190] sm:$0xff]
      %v1316 = vld [vmem:[%s269 + $0x198] sm:$0xff]
      %v1317 = vld [vmem:[%s269 + $0x1a0] sm:$0xff]
      %v1318 = vld [vmem:[%s269 + $0x1a8] sm:$0xff]
      %v1319 = vld [vmem:[%s269 + $0x1b0] sm:$0xff]
      %v1320 = vld [vmem:[%s269 + $0x1b8] sm:$0xff]
      %v1321 = vld [vmem:[%s269 + $0x1c0] sm:$0xff]
      %v1322 = vld [vmem:[%s269 + $0x1c8] sm:$0xff]
      %v1323 = vld [vmem:[%s269 + $0x1d0] sm:$0xff]
      %v1324 = vld [vmem:[%s269 + $0x1d8] sm:$0xff]
      %v1325 = vld [vmem:[%s269 + $0x1e0] sm:$0xff]
      %v1326 = vld [vmem:[%s269 + $0x1e8] sm:$0xff]
      %v1327 = vld [vmem:[%s269 + $0x1f0] sm:$0xff]
      %v1328 = vld [vmem:[%s269 + $0x1f8] sm:$0xff]
      %v1329 = vadd.f32 %v1011, %v1265
      %v1330 = vadd.f32 %v1014, %v1266
      %v1331 = vadd.f32 %v1019, %v1267
      %v1332 = vadd.f32 %v1022, %v1268
      %v1333 = vadd.f32 %v1027, %v1269
      %v1334 = vadd.f32 %v1030, %v1270
      %v1335 = vadd.f32 %v1035, %v1271
      %v1336 = vadd.f32 %v1038, %v1272
      %v1337 = vadd.f32 %v1043, %v1273
      %v1338 = vadd.f32 %v1046, %v1274
      %v1339 = vadd.f32 %v1051, %v1275
      %v1340 = vadd.f32 %v1054, %v1276
      %v1341 = vadd.f32 %v1059, %v1277
      %v1342 = vadd.f32 %v1062, %v1278
      %v1343 = vadd.f32 %v1067, %v1279
      %v1344 = vadd.f32 %v1070, %v1280
      %v1345 = vadd.f32 %v1075, %v1281
      %v1346 = vadd.f32 %v1078, %v1282
      %v1347 = vadd.f32 %v1083, %v1283
      %v1348 = vadd.f32 %v1086, %v1284
      %v1349 = vadd.f32 %v1091, %v1285
      %v1350 = vadd.f32 %v1094, %v1286
      %v1351 = vadd.f32 %v1099, %v1287
      %v1352 = vadd.f32 %v1102, %v1288
      %v1353 = vadd.f32 %v1107, %v1289
      %v1354 = vadd.f32 %v1110, %v1290
      %v1355 = vadd.f32 %v1115, %v1291
      %v1356 = vadd.f32 %v1118, %v1292
      %v1357 = vadd.f32 %v1123, %v1293
      %v1358 = vadd.f32 %v1126, %v1294
      %v1359 = vadd.f32 %v1131, %v1295
      %v1360 = vadd.f32 %v1134, %v1296
      %v1361 = vadd.f32 %v1139, %v1297
      %v1362 = vadd.f32 %v1142, %v1298
      %v1363 = vadd.f32 %v1147, %v1299
      %v1364 = vadd.f32 %v1150, %v1300
      %v1365 = vadd.f32 %v1155, %v1301
      %v1366 = vadd.f32 %v1158, %v1302
      %v1367 = vadd.f32 %v1163, %v1303
      %v1368 = vadd.f32 %v1166, %v1304
      %v1369 = vadd.f32 %v1171, %v1305
      %v1370 = vadd.f32 %v1174, %v1306
      %v1371 = vadd.f32 %v1179, %v1307
      %v1372 = vadd.f32 %v1182, %v1308
      %v1373 = vadd.f32 %v1187, %v1309
      %v1374 = vadd.f32 %v1190, %v1310
      %v1375 = vadd.f32 %v1195, %v1311
      %v1376 = vadd.f32 %v1198, %v1312
      %v1377 = vadd.f32 %v1203, %v1313
      %v1378 = vadd.f32 %v1206, %v1314
      %v1379 = vadd.f32 %v1211, %v1315
      %v1380 = vadd.f32 %v1214, %v1316
      %v1381 = vadd.f32 %v1219, %v1317
      %v1382 = vadd.f32 %v1222, %v1318
      %v1383 = vadd.f32 %v1227, %v1319
      %v1384 = vadd.f32 %v1230, %v1320
      %v1385 = vadd.f32 %v1235, %v1321
      %v1386 = vadd.f32 %v1238, %v1322
      %v1387 = vadd.f32 %v1243, %v1323
      %v1388 = vadd.f32 %v1246, %v1324
      %v1389 = vadd.f32 %v1251, %v1325
      %v1390 = vadd.f32 %v1254, %v1326
      %v1391 = vadd.f32 %v1259, %v1327
      %v1392 = vadd.f32 %v1262, %v1328
      %1393 = vst.msk [vmem:[%s275] sm:$0xff] %vm879, %v1329
      %1394 = vst.msk [vmem:[%s275 + $0x8] sm:$0xff] %vm879, %v1330
      %1395 = vst.msk [vmem:[%s275 + $0x10] sm:$0xff] %vm879, %v1331
      %1396 = vst.msk [vmem:[%s275 + $0x18] sm:$0xff] %vm879, %v1332
      %1397 = vst.msk [vmem:[%s275 + $0x20] sm:$0xff] %vm879, %v1333
      %1398 = vst.msk [vmem:[%s275 + $0x28] sm:$0xff] %vm879, %v1334
      %1399 = vst.msk [vmem:[%s275 + $0x30] sm:$0xff] %vm879, %v1335
      %1400 = vst.msk [vmem:[%s275 + $0x38] sm:$0xff] %vm879, %v1336
      %1401 = vst.msk [vmem:[%s275 + $0x40] sm:$0xff] %vm879, %v1337
      %1402 = vst.msk [vmem:[%s275 + $0x48] sm:$0xff] %vm879, %v1338
      %1403 = vst.msk [vmem:[%s275 + $0x50] sm:$0xff] %vm879, %v1339
      %1404 = vst.msk [vmem:[%s275 + $0x58] sm:$0xff] %vm879, %v1340
      %1405 = vst.msk [vmem:[%s275 + $0x60] sm:$0xff] %vm879, %v1341
      %1406 = vst.msk [vmem:[%s275 + $0x68] sm:$0xff] %vm879, %v1342
      %1407 = vst.msk [vmem:[%s275 + $0x70] sm:$0xff] %vm879, %v1343
      %1408 = vst.msk [vmem:[%s275 + $0x78] sm:$0xff] %vm879, %v1344
      %1409 = vst.msk [vmem:[%s275 + $0x80] sm:$0xff] %vm879, %v1345
      %1410 = vst.msk [vmem:[%s275 + $0x88] sm:$0xff] %vm879, %v1346
      %1411 = vst.msk [vmem:[%s275 + $0x90] sm:$0xff] %vm879, %v1347
      %1412 = vst.msk [vmem:[%s275 + $0x98] sm:$0xff] %vm879, %v1348
      %1413 = vst.msk [vmem:[%s275 + $0xa0] sm:$0xff] %vm879, %v1349
      %1414 = vst.msk [vmem:[%s275 + $0xa8] sm:$0xff] %vm879, %v1350
      %1415 = vst.msk [vmem:[%s275 + $0xb0] sm:$0xff] %vm879, %v1351
      %1416 = vst.msk [vmem:[%s275 + $0xb8] sm:$0xff] %vm879, %v1352
      %1417 = vst.msk [vmem:[%s275 + $0xc0] sm:$0xff] %vm879, %v1353
      %1418 = vst.msk [vmem:[%s275 + $0xc8] sm:$0xff] %vm879, %v1354
      %1419 = vst.msk [vmem:[%s275 + $0xd0] sm:$0xff] %vm879, %v1355
      %1420 = vst.msk [vmem:[%s275 + $0xd8] sm:$0xff] %vm879, %v1356
      %1421 = vst.msk [vmem:[%s275 + $0xe0] sm:$0xff] %vm879, %v1357
      %1422 = vst.msk [vmem:[%s275 + $0xe8] sm:$0xff] %vm879, %v1358
      %1423 = vst.msk [vmem:[%s275 + $0xf0] sm:$0xff] %vm879, %v1359
      %1424 = vst.msk [vmem:[%s275 + $0xf8] sm:$0xff] %vm879, %v1360
      %1425 = vst.msk [vmem:[%s275 + $0x100] sm:$0xff] %vm879, %v1361
      %1426 = vst.msk [vmem:[%s275 + $0x108] sm:$0xff] %vm879, %v1362
      %1427 = vst.msk [vmem:[%s275 + $0x110] sm:$0xff] %vm879, %v1363
      %1428 = vst.msk [vmem:[%s275 + $0x118] sm:$0xff] %vm879, %v1364
      %1429 = vst.msk [vmem:[%s275 + $0x120] sm:$0xff] %vm879, %v1365
      %1430 = vst.msk [vmem:[%s275 + $0x128] sm:$0xff] %vm879, %v1366
      %1431 = vst.msk [vmem:[%s275 + $0x130] sm:$0xff] %vm879, %v1367
      %1432 = vst.msk [vmem:[%s275 + $0x138] sm:$0xff] %vm879, %v1368
      %1433 = vst.msk [vmem:[%s275 + $0x140] sm:$0xff] %vm879, %v1369
      %1434 = vst.msk [vmem:[%s275 + $0x148] sm:$0xff] %vm879, %v1370
      %1435 = vst.msk [vmem:[%s275 + $0x150] sm:$0xff] %vm879, %v1371
      %1436 = vst.msk [vmem:[%s275 + $0x158] sm:$0xff] %vm879, %v1372
      %1437 = vst.msk [vmem:[%s275 + $0x160] sm:$0xff] %vm879, %v1373
      %1438 = vst.msk [vmem:[%s275 + $0x168] sm:$0xff] %vm879, %v1374
      %1439 = vst.msk [vmem:[%s275 + $0x170] sm:$0xff] %vm879, %v1375
      %1440 = vst.msk [vmem:[%s275 + $0x178] sm:$0xff] %vm879, %v1376
      %1441 = vst.msk [vmem:[%s275 + $0x180] sm:$0xff] %vm879, %v1377
      %1442 = vst.msk [vmem:[%s275 + $0x188] sm:$0xff] %vm879, %v1378
      %1443 = vst.msk [vmem:[%s275 + $0x190] sm:$0xff] %vm879, %v1379
      %1444 = vst.msk [vmem:[%s275 + $0x198] sm:$0xff] %vm879, %v1380
      %1445 = vst.msk [vmem:[%s275 + $0x1a0] sm:$0xff] %vm879, %v1381
      %1446 = vst.msk [vmem:[%s275 + $0x1a8] sm:$0xff] %vm879, %v1382
      %1447 = vst.msk [vmem:[%s275 + $0x1b0] sm:$0xff] %vm879, %v1383
      %1448 = vst.msk [vmem:[%s275 + $0x1b8] sm:$0xff] %vm879, %v1384
      %1449 = vst.msk [vmem:[%s275 + $0x1c0] sm:$0xff] %vm879, %v1385
      %1450 = vst.msk [vmem:[%s275 + $0x1c8] sm:$0xff] %vm879, %v1386
      %1451 = vst.msk [vmem:[%s275 + $0x1d0] sm:$0xff] %vm879, %v1387
      %1452 = vst.msk [vmem:[%s275 + $0x1d8] sm:$0xff] %vm879, %v1388
      %1453 = vst.msk [vmem:[%s275 + $0x1e0] sm:$0xff] %vm879, %v1389
      %1454 = vst.msk [vmem:[%s275 + $0x1e8] sm:$0xff] %vm879, %v1390
      %1455 = vst.msk [vmem:[%s275 + $0x1f0] sm:$0xff] %vm879, %v1391
      %1456 = vst.msk [vmem:[%s275 + $0x1f8] sm:$0xff] %vm879, %v1392
      %s1457 = smul.u32 64, %s17
      %p1458 = scmp.lt.s32.totalorder %s1457, 191
      %s1459 = scalar_select %p1458, %s1457, 191
      %s1460 = smul.addr %s1459, 8
      %s1461 = scalar_lea.vmem %s6, %s1460
      // Predicated region
      $region45: #{triplane_transformer_forward.9} parent=43 // pred_check
        %p1462 = pneg %p171
      $region46: #{triplane_transformer_forward.9} parent=43 // pred_check_branch
        %1464 = sbr.rel (%p1462) target = $region48
      $region47: #{triplane_transformer_forward.9} parent=43 // pred_region
        %s1465 = smul.u32 64, %s17
      $region48: #{triplane_transformer_forward.9} parent=43 // pred_fallthru
        _
    $region44: #{triplane_transformer_forward.9} parent=5 // pred_fallthru
      _
    %p1466 = scmp.le.s32.totalorder 2, %s12
    // Predicated region
    $region49: #{triplane_transformer_forward.9} parent=5 // pred_check
      %p1467 = pneg %p1466
    $region50: #{triplane_transformer_forward.9} parent=5 // pred_check_branch
      %1469 = sbr.rel (%p1467) target = $region52
    $region51: #{triplane_transformer_forward.9} parent=5 // pred_region
      %s1470 = ssub.s32 %s12, 2
      // Predicated region
      $region53: #{triplane_transformer_forward.9} parent=51 // pred_check
        %p1471 = pneg %p177
      $region54: #{triplane_transformer_forward.9} parent=51 // pred_check_branch
        %1473 = sbr.rel (%p1471) target = $region56
      $region55: #{triplane_transformer_forward.9} parent=51 // pred_region
        %s1474 = smul.u32 64, %s18
        %p1475 = scmp.lt.s32.totalorder %s1474, 191
        %s1476 = scalar_select %p1475, %s1474, 191
        %s1477 = smul.addr %s1476, 8
        %s1478 = scalar_lea.vmem %s6, %s1477
      $region56: #{triplane_transformer_forward.9} parent=51 // pred_fallthru
        _
    $region52: #{triplane_transformer_forward.9} parent=5 // pred_fallthru
      _
  $region6: #{triplane_transformer_forward.9} parent=0 // loop_footer
    %s16 = sadd.s32 1, %s12
  $region7: #{triplane_transformer_forward.9} parent=0 // loop_footer_branch
    %11 = sbr.rel target = $region3
  $region8: #{triplane_transformer_forward.9} parent=0 // loop_exit
    _

</llo_original>
